<compile_context>
chip_gen: v7x
topology: tpu7x:2x2x1
jax: 0.10.0
libtpu: 0.0.40
codegen_flags: <defaults>
</compile_context>

<pallas_src>
import jax
import jax.numpy as jnp
from jax.experimental import pallas as pl
from jax.experimental.pallas import tpu as pltpu


# ---------------------------------------------------------------------------
# Static problem sizes (MNIST).
# ---------------------------------------------------------------------------
H = W = 28                  # input spatial size
C1 = 32                     # conv1 output channels
C2 = 64                     # conv2 output channels
P1 = 14                     # spatial size after pool1 (28 / 2)
P2 = 7                      # spatial size after pool2 (14 / 2)
PITCH = 16                  # row pitch of the flat, zero-padded stage-2 buffers
NFLAT = P1 * PITCH          # 224 flat conv2 output rows (14 rows x 16 pitch)
HBUF_ROWS = 18 * PITCH      # 288: (1+14+1) padded rows + slack for shifted reads
OBUF_ROWS = 16 * PITCH      # 256: 224 real rows + zero tail for shifted reads
NOUT = 10                   # logits
NOUT_PAD = 16               # padded FC output width


# ---------------------------------------------------------------------------
# Fused forward kernel: one image per grid step, everything resident in VMEM.
# ---------------------------------------------------------------------------
def _merged_forward_kernel(xe_ref, xo_ref, w1_ref, b1_ref, w2_ref, b2_ref,
                           wfc_ref, bfc_ref, out_ref, hbuf, obuf):
    f32 = jnp.float32

    # ---- Stage 1: conv1(1->32, 3x3, pad=1) + ReLU + 2x2 maxpool (VPU) --------
    # xe/xo hold the zero-padded 30x30 image split into even / odd columns,
    # each [30, 15, 1].  acc_e / acc_o accumulate conv1 at even / odd output
    # columns, so the W-direction pool is a single elementwise max.
    acc_e = jnp.zeros((H, P1, C1), f32)
    acc_o = jnp.zeros((H, P1, C1), f32)
    for kh in range(3):
        xe0 = xe_ref[0, kh:kh + H, 0:P1, :]        # xpad[i+kh, 2*jo    ]
        xo0 = xo_ref[0, kh:kh + H, 0:P1, :]        # xpad[i+kh, 2*jo + 1]
        xe1 = xe_ref[0, kh:kh + H, 1:P1 + 1, :]    # xpad[i+kh, 2*jo + 2]
        xo1 = xo_ref[0, kh:kh + H, 1:P1 + 1, :]    # xpad[i+kh, 2*jo + 3]
        wk0 = w1_ref[3 * kh + 0]                   # [32]
        wk1 = w1_ref[3 * kh + 1]
        wk2 = w1_ref[3 * kh + 2]
        acc_e = acc_e + xe0 * wk0 + xo0 * wk1 + xe1 * wk2
        acc_o = acc_o + xo0 * wk0 + xe1 * wk1 + xo1 * wk2

    hw = jnp.maximum(acc_e, acc_o)                       # W-pooled: [28, 14, 32]
    hp = jnp.max(hw.reshape(P1, 2, P1, C1), axis=1)      # H-pooled: [14, 14, 32]
    h1 = jnp.maximum(hp + b1_ref[0], 0.0)                # bias+ReLU (commute w/ max)

    # Scatter pooled activations into a zero-padded flat buffer with row pitch
    # 16: hbuf[(io+1)*16 + (jo+1), c] = h1[io, jo, c]; the zero halo doubles as
    # conv2's padding.
    hbuf[...] = jnp.zeros((HBUF_ROWS, C1), f32)
    for io in range(P1):
        hbuf[pl.ds((io + 1) * PITCH + 1, P1), :] = h1[io]

    # ---- Stage 2: conv2(32->64, 3x3, pad=1) + ReLU (MXU, bf16 in / f32 acc) --
    # In-kernel im2col: each (kh, kw) tap is a shifted [224, 32] view of hbuf.
    acc2 = jnp.zeros((NFLAT, C2), f32)
    for kh in range(3):
        for kw in range(3):
            tap = hbuf[pl.ds(kh * PITCH + kw, NFLAT), :].astype(jnp.bfloat16)
            acc2 = acc2 + jnp.dot(tap, w2_ref[3 * kh + kw],
                                  preferred_element_type=jnp.float32)
    o2 = jnp.maximum(acc2 + b2_ref[0], 0.0)              # [224, 64], flat 14x16 rows

    # ---- 2x2 maxpool over the flat conv2 output (overlapping shifted maxima) -
    obuf[pl.ds(0, NFLAT), :] = o2
    obuf[pl.ds(NFLAT, OBUF_ROWS - NFLAT), :] = jnp.zeros(
        (OBUF_ROWS - NFLAT, C2), f32)
    pooled = jnp.maximum(
        jnp.maximum(obuf[pl.ds(0, NFLAT), :], obuf[pl.ds(1, NFLAT), :]),
        jnp.maximum(obuf[pl.ds(PITCH, NFLAT), :], obuf[pl.ds(PITCH + 1, NFLAT), :]))
    # pooled[g, d] is the 2x2-max at g = 32*io + 2*jo; every other row is junk
    # that the pre-masked FC weights multiply by zero.

    # ---- FC (3136 -> 10): weights pre-permuted to this layout + zero-masked --
    prod = pooled[None, :, :] * wfc_ref[...]             # [16, 224, 64]
    s = jnp.sum(prod, axis=1)                            # [16, 64]
    logits = jnp.sum(s, axis=1, keepdims=True)           # [16, 1]
    out_ref[...] = (logits + bfc_ref[...])[None, :, :]   # [1, 16, 1]


# ---------------------------------------------------------------------------
# One-time parameter preparation (layout permutations folded in offline).
# ---------------------------------------------------------------------------
def prepare_params(params):
    w1 = params["w1"].astype(jnp.float32)                 # [32, 1, 3, 3]
    b1 = params["b1"].astype(jnp.float32)                 # [32]
    w2 = params["w2"].astype(jnp.float32)                 # [64, 32, 3, 3]
    b2 = params["b2"].astype(jnp.float32)                 # [64]
    wfc = params["wfc"].astype(jnp.float32)               # [10, 3136]
    bfc = params["bfc"].astype(jnp.float32)               # [10]

    w1r = w1.reshape(C1, 9).T                             # [9, 32], row = kh*3+kw
    b1r = b1.reshape(1, C1)
    w2r = jnp.transpose(w2, (2, 3, 1, 0)).reshape(9, C1, C2).astype(jnp.bfloat16)
    b2r = b2.reshape(1, C2)

    # FC weights: from torch NCHW-flatten order (d*49 + io*7 + jo) to the
    # kernel's flat pooled layout (row g = 32*io + 2*jo, lane d); junk rows are
    # zero-masked and the output is padded 10 -> 16.
    wfc4 = wfc.reshape(NOUT, C2, P2, P2)                         # [n, d, io, jo]
    vals = jnp.transpose(wfc4, (0, 2, 3, 1)).reshape(NOUT, P2 * P2, C2)
    io = jnp.arange(P2)
    jo = jnp.arange(P2)
    g0 = (2 * PITCH * io[:, None] + 2 * jo[None, :]).reshape(-1)  # [49]
    wfcr = jnp.zeros((NOUT_PAD, NFLAT, C2), jnp.float32)
    wfcr = wfcr.at[:NOUT, g0, :].set(vals)
    bfcr = jnp.zeros((NOUT_PAD, 1), jnp.float32).at[:NOUT, 0].set(bfc)

    return {"w1": w1r, "b1": b1r, "w2": w2r, "b2": b2r, "wfc": wfcr, "bfc": bfcr}


# ---------------------------------------------------------------------------
# Forward wrapper.
# ---------------------------------------------------------------------------
def merged_model_forward(x_nchw, prep):
    B = x_nchw.shape[0]
    x = x_nchw.reshape(B, H, W).astype(jnp.float32)       # Cin == 1
    xpad = jnp.pad(x, ((0, 0), (1, 1), (1, 1)))           # [B, 30, 30]
    xe = xpad[:, :, 0::2][..., None]                      # [B, 30, 15, 1] even cols
    xo = xpad[:, :, 1::2][..., None]                      # [B, 30, 15, 1] odd  cols

    out = pl.pallas_call(
        _merged_forward_kernel,
        out_shape=jax.ShapeDtypeStruct((B, NOUT_PAD, 1), jnp.float32),
        grid=(B,),
        in_specs=[
            pl.BlockSpec((1, H + 2, P1 + 1, 1), lambda b: (b, 0, 0, 0)),
            pl.BlockSpec((1, H + 2, P1 + 1, 1), lambda b: (b, 0, 0, 0)),
            pl.BlockSpec((9, C1), lambda b: (0, 0)),
            pl.BlockSpec((1, C1), lambda b: (0, 0)),
            pl.BlockSpec((9, C1, C2), lambda b: (0, 0, 0)),
            pl.BlockSpec((1, C2), lambda b: (0, 0)),
            pl.BlockSpec((NOUT_PAD, NFLAT, C2), lambda b: (0, 0, 0)),
            pl.BlockSpec((NOUT_PAD, 1), lambda b: (0, 0)),
        ],
        out_specs=pl.BlockSpec((1, NOUT_PAD, 1), lambda b: (b, 0, 0)),
        scratch_shapes=[
            pltpu.VMEM((HBUF_ROWS, C1), jnp.float32),     # padded conv2 input
            pltpu.VMEM((OBUF_ROWS, C2), jnp.float32),     # flat conv2 output
        ],
        compiler_params=pltpu.CompilerParams(
            dimension_semantics=("parallel",),
            vmem_limit_bytes=32 * 1024 * 1024,
        ),
    )(xe, xo, prep["w1"], prep["b1"], prep["w2"], prep["b2"],
      prep["wfc"], prep["bfc"])
    return out[:, :NOUT, 0]


# ---------------------------------------------------------------------------
# Pure-JAX reference (torch semantics) + synthetic parameters.
# ---------------------------------------------------------------------------
def reference_forward(x_nchw, params):
    x = x_nchw.astype(jnp.float32)
    y = jax.lax.conv_general_dilated(
        x, params["w1"].astype(jnp.float32), (1, 1), ((1, 1), (1, 1)),
        dimension_numbers=("NCHW", "OIHW", "NCHW"))
    y = jax.nn.relu(y + params["b1"].astype(jnp.float32)[None, :, None, None])
    y = jax.lax.reduce_window(y, -jnp.inf, jax.lax.max,
                              (1, 1, 2, 2), (1, 1, 2, 2), "VALID")
    y = jax.lax.conv_general_dilated(
        y, params["w2"].astype(jnp.float32), (1, 1), ((1, 1), (1, 1)),
        dimension_numbers=("NCHW", "OIHW", "NCHW"))
    y = jax.nn.relu(y + params["b2"].astype(jnp.float32)[None, :, None, None])
    y = jax.lax.reduce_window(y, -jnp.inf, jax.lax.max,
                              (1, 1, 2, 2), (1, 1, 2, 2), "VALID")
    feat = y.reshape(y.shape[0], -1)                       # NCHW flatten (torch .view)
    return feat @ params["wfc"].astype(jnp.float32).T + params["bfc"].astype(jnp.float32)


def init_params(key):
    ks = jax.random.split(key, 6)
    w1 = jax.random.normal(ks[0], (C1, 1, 3, 3), jnp.float32) * (2.0 / 9) ** 0.5
    b1 = jax.random.normal(ks[1], (C1,), jnp.float32) * 0.01
    w2 = jax.random.normal(ks[2], (C2, C1, 3, 3), jnp.float32) * (2.0 / (C1 * 9)) ** 0.5
    b2 = jax.random.normal(ks[3], (C2,), jnp.float32) * 0.01
    wfc = jax.random.normal(ks[4], (NOUT, C2 * P2 * P2), jnp.float32) * (1.0 / 3136) ** 0.5
    bfc = jax.random.normal(ks[5], (NOUT,), jnp.float32) * 0.01
    return {"w1": w1, "b1": b1, "w2": w2, "b2": b2, "wfc": wfc, "bfc": bfc}


if __name__ == "__main__":
    key = jax.random.PRNGKey(0)
    k_x, k_p = jax.random.split(key)

    B = 2
    x = jax.random.normal(k_x, (B, 1, 28, 28), jnp.float32)   # MNIST-shaped NCHW input
    params = init_params(k_p)
    prep = prepare_params(params)

    fwd = jax.jit(merged_model_forward)
    logits = jax.block_until_ready(fwd(x, prep))

    assert logits.shape == (B, NOUT), logits.shape
    assert bool(jnp.all(jnp.isfinite(logits)))

    ref = reference_forward(x, params)
    assert bool(jnp.allclose(logits, ref, rtol=5e-2, atol=5e-2)), (
        float(jnp.max(jnp.abs(logits - ref))))
    print("KERNEL_OK")
</pallas_src>

<mosaic_0001>
module attributes {stable_mosaic.version = 11 : i64} {
  func.func @_merged_forward_kernel(%arg0: i32, %arg1: memref<1x30x15x1xf32, #tpu.memory_space<vmem>>, %arg2: memref<1x30x15x1xf32, #tpu.memory_space<vmem>>, %arg3: memref<9x32xf32, #tpu.memory_space<vmem>>, %arg4: memref<1x32xf32, #tpu.memory_space<vmem>>, %arg5: memref<9x32x64xbf16, #tpu.memory_space<vmem>>, %arg6: memref<1x64xf32, #tpu.memory_space<vmem>>, %arg7: memref<16x224x64xf32, #tpu.memory_space<vmem>>, %arg8: memref<16x1xf32, #tpu.memory_space<vmem>>, %arg9: memref<1x16x1xf32, #tpu.memory_space<vmem>>, %arg10: memref<288x32xf32, #tpu.memory_space<vmem>>, %arg11: memref<256x64xf32, #tpu.memory_space<vmem>>) attributes {dimension_semantics = [#tpu.dimension_semantics<parallel>], iteration_bounds = array<i64: 2>, scalar_prefetch = 0 : i64, scratch_operands = 2 : i64, tpu.core_type = #tpu.core_type<tc>, window_params = [{transform_indices = @transform_0, window_bounds = array<i64: 1, 30, 15, 1>}, {transform_indices = @transform_1, window_bounds = array<i64: 1, 30, 15, 1>}, {pipeline_mode = #tpu.pipeline_mode<synchronous>, transform_indices = @transform_2, window_bounds = array<i64: 9, 32>}, {pipeline_mode = #tpu.pipeline_mode<synchronous>, transform_indices = @transform_3, window_bounds = array<i64: 1, 32>}, {pipeline_mode = #tpu.pipeline_mode<synchronous>, transform_indices = @transform_4, window_bounds = array<i64: 9, 32, 64>}, {pipeline_mode = #tpu.pipeline_mode<synchronous>, transform_indices = @transform_5, window_bounds = array<i64: 1, 64>}, {pipeline_mode = #tpu.pipeline_mode<synchronous>, transform_indices = @transform_6, window_bounds = array<i64: 16, 224, 64>}, {pipeline_mode = #tpu.pipeline_mode<synchronous>, transform_indices = @transform_7, window_bounds = array<i64: 16, 1>}, {transform_indices = @transform_8, window_bounds = array<i64: 1, 16, 1>}]} {
    %cst = arith.constant 0.000000e+00 : f32
    %0 = vector.broadcast %cst : f32 to vector<28x14x32xf32>
    %cst_0 = arith.constant 0.000000e+00 : f32
    %1 = vector.broadcast %cst_0 : f32 to vector<28x14x32xf32>
    %c0 = arith.constant 0 : index
    %c0_1 = arith.constant 0 : index
    %c0_2 = arith.constant 0 : index
    %c0_3 = arith.constant 0 : index
    %2 = vector.load %arg1[%c0, %c0_1, %c0_2, %c0_3] : memref<1x30x15x1xf32, #tpu.memory_space<vmem>>, vector<1x28x14x1xf32>
    %3 = vector.shape_cast %2 : vector<1x28x14x1xf32> to vector<28x14x1xf32>
    %c0_4 = arith.constant 0 : index
    %c0_5 = arith.constant 0 : index
    %c0_6 = arith.constant 0 : index
    %c0_7 = arith.constant 0 : index
    %4 = vector.load %arg2[%c0_4, %c0_5, %c0_6, %c0_7] : memref<1x30x15x1xf32, #tpu.memory_space<vmem>>, vector<1x28x14x1xf32>
    %5 = vector.shape_cast %4 : vector<1x28x14x1xf32> to vector<28x14x1xf32>
    %c0_8 = arith.constant 0 : index
    %c0_9 = arith.constant 0 : index
    %c1 = arith.constant 1 : index
    %c0_10 = arith.constant 0 : index
    %6 = vector.load %arg1[%c0_8, %c0_9, %c1, %c0_10] : memref<1x30x15x1xf32, #tpu.memory_space<vmem>>, vector<1x28x14x1xf32>
    %7 = vector.shape_cast %6 : vector<1x28x14x1xf32> to vector<28x14x1xf32>
    %c0_11 = arith.constant 0 : index
    %c0_12 = arith.constant 0 : index
    %c1_13 = arith.constant 1 : index
    %c0_14 = arith.constant 0 : index
    %8 = vector.load %arg2[%c0_11, %c0_12, %c1_13, %c0_14] : memref<1x30x15x1xf32, #tpu.memory_space<vmem>>, vector<1x28x14x1xf32>
    %9 = vector.shape_cast %8 : vector<1x28x14x1xf32> to vector<28x14x1xf32>
    %c0_15 = arith.constant 0 : index
    %c0_16 = arith.constant 0 : index
    %10 = vector.load %arg3[%c0_15, %c0_16] : memref<9x32xf32, #tpu.memory_space<vmem>>, vector<1x32xf32>
    %11 = vector.shape_cast %10 : vector<1x32xf32> to vector<32xf32>
    %c1_17 = arith.constant 1 : index
    %c0_18 = arith.constant 0 : index
    %12 = vector.load %arg3[%c1_17, %c0_18] : memref<9x32xf32, #tpu.memory_space<vmem>>, vector<1x32xf32>
    %13 = vector.shape_cast %12 : vector<1x32xf32> to vector<32xf32>
    %c2 = arith.constant 2 : index
    %c0_19 = arith.constant 0 : index
    %14 = vector.load %arg3[%c2, %c0_19] : memref<9x32xf32, #tpu.memory_space<vmem>>, vector<1x32xf32>
    %15 = vector.shape_cast %14 : vector<1x32xf32> to vector<32xf32>
    %16 = vector.shape_cast %11 : vector<32xf32> to vector<1x1x32xf32>
    %17 = vector.broadcast %3 : vector<28x14x1xf32> to vector<28x14x32xf32>
    %18 = vector.broadcast %16 : vector<1x1x32xf32> to vector<28x14x32xf32>
    %19 = arith.mulf %17, %18 : vector<28x14x32xf32>
    %20 = arith.addf %0, %19 : vector<28x14x32xf32>
    %21 = vector.shape_cast %13 : vector<32xf32> to vector<1x1x32xf32>
    %22 = vector.broadcast %5 : vector<28x14x1xf32> to vector<28x14x32xf32>
    %23 = vector.broadcast %21 : vector<1x1x32xf32> to vector<28x14x32xf32>
    %24 = arith.mulf %22, %23 : vector<28x14x32xf32>
    %25 = arith.addf %20, %24 : vector<28x14x32xf32>
    %26 = vector.shape_cast %15 : vector<32xf32> to vector<1x1x32xf32>
    %27 = vector.broadcast %7 : vector<28x14x1xf32> to vector<28x14x32xf32>
    %28 = vector.broadcast %26 : vector<1x1x32xf32> to vector<28x14x32xf32>
    %29 = arith.mulf %27, %28 : vector<28x14x32xf32>
    %30 = arith.addf %25, %29 : vector<28x14x32xf32>
    %31 = vector.shape_cast %11 : vector<32xf32> to vector<1x1x32xf32>
    %32 = vector.broadcast %5 : vector<28x14x1xf32> to vector<28x14x32xf32>
    %33 = vector.broadcast %31 : vector<1x1x32xf32> to vector<28x14x32xf32>
    %34 = arith.mulf %32, %33 : vector<28x14x32xf32>
    %35 = arith.addf %1, %34 : vector<28x14x32xf32>
    %36 = vector.shape_cast %13 : vector<32xf32> to vector<1x1x32xf32>
    %37 = vector.broadcast %7 : vector<28x14x1xf32> to vector<28x14x32xf32>
    %38 = vector.broadcast %36 : vector<1x1x32xf32> to vector<28x14x32xf32>
    %39 = arith.mulf %37, %38 : vector<28x14x32xf32>
    %40 = arith.addf %35, %39 : vector<28x14x32xf32>
    %41 = vector.shape_cast %15 : vector<32xf32> to vector<1x1x32xf32>
    %42 = vector.broadcast %9 : vector<28x14x1xf32> to vector<28x14x32xf32>
    %43 = vector.broadcast %41 : vector<1x1x32xf32> to vector<28x14x32xf32>
    %44 = arith.mulf %42, %43 : vector<28x14x32xf32>
    %45 = arith.addf %40, %44 : vector<28x14x32xf32>
    %c0_20 = arith.constant 0 : index
    %c1_21 = arith.constant 1 : index
    %c0_22 = arith.constant 0 : index
    %c0_23 = arith.constant 0 : index
    %46 = vector.load %arg1[%c0_20, %c1_21, %c0_22, %c0_23] : memref<1x30x15x1xf32, #tpu.memory_space<vmem>>, vector<1x28x14x1xf32>
    %47 = vector.shape_cast %46 : vector<1x28x14x1xf32> to vector<28x14x1xf32>
    %c0_24 = arith.constant 0 : index
    %c1_25 = arith.constant 1 : index
    %c0_26 = arith.constant 0 : index
    %c0_27 = arith.constant 0 : index
    %48 = vector.load %arg2[%c0_24, %c1_25, %c0_26, %c0_27] : memref<1x30x15x1xf32, #tpu.memory_space<vmem>>, vector<1x28x14x1xf32>
    %49 = vector.shape_cast %48 : vector<1x28x14x1xf32> to vector<28x14x1xf32>
    %c0_28 = arith.constant 0 : index
    %c1_29 = arith.constant 1 : index
    %c1_30 = arith.constant 1 : index
    %c0_31 = arith.constant 0 : index
    %50 = vector.load %arg1[%c0_28, %c1_29, %c1_30, %c0_31] : memref<1x30x15x1xf32, #tpu.memory_space<vmem>>, vector<1x28x14x1xf32>
    %51 = vector.shape_cast %50 : vector<1x28x14x1xf32> to vector<28x14x1xf32>
    %c0_32 = arith.constant 0 : index
    %c1_33 = arith.constant 1 : index
    %c1_34 = arith.constant 1 : index
    %c0_35 = arith.constant 0 : index
    %52 = vector.load %arg2[%c0_32, %c1_33, %c1_34, %c0_35] : memref<1x30x15x1xf32, #tpu.memory_space<vmem>>, vector<1x28x14x1xf32>
    %53 = vector.shape_cast %52 : vector<1x28x14x1xf32> to vector<28x14x1xf32>
    %c3 = arith.constant 3 : index
    %c0_36 = arith.constant 0 : index
    %54 = vector.load %arg3[%c3, %c0_36] : memref<9x32xf32, #tpu.memory_space<vmem>>, vector<1x32xf32>
    %55 = vector.shape_cast %54 : vector<1x32xf32> to vector<32xf32>
    %c4 = arith.constant 4 : index
    %c0_37 = arith.constant 0 : index
    %56 = vector.load %arg3[%c4, %c0_37] : memref<9x32xf32, #tpu.memory_space<vmem>>, vector<1x32xf32>
    %57 = vector.shape_cast %56 : vector<1x32xf32> to vector<32xf32>
    %c5 = arith.constant 5 : index
    %c0_38 = arith.constant 0 : index
    %58 = vector.load %arg3[%c5, %c0_38] : memref<9x32xf32, #tpu.memory_space<vmem>>, vector<1x32xf32>
    %59 = vector.shape_cast %58 : vector<1x32xf32> to vector<32xf32>
    %60 = vector.shape_cast %55 : vector<32xf32> to vector<1x1x32xf32>
    %61 = vector.broadcast %47 : vector<28x14x1xf32> to vector<28x14x32xf32>
    %62 = vector.broadcast %60 : vector<1x1x32xf32> to vector<28x14x32xf32>
    %63 = arith.mulf %61, %62 : vector<28x14x32xf32>
    %64 = arith.addf %30, %63 : vector<28x14x32xf32>
    %65 = vector.shape_cast %57 : vector<32xf32> to vector<1x1x32xf32>
    %66 = vector.broadcast %49 : vector<28x14x1xf32> to vector<28x14x32xf32>
    %67 = vector.broadcast %65 : vector<1x1x32xf32> to vector<28x14x32xf32>
    %68 = arith.mulf %66, %67 : vector<28x14x32xf32>
    %69 = arith.addf %64, %68 : vector<28x14x32xf32>
    %70 = vector.shape_cast %59 : vector<32xf32> to vector<1x1x32xf32>
    %71 = vector.broadcast %51 : vector<28x14x1xf32> to vector<28x14x32xf32>
    %72 = vector.broadcast %70 : vector<1x1x32xf32> to vector<28x14x32xf32>
    %73 = arith.mulf %71, %72 : vector<28x14x32xf32>
    %74 = arith.addf %69, %73 : vector<28x14x32xf32>
    %75 = vector.shape_cast %55 : vector<32xf32> to vector<1x1x32xf32>
    %76 = vector.broadcast %49 : vector<28x14x1xf32> to vector<28x14x32xf32>
    %77 = vector.broadcast %75 : vector<1x1x32xf32> to vector<28x14x32xf32>
    %78 = arith.mulf %76, %77 : vector<28x14x32xf32>
    %79 = arith.addf %45, %78 : vector<28x14x32xf32>
    %80 = vector.shape_cast %57 : vector<32xf32> to vector<1x1x32xf32>
    %81 = vector.broadcast %51 : vector<28x14x1xf32> to vector<28x14x32xf32>
    %82 = vector.broadcast %80 : vector<1x1x32xf32> to vector<28x14x32xf32>
    %83 = arith.mulf %81, %82 : vector<28x14x32xf32>
    %84 = arith.addf %79, %83 : vector<28x14x32xf32>
    %85 = vector.shape_cast %59 : vector<32xf32> to vector<1x1x32xf32>
    %86 = vector.broadcast %53 : vector<28x14x1xf32> to vector<28x14x32xf32>
    %87 = vector.broadcast %85 : vector<1x1x32xf32> to vector<28x14x32xf32>
    %88 = arith.mulf %86, %87 : vector<28x14x32xf32>
    %89 = arith.addf %84, %88 : vector<28x14x32xf32>
    %c0_39 = arith.constant 0 : index
    %c2_40 = arith.constant 2 : index
    %c0_41 = arith.constant 0 : index
    %c0_42 = arith.constant 0 : index
    %90 = vector.load %arg1[%c0_39, %c2_40, %c0_41, %c0_42] : memref<1x30x15x1xf32, #tpu.memory_space<vmem>>, vector<1x28x14x1xf32>
    %91 = vector.shape_cast %90 : vector<1x28x14x1xf32> to vector<28x14x1xf32>
    %c0_43 = arith.constant 0 : index
    %c2_44 = arith.constant 2 : index
    %c0_45 = arith.constant 0 : index
    %c0_46 = arith.constant 0 : index
    %92 = vector.load %arg2[%c0_43, %c2_44, %c0_45, %c0_46] : memref<1x30x15x1xf32, #tpu.memory_space<vmem>>, vector<1x28x14x1xf32>
    %93 = vector.shape_cast %92 : vector<1x28x14x1xf32> to vector<28x14x1xf32>
    %c0_47 = arith.constant 0 : index
    %c2_48 = arith.constant 2 : index
    %c1_49 = arith.constant 1 : index
    %c0_50 = arith.constant 0 : index
    %94 = vector.load %arg1[%c0_47, %c2_48, %c1_49, %c0_50] : memref<1x30x15x1xf32, #tpu.memory_space<vmem>>, vector<1x28x14x1xf32>
    %95 = vector.shape_cast %94 : vector<1x28x14x1xf32> to vector<28x14x1xf32>
    %c0_51 = arith.constant 0 : index
    %c2_52 = arith.constant 2 : index
    %c1_53 = arith.constant 1 : index
    %c0_54 = arith.constant 0 : index
    %96 = vector.load %arg2[%c0_51, %c2_52, %c1_53, %c0_54] : memref<1x30x15x1xf32, #tpu.memory_space<vmem>>, vector<1x28x14x1xf32>
    %97 = vector.shape_cast %96 : vector<1x28x14x1xf32> to vector<28x14x1xf32>
    %c6 = arith.constant 6 : index
    %c0_55 = arith.constant 0 : index
    %98 = vector.load %arg3[%c6, %c0_55] : memref<9x32xf32, #tpu.memory_space<vmem>>, vector<1x32xf32>
    %99 = vector.shape_cast %98 : vector<1x32xf32> to vector<32xf32>
    %c7 = arith.constant 7 : index
    %c0_56 = arith.constant 0 : index
    %100 = vector.load %arg3[%c7, %c0_56] : memref<9x32xf32, #tpu.memory_space<vmem>>, vector<1x32xf32>
    %101 = vector.shape_cast %100 : vector<1x32xf32> to vector<32xf32>
    %c8 = arith.constant 8 : index
    %c0_57 = arith.constant 0 : index
    %102 = vector.load %arg3[%c8, %c0_57] : memref<9x32xf32, #tpu.memory_space<vmem>>, vector<1x32xf32>
    %103 = vector.shape_cast %102 : vector<1x32xf32> to vector<32xf32>
    %104 = vector.shape_cast %99 : vector<32xf32> to vector<1x1x32xf32>
    %105 = vector.broadcast %91 : vector<28x14x1xf32> to vector<28x14x32xf32>
    %106 = vector.broadcast %104 : vector<1x1x32xf32> to vector<28x14x32xf32>
    %107 = arith.mulf %105, %106 : vector<28x14x32xf32>
    %108 = arith.addf %74, %107 : vector<28x14x32xf32>
    %109 = vector.shape_cast %101 : vector<32xf32> to vector<1x1x32xf32>
    %110 = vector.broadcast %93 : vector<28x14x1xf32> to vector<28x14x32xf32>
    %111 = vector.broadcast %109 : vector<1x1x32xf32> to vector<28x14x32xf32>
    %112 = arith.mulf %110, %111 : vector<28x14x32xf32>
    %113 = arith.addf %108, %112 : vector<28x14x32xf32>
    %114 = vector.shape_cast %103 : vector<32xf32> to vector<1x1x32xf32>
    %115 = vector.broadcast %95 : vector<28x14x1xf32> to vector<28x14x32xf32>
    %116 = vector.broadcast %114 : vector<1x1x32xf32> to vector<28x14x32xf32>
    %117 = arith.mulf %115, %116 : vector<28x14x32xf32>
    %118 = arith.addf %113, %117 : vector<28x14x32xf32>
    %119 = vector.shape_cast %99 : vector<32xf32> to vector<1x1x32xf32>
    %120 = vector.broadcast %93 : vector<28x14x1xf32> to vector<28x14x32xf32>
    %121 = vector.broadcast %119 : vector<1x1x32xf32> to vector<28x14x32xf32>
    %122 = arith.mulf %120, %121 : vector<28x14x32xf32>
    %123 = arith.addf %89, %122 : vector<28x14x32xf32>
    %124 = vector.shape_cast %101 : vector<32xf32> to vector<1x1x32xf32>
    %125 = vector.broadcast %95 : vector<28x14x1xf32> to vector<28x14x32xf32>
    %126 = vector.broadcast %124 : vector<1x1x32xf32> to vector<28x14x32xf32>
    %127 = arith.mulf %125, %126 : vector<28x14x32xf32>
    %128 = arith.addf %123, %127 : vector<28x14x32xf32>
    %129 = vector.shape_cast %103 : vector<32xf32> to vector<1x1x32xf32>
    %130 = vector.broadcast %97 : vector<28x14x1xf32> to vector<28x14x32xf32>
    %131 = vector.broadcast %129 : vector<1x1x32xf32> to vector<28x14x32xf32>
    %132 = arith.mulf %130, %131 : vector<28x14x32xf32>
    %133 = arith.addf %128, %132 : vector<28x14x32xf32>
    %134 = arith.maximumf %118, %133 : vector<28x14x32xf32>
    %135 = vector.shape_cast %134 : vector<28x14x32xf32> to vector<14x2x14x32xf32>
    %cst_58 = arith.constant dense<0xFF800000> : vector<14x14x32xf32>
    %136 = vector.multi_reduction <maximumf>, %135, %cst_58 [1] : vector<14x2x14x32xf32> to vector<14x14x32xf32>
    %c0_59 = arith.constant 0 : index
    %c0_60 = arith.constant 0 : index
    %137 = vector.load %arg4[%c0_59, %c0_60] : memref<1x32xf32, #tpu.memory_space<vmem>>, vector<1x32xf32>
    %138 = vector.shape_cast %137 : vector<1x32xf32> to vector<32xf32>
    %139 = vector.shape_cast %138 : vector<32xf32> to vector<1x1x32xf32>
    %140 = vector.broadcast %139 : vector<1x1x32xf32> to vector<14x14x32xf32>
    %141 = arith.addf %136, %140 : vector<14x14x32xf32>
    %cst_61 = arith.constant 0.000000e+00 : f32
    %142 = vector.broadcast %cst_61 : f32 to vector<14x14x32xf32>
    %143 = arith.maximumf %141, %142 : vector<14x14x32xf32>
    %cst_62 = arith.constant 0.000000e+00 : f32
    %144 = vector.broadcast %cst_62 : f32 to vector<288x32xf32>
    %c0_63 = arith.constant 0 : index
    %c0_64 = arith.constant 0 : index
    %145 = vector.load %arg10[%c0_63, %c0_64] : memref<288x32xf32, #tpu.memory_space<vmem>>, vector<288x32xf32>
    tpu.vector_store %arg10[%c0_63, %c0_64], %144 {strides = array<i32>} : memref<288x32xf32, #tpu.memory_space<vmem>>, vector<288x32xf32>,
    %146 = vector.extract_strided_slice %143 {offsets = [0, 0, 0], sizes = [1, 14, 32], strides = [1, 1, 1]} : vector<14x14x32xf32> to vector<1x14x32xf32>
    %147 = vector.shape_cast %146 : vector<1x14x32xf32> to vector<14x32xf32>
    %c17 = arith.constant 17 : index
    %c0_65 = arith.constant 0 : index
    %148 = vector.load %arg10[%c17, %c0_65] : memref<288x32xf32, #tpu.memory_space<vmem>>, vector<14x32xf32>
    tpu.vector_store %arg10[%c17, %c0_65], %147 {strides = array<i32>} : memref<288x32xf32, #tpu.memory_space<vmem>>, vector<14x32xf32>,
    %149 = vector.extract_strided_slice %143 {offsets = [1, 0, 0], sizes = [1, 14, 32], strides = [1, 1, 1]} : vector<14x14x32xf32> to vector<1x14x32xf32>
    %150 = vector.shape_cast %149 : vector<1x14x32xf32> to vector<14x32xf32>
    %c33 = arith.constant 33 : index
    %c0_66 = arith.constant 0 : index
    %151 = vector.load %arg10[%c33, %c0_66] : memref<288x32xf32, #tpu.memory_space<vmem>>, vector<14x32xf32>
    tpu.vector_store %arg10[%c33, %c0_66], %150 {strides = array<i32>} : memref<288x32xf32, #tpu.memory_space<vmem>>, vector<14x32xf32>,
    %152 = vector.extract_strided_slice %143 {offsets = [2, 0, 0], sizes = [1, 14, 32], strides = [1, 1, 1]} : vector<14x14x32xf32> to vector<1x14x32xf32>
    %153 = vector.shape_cast %152 : vector<1x14x32xf32> to vector<14x32xf32>
    %c49 = arith.constant 49 : index
    %c0_67 = arith.constant 0 : index
    %154 = vector.load %arg10[%c49, %c0_67] : memref<288x32xf32, #tpu.memory_space<vmem>>, vector<14x32xf32>
    tpu.vector_store %arg10[%c49, %c0_67], %153 {strides = array<i32>} : memref<288x32xf32, #tpu.memory_space<vmem>>, vector<14x32xf32>,
    %155 = vector.extract_strided_slice %143 {offsets = [3, 0, 0], sizes = [1, 14, 32], strides = [1, 1, 1]} : vector<14x14x32xf32> to vector<1x14x32xf32>
    %156 = vector.shape_cast %155 : vector<1x14x32xf32> to vector<14x32xf32>
    %c65 = arith.constant 65 : index
    %c0_68 = arith.constant 0 : index
    %157 = vector.load %arg10[%c65, %c0_68] : memref<288x32xf32, #tpu.memory_space<vmem>>, vector<14x32xf32>
    tpu.vector_store %arg10[%c65, %c0_68], %156 {strides = array<i32>} : memref<288x32xf32, #tpu.memory_space<vmem>>, vector<14x32xf32>,
    %158 = vector.extract_strided_slice %143 {offsets = [4, 0, 0], sizes = [1, 14, 32], strides = [1, 1, 1]} : vector<14x14x32xf32> to vector<1x14x32xf32>
    %159 = vector.shape_cast %158 : vector<1x14x32xf32> to vector<14x32xf32>
    %c81 = arith.constant 81 : index
    %c0_69 = arith.constant 0 : index
    %160 = vector.load %arg10[%c81, %c0_69] : memref<288x32xf32, #tpu.memory_space<vmem>>, vector<14x32xf32>
    tpu.vector_store %arg10[%c81, %c0_69], %159 {strides = array<i32>} : memref<288x32xf32, #tpu.memory_space<vmem>>, vector<14x32xf32>,
    %161 = vector.extract_strided_slice %143 {offsets = [5, 0, 0], sizes = [1, 14, 32], strides = [1, 1, 1]} : vector<14x14x32xf32> to vector<1x14x32xf32>
    %162 = vector.shape_cast %161 : vector<1x14x32xf32> to vector<14x32xf32>
    %c97 = arith.constant 97 : index
    %c0_70 = arith.constant 0 : index
    %163 = vector.load %arg10[%c97, %c0_70] : memref<288x32xf32, #tpu.memory_space<vmem>>, vector<14x32xf32>
    tpu.vector_store %arg10[%c97, %c0_70], %162 {strides = array<i32>} : memref<288x32xf32, #tpu.memory_space<vmem>>, vector<14x32xf32>,
    %164 = vector.extract_strided_slice %143 {offsets = [6, 0, 0], sizes = [1, 14, 32], strides = [1, 1, 1]} : vector<14x14x32xf32> to vector<1x14x32xf32>
    %165 = vector.shape_cast %164 : vector<1x14x32xf32> to vector<14x32xf32>
    %c113 = arith.constant 113 : index
    %c0_71 = arith.constant 0 : index
    %166 = vector.load %arg10[%c113, %c0_71] : memref<288x32xf32, #tpu.memory_space<vmem>>, vector<14x32xf32>
    tpu.vector_store %arg10[%c113, %c0_71], %165 {strides = array<i32>} : memref<288x32xf32, #tpu.memory_space<vmem>>, vector<14x32xf32>,
    %167 = vector.extract_strided_slice %143 {offsets = [7, 0, 0], sizes = [1, 14, 32], strides = [1, 1, 1]} : vector<14x14x32xf32> to vector<1x14x32xf32>
    %168 = vector.shape_cast %167 : vector<1x14x32xf32> to vector<14x32xf32>
    %c129 = arith.constant 129 : index
    %c0_72 = arith.constant 0 : index
    %169 = vector.load %arg10[%c129, %c0_72] : memref<288x32xf32, #tpu.memory_space<vmem>>, vector<14x32xf32>
    tpu.vector_store %arg10[%c129, %c0_72], %168 {strides = array<i32>} : memref<288x32xf32, #tpu.memory_space<vmem>>, vector<14x32xf32>,
    %170 = vector.extract_strided_slice %143 {offsets = [8, 0, 0], sizes = [1, 14, 32], strides = [1, 1, 1]} : vector<14x14x32xf32> to vector<1x14x32xf32>
    %171 = vector.shape_cast %170 : vector<1x14x32xf32> to vector<14x32xf32>
    %c145 = arith.constant 145 : index
    %c0_73 = arith.constant 0 : index
    %172 = vector.load %arg10[%c145, %c0_73] : memref<288x32xf32, #tpu.memory_space<vmem>>, vector<14x32xf32>
    tpu.vector_store %arg10[%c145, %c0_73], %171 {strides = array<i32>} : memref<288x32xf32, #tpu.memory_space<vmem>>, vector<14x32xf32>,
    %173 = vector.extract_strided_slice %143 {offsets = [9, 0, 0], sizes = [1, 14, 32], strides = [1, 1, 1]} : vector<14x14x32xf32> to vector<1x14x32xf32>
    %174 = vector.shape_cast %173 : vector<1x14x32xf32> to vector<14x32xf32>
    %c161 = arith.constant 161 : index
    %c0_74 = arith.constant 0 : index
    %175 = vector.load %arg10[%c161, %c0_74] : memref<288x32xf32, #tpu.memory_space<vmem>>, vector<14x32xf32>
    tpu.vector_store %arg10[%c161, %c0_74], %174 {strides = array<i32>} : memref<288x32xf32, #tpu.memory_space<vmem>>, vector<14x32xf32>,
    %176 = vector.extract_strided_slice %143 {offsets = [10, 0, 0], sizes = [1, 14, 32], strides = [1, 1, 1]} : vector<14x14x32xf32> to vector<1x14x32xf32>
    %177 = vector.shape_cast %176 : vector<1x14x32xf32> to vector<14x32xf32>
    %c177 = arith.constant 177 : index
    %c0_75 = arith.constant 0 : index
    %178 = vector.load %arg10[%c177, %c0_75] : memref<288x32xf32, #tpu.memory_space<vmem>>, vector<14x32xf32>
    tpu.vector_store %arg10[%c177, %c0_75], %177 {strides = array<i32>} : memref<288x32xf32, #tpu.memory_space<vmem>>, vector<14x32xf32>,
    %179 = vector.extract_strided_slice %143 {offsets = [11, 0, 0], sizes = [1, 14, 32], strides = [1, 1, 1]} : vector<14x14x32xf32> to vector<1x14x32xf32>
    %180 = vector.shape_cast %179 : vector<1x14x32xf32> to vector<14x32xf32>
    %c193 = arith.constant 193 : index
    %c0_76 = arith.constant 0 : index
    %181 = vector.load %arg10[%c193, %c0_76] : memref<288x32xf32, #tpu.memory_space<vmem>>, vector<14x32xf32>
    tpu.vector_store %arg10[%c193, %c0_76], %180 {strides = array<i32>} : memref<288x32xf32, #tpu.memory_space<vmem>>, vector<14x32xf32>,
    %182 = vector.extract_strided_slice %143 {offsets = [12, 0, 0], sizes = [1, 14, 32], strides = [1, 1, 1]} : vector<14x14x32xf32> to vector<1x14x32xf32>
    %183 = vector.shape_cast %182 : vector<1x14x32xf32> to vector<14x32xf32>
    %c209 = arith.constant 209 : index
    %c0_77 = arith.constant 0 : index
    %184 = vector.load %arg10[%c209, %c0_77] : memref<288x32xf32, #tpu.memory_space<vmem>>, vector<14x32xf32>
    tpu.vector_store %arg10[%c209, %c0_77], %183 {strides = array<i32>} : memref<288x32xf32, #tpu.memory_space<vmem>>, vector<14x32xf32>,
    %185 = vector.extract_strided_slice %143 {offsets = [13, 0, 0], sizes = [1, 14, 32], strides = [1, 1, 1]} : vector<14x14x32xf32> to vector<1x14x32xf32>
    %186 = vector.shape_cast %185 : vector<1x14x32xf32> to vector<14x32xf32>
    %c225 = arith.constant 225 : index
    %c0_78 = arith.constant 0 : index
    %187 = vector.load %arg10[%c225, %c0_78] : memref<288x32xf32, #tpu.memory_space<vmem>>, vector<14x32xf32>
    tpu.vector_store %arg10[%c225, %c0_78], %186 {strides = array<i32>} : memref<288x32xf32, #tpu.memory_space<vmem>>, vector<14x32xf32>,
    %cst_79 = arith.constant 0.000000e+00 : f32
    %188 = vector.broadcast %cst_79 : f32 to vector<224x64xf32>
    %c0_80 = arith.constant 0 : index
    %c0_81 = arith.constant 0 : index
    %189 = vector.load %arg10[%c0_80, %c0_81] : memref<288x32xf32, #tpu.memory_space<vmem>>, vector<224x32xf32>
    %190 = arith.truncf %189 : vector<224x32xf32> to vector<224x32xbf16>
    %c0_82 = arith.constant 0 : index
    %c0_83 = arith.constant 0 : index
    %c0_84 = arith.constant 0 : index
    %191 = vector.load %arg5[%c0_82, %c0_83, %c0_84] : memref<9x32x64xbf16, #tpu.memory_space<vmem>>, vector<1x32x64xbf16>
    %192 = vector.shape_cast %191 : vector<1x32x64xbf16> to vector<32x64xbf16>
    %cst_85 = arith.constant dense<0.000000e+00> : vector<224x64xf32>
    %193 = tpu.matmul %190, %192, %cst_85 {dimension_numbers = #tpu.dot_dimension_numbers<[1], [0], [0], [1], [0, 0, 1, 1], [], []>} : vector<224x32xbf16>, vector<32x64xbf16>, vector<224x64xf32> -> vector<224x64xf32>
    %194 = arith.addf %188, %193 : vector<224x64xf32>
    %c1_86 = arith.constant 1 : index
    %c0_87 = arith.constant 0 : index
    %195 = vector.load %arg10[%c1_86, %c0_87] : memref<288x32xf32, #tpu.memory_space<vmem>>, vector<224x32xf32>
    %196 = arith.truncf %195 : vector<224x32xf32> to vector<224x32xbf16>
    %c1_88 = arith.constant 1 : index
    %c0_89 = arith.constant 0 : index
    %c0_90 = arith.constant 0 : index
    %197 = vector.load %arg5[%c1_88, %c0_89, %c0_90] : memref<9x32x64xbf16, #tpu.memory_space<vmem>>, vector<1x32x64xbf16>
    %198 = vector.shape_cast %197 : vector<1x32x64xbf16> to vector<32x64xbf16>
    %cst_91 = arith.constant dense<0.000000e+00> : vector<224x64xf32>
    %199 = tpu.matmul %196, %198, %cst_91 {dimension_numbers = #tpu.dot_dimension_numbers<[1], [0], [0], [1], [0, 0, 1, 1], [], []>} : vector<224x32xbf16>, vector<32x64xbf16>, vector<224x64xf32> -> vector<224x64xf32>
    %200 = arith.addf %194, %199 : vector<224x64xf32>
    %c2_92 = arith.constant 2 : index
    %c0_93 = arith.constant 0 : index
    %201 = vector.load %arg10[%c2_92, %c0_93] : memref<288x32xf32, #tpu.memory_space<vmem>>, vector<224x32xf32>
    %202 = arith.truncf %201 : vector<224x32xf32> to vector<224x32xbf16>
    %c2_94 = arith.constant 2 : index
    %c0_95 = arith.constant 0 : index
    %c0_96 = arith.constant 0 : index
    %203 = vector.load %arg5[%c2_94, %c0_95, %c0_96] : memref<9x32x64xbf16, #tpu.memory_space<vmem>>, vector<1x32x64xbf16>
    %204 = vector.shape_cast %203 : vector<1x32x64xbf16> to vector<32x64xbf16>
    %cst_97 = arith.constant dense<0.000000e+00> : vector<224x64xf32>
    %205 = tpu.matmul %202, %204, %cst_97 {dimension_numbers = #tpu.dot_dimension_numbers<[1], [0], [0], [1], [0, 0, 1, 1], [], []>} : vector<224x32xbf16>, vector<32x64xbf16>, vector<224x64xf32> -> vector<224x64xf32>
    %206 = arith.addf %200, %205 : vector<224x64xf32>
    %c16 = arith.constant 16 : index
    %c0_98 = arith.constant 0 : index
    %207 = vector.load %arg10[%c16, %c0_98] : memref<288x32xf32, #tpu.memory_space<vmem>>, vector<224x32xf32>
    %208 = arith.truncf %207 : vector<224x32xf32> to vector<224x32xbf16>
    %c3_99 = arith.constant 3 : index
    %c0_100 = arith.constant 0 : index
    %c0_101 = arith.constant 0 : index
    %209 = vector.load %arg5[%c3_99, %c0_100, %c0_101] : memref<9x32x64xbf16, #tpu.memory_space<vmem>>, vector<1x32x64xbf16>
    %210 = vector.shape_cast %209 : vector<1x32x64xbf16> to vector<32x64xbf16>
    %cst_102 = arith.constant dense<0.000000e+00> : vector<224x64xf32>
    %211 = tpu.matmul %208, %210, %cst_102 {dimension_numbers = #tpu.dot_dimension_numbers<[1], [0], [0], [1], [0, 0, 1, 1], [], []>} : vector<224x32xbf16>, vector<32x64xbf16>, vector<224x64xf32> -> vector<224x64xf32>
    %212 = arith.addf %206, %211 : vector<224x64xf32>
    %c17_103 = arith.constant 17 : index
    %c0_104 = arith.constant 0 : index
    %213 = vector.load %arg10[%c17_103, %c0_104] : memref<288x32xf32, #tpu.memory_space<vmem>>, vector<224x32xf32>
    %214 = arith.truncf %213 : vector<224x32xf32> to vector<224x32xbf16>
    %c4_105 = arith.constant 4 : index
    %c0_106 = arith.constant 0 : index
    %c0_107 = arith.constant 0 : index
    %215 = vector.load %arg5[%c4_105, %c0_106, %c0_107] : memref<9x32x64xbf16, #tpu.memory_space<vmem>>, vector<1x32x64xbf16>
    %216 = vector.shape_cast %215 : vector<1x32x64xbf16> to vector<32x64xbf16>
    %cst_108 = arith.constant dense<0.000000e+00> : vector<224x64xf32>
    %217 = tpu.matmul %214, %216, %cst_108 {dimension_numbers = #tpu.dot_dimension_numbers<[1], [0], [0], [1], [0, 0, 1, 1], [], []>} : vector<224x32xbf16>, vector<32x64xbf16>, vector<224x64xf32> -> vector<224x64xf32>
    %218 = arith.addf %212, %217 : vector<224x64xf32>
    %c18 = arith.constant 18 : index
    %c0_109 = arith.constant 0 : index
    %219 = vector.load %arg10[%c18, %c0_109] : memref<288x32xf32, #tpu.memory_space<vmem>>, vector<224x32xf32>
    %220 = arith.truncf %219 : vector<224x32xf32> to vector<224x32xbf16>
    %c5_110 = arith.constant 5 : index
    %c0_111 = arith.constant 0 : index
    %c0_112 = arith.constant 0 : index
    %221 = vector.load %arg5[%c5_110, %c0_111, %c0_112] : memref<9x32x64xbf16, #tpu.memory_space<vmem>>, vector<1x32x64xbf16>
    %222 = vector.shape_cast %221 : vector<1x32x64xbf16> to vector<32x64xbf16>
    %cst_113 = arith.constant dense<0.000000e+00> : vector<224x64xf32>
    %223 = tpu.matmul %220, %222, %cst_113 {dimension_numbers = #tpu.dot_dimension_numbers<[1], [0], [0], [1], [0, 0, 1, 1], [], []>} : vector<224x32xbf16>, vector<32x64xbf16>, vector<224x64xf32> -> vector<224x64xf32>
    %224 = arith.addf %218, %223 : vector<224x64xf32>
    %c32 = arith.constant 32 : index
    %c0_114 = arith.constant 0 : index
    %225 = vector.load %arg10[%c32, %c0_114] : memref<288x32xf32, #tpu.memory_space<vmem>>, vector<224x32xf32>
    %226 = arith.truncf %225 : vector<224x32xf32> to vector<224x32xbf16>
    %c6_115 = arith.constant 6 : index
    %c0_116 = arith.constant 0 : index
    %c0_117 = arith.constant 0 : index
    %227 = vector.load %arg5[%c6_115, %c0_116, %c0_117] : memref<9x32x64xbf16, #tpu.memory_space<vmem>>, vector<1x32x64xbf16>
    %228 = vector.shape_cast %227 : vector<1x32x64xbf16> to vector<32x64xbf16>
    %cst_118 = arith.constant dense<0.000000e+00> : vector<224x64xf32>
    %229 = tpu.matmul %226, %228, %cst_118 {dimension_numbers = #tpu.dot_dimension_numbers<[1], [0], [0], [1], [0, 0, 1, 1], [], []>} : vector<224x32xbf16>, vector<32x64xbf16>, vector<224x64xf32> -> vector<224x64xf32>
    %230 = arith.addf %224, %229 : vector<224x64xf32>
    %c33_119 = arith.constant 33 : index
    %c0_120 = arith.constant 0 : index
    %231 = vector.load %arg10[%c33_119, %c0_120] : memref<288x32xf32, #tpu.memory_space<vmem>>, vector<224x32xf32>
    %232 = arith.truncf %231 : vector<224x32xf32> to vector<224x32xbf16>
    %c7_121 = arith.constant 7 : index
    %c0_122 = arith.constant 0 : index
    %c0_123 = arith.constant 0 : index
    %233 = vector.load %arg5[%c7_121, %c0_122, %c0_123] : memref<9x32x64xbf16, #tpu.memory_space<vmem>>, vector<1x32x64xbf16>
    %234 = vector.shape_cast %233 : vector<1x32x64xbf16> to vector<32x64xbf16>
    %cst_124 = arith.constant dense<0.000000e+00> : vector<224x64xf32>
    %235 = tpu.matmul %232, %234, %cst_124 {dimension_numbers = #tpu.dot_dimension_numbers<[1], [0], [0], [1], [0, 0, 1, 1], [], []>} : vector<224x32xbf16>, vector<32x64xbf16>, vector<224x64xf32> -> vector<224x64xf32>
    %236 = arith.addf %230, %235 : vector<224x64xf32>
    %c34 = arith.constant 34 : index
    %c0_125 = arith.constant 0 : index
    %237 = vector.load %arg10[%c34, %c0_125] : memref<288x32xf32, #tpu.memory_space<vmem>>, vector<224x32xf32>
    %238 = arith.truncf %237 : vector<224x32xf32> to vector<224x32xbf16>
    %c8_126 = arith.constant 8 : index
    %c0_127 = arith.constant 0 : index
    %c0_128 = arith.constant 0 : index
    %239 = vector.load %arg5[%c8_126, %c0_127, %c0_128] : memref<9x32x64xbf16, #tpu.memory_space<vmem>>, vector<1x32x64xbf16>
    %240 = vector.shape_cast %239 : vector<1x32x64xbf16> to vector<32x64xbf16>
    %cst_129 = arith.constant dense<0.000000e+00> : vector<224x64xf32>
    %241 = tpu.matmul %238, %240, %cst_129 {dimension_numbers = #tpu.dot_dimension_numbers<[1], [0], [0], [1], [0, 0, 1, 1], [], []>} : vector<224x32xbf16>, vector<32x64xbf16>, vector<224x64xf32> -> vector<224x64xf32>
    %242 = arith.addf %236, %241 : vector<224x64xf32>
    %c0_130 = arith.constant 0 : index
    %c0_131 = arith.constant 0 : index
    %243 = vector.load %arg6[%c0_130, %c0_131] : memref<1x64xf32, #tpu.memory_space<vmem>>, vector<1x64xf32>
    %244 = vector.shape_cast %243 : vector<1x64xf32> to vector<64xf32>
    %245 = vector.shape_cast %244 : vector<64xf32> to vector<1x64xf32>
    %246 = vector.broadcast %245 : vector<1x64xf32> to vector<224x64xf32>
    %247 = arith.addf %242, %246 : vector<224x64xf32>
    %cst_132 = arith.constant 0.000000e+00 : f32
    %248 = vector.broadcast %cst_132 : f32 to vector<224x64xf32>
    %249 = arith.maximumf %247, %248 : vector<224x64xf32>
    %c0_133 = arith.constant 0 : index
    %c0_134 = arith.constant 0 : index
    %250 = vector.load %arg11[%c0_133, %c0_134] : memref<256x64xf32, #tpu.memory_space<vmem>>, vector<224x64xf32>
    tpu.vector_store %arg11[%c0_133, %c0_134], %249 {strides = array<i32>} : memref<256x64xf32, #tpu.memory_space<vmem>>, vector<224x64xf32>,
    %cst_135 = arith.constant 0.000000e+00 : f32
    %251 = vector.broadcast %cst_135 : f32 to vector<32x64xf32>
    %c224 = arith.constant 224 : index
    %c0_136 = arith.constant 0 : index
    %252 = vector.load %arg11[%c224, %c0_136] : memref<256x64xf32, #tpu.memory_space<vmem>>, vector<32x64xf32>
    tpu.vector_store %arg11[%c224, %c0_136], %251 {strides = array<i32>} : memref<256x64xf32, #tpu.memory_space<vmem>>, vector<32x64xf32>,
    %c0_137 = arith.constant 0 : index
    %c0_138 = arith.constant 0 : index
    %253 = vector.load %arg11[%c0_137, %c0_138] : memref<256x64xf32, #tpu.memory_space<vmem>>, vector<224x64xf32>
    %c1_139 = arith.constant 1 : index
    %c0_140 = arith.constant 0 : index
    %254 = vector.load %arg11[%c1_139, %c0_140] : memref<256x64xf32, #tpu.memory_space<vmem>>, vector<224x64xf32>
    %255 = arith.maximumf %253, %254 : vector<224x64xf32>
    %c16_141 = arith.constant 16 : index
    %c0_142 = arith.constant 0 : index
    %256 = vector.load %arg11[%c16_141, %c0_142] : memref<256x64xf32, #tpu.memory_space<vmem>>, vector<224x64xf32>
    %c17_143 = arith.constant 17 : index
    %c0_144 = arith.constant 0 : index
    %257 = vector.load %arg11[%c17_143, %c0_144] : memref<256x64xf32, #tpu.memory_space<vmem>>, vector<224x64xf32>
    %258 = arith.maximumf %256, %257 : vector<224x64xf32>
    %259 = arith.maximumf %255, %258 : vector<224x64xf32>
    %260 = vector.shape_cast %259 : vector<224x64xf32> to vector<1x224x64xf32>
    %c0_145 = arith.constant 0 : index
    %c0_146 = arith.constant 0 : index
    %c0_147 = arith.constant 0 : index
    %261 = vector.load %arg7[%c0_145, %c0_146, %c0_147] : memref<16x224x64xf32, #tpu.memory_space<vmem>>, vector<16x224x64xf32>
    %262 = vector.broadcast %260 : vector<1x224x64xf32> to vector<16x224x64xf32>
    %263 = arith.mulf %262, %261 : vector<16x224x64xf32>
    %cst_148 = arith.constant dense<0.000000e+00> : vector<16x64xf32>
    %264 = vector.multi_reduction <add>, %263, %cst_148 [1] : vector<16x224x64xf32> to vector<16x64xf32>
    %cst_149 = arith.constant dense<0.000000e+00> : vector<16xf32>
    %265 = vector.multi_reduction <add>, %264, %cst_149 [1] : vector<16x64xf32> to vector<16xf32>
    %266 = vector.shape_cast %265 : vector<16xf32> to vector<16x1xf32>
    %c0_150 = arith.constant 0 : index
    %c0_151 = arith.constant 0 : index
    %267 = vector.load %arg8[%c0_150, %c0_151] : memref<16x1xf32, #tpu.memory_space<vmem>>, vector<16x1xf32>
    %268 = arith.addf %266, %267 : vector<16x1xf32>
    %269 = vector.shape_cast %268 : vector<16x1xf32> to vector<1x16x1xf32>
    %c0_152 = arith.constant 0 : index
    %c0_153 = arith.constant 0 : index
    %c0_154 = arith.constant 0 : index
    %270 = vector.load %arg9[%c0_152, %c0_153, %c0_154] : memref<1x16x1xf32, #tpu.memory_space<vmem>>, vector<1x16x1xf32>
    tpu.vector_store %arg9[%c0_152, %c0_153, %c0_154], %269 {strides = array<i32>} : memref<1x16x1xf32, #tpu.memory_space<vmem>>, vector<1x16x1xf32>,
    return
  }
  func.func @transform_0(%arg0: i32) -> (i32, i32, i32, i32) {
    %c0_i32 = arith.constant 0 : i32
    %c0_i32_0 = arith.constant 0 : i32
    %c0_i32_1 = arith.constant 0 : i32
    %c0_i32_2 = arith.constant 0 : i32
    return %arg0, %c0_i32, %c0_i32_0, %c0_i32_1 : i32, i32, i32, i32
  }
  func.func @transform_1(%arg0: i32) -> (i32, i32, i32, i32) {
    %c0_i32 = arith.constant 0 : i32
    %c0_i32_0 = arith.constant 0 : i32
    %c0_i32_1 = arith.constant 0 : i32
    %c0_i32_2 = arith.constant 0 : i32
    return %arg0, %c0_i32, %c0_i32_0, %c0_i32_1 : i32, i32, i32, i32
  }
  func.func @transform_2(%arg0: i32) -> (i32, i32) {
    %c0_i32 = arith.constant 0 : i32
    %c0_i32_0 = arith.constant 0 : i32
    %c0_i32_1 = arith.constant 0 : i32
    return %c0_i32, %c0_i32_0 : i32, i32
  }
  func.func @transform_3(%arg0: i32) -> (i32, i32) {
    %c0_i32 = arith.constant 0 : i32
    %c0_i32_0 = arith.constant 0 : i32
    %c0_i32_1 = arith.constant 0 : i32
    return %c0_i32, %c0_i32_0 : i32, i32
  }
  func.func @transform_4(%arg0: i32) -> (i32, i32, i32) {
    %c0_i32 = arith.constant 0 : i32
    %c0_i32_0 = arith.constant 0 : i32
    %c0_i32_1 = arith.constant 0 : i32
    %c0_i32_2 = arith.constant 0 : i32
    return %c0_i32, %c0_i32_0, %c0_i32_1 : i32, i32, i32
  }
  func.func @transform_5(%arg0: i32) -> (i32, i32) {
    %c0_i32 = arith.constant 0 : i32
    %c0_i32_0 = arith.constant 0 : i32
    %c0_i32_1 = arith.constant 0 : i32
    return %c0_i32, %c0_i32_0 : i32, i32
  }
  func.func @transform_6(%arg0: i32) -> (i32, i32, i32) {
    %c0_i32 = arith.constant 0 : i32
    %c0_i32_0 = arith.constant 0 : i32
    %c0_i32_1 = arith.constant 0 : i32
    %c0_i32_2 = arith.constant 0 : i32
    return %c0_i32, %c0_i32_0, %c0_i32_1 : i32, i32, i32
  }
  func.func @transform_7(%arg0: i32) -> (i32, i32) {
    %c0_i32 = arith.constant 0 : i32
    %c0_i32_0 = arith.constant 0 : i32
    %c0_i32_1 = arith.constant 0 : i32
    return %c0_i32, %c0_i32_0 : i32, i32
  }
  func.func @transform_8(%arg0: i32) -> (i32, i32, i32) {
    %c0_i32 = arith.constant 0 : i32
    %c0_i32_0 = arith.constant 0 : i32
    %c0_i32_1 = arith.constant 0 : i32
    return %arg0, %c0_i32, %c0_i32_0 : i32, i32, i32
  }
}

</mosaic_0001>

<llo_original>
// kernel: merged_model_forward.1
$region0: #{merged_model_forward.1}
  #allocation0 [shape = 'u32[]', space=smem, size = 0x4, offset = 0x4, fixed_abs, tag = 'smem constant byte address 0x4 - core index']
  #allocation1 [shape = 'u32[144,128]{1,0:T(1,128)}', space=vmem, size = 0x12000, scoped, tag = 'internal scratch']
  #allocation2 [shape = 'f32[288,32]{1,0:T(8,128)}', space=vmem, size = 0x24000, scoped, tag = 'scratch operand']
  #allocation3 [shape = 'f32[256,64]{1,0:T(8,128)}', space=vmem, size = 0x20000, scoped, tag = 'scratch operand']
  %s0 = inlined_call_operand.vmem [shape: f32[2,30,15,1], index: 0, kind: input, shape index: {}]
  %s1 = inlined_call_operand.vmem [shape: f32[2,30,15,1], index: 1, kind: input, shape index: {}]
  %s2 = inlined_call_operand.vmem [shape: f32[9,32], index: 2, kind: input, shape index: {}]
  %s3 = inlined_call_operand.vmem [shape: f32[1,32], index: 3, kind: input, shape index: {}]
  %s4 = inlined_call_operand.vmem [shape: bf16[9,32,64], index: 4, kind: input, shape index: {}]
  %s5 = inlined_call_operand.vmem [shape: f32[1,64], index: 5, kind: input, shape index: {}]
  %s6 = inlined_call_operand.vmem [shape: f32[16,224,64], index: 6, kind: input, shape index: {}]
  %s7 = inlined_call_operand.vmem [shape: f32[16,1], index: 7, kind: input, shape index: {}]
  %s8 = inlined_call_operand.vmem [shape: f32[2,16,1], index: 8, kind: output, shape index: {}]
  %s9 = sld [smem:[#allocation0]]
  $region65: #{merged_model_forward.1} parent=0
    _
  %s11 = ssub.s32 1, %s9
  %s12 = scalar_select 0, %s11, %s9
  loop: start=0, step=1, limit=4
  $region2: #{merged_model_forward.1} parent=0 // loop_pre_header
    _
  $region3: #{merged_model_forward.1} parent=0 // loop_header
    %s14 = sphi 0, %s18
    %p15 = scmp.ge.s32.totalorder %s14, 4
    %s24 = sphi 0, %s26
    %s27 = sphi 0, %s24
    %s28 = sphi 0, %s27
    %s44 = sphi 0, %s28
    %s50 = sphi 0, %s52
    %s53 = sphi 0, %s50
    %s54 = sphi 0, %s53
    %s70 = sphi 0, %s54
    %s74 = sphi 0, %s74
    %s76 = sphi 0, %s74
    %s77 = sphi 0, %s76
    %s91 = sphi 0, %s77
    %s95 = sphi 0, %s95
    %s97 = sphi 0, %s95
    %s98 = sphi 0, %s97
    %s112 = sphi 0, %s98
    %s116 = sphi 0, %s116
    %s118 = sphi 0, %s116
    %s119 = sphi 0, %s118
    %s133 = sphi 0, %s119
    %s137 = sphi 0, %s137
    %s139 = sphi 0, %s137
    %s140 = sphi 0, %s139
    %s154 = sphi 0, %s140
    %s158 = sphi 0, %s158
    %s160 = sphi 0, %s158
    %s161 = sphi 0, %s160
    %s175 = sphi 0, %s161
    %s179 = sphi 0, %s179
    %s181 = sphi 0, %s179
    %s182 = sphi 0, %s181
    %s196 = sphi 0, %s182
    %s202 = sphi 0, %s204
    %s205 = sphi 0, %s202
    %s206 = sphi 0, %s205
    %s222 = sphi 0, %s206
  $region4: #{merged_model_forward.1} parent=0 // loop_header_branch
    %17 = sbr.rel (%p15) target = $region8
  $region5: #{merged_model_forward.1} parent=0 // loop_body
    %s19 = ssub.s32 %s14, 1
    %s20 = ssub.s32 %s14, 2
    %s21 = sadd.s32 %s14, 1
    %s22 = ssub.s32 %s14, %s21
    %p23 = scmp.eq.s32.totalorder %s22, 0
    %s25 = sadd.s32 %s24, 1
    %s26 = scalar_select %p23, %s24, %s25
    %p29 = pneg %p23
    %p30 = scmp.eq.s32.totalorder %s14, 1
    %p31 = por %p29, %p30
    %p32 = scmp.ne.s32.totalorder %s24, %s27
    %p33 = scmp.eq.s32.totalorder %s14, 0
    %p34 = por %p32, %p33
    %p35 = scmp.ne.s32.totalorder %s24, %s27
    %p36 = scmp.eq.s32.totalorder %s19, 1
    %p37 = por %p35, %p36
    %p38 = scmp.ne.s32.totalorder %s27, %s28
    %p39 = scmp.eq.s32.totalorder %s19, 0
    %p40 = por %p38, %p39
    %p41 = scmp.ne.s32.totalorder %s27, %s28
    %p42 = scmp.eq.s32.totalorder %s20, 1
    %p43 = por %p41, %p42
    %p45 = scmp.ne.s32.totalorder %s28, %s44
    %p46 = scmp.eq.s32.totalorder %s20, 0
    %p47 = por %p45, %p46
    %s48 = ssub.s32 %s14, %s21
    %p49 = scmp.eq.s32.totalorder %s48, 0
    %s51 = sadd.s32 %s50, 1
    %s52 = scalar_select %p49, %s50, %s51
    %p55 = pneg %p49
    %p56 = scmp.eq.s32.totalorder %s14, 1
    %p57 = por %p55, %p56
    %p58 = scmp.ne.s32.totalorder %s50, %s53
    %p59 = scmp.eq.s32.totalorder %s14, 0
    %p60 = por %p58, %p59
    %p61 = scmp.ne.s32.totalorder %s50, %s53
    %p62 = scmp.eq.s32.totalorder %s19, 1
    %p63 = por %p61, %p62
    %p64 = scmp.ne.s32.totalorder %s53, %s54
    %p65 = scmp.eq.s32.totalorder %s19, 0
    %p66 = por %p64, %p65
    %p67 = scmp.ne.s32.totalorder %s53, %s54
    %p68 = scmp.eq.s32.totalorder %s20, 1
    %p69 = por %p67, %p68
    %p71 = scmp.ne.s32.totalorder %s54, %s70
    %p72 = scmp.eq.s32.totalorder %s20, 0
    %p73 = por %p71, %p72
    %s75 = sadd.s32 %s74, 1
    %p78 = scmp.eq.s32.totalorder %s14, 1
    %p79 = scmp.ne.s32.totalorder %s74, %s76
    %p80 = scmp.eq.s32.totalorder %s14, 0
    %p81 = por %p79, %p80
    %p82 = scmp.ne.s32.totalorder %s74, %s76
    %p83 = scmp.eq.s32.totalorder %s19, 1
    %p84 = por %p82, %p83
    %p85 = scmp.ne.s32.totalorder %s76, %s77
    %p86 = scmp.eq.s32.totalorder %s19, 0
    %p87 = por %p85, %p86
    %p88 = scmp.ne.s32.totalorder %s76, %s77
    %p89 = scmp.eq.s32.totalorder %s20, 1
    %p90 = por %p88, %p89
    %p92 = scmp.ne.s32.totalorder %s77, %s91
    %p93 = scmp.eq.s32.totalorder %s20, 0
    %p94 = por %p92, %p93
    %s96 = sadd.s32 %s95, 1
    %p99 = scmp.eq.s32.totalorder %s14, 1
    %p100 = scmp.ne.s32.totalorder %s95, %s97
    %p101 = scmp.eq.s32.totalorder %s14, 0
    %p102 = por %p100, %p101
    %p103 = scmp.ne.s32.totalorder %s95, %s97
    %p104 = scmp.eq.s32.totalorder %s19, 1
    %p105 = por %p103, %p104
    %p106 = scmp.ne.s32.totalorder %s97, %s98
    %p107 = scmp.eq.s32.totalorder %s19, 0
    %p108 = por %p106, %p107
    %p109 = scmp.ne.s32.totalorder %s97, %s98
    %p110 = scmp.eq.s32.totalorder %s20, 1
    %p111 = por %p109, %p110
    %p113 = scmp.ne.s32.totalorder %s98, %s112
    %p114 = scmp.eq.s32.totalorder %s20, 0
    %p115 = por %p113, %p114
    %s117 = sadd.s32 %s116, 1
    %p120 = scmp.eq.s32.totalorder %s14, 1
    %p121 = scmp.ne.s32.totalorder %s116, %s118
    %p122 = scmp.eq.s32.totalorder %s14, 0
    %p123 = por %p121, %p122
    %p124 = scmp.ne.s32.totalorder %s116, %s118
    %p125 = scmp.eq.s32.totalorder %s19, 1
    %p126 = por %p124, %p125
    %p127 = scmp.ne.s32.totalorder %s118, %s119
    %p128 = scmp.eq.s32.totalorder %s19, 0
    %p129 = por %p127, %p128
    %p130 = scmp.ne.s32.totalorder %s118, %s119
    %p131 = scmp.eq.s32.totalorder %s20, 1
    %p132 = por %p130, %p131
    %p134 = scmp.ne.s32.totalorder %s119, %s133
    %p135 = scmp.eq.s32.totalorder %s20, 0
    %p136 = por %p134, %p135
    %s138 = sadd.s32 %s137, 1
    %p141 = scmp.eq.s32.totalorder %s14, 1
    %p142 = scmp.ne.s32.totalorder %s137, %s139
    %p143 = scmp.eq.s32.totalorder %s14, 0
    %p144 = por %p142, %p143
    %p145 = scmp.ne.s32.totalorder %s137, %s139
    %p146 = scmp.eq.s32.totalorder %s19, 1
    %p147 = por %p145, %p146
    %p148 = scmp.ne.s32.totalorder %s139, %s140
    %p149 = scmp.eq.s32.totalorder %s19, 0
    %p150 = por %p148, %p149
    %p151 = scmp.ne.s32.totalorder %s139, %s140
    %p152 = scmp.eq.s32.totalorder %s20, 1
    %p153 = por %p151, %p152
    %p155 = scmp.ne.s32.totalorder %s140, %s154
    %p156 = scmp.eq.s32.totalorder %s20, 0
    %p157 = por %p155, %p156
    %s159 = sadd.s32 %s158, 1
    %p162 = scmp.eq.s32.totalorder %s14, 1
    %p163 = scmp.ne.s32.totalorder %s158, %s160
    %p164 = scmp.eq.s32.totalorder %s14, 0
    %p165 = por %p163, %p164
    %p166 = scmp.ne.s32.totalorder %s158, %s160
    %p167 = scmp.eq.s32.totalorder %s19, 1
    %p168 = por %p166, %p167
    %p169 = scmp.ne.s32.totalorder %s160, %s161
    %p170 = scmp.eq.s32.totalorder %s19, 0
    %p171 = por %p169, %p170
    %p172 = scmp.ne.s32.totalorder %s160, %s161
    %p173 = scmp.eq.s32.totalorder %s20, 1
    %p174 = por %p172, %p173
    %p176 = scmp.ne.s32.totalorder %s161, %s175
    %p177 = scmp.eq.s32.totalorder %s20, 0
    %p178 = por %p176, %p177
    %s180 = sadd.s32 %s179, 1
    %p183 = scmp.eq.s32.totalorder %s14, 1
    %p184 = scmp.ne.s32.totalorder %s179, %s181
    %p185 = scmp.eq.s32.totalorder %s14, 0
    %p186 = por %p184, %p185
    %p187 = scmp.ne.s32.totalorder %s179, %s181
    %p188 = scmp.eq.s32.totalorder %s19, 1
    %p189 = por %p187, %p188
    %p190 = scmp.ne.s32.totalorder %s181, %s182
    %p191 = scmp.eq.s32.totalorder %s19, 0
    %p192 = por %p190, %p191
    %p193 = scmp.ne.s32.totalorder %s181, %s182
    %p194 = scmp.eq.s32.totalorder %s20, 1
    %p195 = por %p193, %p194
    %p197 = scmp.ne.s32.totalorder %s182, %s196
    %p198 = scmp.eq.s32.totalorder %s20, 0
    %p199 = por %p197, %p198
    %s200 = ssub.s32 %s14, %s21
    %p201 = scmp.eq.s32.totalorder %s200, 0
    %s203 = sadd.s32 %s202, 1
    %s204 = scalar_select %p201, %s202, %s203
    %p207 = pneg %p201
    %p208 = scmp.eq.s32.totalorder %s14, 1
    %p209 = por %p207, %p208
    %p210 = scmp.ne.s32.totalorder %s202, %s205
    %p211 = scmp.eq.s32.totalorder %s14, 0
    %p212 = por %p210, %p211
    %p213 = scmp.ne.s32.totalorder %s202, %s205
    %p214 = scmp.eq.s32.totalorder %s19, 1
    %p215 = por %p213, %p214
    %p216 = scmp.ne.s32.totalorder %s205, %s206
    %p217 = scmp.eq.s32.totalorder %s19, 0
    %p218 = por %p216, %p217
    %p219 = scmp.ne.s32.totalorder %s205, %s206
    %p220 = scmp.eq.s32.totalorder %s20, 1
    %p221 = por %p219, %p220
    %p223 = scmp.ne.s32.totalorder %s206, %s222
    %p224 = scmp.eq.s32.totalorder %s20, 0
    %p225 = por %p223, %p224
    %p226 = scmp.le.s32.totalorder 1, %s14
    %p227 = scmp.lt.s32.totalorder %s14, 3
    %p228 = pnand %p226, %p227
    %p229 = pneg %p228
    // Predicated region
    $region9: #{merged_model_forward.1} parent=5 // pred_check
      _
    $region10: #{merged_model_forward.1} parent=5 // pred_check_branch
      %231 = sbr.rel (%p228) target = $region12
    $region11: #{merged_model_forward.1} parent=5 // pred_region
      %s232 = ssub.s32 %s14, 1
      // Predicated region
      $region13: #{merged_model_forward.1} parent=11 // pred_check
        %p233 = pneg %p87
      $region14: #{merged_model_forward.1} parent=11 // pred_check_branch
        %235 = sbr.rel (%p233) target = $region16
      $region15: #{merged_model_forward.1} parent=11 // pred_region
        _
      $region16: #{merged_model_forward.1} parent=11 // pred_fallthru
        _
      // Predicated region
      $region17: #{merged_model_forward.1} parent=11 // pred_check
        %p236 = pneg %p108
      $region18: #{merged_model_forward.1} parent=11 // pred_check_branch
        %238 = sbr.rel (%p236) target = $region20
      $region19: #{merged_model_forward.1} parent=11 // pred_region
        _
      $region20: #{merged_model_forward.1} parent=11 // pred_fallthru
        _
      // Predicated region
      $region21: #{merged_model_forward.1} parent=11 // pred_check
        %p239 = pneg %p129
      $region22: #{merged_model_forward.1} parent=11 // pred_check_branch
        %241 = sbr.rel (%p239) target = $region24
      $region23: #{merged_model_forward.1} parent=11 // pred_region
        _
      $region24: #{merged_model_forward.1} parent=11 // pred_fallthru
        _
      // Predicated region
      $region25: #{merged_model_forward.1} parent=11 // pred_check
        %p242 = pneg %p150
      $region26: #{merged_model_forward.1} parent=11 // pred_check_branch
        %244 = sbr.rel (%p242) target = $region28
      $region27: #{merged_model_forward.1} parent=11 // pred_region
        _
      $region28: #{merged_model_forward.1} parent=11 // pred_fallthru
        _
      // Predicated region
      $region29: #{merged_model_forward.1} parent=11 // pred_check
        %p245 = pneg %p171
      $region30: #{merged_model_forward.1} parent=11 // pred_check_branch
        %247 = sbr.rel (%p245) target = $region32
      $region31: #{merged_model_forward.1} parent=11 // pred_region
        _
      $region32: #{merged_model_forward.1} parent=11 // pred_fallthru
        _
      // Predicated region
      $region33: #{merged_model_forward.1} parent=11 // pred_check
        %p248 = pneg %p192
      $region34: #{merged_model_forward.1} parent=11 // pred_check_branch
        %250 = sbr.rel (%p248) target = $region36
      $region35: #{merged_model_forward.1} parent=11 // pred_region
        _
      $region36: #{merged_model_forward.1} parent=11 // pred_fallthru
        _
    $region12: #{merged_model_forward.1} parent=5 // pred_fallthru
      _
    %p251 = scmp.lt.s32.totalorder %s14, 2
    // Predicated region
    $region37: #{merged_model_forward.1} parent=5 // pred_check
      %p252 = pneg %p251
    $region38: #{merged_model_forward.1} parent=5 // pred_check_branch
      %254 = sbr.rel (%p252) target = $region40
    $region39: #{merged_model_forward.1} parent=5 // pred_region
      // Predicated region
      $region41: #{merged_model_forward.1} parent=39 // pred_check
        %p255 = pneg %p34
      $region42: #{merged_model_forward.1} parent=39 // pred_check_branch
        %257 = sbr.rel (%p255) target = $region44
      $region43: #{merged_model_forward.1} parent=39 // pred_region
        %p258 = scmp.lt.s32.totalorder %s14, 1
        %s259 = scalar_select %p258, %s14, 1
        %s260 = smul.addr %s259, 60
        %s261 = smul.addr %s260, 8
        %s262 = scalar_lea.vmem %s0, %s261
      $region44: #{merged_model_forward.1} parent=39 // pred_fallthru
        _
      // Predicated region
      $region45: #{merged_model_forward.1} parent=39 // pred_check
        %p263 = pneg %p60
      $region46: #{merged_model_forward.1} parent=39 // pred_check_branch
        %265 = sbr.rel (%p263) target = $region48
      $region47: #{merged_model_forward.1} parent=39 // pred_region
        %p266 = scmp.lt.s32.totalorder %s14, 1
        %s267 = scalar_select %p266, %s14, 1
        %s268 = smul.addr %s267, 60
        %s269 = smul.addr %s268, 8
        %s270 = scalar_lea.vmem %s1, %s269
      $region48: #{merged_model_forward.1} parent=39 // pred_fallthru
        _
    $region40: #{merged_model_forward.1} parent=5 // pred_fallthru
      _
    %p271 = scmp.le.s32.totalorder 1, %s14
    %p272 = scmp.lt.s32.totalorder %s14, 3
    %p273 = pnand %p271, %p272
    %p274 = pneg %p273
    // Predicated region
    $region49: #{merged_model_forward.1} parent=5 // pred_check
      _
    $region50: #{merged_model_forward.1} parent=5 // pred_check_branch
      %276 = sbr.rel (%p273) target = $region52
    $region51: #{merged_model_forward.1} parent=5 // pred_region
      %s277 = ssub.s32 %s14, 1
      %p278 = scmp.lt.s32.totalorder %s19, 1
      %s279 = scalar_select %p278, %s19, 1
      %s280 = smul.addr %s279, 60
      %s281 = smul.addr %s280, 8
      %s282 = scalar_lea.vmem %s0, %s281
      %p283 = pneg %p40
      %p284 = pneg %p37
      %p285 = scmp.lt.s32.totalorder %s19, 1
      %s286 = scalar_select %p285, %s19, 1
      %s287 = smul.addr %s286, 60
      %s288 = smul.addr %s287, 8
      %s289 = scalar_lea.vmem %s1, %s288
      %p290 = pneg %p66
      %p291 = pneg %p63
      %p292 = pneg %p87
      %p293 = pneg %p84
      %p294 = pneg %p108
      %p295 = pneg %p105
      %p296 = pneg %p129
      %p297 = pneg %p126
      %p298 = pneg %p150
      %p299 = pneg %p147
      %p300 = pneg %p171
      %p301 = pneg %p168
      %p302 = pneg %p192
      %p303 = pneg %p189
      %p304 = pneg %p218
      %p305 = pneg %p215
      %p306 = scmp.lt.s32.totalorder %s19, 1
      %s307 = scalar_select %p306, %s19, 1
      %s308 = smul.addr %s307, 2
      %s309 = smul.addr %s308, 8
      %s310 = scalar_lea.vmem %s8, %s309
      %p311 = scmp.lt.s32.totalorder %s19, 1
      %s312 = scalar_select %p311, %s19, 1
      %s313 = smul.addr %s312, 60
      %s314 = smul.addr %s313, 8
      %s315 = scalar_lea.vmem %s0, %s314
      %p316 = scmp.lt.s32.totalorder %s19, 1
      %s317 = scalar_select %p316, %s19, 1
      %s318 = smul.addr %s317, 60
      %s319 = smul.addr %s318, 8
      %s320 = scalar_lea.vmem %s1, %s319
      %p321 = scmp.lt.s32.totalorder %s19, 1
      %s322 = scalar_select %p321, %s19, 1
      %s323 = smul.addr %s322, 2
      %s324 = smul.addr %s323, 8
      %s325 = scalar_lea.vmem %s8, %s324
      %v327 = vld [vmem:[%s315] sm:$0xff]
      %v328 = vld [vmem:[%s315 + $0x8] sm:$0x3f]
      %v329 = vld [vmem:[%s315 + $0x10] sm:$0xff]
      %v330 = vld [vmem:[%s315 + $0x18] sm:$0x3f]
      %v331 = vld [vmem:[%s315 + $0x20] sm:$0xff]
      %v332 = vld [vmem:[%s315 + $0x28] sm:$0x3f]
      %v333 = vld [vmem:[%s315 + $0x30] sm:$0xff]
      %v334 = vld [vmem:[%s315 + $0x38] sm:$0x3f]
      %v335 = vld [vmem:[%s315 + $0x40] sm:$0xff]
      %v336 = vld [vmem:[%s315 + $0x48] sm:$0x3f]
      %v337 = vld [vmem:[%s315 + $0x50] sm:$0xff]
      %v338 = vld [vmem:[%s315 + $0x58] sm:$0x3f]
      %v339 = vld [vmem:[%s315 + $0x60] sm:$0xff]
      %v340 = vld [vmem:[%s315 + $0x68] sm:$0x3f]
      %v341 = vld [vmem:[%s315 + $0x70] sm:$0xff]
      %v342 = vld [vmem:[%s315 + $0x78] sm:$0x3f]
      %v343 = vld [vmem:[%s315 + $0x80] sm:$0xff]
      %v344 = vld [vmem:[%s315 + $0x88] sm:$0x3f]
      %v345 = vld [vmem:[%s315 + $0x90] sm:$0xff]
      %v346 = vld [vmem:[%s315 + $0x98] sm:$0x3f]
      %v347 = vld [vmem:[%s315 + $0xa0] sm:$0xff]
      %v348 = vld [vmem:[%s315 + $0xa8] sm:$0x3f]
      %v349 = vld [vmem:[%s315 + $0xb0] sm:$0xff]
      %v350 = vld [vmem:[%s315 + $0xb8] sm:$0x3f]
      %v351 = vld [vmem:[%s315 + $0xc0] sm:$0xff]
      %v352 = vld [vmem:[%s315 + $0xc8] sm:$0x3f]
      %v353 = vld [vmem:[%s315 + $0xd0] sm:$0xff]
      %v354 = vld [vmem:[%s315 + $0xd8] sm:$0x3f]
      %v355 = vld [vmem:[%s315 + $0xe0] sm:$0xff]
      %v356 = vld [vmem:[%s315 + $0xe8] sm:$0x3f]
      %v357 = vld [vmem:[%s315 + $0xf0] sm:$0xff]
      %v358 = vld [vmem:[%s315 + $0xf8] sm:$0x3f]
      %v359 = vld [vmem:[%s315 + $0x100] sm:$0xff]
      %v360 = vld [vmem:[%s315 + $0x108] sm:$0x3f]
      %v361 = vld [vmem:[%s315 + $0x110] sm:$0xff]
      %v362 = vld [vmem:[%s315 + $0x118] sm:$0x3f]
      %v363 = vld [vmem:[%s315 + $0x120] sm:$0xff]
      %v364 = vld [vmem:[%s315 + $0x128] sm:$0x3f]
      %v365 = vld [vmem:[%s315 + $0x130] sm:$0xff]
      %v366 = vld [vmem:[%s315 + $0x138] sm:$0x3f]
      %v367 = vld [vmem:[%s315 + $0x140] sm:$0xff]
      %v368 = vld [vmem:[%s315 + $0x148] sm:$0x3f]
      %v369 = vld [vmem:[%s315 + $0x150] sm:$0xff]
      %v370 = vld [vmem:[%s315 + $0x158] sm:$0x3f]
      %v371 = vld [vmem:[%s315 + $0x160] sm:$0xff]
      %v372 = vld [vmem:[%s315 + $0x168] sm:$0x3f]
      %v373 = vld [vmem:[%s315 + $0x170] sm:$0xff]
      %v374 = vld [vmem:[%s315 + $0x178] sm:$0x3f]
      %v375 = vld [vmem:[%s315 + $0x180] sm:$0xff]
      %v376 = vld [vmem:[%s315 + $0x188] sm:$0x3f]
      %v377 = vld [vmem:[%s315 + $0x190] sm:$0xff]
      %v378 = vld [vmem:[%s315 + $0x198] sm:$0x3f]
      %v379 = vld [vmem:[%s315 + $0x1a0] sm:$0xff]
      %v380 = vld [vmem:[%s315 + $0x1a8] sm:$0x3f]
      %v381 = vld [vmem:[%s315 + $0x1b0] sm:$0xff]
      %v382 = vld [vmem:[%s315 + $0x1b8] sm:$0x3f]
      %v383 = vld [vmem:[%s320] sm:$0xff]
      %v384 = vld [vmem:[%s320 + $0x8] sm:$0x3f]
      %v385 = vld [vmem:[%s320 + $0x10] sm:$0xff]
      %v386 = vld [vmem:[%s320 + $0x18] sm:$0x3f]
      %v387 = vld [vmem:[%s320 + $0x20] sm:$0xff]
      %v388 = vld [vmem:[%s320 + $0x28] sm:$0x3f]
      %v389 = vld [vmem:[%s320 + $0x30] sm:$0xff]
      %v390 = vld [vmem:[%s320 + $0x38] sm:$0x3f]
      %v391 = vld [vmem:[%s320 + $0x40] sm:$0xff]
      %v392 = vld [vmem:[%s320 + $0x48] sm:$0x3f]
      %v393 = vld [vmem:[%s320 + $0x50] sm:$0xff]
      %v394 = vld [vmem:[%s320 + $0x58] sm:$0x3f]
      %v395 = vld [vmem:[%s320 + $0x60] sm:$0xff]
      %v396 = vld [vmem:[%s320 + $0x68] sm:$0x3f]
      %v397 = vld [vmem:[%s320 + $0x70] sm:$0xff]
      %v398 = vld [vmem:[%s320 + $0x78] sm:$0x3f]
      %v399 = vld [vmem:[%s320 + $0x80] sm:$0xff]
      %v400 = vld [vmem:[%s320 + $0x88] sm:$0x3f]
      %v401 = vld [vmem:[%s320 + $0x90] sm:$0xff]
      %v402 = vld [vmem:[%s320 + $0x98] sm:$0x3f]
      %v403 = vld [vmem:[%s320 + $0xa0] sm:$0xff]
      %v404 = vld [vmem:[%s320 + $0xa8] sm:$0x3f]
      %v405 = vld [vmem:[%s320 + $0xb0] sm:$0xff]
      %v406 = vld [vmem:[%s320 + $0xb8] sm:$0x3f]
      %v407 = vld [vmem:[%s320 + $0xc0] sm:$0xff]
      %v408 = vld [vmem:[%s320 + $0xc8] sm:$0x3f]
      %v409 = vld [vmem:[%s320 + $0xd0] sm:$0xff]
      %v410 = vld [vmem:[%s320 + $0xd8] sm:$0x3f]
      %v411 = vld [vmem:[%s320 + $0xe0] sm:$0xff]
      %v412 = vld [vmem:[%s320 + $0xe8] sm:$0x3f]
      %v413 = vld [vmem:[%s320 + $0xf0] sm:$0xff]
      %v414 = vld [vmem:[%s320 + $0xf8] sm:$0x3f]
      %v415 = vld [vmem:[%s320 + $0x100] sm:$0xff]
      %v416 = vld [vmem:[%s320 + $0x108] sm:$0x3f]
      %v417 = vld [vmem:[%s320 + $0x110] sm:$0xff]
      %v418 = vld [vmem:[%s320 + $0x118] sm:$0x3f]
      %v419 = vld [vmem:[%s320 + $0x120] sm:$0xff]
      %v420 = vld [vmem:[%s320 + $0x128] sm:$0x3f]
      %v421 = vld [vmem:[%s320 + $0x130] sm:$0xff]
      %v422 = vld [vmem:[%s320 + $0x138] sm:$0x3f]
      %v423 = vld [vmem:[%s320 + $0x140] sm:$0xff]
      %v424 = vld [vmem:[%s320 + $0x148] sm:$0x3f]
      %v425 = vld [vmem:[%s320 + $0x150] sm:$0xff]
      %v426 = vld [vmem:[%s320 + $0x158] sm:$0x3f]
      %v427 = vld [vmem:[%s320 + $0x160] sm:$0xff]
      %v428 = vld [vmem:[%s320 + $0x168] sm:$0x3f]
      %v429 = vld [vmem:[%s320 + $0x170] sm:$0xff]
      %v430 = vld [vmem:[%s320 + $0x178] sm:$0x3f]
      %v431 = vld [vmem:[%s320 + $0x180] sm:$0xff]
      %v432 = vld [vmem:[%s320 + $0x188] sm:$0x3f]
      %v433 = vld [vmem:[%s320 + $0x190] sm:$0xff]
      %v434 = vld [vmem:[%s320 + $0x198] sm:$0x3f]
      %v435 = vld [vmem:[%s320 + $0x1a0] sm:$0xff]
      %v436 = vld [vmem:[%s320 + $0x1a8] sm:$0x3f]
      %v437 = vld [vmem:[%s320 + $0x1b0] sm:$0xff]
      %v438 = vld [vmem:[%s320 + $0x1b8] sm:$0x3f]
      %v439 = vld [vmem:[%s315 + $0x1] sm:$0xff]
      %v440 = vld [vmem:[%s315 + $0x9] sm:$0x3f]
      %v441 = vld [vmem:[%s315 + $0x11] sm:$0xff]
      %v442 = vld [vmem:[%s315 + $0x19] sm:$0x3f]
      %v443 = vld [vmem:[%s315 + $0x21] sm:$0xff]
      %v444 = vld [vmem:[%s315 + $0x29] sm:$0x3f]
      %v445 = vld [vmem:[%s315 + $0x31] sm:$0xff]
      %v446 = vld [vmem:[%s315 + $0x39] sm:$0x3f]
      %v447 = vld [vmem:[%s315 + $0x41] sm:$0xff]
      %v448 = vld [vmem:[%s315 + $0x49] sm:$0x3f]
      %v449 = vld [vmem:[%s315 + $0x51] sm:$0xff]
      %v450 = vld [vmem:[%s315 + $0x59] sm:$0x3f]
      %v451 = vld [vmem:[%s315 + $0x61] sm:$0xff]
      %v452 = vld [vmem:[%s315 + $0x69] sm:$0x3f]
      %v453 = vld [vmem:[%s315 + $0x71] sm:$0xff]
      %v454 = vld [vmem:[%s315 + $0x79] sm:$0x3f]
      %v455 = vld [vmem:[%s315 + $0x81] sm:$0xff]
      %v456 = vld [vmem:[%s315 + $0x89] sm:$0x3f]
      %v457 = vld [vmem:[%s315 + $0x91] sm:$0xff]
      %v458 = vld [vmem:[%s315 + $0x99] sm:$0x3f]
      %v459 = vld [vmem:[%s315 + $0xa1] sm:$0xff]
      %v460 = vld [vmem:[%s315 + $0xa9] sm:$0x3f]
      %v461 = vld [vmem:[%s315 + $0xb1] sm:$0xff]
      %v462 = vld [vmem:[%s315 + $0xb9] sm:$0x3f]
      %v463 = vld [vmem:[%s315 + $0xc1] sm:$0xff]
      %v464 = vld [vmem:[%s315 + $0xc9] sm:$0x3f]
      %v465 = vld [vmem:[%s315 + $0xd1] sm:$0xff]
      %v466 = vld [vmem:[%s315 + $0xd9] sm:$0x3f]
      %v467 = vld [vmem:[%s315 + $0xe1] sm:$0xff]
      %v468 = vld [vmem:[%s315 + $0xe9] sm:$0x3f]
      %v469 = vld [vmem:[%s315 + $0xf1] sm:$0xff]
      %v470 = vld [vmem:[%s315 + $0xf9] sm:$0x3f]
      %v471 = vld [vmem:[%s315 + $0x101] sm:$0xff]
      %v472 = vld [vmem:[%s315 + $0x109] sm:$0x3f]
      %v473 = vld [vmem:[%s315 + $0x111] sm:$0xff]
      %v474 = vld [vmem:[%s315 + $0x119] sm:$0x3f]
      %v475 = vld [vmem:[%s315 + $0x121] sm:$0xff]
      %v476 = vld [vmem:[%s315 + $0x129] sm:$0x3f]
      %v477 = vld [vmem:[%s315 + $0x131] sm:$0xff]
      %v478 = vld [vmem:[%s315 + $0x139] sm:$0x3f]
      %v479 = vld [vmem:[%s315 + $0x141] sm:$0xff]
      %v480 = vld [vmem:[%s315 + $0x149] sm:$0x3f]
      %v481 = vld [vmem:[%s315 + $0x151] sm:$0xff]
      %v482 = vld [vmem:[%s315 + $0x159] sm:$0x3f]
      %v483 = vld [vmem:[%s315 + $0x161] sm:$0xff]
      %v484 = vld [vmem:[%s315 + $0x169] sm:$0x3f]
      %v485 = vld [vmem:[%s315 + $0x171] sm:$0xff]
      %v486 = vld [vmem:[%s315 + $0x179] sm:$0x3f]
      %v487 = vld [vmem:[%s315 + $0x181] sm:$0xff]
      %v488 = vld [vmem:[%s315 + $0x189] sm:$0x3f]
      %v489 = vld [vmem:[%s315 + $0x191] sm:$0xff]
      %v490 = vld [vmem:[%s315 + $0x199] sm:$0x3f]
      %v491 = vld [vmem:[%s315 + $0x1a1] sm:$0xff]
      %v492 = vld [vmem:[%s315 + $0x1a9] sm:$0x3f]
      %v493 = vld [vmem:[%s315 + $0x1b1] sm:$0xff]
      %v494 = vld [vmem:[%s315 + $0x1b9] sm:$0x3f]
      %v495 = vld [vmem:[%s320 + $0x1] sm:$0xff]
      %v496 = vld [vmem:[%s320 + $0x9] sm:$0x3f]
      %v497 = vld [vmem:[%s320 + $0x11] sm:$0xff]
      %v498 = vld [vmem:[%s320 + $0x19] sm:$0x3f]
      %v499 = vld [vmem:[%s320 + $0x21] sm:$0xff]
      %v500 = vld [vmem:[%s320 + $0x29] sm:$0x3f]
      %v501 = vld [vmem:[%s320 + $0x31] sm:$0xff]
      %v502 = vld [vmem:[%s320 + $0x39] sm:$0x3f]
      %v503 = vld [vmem:[%s320 + $0x41] sm:$0xff]
      %v504 = vld [vmem:[%s320 + $0x49] sm:$0x3f]
      %v505 = vld [vmem:[%s320 + $0x51] sm:$0xff]
      %v506 = vld [vmem:[%s320 + $0x59] sm:$0x3f]
      %v507 = vld [vmem:[%s320 + $0x61] sm:$0xff]
      %v508 = vld [vmem:[%s320 + $0x69] sm:$0x3f]
      %v509 = vld [vmem:[%s320 + $0x71] sm:$0xff]
      %v510 = vld [vmem:[%s320 + $0x79] sm:$0x3f]
      %v511 = vld [vmem:[%s320 + $0x81] sm:$0xff]
      %v512 = vld [vmem:[%s320 + $0x89] sm:$0x3f]
      %v513 = vld [vmem:[%s320 + $0x91] sm:$0xff]
      %v514 = vld [vmem:[%s320 + $0x99] sm:$0x3f]
      %v515 = vld [vmem:[%s320 + $0xa1] sm:$0xff]
      %v516 = vld [vmem:[%s320 + $0xa9] sm:$0x3f]
      %v517 = vld [vmem:[%s320 + $0xb1] sm:$0xff]
      %v518 = vld [vmem:[%s320 + $0xb9] sm:$0x3f]
      %v519 = vld [vmem:[%s320 + $0xc1] sm:$0xff]
      %v520 = vld [vmem:[%s320 + $0xc9] sm:$0x3f]
      %v521 = vld [vmem:[%s320 + $0xd1] sm:$0xff]
      %v522 = vld [vmem:[%s320 + $0xd9] sm:$0x3f]
      %v523 = vld [vmem:[%s320 + $0xe1] sm:$0xff]
      %v524 = vld [vmem:[%s320 + $0xe9] sm:$0x3f]
      %v525 = vld [vmem:[%s320 + $0xf1] sm:$0xff]
      %v526 = vld [vmem:[%s320 + $0xf9] sm:$0x3f]
      %v527 = vld [vmem:[%s320 + $0x101] sm:$0xff]
      %v528 = vld [vmem:[%s320 + $0x109] sm:$0x3f]
      %v529 = vld [vmem:[%s320 + $0x111] sm:$0xff]
      %v530 = vld [vmem:[%s320 + $0x119] sm:$0x3f]
      %v531 = vld [vmem:[%s320 + $0x121] sm:$0xff]
      %v532 = vld [vmem:[%s320 + $0x129] sm:$0x3f]
      %v533 = vld [vmem:[%s320 + $0x131] sm:$0xff]
      %v534 = vld [vmem:[%s320 + $0x139] sm:$0x3f]
      %v535 = vld [vmem:[%s320 + $0x141] sm:$0xff]
      %v536 = vld [vmem:[%s320 + $0x149] sm:$0x3f]
      %v537 = vld [vmem:[%s320 + $0x151] sm:$0xff]
      %v538 = vld [vmem:[%s320 + $0x159] sm:$0x3f]
      %v539 = vld [vmem:[%s320 + $0x161] sm:$0xff]
      %v540 = vld [vmem:[%s320 + $0x169] sm:$0x3f]
      %v541 = vld [vmem:[%s320 + $0x171] sm:$0xff]
      %v542 = vld [vmem:[%s320 + $0x179] sm:$0x3f]
      %v543 = vld [vmem:[%s320 + $0x181] sm:$0xff]
      %v544 = vld [vmem:[%s320 + $0x189] sm:$0x3f]
      %v545 = vld [vmem:[%s320 + $0x191] sm:$0xff]
      %v546 = vld [vmem:[%s320 + $0x199] sm:$0x3f]
      %v547 = vld [vmem:[%s320 + $0x1a1] sm:$0xff]
      %v548 = vld [vmem:[%s320 + $0x1a9] sm:$0x3f]
      %v549 = vld [vmem:[%s320 + $0x1b1] sm:$0xff]
      %v550 = vld [vmem:[%s320 + $0x1b9] sm:$0x3f]
      %v551 = vld [vmem:[%s2] sm:$0x1]
      %v552 = vld [vmem:[%s2 + $0x1] sm:$0x1]
      %v553 = vld [vmem:[%s2 + $0x2] sm:$0x1]
      %555 = vset.pattern.permute.xlu0 0
      %556 = vperm.xlu0 %555, %v327
      %v557 = vpop.permute.xlu0 %556
      %560 = vset.pattern.permute.xlu0 0
      %561 = vperm.xlu0 %560, %v328
      %v562 = vpop.permute.xlu0 %561
      %565 = vset.pattern.permute.xlu0 0
      %566 = vperm.xlu0 %565, %v329
      %v567 = vpop.permute.xlu0 %566
      %570 = vset.pattern.permute.xlu0 0
      %571 = vperm.xlu0 %570, %v330
      %v572 = vpop.permute.xlu0 %571
      %575 = vset.pattern.permute.xlu0 0
      %576 = vperm.xlu0 %575, %v331
      %v577 = vpop.permute.xlu0 %576
      %580 = vset.pattern.permute.xlu0 0
      %581 = vperm.xlu0 %580, %v332
      %v582 = vpop.permute.xlu0 %581
      %585 = vset.pattern.permute.xlu0 0
      %586 = vperm.xlu0 %585, %v333
      %v587 = vpop.permute.xlu0 %586
      %590 = vset.pattern.permute.xlu0 0
      %591 = vperm.xlu0 %590, %v334
      %v592 = vpop.permute.xlu0 %591
      %595 = vset.pattern.permute.xlu0 0
      %596 = vperm.xlu0 %595, %v335
      %v597 = vpop.permute.xlu0 %596
      %600 = vset.pattern.permute.xlu0 0
      %601 = vperm.xlu0 %600, %v336
      %v602 = vpop.permute.xlu0 %601
      %605 = vset.pattern.permute.xlu0 0
      %606 = vperm.xlu0 %605, %v337
      %v607 = vpop.permute.xlu0 %606
      %610 = vset.pattern.permute.xlu0 0
      %611 = vperm.xlu0 %610, %v338
      %v612 = vpop.permute.xlu0 %611
      %615 = vset.pattern.permute.xlu0 0
      %616 = vperm.xlu0 %615, %v339
      %v617 = vpop.permute.xlu0 %616
      %620 = vset.pattern.permute.xlu0 0
      %621 = vperm.xlu0 %620, %v340
      %v622 = vpop.permute.xlu0 %621
      %625 = vset.pattern.permute.xlu0 0
      %626 = vperm.xlu0 %625, %v341
      %v627 = vpop.permute.xlu0 %626
      %630 = vset.pattern.permute.xlu0 0
      %631 = vperm.xlu0 %630, %v342
      %v632 = vpop.permute.xlu0 %631
      %635 = vset.pattern.permute.xlu0 0
      %636 = vperm.xlu0 %635, %v343
      %v637 = vpop.permute.xlu0 %636
      %640 = vset.pattern.permute.xlu0 0
      %641 = vperm.xlu0 %640, %v344
      %v642 = vpop.permute.xlu0 %641
      %645 = vset.pattern.permute.xlu0 0
      %646 = vperm.xlu0 %645, %v345
      %v647 = vpop.permute.xlu0 %646
      %650 = vset.pattern.permute.xlu0 0
      %651 = vperm.xlu0 %650, %v346
      %v652 = vpop.permute.xlu0 %651
      %655 = vset.pattern.permute.xlu0 0
      %656 = vperm.xlu0 %655, %v347
      %v657 = vpop.permute.xlu0 %656
      %660 = vset.pattern.permute.xlu0 0
      %661 = vperm.xlu0 %660, %v348
      %v662 = vpop.permute.xlu0 %661
      %665 = vset.pattern.permute.xlu0 0
      %666 = vperm.xlu0 %665, %v349
      %v667 = vpop.permute.xlu0 %666
      %670 = vset.pattern.permute.xlu0 0
      %671 = vperm.xlu0 %670, %v350
      %v672 = vpop.permute.xlu0 %671
      %675 = vset.pattern.permute.xlu0 0
      %676 = vperm.xlu0 %675, %v351
      %v677 = vpop.permute.xlu0 %676
      %680 = vset.pattern.permute.xlu0 0
      %681 = vperm.xlu0 %680, %v352
      %v682 = vpop.permute.xlu0 %681
      %685 = vset.pattern.permute.xlu0 0
      %686 = vperm.xlu0 %685, %v353
      %v687 = vpop.permute.xlu0 %686
      %690 = vset.pattern.permute.xlu0 0
      %691 = vperm.xlu0 %690, %v354
      %v692 = vpop.permute.xlu0 %691
      %695 = vset.pattern.permute.xlu0 0
      %696 = vperm.xlu0 %695, %v355
      %v697 = vpop.permute.xlu0 %696
      %700 = vset.pattern.permute.xlu0 0
      %701 = vperm.xlu0 %700, %v356
      %v702 = vpop.permute.xlu0 %701
      %705 = vset.pattern.permute.xlu0 0
      %706 = vperm.xlu0 %705, %v357
      %v707 = vpop.permute.xlu0 %706
      %710 = vset.pattern.permute.xlu0 0
      %711 = vperm.xlu0 %710, %v358
      %v712 = vpop.permute.xlu0 %711
      %715 = vset.pattern.permute.xlu0 0
      %716 = vperm.xlu0 %715, %v359
      %v717 = vpop.permute.xlu0 %716
      %720 = vset.pattern.permute.xlu0 0
      %721 = vperm.xlu0 %720, %v360
      %v722 = vpop.permute.xlu0 %721
      %725 = vset.pattern.permute.xlu0 0
      %726 = vperm.xlu0 %725, %v361
      %v727 = vpop.permute.xlu0 %726
      %730 = vset.pattern.permute.xlu0 0
      %731 = vperm.xlu0 %730, %v362
      %v732 = vpop.permute.xlu0 %731
      %735 = vset.pattern.permute.xlu0 0
      %736 = vperm.xlu0 %735, %v363
      %v737 = vpop.permute.xlu0 %736
      %740 = vset.pattern.permute.xlu0 0
      %741 = vperm.xlu0 %740, %v364
      %v742 = vpop.permute.xlu0 %741
      %745 = vset.pattern.permute.xlu0 0
      %746 = vperm.xlu0 %745, %v365
      %v747 = vpop.permute.xlu0 %746
      %750 = vset.pattern.permute.xlu0 0
      %751 = vperm.xlu0 %750, %v366
      %v752 = vpop.permute.xlu0 %751
      %755 = vset.pattern.permute.xlu0 0
      %756 = vperm.xlu0 %755, %v367
      %v757 = vpop.permute.xlu0 %756
      %760 = vset.pattern.permute.xlu0 0
      %761 = vperm.xlu0 %760, %v368
      %v762 = vpop.permute.xlu0 %761
      %765 = vset.pattern.permute.xlu0 0
      %766 = vperm.xlu0 %765, %v369
      %v767 = vpop.permute.xlu0 %766
      %770 = vset.pattern.permute.xlu0 0
      %771 = vperm.xlu0 %770, %v370
      %v772 = vpop.permute.xlu0 %771
      %775 = vset.pattern.permute.xlu0 0
      %776 = vperm.xlu0 %775, %v371
      %v777 = vpop.permute.xlu0 %776
      %780 = vset.pattern.permute.xlu0 0
      %781 = vperm.xlu0 %780, %v372
      %v782 = vpop.permute.xlu0 %781
      %785 = vset.pattern.permute.xlu0 0
      %786 = vperm.xlu0 %785, %v373
      %v787 = vpop.permute.xlu0 %786
      %790 = vset.pattern.permute.xlu0 0
      %791 = vperm.xlu0 %790, %v374
      %v792 = vpop.permute.xlu0 %791
      %795 = vset.pattern.permute.xlu0 0
      %796 = vperm.xlu0 %795, %v375
      %v797 = vpop.permute.xlu0 %796
      %800 = vset.pattern.permute.xlu0 0
      %801 = vperm.xlu0 %800, %v376
      %v802 = vpop.permute.xlu0 %801
      %805 = vset.pattern.permute.xlu0 0
      %806 = vperm.xlu0 %805, %v377
      %v807 = vpop.permute.xlu0 %806
      %810 = vset.pattern.permute.xlu0 0
      %811 = vperm.xlu0 %810, %v378
      %v812 = vpop.permute.xlu0 %811
      %815 = vset.pattern.permute.xlu0 0
      %816 = vperm.xlu0 %815, %v379
      %v817 = vpop.permute.xlu0 %816
      %820 = vset.pattern.permute.xlu0 0
      %821 = vperm.xlu0 %820, %v380
      %v822 = vpop.permute.xlu0 %821
      %825 = vset.pattern.permute.xlu0 0
      %826 = vperm.xlu0 %825, %v381
      %v827 = vpop.permute.xlu0 %826
      %830 = vset.pattern.permute.xlu0 0
      %831 = vperm.xlu0 %830, %v382
      %v832 = vpop.permute.xlu0 %831
      %v834 = vlaneseq
      %v835 = vshrl.u32 %v834, 7
      %v836 = vsub.s32 0, %v835
      %v837 = vrot.slane %v551, %v836
      %v838 = vmul.f32 %v557, %v837
      %v839 = vmul.f32 %v562, %v837
      %v840 = vmul.f32 %v567, %v837
      %v841 = vmul.f32 %v572, %v837
      %v842 = vmul.f32 %v577, %v837
      %v843 = vmul.f32 %v582, %v837
      %v844 = vmul.f32 %v587, %v837
      %v845 = vmul.f32 %v592, %v837
      %v846 = vmul.f32 %v597, %v837
      %v847 = vmul.f32 %v602, %v837
      %v848 = vmul.f32 %v607, %v837
      %v849 = vmul.f32 %v612, %v837
      %v850 = vmul.f32 %v617, %v837
      %v851 = vmul.f32 %v622, %v837
      %v852 = vmul.f32 %v627, %v837
      %v853 = vmul.f32 %v632, %v837
      %v854 = vmul.f32 %v637, %v837
      %v855 = vmul.f32 %v642, %v837
      %v856 = vmul.f32 %v647, %v837
      %v857 = vmul.f32 %v652, %v837
      %v858 = vmul.f32 %v657, %v837
      %v859 = vmul.f32 %v662, %v837
      %v860 = vmul.f32 %v667, %v837
      %v861 = vmul.f32 %v672, %v837
      %v862 = vmul.f32 %v677, %v837
      %v863 = vmul.f32 %v682, %v837
      %v864 = vmul.f32 %v687, %v837
      %v865 = vmul.f32 %v692, %v837
      %v866 = vmul.f32 %v697, %v837
      %v867 = vmul.f32 %v702, %v837
      %v868 = vmul.f32 %v707, %v837
      %v869 = vmul.f32 %v712, %v837
      %v870 = vmul.f32 %v717, %v837
      %v871 = vmul.f32 %v722, %v837
      %v872 = vmul.f32 %v727, %v837
      %v873 = vmul.f32 %v732, %v837
      %v874 = vmul.f32 %v737, %v837
      %v875 = vmul.f32 %v742, %v837
      %v876 = vmul.f32 %v747, %v837
      %v877 = vmul.f32 %v752, %v837
      %v878 = vmul.f32 %v757, %v837
      %v879 = vmul.f32 %v762, %v837
      %v880 = vmul.f32 %v767, %v837
      %v881 = vmul.f32 %v772, %v837
      %v882 = vmul.f32 %v777, %v837
      %v883 = vmul.f32 %v782, %v837
      %v884 = vmul.f32 %v787, %v837
      %v885 = vmul.f32 %v792, %v837
      %v886 = vmul.f32 %v797, %v837
      %v887 = vmul.f32 %v802, %v837
      %v888 = vmul.f32 %v807, %v837
      %v889 = vmul.f32 %v812, %v837
      %v890 = vmul.f32 %v817, %v837
      %v891 = vmul.f32 %v822, %v837
      %v892 = vmul.f32 %v827, %v837
      %v893 = vmul.f32 %v832, %v837
      %v894 = vadd.f32 %v838, 0.0
      %v895 = vadd.f32 %v839, 0.0
      %v896 = vadd.f32 %v840, 0.0
      %v897 = vadd.f32 %v841, 0.0
      %v898 = vadd.f32 %v842, 0.0
      %v899 = vadd.f32 %v843, 0.0
      %v900 = vadd.f32 %v844, 0.0
      %v901 = vadd.f32 %v845, 0.0
      %v902 = vadd.f32 %v846, 0.0
      %v903 = vadd.f32 %v847, 0.0
      %v904 = vadd.f32 %v848, 0.0
      %v905 = vadd.f32 %v849, 0.0
      %v906 = vadd.f32 %v850, 0.0
      %v907 = vadd.f32 %v851, 0.0
      %v908 = vadd.f32 %v852, 0.0
      %v909 = vadd.f32 %v853, 0.0
      %v910 = vadd.f32 %v854, 0.0
      %v911 = vadd.f32 %v855, 0.0
      %v912 = vadd.f32 %v856, 0.0
      %v913 = vadd.f32 %v857, 0.0
      %v914 = vadd.f32 %v858, 0.0
      %v915 = vadd.f32 %v859, 0.0
      %v916 = vadd.f32 %v860, 0.0
      %v917 = vadd.f32 %v861, 0.0
      %v918 = vadd.f32 %v862, 0.0
      %v919 = vadd.f32 %v863, 0.0
      %v920 = vadd.f32 %v864, 0.0
      %v921 = vadd.f32 %v865, 0.0
      %v922 = vadd.f32 %v866, 0.0
      %v923 = vadd.f32 %v867, 0.0
      %v924 = vadd.f32 %v868, 0.0
      %v925 = vadd.f32 %v869, 0.0
      %v926 = vadd.f32 %v870, 0.0
      %v927 = vadd.f32 %v871, 0.0
      %v928 = vadd.f32 %v872, 0.0
      %v929 = vadd.f32 %v873, 0.0
      %v930 = vadd.f32 %v874, 0.0
      %v931 = vadd.f32 %v875, 0.0
      %v932 = vadd.f32 %v876, 0.0
      %v933 = vadd.f32 %v877, 0.0
      %v934 = vadd.f32 %v878, 0.0
      %v935 = vadd.f32 %v879, 0.0
      %v936 = vadd.f32 %v880, 0.0
      %v937 = vadd.f32 %v881, 0.0
      %v938 = vadd.f32 %v882, 0.0
      %v939 = vadd.f32 %v883, 0.0
      %v940 = vadd.f32 %v884, 0.0
      %v941 = vadd.f32 %v885, 0.0
      %v942 = vadd.f32 %v886, 0.0
      %v943 = vadd.f32 %v887, 0.0
      %v944 = vadd.f32 %v888, 0.0
      %v945 = vadd.f32 %v889, 0.0
      %v946 = vadd.f32 %v890, 0.0
      %v947 = vadd.f32 %v891, 0.0
      %v948 = vadd.f32 %v892, 0.0
      %v949 = vadd.f32 %v893, 0.0
      %951 = vset.pattern.permute.xlu0 0
      %952 = vperm.xlu0 %951, %v383
      %v953 = vpop.permute.xlu0 %952
      %956 = vset.pattern.permute.xlu0 0
      %957 = vperm.xlu0 %956, %v384
      %v958 = vpop.permute.xlu0 %957
      %961 = vset.pattern.permute.xlu0 0
      %962 = vperm.xlu0 %961, %v385
      %v963 = vpop.permute.xlu0 %962
      %966 = vset.pattern.permute.xlu0 0
      %967 = vperm.xlu0 %966, %v386
      %v968 = vpop.permute.xlu0 %967
      %971 = vset.pattern.permute.xlu0 0
      %972 = vperm.xlu0 %971, %v387
      %v973 = vpop.permute.xlu0 %972
      %976 = vset.pattern.permute.xlu0 0
      %977 = vperm.xlu0 %976, %v388
      %v978 = vpop.permute.xlu0 %977
      %981 = vset.pattern.permute.xlu0 0
      %982 = vperm.xlu0 %981, %v389
      %v983 = vpop.permute.xlu0 %982
      %986 = vset.pattern.permute.xlu0 0
      %987 = vperm.xlu0 %986, %v390
      %v988 = vpop.permute.xlu0 %987
      %991 = vset.pattern.permute.xlu0 0
      %992 = vperm.xlu0 %991, %v391
      %v993 = vpop.permute.xlu0 %992
      %996 = vset.pattern.permute.xlu0 0
      %997 = vperm.xlu0 %996, %v392
      %v998 = vpop.permute.xlu0 %997
      %1001 = vset.pattern.permute.xlu0 0
      %1002 = vperm.xlu0 %1001, %v393
      %v1003 = vpop.permute.xlu0 %1002
      %1006 = vset.pattern.permute.xlu0 0
      %1007 = vperm.xlu0 %1006, %v394
      %v1008 = vpop.permute.xlu0 %1007
      %1011 = vset.pattern.permute.xlu0 0
      %1012 = vperm.xlu0 %1011, %v395
      %v1013 = vpop.permute.xlu0 %1012
      %1016 = vset.pattern.permute.xlu0 0
      %1017 = vperm.xlu0 %1016, %v396
      %v1018 = vpop.permute.xlu0 %1017
      %1021 = vset.pattern.permute.xlu0 0
      %1022 = vperm.xlu0 %1021, %v397
      %v1023 = vpop.permute.xlu0 %1022
      %1026 = vset.pattern.permute.xlu0 0
      %1027 = vperm.xlu0 %1026, %v398
      %v1028 = vpop.permute.xlu0 %1027
      %1031 = vset.pattern.permute.xlu0 0
      %1032 = vperm.xlu0 %1031, %v399
      %v1033 = vpop.permute.xlu0 %1032
      %1036 = vset.pattern.permute.xlu0 0
      %1037 = vperm.xlu0 %1036, %v400
      %v1038 = vpop.permute.xlu0 %1037
      %1041 = vset.pattern.permute.xlu0 0
      %1042 = vperm.xlu0 %1041, %v401
      %v1043 = vpop.permute.xlu0 %1042
      %1046 = vset.pattern.permute.xlu0 0
      %1047 = vperm.xlu0 %1046, %v402
      %v1048 = vpop.permute.xlu0 %1047
      %1051 = vset.pattern.permute.xlu0 0
      %1052 = vperm.xlu0 %1051, %v403
      %v1053 = vpop.permute.xlu0 %1052
      %1056 = vset.pattern.permute.xlu0 0
      %1057 = vperm.xlu0 %1056, %v404
      %v1058 = vpop.permute.xlu0 %1057
      %1061 = vset.pattern.permute.xlu0 0
      %1062 = vperm.xlu0 %1061, %v405
      %v1063 = vpop.permute.xlu0 %1062
      %1066 = vset.pattern.permute.xlu0 0
      %1067 = vperm.xlu0 %1066, %v406
      %v1068 = vpop.permute.xlu0 %1067
      %1071 = vset.pattern.permute.xlu0 0
      %1072 = vperm.xlu0 %1071, %v407
      %v1073 = vpop.permute.xlu0 %1072
      %1076 = vset.pattern.permute.xlu0 0
      %1077 = vperm.xlu0 %1076, %v408
      %v1078 = vpop.permute.xlu0 %1077
      %1081 = vset.pattern.permute.xlu0 0
      %1082 = vperm.xlu0 %1081, %v409
      %v1083 = vpop.permute.xlu0 %1082
      %1086 = vset.pattern.permute.xlu0 0
      %1087 = vperm.xlu0 %1086, %v410
      %v1088 = vpop.permute.xlu0 %1087
      %1091 = vset.pattern.permute.xlu0 0
      %1092 = vperm.xlu0 %1091, %v411
      %v1093 = vpop.permute.xlu0 %1092
      %1096 = vset.pattern.permute.xlu0 0
      %1097 = vperm.xlu0 %1096, %v412
      %v1098 = vpop.permute.xlu0 %1097
      %1101 = vset.pattern.permute.xlu0 0
      %1102 = vperm.xlu0 %1101, %v413
      %v1103 = vpop.permute.xlu0 %1102
      %1106 = vset.pattern.permute.xlu0 0
      %1107 = vperm.xlu0 %1106, %v414
      %v1108 = vpop.permute.xlu0 %1107
      %1111 = vset.pattern.permute.xlu0 0
      %1112 = vperm.xlu0 %1111, %v415
      %v1113 = vpop.permute.xlu0 %1112
      %1116 = vset.pattern.permute.xlu0 0
      %1117 = vperm.xlu0 %1116, %v416
      %v1118 = vpop.permute.xlu0 %1117
      %1121 = vset.pattern.permute.xlu0 0
      %1122 = vperm.xlu0 %1121, %v417
      %v1123 = vpop.permute.xlu0 %1122
      %1126 = vset.pattern.permute.xlu0 0
      %1127 = vperm.xlu0 %1126, %v418
      %v1128 = vpop.permute.xlu0 %1127
      %1131 = vset.pattern.permute.xlu0 0
      %1132 = vperm.xlu0 %1131, %v419
      %v1133 = vpop.permute.xlu0 %1132
      %1136 = vset.pattern.permute.xlu0 0
      %1137 = vperm.xlu0 %1136, %v420
      %v1138 = vpop.permute.xlu0 %1137
      %1141 = vset.pattern.permute.xlu0 0
      %1142 = vperm.xlu0 %1141, %v421
      %v1143 = vpop.permute.xlu0 %1142
      %1146 = vset.pattern.permute.xlu0 0
      %1147 = vperm.xlu0 %1146, %v422
      %v1148 = vpop.permute.xlu0 %1147
      %1151 = vset.pattern.permute.xlu0 0
      %1152 = vperm.xlu0 %1151, %v423
      %v1153 = vpop.permute.xlu0 %1152
      %1156 = vset.pattern.permute.xlu0 0
      %1157 = vperm.xlu0 %1156, %v424
      %v1158 = vpop.permute.xlu0 %1157
      %1161 = vset.pattern.permute.xlu0 0
      %1162 = vperm.xlu0 %1161, %v425
      %v1163 = vpop.permute.xlu0 %1162
      %1166 = vset.pattern.permute.xlu0 0
      %1167 = vperm.xlu0 %1166, %v426
      %v1168 = vpop.permute.xlu0 %1167
      %1171 = vset.pattern.permute.xlu0 0
      %1172 = vperm.xlu0 %1171, %v427
      %v1173 = vpop.permute.xlu0 %1172
      %1176 = vset.pattern.permute.xlu0 0
      %1177 = vperm.xlu0 %1176, %v428
      %v1178 = vpop.permute.xlu0 %1177
      %1181 = vset.pattern.permute.xlu0 0
      %1182 = vperm.xlu0 %1181, %v429
      %v1183 = vpop.permute.xlu0 %1182
      %1186 = vset.pattern.permute.xlu0 0
      %1187 = vperm.xlu0 %1186, %v430
      %v1188 = vpop.permute.xlu0 %1187
      %1191 = vset.pattern.permute.xlu0 0
      %1192 = vperm.xlu0 %1191, %v431
      %v1193 = vpop.permute.xlu0 %1192
      %1196 = vset.pattern.permute.xlu0 0
      %1197 = vperm.xlu0 %1196, %v432
      %v1198 = vpop.permute.xlu0 %1197
      %1201 = vset.pattern.permute.xlu0 0
      %1202 = vperm.xlu0 %1201, %v433
      %v1203 = vpop.permute.xlu0 %1202
      %1206 = vset.pattern.permute.xlu0 0
      %1207 = vperm.xlu0 %1206, %v434
      %v1208 = vpop.permute.xlu0 %1207
      %1211 = vset.pattern.permute.xlu0 0
      %1212 = vperm.xlu0 %1211, %v435
      %v1213 = vpop.permute.xlu0 %1212
      %1216 = vset.pattern.permute.xlu0 0
      %1217 = vperm.xlu0 %1216, %v436
      %v1218 = vpop.permute.xlu0 %1217
      %1221 = vset.pattern.permute.xlu0 0
      %1222 = vperm.xlu0 %1221, %v437
      %v1223 = vpop.permute.xlu0 %1222
      %1226 = vset.pattern.permute.xlu0 0
      %1227 = vperm.xlu0 %1226, %v438
      %v1228 = vpop.permute.xlu0 %1227
      %v1230 = vlaneseq
      %v1231 = vshrl.u32 %v1230, 7
      %v1232 = vsub.s32 0, %v1231
      %v1233 = vrot.slane %v552, %v1232
      %v1234 = vmul.f32 %v953, %v1233
      %v1235 = vmul.f32 %v958, %v1233
      %v1236 = vmul.f32 %v963, %v1233
      %v1237 = vmul.f32 %v968, %v1233
      %v1238 = vmul.f32 %v973, %v1233
      %v1239 = vmul.f32 %v978, %v1233
      %v1240 = vmul.f32 %v983, %v1233
      %v1241 = vmul.f32 %v988, %v1233
      %v1242 = vmul.f32 %v993, %v1233
      %v1243 = vmul.f32 %v998, %v1233
      %v1244 = vmul.f32 %v1003, %v1233
      %v1245 = vmul.f32 %v1008, %v1233
      %v1246 = vmul.f32 %v1013, %v1233
      %v1247 = vmul.f32 %v1018, %v1233
      %v1248 = vmul.f32 %v1023, %v1233
      %v1249 = vmul.f32 %v1028, %v1233
      %v1250 = vmul.f32 %v1033, %v1233
      %v1251 = vmul.f32 %v1038, %v1233
      %v1252 = vmul.f32 %v1043, %v1233
      %v1253 = vmul.f32 %v1048, %v1233
      %v1254 = vmul.f32 %v1053, %v1233
      %v1255 = vmul.f32 %v1058, %v1233
      %v1256 = vmul.f32 %v1063, %v1233
      %v1257 = vmul.f32 %v1068, %v1233
      %v1258 = vmul.f32 %v1073, %v1233
      %v1259 = vmul.f32 %v1078, %v1233
      %v1260 = vmul.f32 %v1083, %v1233
      %v1261 = vmul.f32 %v1088, %v1233
      %v1262 = vmul.f32 %v1093, %v1233
      %v1263 = vmul.f32 %v1098, %v1233
      %v1264 = vmul.f32 %v1103, %v1233
      %v1265 = vmul.f32 %v1108, %v1233
      %v1266 = vmul.f32 %v1113, %v1233
      %v1267 = vmul.f32 %v1118, %v1233
      %v1268 = vmul.f32 %v1123, %v1233
      %v1269 = vmul.f32 %v1128, %v1233
      %v1270 = vmul.f32 %v1133, %v1233
      %v1271 = vmul.f32 %v1138, %v1233
      %v1272 = vmul.f32 %v1143, %v1233
      %v1273 = vmul.f32 %v1148, %v1233
      %v1274 = vmul.f32 %v1153, %v1233
      %v1275 = vmul.f32 %v1158, %v1233
      %v1276 = vmul.f32 %v1163, %v1233
      %v1277 = vmul.f32 %v1168, %v1233
      %v1278 = vmul.f32 %v1173, %v1233
      %v1279 = vmul.f32 %v1178, %v1233
      %v1280 = vmul.f32 %v1183, %v1233
      %v1281 = vmul.f32 %v1188, %v1233
      %v1282 = vmul.f32 %v1193, %v1233
      %v1283 = vmul.f32 %v1198, %v1233
      %v1284 = vmul.f32 %v1203, %v1233
      %v1285 = vmul.f32 %v1208, %v1233
      %v1286 = vmul.f32 %v1213, %v1233
      %v1287 = vmul.f32 %v1218, %v1233
      %v1288 = vmul.f32 %v1223, %v1233
      %v1289 = vmul.f32 %v1228, %v1233
      %v1290 = vadd.f32 %v894, %v1234
      %v1291 = vadd.f32 %v895, %v1235
      %v1292 = vadd.f32 %v896, %v1236
      %v1293 = vadd.f32 %v897, %v1237
      %v1294 = vadd.f32 %v898, %v1238
      %v1295 = vadd.f32 %v899, %v1239
      %v1296 = vadd.f32 %v900, %v1240
      %v1297 = vadd.f32 %v901, %v1241
      %v1298 = vadd.f32 %v902, %v1242
      %v1299 = vadd.f32 %v903, %v1243
      %v1300 = vadd.f32 %v904, %v1244
      %v1301 = vadd.f32 %v905, %v1245
      %v1302 = vadd.f32 %v906, %v1246
      %v1303 = vadd.f32 %v907, %v1247
      %v1304 = vadd.f32 %v908, %v1248
      %v1305 = vadd.f32 %v909, %v1249
      %v1306 = vadd.f32 %v910, %v1250
      %v1307 = vadd.f32 %v911, %v1251
      %v1308 = vadd.f32 %v912, %v1252
      %v1309 = vadd.f32 %v913, %v1253
      %v1310 = vadd.f32 %v914, %v1254
      %v1311 = vadd.f32 %v915, %v1255
      %v1312 = vadd.f32 %v916, %v1256
      %v1313 = vadd.f32 %v917, %v1257
      %v1314 = vadd.f32 %v918, %v1258
      %v1315 = vadd.f32 %v919, %v1259
      %v1316 = vadd.f32 %v920, %v1260
      %v1317 = vadd.f32 %v921, %v1261
      %v1318 = vadd.f32 %v922, %v1262
      %v1319 = vadd.f32 %v923, %v1263
      %v1320 = vadd.f32 %v924, %v1264
      %v1321 = vadd.f32 %v925, %v1265
      %v1322 = vadd.f32 %v926, %v1266
      %v1323 = vadd.f32 %v927, %v1267
      %v1324 = vadd.f32 %v928, %v1268
      %v1325 = vadd.f32 %v929, %v1269
      %v1326 = vadd.f32 %v930, %v1270
      %v1327 = vadd.f32 %v931, %v1271
      %v1328 = vadd.f32 %v932, %v1272
      %v1329 = vadd.f32 %v933, %v1273
      %v1330 = vadd.f32 %v934, %v1274
      %v1331 = vadd.f32 %v935, %v1275
      %v1332 = vadd.f32 %v936, %v1276
      %v1333 = vadd.f32 %v937, %v1277
      %v1334 = vadd.f32 %v938, %v1278
      %v1335 = vadd.f32 %v939, %v1279
      %v1336 = vadd.f32 %v940, %v1280
      %v1337 = vadd.f32 %v941, %v1281
      %v1338 = vadd.f32 %v942, %v1282
      %v1339 = vadd.f32 %v943, %v1283
      %v1340 = vadd.f32 %v944, %v1284
      %v1341 = vadd.f32 %v945, %v1285
      %v1342 = vadd.f32 %v946, %v1286
      %v1343 = vadd.f32 %v947, %v1287
      %v1344 = vadd.f32 %v948, %v1288
      %v1345 = vadd.f32 %v949, %v1289
      %1347 = vset.pattern.permute.xlu0 0
      %1348 = vperm.xlu0 %1347, %v439
      %v1349 = vpop.permute.xlu0 %1348
      %1352 = vset.pattern.permute.xlu0 0
      %1353 = vperm.xlu0 %1352, %v440
      %v1354 = vpop.permute.xlu0 %1353
      %1357 = vset.pattern.permute.xlu0 0
      %1358 = vperm.xlu0 %1357, %v441
      %v1359 = vpop.permute.xlu0 %1358
      %1362 = vset.pattern.permute.xlu0 0
      %1363 = vperm.xlu0 %1362, %v442
      %v1364 = vpop.permute.xlu0 %1363
      %1367 = vset.pattern.permute.xlu0 0
      %1368 = vperm.xlu0 %1367, %v443
      %v1369 = vpop.permute.xlu0 %1368
      %1372 = vset.pattern.permute.xlu0 0
      %1373 = vperm.xlu0 %1372, %v444
      %v1374 = vpop.permute.xlu0 %1373
      %1377 = vset.pattern.permute.xlu0 0
      %1378 = vperm.xlu0 %1377, %v445
      %v1379 = vpop.permute.xlu0 %1378
      %1382 = vset.pattern.permute.xlu0 0
      %1383 = vperm.xlu0 %1382, %v446
      %v1384 = vpop.permute.xlu0 %1383
      %1387 = vset.pattern.permute.xlu0 0
      %1388 = vperm.xlu0 %1387, %v447
      %v1389 = vpop.permute.xlu0 %1388
      %1392 = vset.pattern.permute.xlu0 0
      %1393 = vperm.xlu0 %1392, %v448
      %v1394 = vpop.permute.xlu0 %1393
      %1397 = vset.pattern.permute.xlu0 0
      %1398 = vperm.xlu0 %1397, %v449
      %v1399 = vpop.permute.xlu0 %1398
      %1402 = vset.pattern.permute.xlu0 0
      %1403 = vperm.xlu0 %1402, %v450
      %v1404 = vpop.permute.xlu0 %1403
      %1407 = vset.pattern.permute.xlu0 0
      %1408 = vperm.xlu0 %1407, %v451
      %v1409 = vpop.permute.xlu0 %1408
      %1412 = vset.pattern.permute.xlu0 0
      %1413 = vperm.xlu0 %1412, %v452
      %v1414 = vpop.permute.xlu0 %1413
      %1417 = vset.pattern.permute.xlu0 0
      %1418 = vperm.xlu0 %1417, %v453
      %v1419 = vpop.permute.xlu0 %1418
      %1422 = vset.pattern.permute.xlu0 0
      %1423 = vperm.xlu0 %1422, %v454
      %v1424 = vpop.permute.xlu0 %1423
      %1427 = vset.pattern.permute.xlu0 0
      %1428 = vperm.xlu0 %1427, %v455
      %v1429 = vpop.permute.xlu0 %1428
      %1432 = vset.pattern.permute.xlu0 0
      %1433 = vperm.xlu0 %1432, %v456
      %v1434 = vpop.permute.xlu0 %1433
      %1437 = vset.pattern.permute.xlu0 0
      %1438 = vperm.xlu0 %1437, %v457
      %v1439 = vpop.permute.xlu0 %1438
      %1442 = vset.pattern.permute.xlu0 0
      %1443 = vperm.xlu0 %1442, %v458
      %v1444 = vpop.permute.xlu0 %1443
      %1447 = vset.pattern.permute.xlu0 0
      %1448 = vperm.xlu0 %1447, %v459
      %v1449 = vpop.permute.xlu0 %1448
      %1452 = vset.pattern.permute.xlu0 0
      %1453 = vperm.xlu0 %1452, %v460
      %v1454 = vpop.permute.xlu0 %1453
      %1457 = vset.pattern.permute.xlu0 0
      %1458 = vperm.xlu0 %1457, %v461
      %v1459 = vpop.permute.xlu0 %1458
      %1462 = vset.pattern.permute.xlu0 0
      %1463 = vperm.xlu0 %1462, %v462
      %v1464 = vpop.permute.xlu0 %1463
      %1467 = vset.pattern.permute.xlu0 0
      %1468 = vperm.xlu0 %1467, %v463
      %v1469 = vpop.permute.xlu0 %1468
      %1472 = vset.pattern.permute.xlu0 0
      %1473 = vperm.xlu0 %1472, %v464
      %v1474 = vpop.permute.xlu0 %1473
      %1477 = vset.pattern.permute.xlu0 0
      %1478 = vperm.xlu0 %1477, %v465
      %v1479 = vpop.permute.xlu0 %1478
      %1482 = vset.pattern.permute.xlu0 0
      %1483 = vperm.xlu0 %1482, %v466
      %v1484 = vpop.permute.xlu0 %1483
      %1487 = vset.pattern.permute.xlu0 0
      %1488 = vperm.xlu0 %1487, %v467
      %v1489 = vpop.permute.xlu0 %1488
      %1492 = vset.pattern.permute.xlu0 0
      %1493 = vperm.xlu0 %1492, %v468
      %v1494 = vpop.permute.xlu0 %1493
      %1497 = vset.pattern.permute.xlu0 0
      %1498 = vperm.xlu0 %1497, %v469
      %v1499 = vpop.permute.xlu0 %1498
      %1502 = vset.pattern.permute.xlu0 0
      %1503 = vperm.xlu0 %1502, %v470
      %v1504 = vpop.permute.xlu0 %1503
      %1507 = vset.pattern.permute.xlu0 0
      %1508 = vperm.xlu0 %1507, %v471
      %v1509 = vpop.permute.xlu0 %1508
      %1512 = vset.pattern.permute.xlu0 0
      %1513 = vperm.xlu0 %1512, %v472
      %v1514 = vpop.permute.xlu0 %1513
      %1517 = vset.pattern.permute.xlu0 0
      %1518 = vperm.xlu0 %1517, %v473
      %v1519 = vpop.permute.xlu0 %1518
      %1522 = vset.pattern.permute.xlu0 0
      %1523 = vperm.xlu0 %1522, %v474
      %v1524 = vpop.permute.xlu0 %1523
      %1527 = vset.pattern.permute.xlu0 0
      %1528 = vperm.xlu0 %1527, %v475
      %v1529 = vpop.permute.xlu0 %1528
      %1532 = vset.pattern.permute.xlu0 0
      %1533 = vperm.xlu0 %1532, %v476
      %v1534 = vpop.permute.xlu0 %1533
      %1537 = vset.pattern.permute.xlu0 0
      %1538 = vperm.xlu0 %1537, %v477
      %v1539 = vpop.permute.xlu0 %1538
      %1542 = vset.pattern.permute.xlu0 0
      %1543 = vperm.xlu0 %1542, %v478
      %v1544 = vpop.permute.xlu0 %1543
      %1547 = vset.pattern.permute.xlu0 0
      %1548 = vperm.xlu0 %1547, %v479
      %v1549 = vpop.permute.xlu0 %1548
      %1552 = vset.pattern.permute.xlu0 0
      %1553 = vperm.xlu0 %1552, %v480
      %v1554 = vpop.permute.xlu0 %1553
      %1557 = vset.pattern.permute.xlu0 0
      %1558 = vperm.xlu0 %1557, %v481
      %v1559 = vpop.permute.xlu0 %1558
      %1562 = vset.pattern.permute.xlu0 0
      %1563 = vperm.xlu0 %1562, %v482
      %v1564 = vpop.permute.xlu0 %1563
      %1567 = vset.pattern.permute.xlu0 0
      %1568 = vperm.xlu0 %1567, %v483
      %v1569 = vpop.permute.xlu0 %1568
      %1572 = vset.pattern.permute.xlu0 0
      %1573 = vperm.xlu0 %1572, %v484
      %v1574 = vpop.permute.xlu0 %1573
      %1577 = vset.pattern.permute.xlu0 0
      %1578 = vperm.xlu0 %1577, %v485
      %v1579 = vpop.permute.xlu0 %1578
      %1582 = vset.pattern.permute.xlu0 0
      %1583 = vperm.xlu0 %1582, %v486
      %v1584 = vpop.permute.xlu0 %1583
      %1587 = vset.pattern.permute.xlu0 0
      %1588 = vperm.xlu0 %1587, %v487
      %v1589 = vpop.permute.xlu0 %1588
      %1592 = vset.pattern.permute.xlu0 0
      %1593 = vperm.xlu0 %1592, %v488
      %v1594 = vpop.permute.xlu0 %1593
      %1597 = vset.pattern.permute.xlu0 0
      %1598 = vperm.xlu0 %1597, %v489
      %v1599 = vpop.permute.xlu0 %1598
      %1602 = vset.pattern.permute.xlu0 0
      %1603 = vperm.xlu0 %1602, %v490
      %v1604 = vpop.permute.xlu0 %1603
      %1607 = vset.pattern.permute.xlu0 0
      %1608 = vperm.xlu0 %1607, %v491
      %v1609 = vpop.permute.xlu0 %1608
      %1612 = vset.pattern.permute.xlu0 0
      %1613 = vperm.xlu0 %1612, %v492
      %v1614 = vpop.permute.xlu0 %1613
      %1617 = vset.pattern.permute.xlu0 0
      %1618 = vperm.xlu0 %1617, %v493
      %v1619 = vpop.permute.xlu0 %1618
      %1622 = vset.pattern.permute.xlu0 0
      %1623 = vperm.xlu0 %1622, %v494
      %v1624 = vpop.permute.xlu0 %1623
      %v1626 = vlaneseq
      %v1627 = vshrl.u32 %v1626, 7
      %v1628 = vsub.s32 0, %v1627
      %v1629 = vrot.slane %v553, %v1628
      %v1630 = vmul.f32 %v1349, %v1629
      %v1631 = vmul.f32 %v1354, %v1629
      %v1632 = vmul.f32 %v1359, %v1629
      %v1633 = vmul.f32 %v1364, %v1629
      %v1634 = vmul.f32 %v1369, %v1629
      %v1635 = vmul.f32 %v1374, %v1629
      %v1636 = vmul.f32 %v1379, %v1629
      %v1637 = vmul.f32 %v1384, %v1629
      %v1638 = vmul.f32 %v1389, %v1629
      %v1639 = vmul.f32 %v1394, %v1629
      %v1640 = vmul.f32 %v1399, %v1629
      %v1641 = vmul.f32 %v1404, %v1629
      %v1642 = vmul.f32 %v1409, %v1629
      %v1643 = vmul.f32 %v1414, %v1629
      %v1644 = vmul.f32 %v1419, %v1629
      %v1645 = vmul.f32 %v1424, %v1629
      %v1646 = vmul.f32 %v1429, %v1629
      %v1647 = vmul.f32 %v1434, %v1629
      %v1648 = vmul.f32 %v1439, %v1629
      %v1649 = vmul.f32 %v1444, %v1629
      %v1650 = vmul.f32 %v1449, %v1629
      %v1651 = vmul.f32 %v1454, %v1629
      %v1652 = vmul.f32 %v1459, %v1629
      %v1653 = vmul.f32 %v1464, %v1629
      %v1654 = vmul.f32 %v1469, %v1629
      %v1655 = vmul.f32 %v1474, %v1629
      %v1656 = vmul.f32 %v1479, %v1629
      %v1657 = vmul.f32 %v1484, %v1629
      %v1658 = vmul.f32 %v1489, %v1629
      %v1659 = vmul.f32 %v1494, %v1629
      %v1660 = vmul.f32 %v1499, %v1629
      %v1661 = vmul.f32 %v1504, %v1629
      %v1662 = vmul.f32 %v1509, %v1629
      %v1663 = vmul.f32 %v1514, %v1629
      %v1664 = vmul.f32 %v1519, %v1629
      %v1665 = vmul.f32 %v1524, %v1629
      %v1666 = vmul.f32 %v1529, %v1629
      %v1667 = vmul.f32 %v1534, %v1629
      %v1668 = vmul.f32 %v1539, %v1629
      %v1669 = vmul.f32 %v1544, %v1629
      %v1670 = vmul.f32 %v1549, %v1629
      %v1671 = vmul.f32 %v1554, %v1629
      %v1672 = vmul.f32 %v1559, %v1629
      %v1673 = vmul.f32 %v1564, %v1629
      %v1674 = vmul.f32 %v1569, %v1629
      %v1675 = vmul.f32 %v1574, %v1629
      %v1676 = vmul.f32 %v1579, %v1629
      %v1677 = vmul.f32 %v1584, %v1629
      %v1678 = vmul.f32 %v1589, %v1629
      %v1679 = vmul.f32 %v1594, %v1629
      %v1680 = vmul.f32 %v1599, %v1629
      %v1681 = vmul.f32 %v1604, %v1629
      %v1682 = vmul.f32 %v1609, %v1629
      %v1683 = vmul.f32 %v1614, %v1629
      %v1684 = vmul.f32 %v1619, %v1629
      %v1685 = vmul.f32 %v1624, %v1629
      %v1686 = vadd.f32 %v1290, %v1630
      %v1687 = vadd.f32 %v1291, %v1631
      %v1688 = vadd.f32 %v1292, %v1632
      %v1689 = vadd.f32 %v1293, %v1633
      %v1690 = vadd.f32 %v1294, %v1634
      %v1691 = vadd.f32 %v1295, %v1635
      %v1692 = vadd.f32 %v1296, %v1636
      %v1693 = vadd.f32 %v1297, %v1637
      %v1694 = vadd.f32 %v1298, %v1638
      %v1695 = vadd.f32 %v1299, %v1639
      %v1696 = vadd.f32 %v1300, %v1640
      %v1697 = vadd.f32 %v1301, %v1641
      %v1698 = vadd.f32 %v1302, %v1642
      %v1699 = vadd.f32 %v1303, %v1643
      %v1700 = vadd.f32 %v1304, %v1644
      %v1701 = vadd.f32 %v1305, %v1645
      %v1702 = vadd.f32 %v1306, %v1646
      %v1703 = vadd.f32 %v1307, %v1647
      %v1704 = vadd.f32 %v1308, %v1648
      %v1705 = vadd.f32 %v1309, %v1649
      %v1706 = vadd.f32 %v1310, %v1650
      %v1707 = vadd.f32 %v1311, %v1651
      %v1708 = vadd.f32 %v1312, %v1652
      %v1709 = vadd.f32 %v1313, %v1653
      %v1710 = vadd.f32 %v1314, %v1654
      %v1711 = vadd.f32 %v1315, %v1655
      %v1712 = vadd.f32 %v1316, %v1656
      %v1713 = vadd.f32 %v1317, %v1657
      %v1714 = vadd.f32 %v1318, %v1658
      %v1715 = vadd.f32 %v1319, %v1659
      %v1716 = vadd.f32 %v1320, %v1660
      %v1717 = vadd.f32 %v1321, %v1661
      %v1718 = vadd.f32 %v1322, %v1662
      %v1719 = vadd.f32 %v1323, %v1663
      %v1720 = vadd.f32 %v1324, %v1664
      %v1721 = vadd.f32 %v1325, %v1665
      %v1722 = vadd.f32 %v1326, %v1666
      %v1723 = vadd.f32 %v1327, %v1667
      %v1724 = vadd.f32 %v1328, %v1668
      %v1725 = vadd.f32 %v1329, %v1669
      %v1726 = vadd.f32 %v1330, %v1670
      %v1727 = vadd.f32 %v1331, %v1671
      %v1728 = vadd.f32 %v1332, %v1672
      %v1729 = vadd.f32 %v1333, %v1673
      %v1730 = vadd.f32 %v1334, %v1674
      %v1731 = vadd.f32 %v1335, %v1675
      %v1732 = vadd.f32 %v1336, %v1676
      %v1733 = vadd.f32 %v1337, %v1677
      %v1734 = vadd.f32 %v1338, %v1678
      %v1735 = vadd.f32 %v1339, %v1679
      %v1736 = vadd.f32 %v1340, %v1680
      %v1737 = vadd.f32 %v1341, %v1681
      %v1738 = vadd.f32 %v1342, %v1682
      %v1739 = vadd.f32 %v1343, %v1683
      %v1740 = vadd.f32 %v1344, %v1684
      %v1741 = vadd.f32 %v1345, %v1685
      %v1742 = vmul.f32 %v953, %v837
      %v1743 = vmul.f32 %v958, %v837
      %v1744 = vmul.f32 %v963, %v837
      %v1745 = vmul.f32 %v968, %v837
      %v1746 = vmul.f32 %v973, %v837
      %v1747 = vmul.f32 %v978, %v837
      %v1748 = vmul.f32 %v983, %v837
      %v1749 = vmul.f32 %v988, %v837
      %v1750 = vmul.f32 %v993, %v837
      %v1751 = vmul.f32 %v998, %v837
      %v1752 = vmul.f32 %v1003, %v837
      %v1753 = vmul.f32 %v1008, %v837
      %v1754 = vmul.f32 %v1013, %v837
      %v1755 = vmul.f32 %v1018, %v837
      %v1756 = vmul.f32 %v1023, %v837
      %v1757 = vmul.f32 %v1028, %v837
      %v1758 = vmul.f32 %v1033, %v837
      %v1759 = vmul.f32 %v1038, %v837
      %v1760 = vmul.f32 %v1043, %v837
      %v1761 = vmul.f32 %v1048, %v837
      %v1762 = vmul.f32 %v1053, %v837
      %v1763 = vmul.f32 %v1058, %v837
      %v1764 = vmul.f32 %v1063, %v837
      %v1765 = vmul.f32 %v1068, %v837
      %v1766 = vmul.f32 %v1073, %v837
      %v1767 = vmul.f32 %v1078, %v837
      %v1768 = vmul.f32 %v1083, %v837
      %v1769 = vmul.f32 %v1088, %v837
      %v1770 = vmul.f32 %v1093, %v837
      %v1771 = vmul.f32 %v1098, %v837
      %v1772 = vmul.f32 %v1103, %v837
      %v1773 = vmul.f32 %v1108, %v837
      %v1774 = vmul.f32 %v1113, %v837
      %v1775 = vmul.f32 %v1118, %v837
      %v1776 = vmul.f32 %v1123, %v837
      %v1777 = vmul.f32 %v1128, %v837
      %v1778 = vmul.f32 %v1133, %v837
      %v1779 = vmul.f32 %v1138, %v837
      %v1780 = vmul.f32 %v1143, %v837
      %v1781 = vmul.f32 %v1148, %v837
      %v1782 = vmul.f32 %v1153, %v837
      %v1783 = vmul.f32 %v1158, %v837
      %v1784 = vmul.f32 %v1163, %v837
      %v1785 = vmul.f32 %v1168, %v837
      %v1786 = vmul.f32 %v1173, %v837
      %v1787 = vmul.f32 %v1178, %v837
      %v1788 = vmul.f32 %v1183, %v837
      %v1789 = vmul.f32 %v1188, %v837
      %v1790 = vmul.f32 %v1193, %v837
      %v1791 = vmul.f32 %v1198, %v837
      %v1792 = vmul.f32 %v1203, %v837
      %v1793 = vmul.f32 %v1208, %v837
      %v1794 = vmul.f32 %v1213, %v837
      %v1795 = vmul.f32 %v1218, %v837
      %v1796 = vmul.f32 %v1223, %v837
      %v1797 = vmul.f32 %v1228, %v837
      %v1798 = vadd.f32 %v1742, 0.0
      %v1799 = vadd.f32 %v1743, 0.0
      %v1800 = vadd.f32 %v1744, 0.0
      %v1801 = vadd.f32 %v1745, 0.0
      %v1802 = vadd.f32 %v1746, 0.0
      %v1803 = vadd.f32 %v1747, 0.0
      %v1804 = vadd.f32 %v1748, 0.0
      %v1805 = vadd.f32 %v1749, 0.0
      %v1806 = vadd.f32 %v1750, 0.0
      %v1807 = vadd.f32 %v1751, 0.0
      %v1808 = vadd.f32 %v1752, 0.0
      %v1809 = vadd.f32 %v1753, 0.0
      %v1810 = vadd.f32 %v1754, 0.0
      %v1811 = vadd.f32 %v1755, 0.0
      %v1812 = vadd.f32 %v1756, 0.0
      %v1813 = vadd.f32 %v1757, 0.0
      %v1814 = vadd.f32 %v1758, 0.0
      %v1815 = vadd.f32 %v1759, 0.0
      %v1816 = vadd.f32 %v1760, 0.0
      %v1817 = vadd.f32 %v1761, 0.0
      %v1818 = vadd.f32 %v1762, 0.0
      %v1819 = vadd.f32 %v1763, 0.0
      %v1820 = vadd.f32 %v1764, 0.0
      %v1821 = vadd.f32 %v1765, 0.0
      %v1822 = vadd.f32 %v1766, 0.0
      %v1823 = vadd.f32 %v1767, 0.0
      %v1824 = vadd.f32 %v1768, 0.0
      %v1825 = vadd.f32 %v1769, 0.0
      %v1826 = vadd.f32 %v1770, 0.0
      %v1827 = vadd.f32 %v1771, 0.0
      %v1828 = vadd.f32 %v1772, 0.0
      %v1829 = vadd.f32 %v1773, 0.0
      %v1830 = vadd.f32 %v1774, 0.0
      %v1831 = vadd.f32 %v1775, 0.0
      %v1832 = vadd.f32 %v1776, 0.0
      %v1833 = vadd.f32 %v1777, 0.0
      %v1834 = vadd.f32 %v1778, 0.0
      %v1835 = vadd.f32 %v1779, 0.0
      %v1836 = vadd.f32 %v1780, 0.0
      %v1837 = vadd.f32 %v1781, 0.0
      %v1838 = vadd.f32 %v1782, 0.0
      %v1839 = vadd.f32 %v1783, 0.0
      %v1840 = vadd.f32 %v1784, 0.0
      %v1841 = vadd.f32 %v1785, 0.0
      %v1842 = vadd.f32 %v1786, 0.0
      %v1843 = vadd.f32 %v1787, 0.0
      %v1844 = vadd.f32 %v1788, 0.0
      %v1845 = vadd.f32 %v1789, 0.0
      %v1846 = vadd.f32 %v1790, 0.0
      %v1847 = vadd.f32 %v1791, 0.0
      %v1848 = vadd.f32 %v1792, 0.0
      %v1849 = vadd.f32 %v1793, 0.0
      %v1850 = vadd.f32 %v1794, 0.0
      %v1851 = vadd.f32 %v1795, 0.0
      %v1852 = vadd.f32 %v1796, 0.0
      %v1853 = vadd.f32 %v1797, 0.0
      %v1854 = vmul.f32 %v1349, %v1233
      %v1855 = vmul.f32 %v1354, %v1233
      %v1856 = vmul.f32 %v1359, %v1233
      %v1857 = vmul.f32 %v1364, %v1233
      %v1858 = vmul.f32 %v1369, %v1233
      %v1859 = vmul.f32 %v1374, %v1233
      %v1860 = vmul.f32 %v1379, %v1233
      %v1861 = vmul.f32 %v1384, %v1233
      %v1862 = vmul.f32 %v1389, %v1233
      %v1863 = vmul.f32 %v1394, %v1233
      %v1864 = vmul.f32 %v1399, %v1233
      %v1865 = vmul.f32 %v1404, %v1233
      %v1866 = vmul.f32 %v1409, %v1233
      %v1867 = vmul.f32 %v1414, %v1233
      %v1868 = vmul.f32 %v1419, %v1233
      %v1869 = vmul.f32 %v1424, %v1233
      %v1870 = vmul.f32 %v1429, %v1233
      %v1871 = vmul.f32 %v1434, %v1233
      %v1872 = vmul.f32 %v1439, %v1233
      %v1873 = vmul.f32 %v1444, %v1233
      %v1874 = vmul.f32 %v1449, %v1233
      %v1875 = vmul.f32 %v1454, %v1233
      %v1876 = vmul.f32 %v1459, %v1233
      %v1877 = vmul.f32 %v1464, %v1233
      %v1878 = vmul.f32 %v1469, %v1233
      %v1879 = vmul.f32 %v1474, %v1233
      %v1880 = vmul.f32 %v1479, %v1233
      %v1881 = vmul.f32 %v1484, %v1233
      %v1882 = vmul.f32 %v1489, %v1233
      %v1883 = vmul.f32 %v1494, %v1233
      %v1884 = vmul.f32 %v1499, %v1233
      %v1885 = vmul.f32 %v1504, %v1233
      %v1886 = vmul.f32 %v1509, %v1233
      %v1887 = vmul.f32 %v1514, %v1233
      %v1888 = vmul.f32 %v1519, %v1233
      %v1889 = vmul.f32 %v1524, %v1233
      %v1890 = vmul.f32 %v1529, %v1233
      %v1891 = vmul.f32 %v1534, %v1233
      %v1892 = vmul.f32 %v1539, %v1233
      %v1893 = vmul.f32 %v1544, %v1233
      %v1894 = vmul.f32 %v1549, %v1233
      %v1895 = vmul.f32 %v1554, %v1233
      %v1896 = vmul.f32 %v1559, %v1233
      %v1897 = vmul.f32 %v1564, %v1233
      %v1898 = vmul.f32 %v1569, %v1233
      %v1899 = vmul.f32 %v1574, %v1233
      %v1900 = vmul.f32 %v1579, %v1233
      %v1901 = vmul.f32 %v1584, %v1233
      %v1902 = vmul.f32 %v1589, %v1233
      %v1903 = vmul.f32 %v1594, %v1233
      %v1904 = vmul.f32 %v1599, %v1233
      %v1905 = vmul.f32 %v1604, %v1233
      %v1906 = vmul.f32 %v1609, %v1233
      %v1907 = vmul.f32 %v1614, %v1233
      %v1908 = vmul.f32 %v1619, %v1233
      %v1909 = vmul.f32 %v1624, %v1233
      %v1910 = vadd.f32 %v1798, %v1854
      %v1911 = vadd.f32 %v1799, %v1855
      %v1912 = vadd.f32 %v1800, %v1856
      %v1913 = vadd.f32 %v1801, %v1857
      %v1914 = vadd.f32 %v1802, %v1858
      %v1915 = vadd.f32 %v1803, %v1859
      %v1916 = vadd.f32 %v1804, %v1860
      %v1917 = vadd.f32 %v1805, %v1861
      %v1918 = vadd.f32 %v1806, %v1862
      %v1919 = vadd.f32 %v1807, %v1863
      %v1920 = vadd.f32 %v1808, %v1864
      %v1921 = vadd.f32 %v1809, %v1865
      %v1922 = vadd.f32 %v1810, %v1866
      %v1923 = vadd.f32 %v1811, %v1867
      %v1924 = vadd.f32 %v1812, %v1868
      %v1925 = vadd.f32 %v1813, %v1869
      %v1926 = vadd.f32 %v1814, %v1870
      %v1927 = vadd.f32 %v1815, %v1871
      %v1928 = vadd.f32 %v1816, %v1872
      %v1929 = vadd.f32 %v1817, %v1873
      %v1930 = vadd.f32 %v1818, %v1874
      %v1931 = vadd.f32 %v1819, %v1875
      %v1932 = vadd.f32 %v1820, %v1876
      %v1933 = vadd.f32 %v1821, %v1877
      %v1934 = vadd.f32 %v1822, %v1878
      %v1935 = vadd.f32 %v1823, %v1879
      %v1936 = vadd.f32 %v1824, %v1880
      %v1937 = vadd.f32 %v1825, %v1881
      %v1938 = vadd.f32 %v1826, %v1882
      %v1939 = vadd.f32 %v1827, %v1883
      %v1940 = vadd.f32 %v1828, %v1884
      %v1941 = vadd.f32 %v1829, %v1885
      %v1942 = vadd.f32 %v1830, %v1886
      %v1943 = vadd.f32 %v1831, %v1887
      %v1944 = vadd.f32 %v1832, %v1888
      %v1945 = vadd.f32 %v1833, %v1889
      %v1946 = vadd.f32 %v1834, %v1890
      %v1947 = vadd.f32 %v1835, %v1891
      %v1948 = vadd.f32 %v1836, %v1892
      %v1949 = vadd.f32 %v1837, %v1893
      %v1950 = vadd.f32 %v1838, %v1894
      %v1951 = vadd.f32 %v1839, %v1895
      %v1952 = vadd.f32 %v1840, %v1896
      %v1953 = vadd.f32 %v1841, %v1897
      %v1954 = vadd.f32 %v1842, %v1898
      %v1955 = vadd.f32 %v1843, %v1899
      %v1956 = vadd.f32 %v1844, %v1900
      %v1957 = vadd.f32 %v1845, %v1901
      %v1958 = vadd.f32 %v1846, %v1902
      %v1959 = vadd.f32 %v1847, %v1903
      %v1960 = vadd.f32 %v1848, %v1904
      %v1961 = vadd.f32 %v1849, %v1905
      %v1962 = vadd.f32 %v1850, %v1906
      %v1963 = vadd.f32 %v1851, %v1907
      %v1964 = vadd.f32 %v1852, %v1908
      %v1965 = vadd.f32 %v1853, %v1909
      %1967 = vset.pattern.permute.xlu0 0
      %1968 = vperm.xlu0 %1967, %v495
      %v1969 = vpop.permute.xlu0 %1968
      %1972 = vset.pattern.permute.xlu0 0
      %1973 = vperm.xlu0 %1972, %v496
      %v1974 = vpop.permute.xlu0 %1973
      %1977 = vset.pattern.permute.xlu0 0
      %1978 = vperm.xlu0 %1977, %v497
      %v1979 = vpop.permute.xlu0 %1978
      %1982 = vset.pattern.permute.xlu0 0
      %1983 = vperm.xlu0 %1982, %v498
      %v1984 = vpop.permute.xlu0 %1983
      %1987 = vset.pattern.permute.xlu0 0
      %1988 = vperm.xlu0 %1987, %v499
      %v1989 = vpop.permute.xlu0 %1988
      %1992 = vset.pattern.permute.xlu0 0
      %1993 = vperm.xlu0 %1992, %v500
      %v1994 = vpop.permute.xlu0 %1993
      %1997 = vset.pattern.permute.xlu0 0
      %1998 = vperm.xlu0 %1997, %v501
      %v1999 = vpop.permute.xlu0 %1998
      %2002 = vset.pattern.permute.xlu0 0
      %2003 = vperm.xlu0 %2002, %v502
      %v2004 = vpop.permute.xlu0 %2003
      %2007 = vset.pattern.permute.xlu0 0
      %2008 = vperm.xlu0 %2007, %v503
      %v2009 = vpop.permute.xlu0 %2008
      %2012 = vset.pattern.permute.xlu0 0
      %2013 = vperm.xlu0 %2012, %v504
      %v2014 = vpop.permute.xlu0 %2013
      %2017 = vset.pattern.permute.xlu0 0
      %2018 = vperm.xlu0 %2017, %v505
      %v2019 = vpop.permute.xlu0 %2018
      %2022 = vset.pattern.permute.xlu0 0
      %2023 = vperm.xlu0 %2022, %v506
      %v2024 = vpop.permute.xlu0 %2023
      %2027 = vset.pattern.permute.xlu0 0
      %2028 = vperm.xlu0 %2027, %v507
      %v2029 = vpop.permute.xlu0 %2028
      %2032 = vset.pattern.permute.xlu0 0
      %2033 = vperm.xlu0 %2032, %v508
      %v2034 = vpop.permute.xlu0 %2033
      %2037 = vset.pattern.permute.xlu0 0
      %2038 = vperm.xlu0 %2037, %v509
      %v2039 = vpop.permute.xlu0 %2038
      %2042 = vset.pattern.permute.xlu0 0
      %2043 = vperm.xlu0 %2042, %v510
      %v2044 = vpop.permute.xlu0 %2043
      %2047 = vset.pattern.permute.xlu0 0
      %2048 = vperm.xlu0 %2047, %v511
      %v2049 = vpop.permute.xlu0 %2048
      %2052 = vset.pattern.permute.xlu0 0
      %2053 = vperm.xlu0 %2052, %v512
      %v2054 = vpop.permute.xlu0 %2053
      %2057 = vset.pattern.permute.xlu0 0
      %2058 = vperm.xlu0 %2057, %v513
      %v2059 = vpop.permute.xlu0 %2058
      %2062 = vset.pattern.permute.xlu0 0
      %2063 = vperm.xlu0 %2062, %v514
      %v2064 = vpop.permute.xlu0 %2063
      %2067 = vset.pattern.permute.xlu0 0
      %2068 = vperm.xlu0 %2067, %v515
      %v2069 = vpop.permute.xlu0 %2068
      %2072 = vset.pattern.permute.xlu0 0
      %2073 = vperm.xlu0 %2072, %v516
      %v2074 = vpop.permute.xlu0 %2073
      %2077 = vset.pattern.permute.xlu0 0
      %2078 = vperm.xlu0 %2077, %v517
      %v2079 = vpop.permute.xlu0 %2078
      %2082 = vset.pattern.permute.xlu0 0
      %2083 = vperm.xlu0 %2082, %v518
      %v2084 = vpop.permute.xlu0 %2083
      %2087 = vset.pattern.permute.xlu0 0
      %2088 = vperm.xlu0 %2087, %v519
      %v2089 = vpop.permute.xlu0 %2088
      %2092 = vset.pattern.permute.xlu0 0
      %2093 = vperm.xlu0 %2092, %v520
      %v2094 = vpop.permute.xlu0 %2093
      %2097 = vset.pattern.permute.xlu0 0
      %2098 = vperm.xlu0 %2097, %v521
      %v2099 = vpop.permute.xlu0 %2098
      %2102 = vset.pattern.permute.xlu0 0
      %2103 = vperm.xlu0 %2102, %v522
      %v2104 = vpop.permute.xlu0 %2103
      %2107 = vset.pattern.permute.xlu0 0
      %2108 = vperm.xlu0 %2107, %v523
      %v2109 = vpop.permute.xlu0 %2108
      %2112 = vset.pattern.permute.xlu0 0
      %2113 = vperm.xlu0 %2112, %v524
      %v2114 = vpop.permute.xlu0 %2113
      %2117 = vset.pattern.permute.xlu0 0
      %2118 = vperm.xlu0 %2117, %v525
      %v2119 = vpop.permute.xlu0 %2118
      %2122 = vset.pattern.permute.xlu0 0
      %2123 = vperm.xlu0 %2122, %v526
      %v2124 = vpop.permute.xlu0 %2123
      %2127 = vset.pattern.permute.xlu0 0
      %2128 = vperm.xlu0 %2127, %v527
      %v2129 = vpop.permute.xlu0 %2128
      %2132 = vset.pattern.permute.xlu0 0
      %2133 = vperm.xlu0 %2132, %v528
      %v2134 = vpop.permute.xlu0 %2133
      %2137 = vset.pattern.permute.xlu0 0
      %2138 = vperm.xlu0 %2137, %v529
      %v2139 = vpop.permute.xlu0 %2138
      %2142 = vset.pattern.permute.xlu0 0
      %2143 = vperm.xlu0 %2142, %v530
      %v2144 = vpop.permute.xlu0 %2143
      %2147 = vset.pattern.permute.xlu0 0
      %2148 = vperm.xlu0 %2147, %v531
      %v2149 = vpop.permute.xlu0 %2148
      %2152 = vset.pattern.permute.xlu0 0
      %2153 = vperm.xlu0 %2152, %v532
      %v2154 = vpop.permute.xlu0 %2153
      %2157 = vset.pattern.permute.xlu0 0
      %2158 = vperm.xlu0 %2157, %v533
      %v2159 = vpop.permute.xlu0 %2158
      %2162 = vset.pattern.permute.xlu0 0
      %2163 = vperm.xlu0 %2162, %v534
      %v2164 = vpop.permute.xlu0 %2163
      %2167 = vset.pattern.permute.xlu0 0
      %2168 = vperm.xlu0 %2167, %v535
      %v2169 = vpop.permute.xlu0 %2168
      %2172 = vset.pattern.permute.xlu0 0
      %2173 = vperm.xlu0 %2172, %v536
      %v2174 = vpop.permute.xlu0 %2173
      %2177 = vset.pattern.permute.xlu0 0
      %2178 = vperm.xlu0 %2177, %v537
      %v2179 = vpop.permute.xlu0 %2178
      %2182 = vset.pattern.permute.xlu0 0
      %2183 = vperm.xlu0 %2182, %v538
      %v2184 = vpop.permute.xlu0 %2183
      %2187 = vset.pattern.permute.xlu0 0
      %2188 = vperm.xlu0 %2187, %v539
      %v2189 = vpop.permute.xlu0 %2188
      %2192 = vset.pattern.permute.xlu0 0
      %2193 = vperm.xlu0 %2192, %v540
      %v2194 = vpop.permute.xlu0 %2193
      %2197 = vset.pattern.permute.xlu0 0
      %2198 = vperm.xlu0 %2197, %v541
      %v2199 = vpop.permute.xlu0 %2198
      %2202 = vset.pattern.permute.xlu0 0
      %2203 = vperm.xlu0 %2202, %v542
      %v2204 = vpop.permute.xlu0 %2203
      %2207 = vset.pattern.permute.xlu0 0
      %2208 = vperm.xlu0 %2207, %v543
      %v2209 = vpop.permute.xlu0 %2208
      %2212 = vset.pattern.permute.xlu0 0
      %2213 = vperm.xlu0 %2212, %v544
      %v2214 = vpop.permute.xlu0 %2213
      %2217 = vset.pattern.permute.xlu0 0
      %2218 = vperm.xlu0 %2217, %v545
      %v2219 = vpop.permute.xlu0 %2218
      %2222 = vset.pattern.permute.xlu0 0
      %2223 = vperm.xlu0 %2222, %v546
      %v2224 = vpop.permute.xlu0 %2223
      %2227 = vset.pattern.permute.xlu0 0
      %2228 = vperm.xlu0 %2227, %v547
      %v2229 = vpop.permute.xlu0 %2228
      %2232 = vset.pattern.permute.xlu0 0
      %2233 = vperm.xlu0 %2232, %v548
      %v2234 = vpop.permute.xlu0 %2233
      %2237 = vset.pattern.permute.xlu0 0
      %2238 = vperm.xlu0 %2237, %v549
      %v2239 = vpop.permute.xlu0 %2238
      %2242 = vset.pattern.permute.xlu0 0
      %2243 = vperm.xlu0 %2242, %v550
      %v2244 = vpop.permute.xlu0 %2243
      %v2246 = vmul.f32 %v1969, %v1629
      %v2247 = vmul.f32 %v1974, %v1629
      %v2248 = vmul.f32 %v1979, %v1629
      %v2249 = vmul.f32 %v1984, %v1629
      %v2250 = vmul.f32 %v1989, %v1629
      %v2251 = vmul.f32 %v1994, %v1629
      %v2252 = vmul.f32 %v1999, %v1629
      %v2253 = vmul.f32 %v2004, %v1629
      %v2254 = vmul.f32 %v2009, %v1629
      %v2255 = vmul.f32 %v2014, %v1629
      %v2256 = vmul.f32 %v2019, %v1629
      %v2257 = vmul.f32 %v2024, %v1629
      %v2258 = vmul.f32 %v2029, %v1629
      %v2259 = vmul.f32 %v2034, %v1629
      %v2260 = vmul.f32 %v2039, %v1629
      %v2261 = vmul.f32 %v2044, %v1629
      %v2262 = vmul.f32 %v2049, %v1629
      %v2263 = vmul.f32 %v2054, %v1629
      %v2264 = vmul.f32 %v2059, %v1629
      %v2265 = vmul.f32 %v2064, %v1629
      %v2266 = vmul.f32 %v2069, %v1629
      %v2267 = vmul.f32 %v2074, %v1629
      %v2268 = vmul.f32 %v2079, %v1629
      %v2269 = vmul.f32 %v2084, %v1629
      %v2270 = vmul.f32 %v2089, %v1629
      %v2271 = vmul.f32 %v2094, %v1629
      %v2272 = vmul.f32 %v2099, %v1629
      %v2273 = vmul.f32 %v2104, %v1629
      %v2274 = vmul.f32 %v2109, %v1629
      %v2275 = vmul.f32 %v2114, %v1629
      %v2276 = vmul.f32 %v2119, %v1629
      %v2277 = vmul.f32 %v2124, %v1629
      %v2278 = vmul.f32 %v2129, %v1629
      %v2279 = vmul.f32 %v2134, %v1629
      %v2280 = vmul.f32 %v2139, %v1629
      %v2281 = vmul.f32 %v2144, %v1629
      %v2282 = vmul.f32 %v2149, %v1629
      %v2283 = vmul.f32 %v2154, %v1629
      %v2284 = vmul.f32 %v2159, %v1629
      %v2285 = vmul.f32 %v2164, %v1629
      %v2286 = vmul.f32 %v2169, %v1629
      %v2287 = vmul.f32 %v2174, %v1629
      %v2288 = vmul.f32 %v2179, %v1629
      %v2289 = vmul.f32 %v2184, %v1629
      %v2290 = vmul.f32 %v2189, %v1629
      %v2291 = vmul.f32 %v2194, %v1629
      %v2292 = vmul.f32 %v2199, %v1629
      %v2293 = vmul.f32 %v2204, %v1629
      %v2294 = vmul.f32 %v2209, %v1629
      %v2295 = vmul.f32 %v2214, %v1629
      %v2296 = vmul.f32 %v2219, %v1629
      %v2297 = vmul.f32 %v2224, %v1629
      %v2298 = vmul.f32 %v2229, %v1629
      %v2299 = vmul.f32 %v2234, %v1629
      %v2300 = vmul.f32 %v2239, %v1629
      %v2301 = vmul.f32 %v2244, %v1629
      %v2302 = vadd.f32 %v1910, %v2246
      %v2303 = vadd.f32 %v1911, %v2247
      %v2304 = vadd.f32 %v1912, %v2248
      %v2305 = vadd.f32 %v1913, %v2249
      %v2306 = vadd.f32 %v1914, %v2250
      %v2307 = vadd.f32 %v1915, %v2251
      %v2308 = vadd.f32 %v1916, %v2252
      %v2309 = vadd.f32 %v1917, %v2253
      %v2310 = vadd.f32 %v1918, %v2254
      %v2311 = vadd.f32 %v1919, %v2255
      %v2312 = vadd.f32 %v1920, %v2256
      %v2313 = vadd.f32 %v1921, %v2257
      %v2314 = vadd.f32 %v1922, %v2258
      %v2315 = vadd.f32 %v1923, %v2259
      %v2316 = vadd.f32 %v1924, %v2260
      %v2317 = vadd.f32 %v1925, %v2261
      %v2318 = vadd.f32 %v1926, %v2262
      %v2319 = vadd.f32 %v1927, %v2263
      %v2320 = vadd.f32 %v1928, %v2264
      %v2321 = vadd.f32 %v1929, %v2265
      %v2322 = vadd.f32 %v1930, %v2266
      %v2323 = vadd.f32 %v1931, %v2267
      %v2324 = vadd.f32 %v1932, %v2268
      %v2325 = vadd.f32 %v1933, %v2269
      %v2326 = vadd.f32 %v1934, %v2270
      %v2327 = vadd.f32 %v1935, %v2271
      %v2328 = vadd.f32 %v1936, %v2272
      %v2329 = vadd.f32 %v1937, %v2273
      %v2330 = vadd.f32 %v1938, %v2274
      %v2331 = vadd.f32 %v1939, %v2275
      %v2332 = vadd.f32 %v1940, %v2276
      %v2333 = vadd.f32 %v1941, %v2277
      %v2334 = vadd.f32 %v1942, %v2278
      %v2335 = vadd.f32 %v1943, %v2279
      %v2336 = vadd.f32 %v1944, %v2280
      %v2337 = vadd.f32 %v1945, %v2281
      %v2338 = vadd.f32 %v1946, %v2282
      %v2339 = vadd.f32 %v1947, %v2283
      %v2340 = vadd.f32 %v1948, %v2284
      %v2341 = vadd.f32 %v1949, %v2285
      %v2342 = vadd.f32 %v1950, %v2286
      %v2343 = vadd.f32 %v1951, %v2287
      %v2344 = vadd.f32 %v1952, %v2288
      %v2345 = vadd.f32 %v1953, %v2289
      %v2346 = vadd.f32 %v1954, %v2290
      %v2347 = vadd.f32 %v1955, %v2291
      %v2348 = vadd.f32 %v1956, %v2292
      %v2349 = vadd.f32 %v1957, %v2293
      %v2350 = vadd.f32 %v1958, %v2294
      %v2351 = vadd.f32 %v1959, %v2295
      %v2352 = vadd.f32 %v1960, %v2296
      %v2353 = vadd.f32 %v1961, %v2297
      %v2354 = vadd.f32 %v1962, %v2298
      %v2355 = vadd.f32 %v1963, %v2299
      %v2356 = vadd.f32 %v1964, %v2300
      %v2357 = vadd.f32 %v1965, %v2301
      %s2358 = scalar_lea.vmem %s315, 16
      %v2359 = vld [vmem:[%s2358] sm:$0xff]
      %v2360 = vld [vmem:[%s2358 + $0x8] sm:$0x3f]
      %v2361 = vld [vmem:[%s2358 + $0x10] sm:$0xff]
      %v2362 = vld [vmem:[%s2358 + $0x18] sm:$0x3f]
      %v2363 = vld [vmem:[%s2358 + $0x20] sm:$0xff]
      %v2364 = vld [vmem:[%s2358 + $0x28] sm:$0x3f]
      %v2365 = vld [vmem:[%s2358 + $0x30] sm:$0xff]
      %v2366 = vld [vmem:[%s2358 + $0x38] sm:$0x3f]
      %v2367 = vld [vmem:[%s2358 + $0x40] sm:$0xff]
      %v2368 = vld [vmem:[%s2358 + $0x48] sm:$0x3f]
      %v2369 = vld [vmem:[%s2358 + $0x50] sm:$0xff]
      %v2370 = vld [vmem:[%s2358 + $0x58] sm:$0x3f]
      %v2371 = vld [vmem:[%s2358 + $0x60] sm:$0xff]
      %v2372 = vld [vmem:[%s2358 + $0x68] sm:$0x3f]
      %v2373 = vld [vmem:[%s2358 + $0x70] sm:$0xff]
      %v2374 = vld [vmem:[%s2358 + $0x78] sm:$0x3f]
      %v2375 = vld [vmem:[%s2358 + $0x80] sm:$0xff]
      %v2376 = vld [vmem:[%s2358 + $0x88] sm:$0x3f]
      %v2377 = vld [vmem:[%s2358 + $0x90] sm:$0xff]
      %v2378 = vld [vmem:[%s2358 + $0x98] sm:$0x3f]
      %v2379 = vld [vmem:[%s2358 + $0xa0] sm:$0xff]
      %v2380 = vld [vmem:[%s2358 + $0xa8] sm:$0x3f]
      %v2381 = vld [vmem:[%s2358 + $0xb0] sm:$0xff]
      %v2382 = vld [vmem:[%s2358 + $0xb8] sm:$0x3f]
      %v2383 = vld [vmem:[%s2358 + $0xc0] sm:$0xff]
      %v2384 = vld [vmem:[%s2358 + $0xc8] sm:$0x3f]
      %v2385 = vld [vmem:[%s2358 + $0xd0] sm:$0xff]
      %v2386 = vld [vmem:[%s2358 + $0xd8] sm:$0x3f]
      %v2387 = vld [vmem:[%s2358 + $0xe0] sm:$0xff]
      %v2388 = vld [vmem:[%s2358 + $0xe8] sm:$0x3f]
      %v2389 = vld [vmem:[%s2358 + $0xf0] sm:$0xff]
      %v2390 = vld [vmem:[%s2358 + $0xf8] sm:$0x3f]
      %v2391 = vld [vmem:[%s2358 + $0x100] sm:$0xff]
      %v2392 = vld [vmem:[%s2358 + $0x108] sm:$0x3f]
      %v2393 = vld [vmem:[%s2358 + $0x110] sm:$0xff]
      %v2394 = vld [vmem:[%s2358 + $0x118] sm:$0x3f]
      %v2395 = vld [vmem:[%s2358 + $0x120] sm:$0xff]
      %v2396 = vld [vmem:[%s2358 + $0x128] sm:$0x3f]
      %v2397 = vld [vmem:[%s2358 + $0x130] sm:$0xff]
      %v2398 = vld [vmem:[%s2358 + $0x138] sm:$0x3f]
      %v2399 = vld [vmem:[%s2358 + $0x140] sm:$0xff]
      %v2400 = vld [vmem:[%s2358 + $0x148] sm:$0x3f]
      %v2401 = vld [vmem:[%s2358 + $0x150] sm:$0xff]
      %v2402 = vld [vmem:[%s2358 + $0x158] sm:$0x3f]
      %v2403 = vld [vmem:[%s2358 + $0x160] sm:$0xff]
      %v2404 = vld [vmem:[%s2358 + $0x168] sm:$0x3f]
      %v2405 = vld [vmem:[%s2358 + $0x170] sm:$0xff]
      %v2406 = vld [vmem:[%s2358 + $0x178] sm:$0x3f]
      %v2407 = vld [vmem:[%s2358 + $0x180] sm:$0xff]
      %v2408 = vld [vmem:[%s2358 + $0x188] sm:$0x3f]
      %v2409 = vld [vmem:[%s2358 + $0x190] sm:$0xff]
      %v2410 = vld [vmem:[%s2358 + $0x198] sm:$0x3f]
      %v2411 = vld [vmem:[%s2358 + $0x1a0] sm:$0xff]
      %v2412 = vld [vmem:[%s2358 + $0x1a8] sm:$0x3f]
      %v2413 = vld [vmem:[%s2358 + $0x1b0] sm:$0xff]
      %v2414 = vld [vmem:[%s2358 + $0x1b8] sm:$0x3f]
      %s2415 = scalar_lea.vmem %s320, 16
      %v2416 = vld [vmem:[%s2415] sm:$0xff]
      %v2417 = vld [vmem:[%s2415 + $0x8] sm:$0x3f]
      %v2418 = vld [vmem:[%s2415 + $0x10] sm:$0xff]
      %v2419 = vld [vmem:[%s2415 + $0x18] sm:$0x3f]
      %v2420 = vld [vmem:[%s2415 + $0x20] sm:$0xff]
      %v2421 = vld [vmem:[%s2415 + $0x28] sm:$0x3f]
      %v2422 = vld [vmem:[%s2415 + $0x30] sm:$0xff]
      %v2423 = vld [vmem:[%s2415 + $0x38] sm:$0x3f]
      %v2424 = vld [vmem:[%s2415 + $0x40] sm:$0xff]
      %v2425 = vld [vmem:[%s2415 + $0x48] sm:$0x3f]
      %v2426 = vld [vmem:[%s2415 + $0x50] sm:$0xff]
      %v2427 = vld [vmem:[%s2415 + $0x58] sm:$0x3f]
      %v2428 = vld [vmem:[%s2415 + $0x60] sm:$0xff]
      %v2429 = vld [vmem:[%s2415 + $0x68] sm:$0x3f]
      %v2430 = vld [vmem:[%s2415 + $0x70] sm:$0xff]
      %v2431 = vld [vmem:[%s2415 + $0x78] sm:$0x3f]
      %v2432 = vld [vmem:[%s2415 + $0x80] sm:$0xff]
      %v2433 = vld [vmem:[%s2415 + $0x88] sm:$0x3f]
      %v2434 = vld [vmem:[%s2415 + $0x90] sm:$0xff]
      %v2435 = vld [vmem:[%s2415 + $0x98] sm:$0x3f]
      %v2436 = vld [vmem:[%s2415 + $0xa0] sm:$0xff]
      %v2437 = vld [vmem:[%s2415 + $0xa8] sm:$0x3f]
      %v2438 = vld [vmem:[%s2415 + $0xb0] sm:$0xff]
      %v2439 = vld [vmem:[%s2415 + $0xb8] sm:$0x3f]
      %v2440 = vld [vmem:[%s2415 + $0xc0] sm:$0xff]
      %v2441 = vld [vmem:[%s2415 + $0xc8] sm:$0x3f]
      %v2442 = vld [vmem:[%s2415 + $0xd0] sm:$0xff]
      %v2443 = vld [vmem:[%s2415 + $0xd8] sm:$0x3f]
      %v2444 = vld [vmem:[%s2415 + $0xe0] sm:$0xff]
      %v2445 = vld [vmem:[%s2415 + $0xe8] sm:$0x3f]
      %v2446 = vld [vmem:[%s2415 + $0xf0] sm:$0xff]
      %v2447 = vld [vmem:[%s2415 + $0xf8] sm:$0x3f]
      %v2448 = vld [vmem:[%s2415 + $0x100] sm:$0xff]
      %v2449 = vld [vmem:[%s2415 + $0x108] sm:$0x3f]
      %v2450 = vld [vmem:[%s2415 + $0x110] sm:$0xff]
      %v2451 = vld [vmem:[%s2415 + $0x118] sm:$0x3f]
      %v2452 = vld [vmem:[%s2415 + $0x120] sm:$0xff]
      %v2453 = vld [vmem:[%s2415 + $0x128] sm:$0x3f]
      %v2454 = vld [vmem:[%s2415 + $0x130] sm:$0xff]
      %v2455 = vld [vmem:[%s2415 + $0x138] sm:$0x3f]
      %v2456 = vld [vmem:[%s2415 + $0x140] sm:$0xff]
      %v2457 = vld [vmem:[%s2415 + $0x148] sm:$0x3f]
      %v2458 = vld [vmem:[%s2415 + $0x150] sm:$0xff]
      %v2459 = vld [vmem:[%s2415 + $0x158] sm:$0x3f]
      %v2460 = vld [vmem:[%s2415 + $0x160] sm:$0xff]
      %v2461 = vld [vmem:[%s2415 + $0x168] sm:$0x3f]
      %v2462 = vld [vmem:[%s2415 + $0x170] sm:$0xff]
      %v2463 = vld [vmem:[%s2415 + $0x178] sm:$0x3f]
      %v2464 = vld [vmem:[%s2415 + $0x180] sm:$0xff]
      %v2465 = vld [vmem:[%s2415 + $0x188] sm:$0x3f]
      %v2466 = vld [vmem:[%s2415 + $0x190] sm:$0xff]
      %v2467 = vld [vmem:[%s2415 + $0x198] sm:$0x3f]
      %v2468 = vld [vmem:[%s2415 + $0x1a0] sm:$0xff]
      %v2469 = vld [vmem:[%s2415 + $0x1a8] sm:$0x3f]
      %v2470 = vld [vmem:[%s2415 + $0x1b0] sm:$0xff]
      %v2471 = vld [vmem:[%s2415 + $0x1b8] sm:$0x3f]
      %v2472 = vld [vmem:[%s2358 + $0x1] sm:$0xff]
      %v2473 = vld [vmem:[%s2358 + $0x9] sm:$0x3f]
      %v2474 = vld [vmem:[%s2358 + $0x11] sm:$0xff]
      %v2475 = vld [vmem:[%s2358 + $0x19] sm:$0x3f]
      %v2476 = vld [vmem:[%s2358 + $0x21] sm:$0xff]
      %v2477 = vld [vmem:[%s2358 + $0x29] sm:$0x3f]
      %v2478 = vld [vmem:[%s2358 + $0x31] sm:$0xff]
      %v2479 = vld [vmem:[%s2358 + $0x39] sm:$0x3f]
      %v2480 = vld [vmem:[%s2358 + $0x41] sm:$0xff]
      %v2481 = vld [vmem:[%s2358 + $0x49] sm:$0x3f]
      %v2482 = vld [vmem:[%s2358 + $0x51] sm:$0xff]
      %v2483 = vld [vmem:[%s2358 + $0x59] sm:$0x3f]
      %v2484 = vld [vmem:[%s2358 + $0x61] sm:$0xff]
      %v2485 = vld [vmem:[%s2358 + $0x69] sm:$0x3f]
      %v2486 = vld [vmem:[%s2358 + $0x71] sm:$0xff]
      %v2487 = vld [vmem:[%s2358 + $0x79] sm:$0x3f]
      %v2488 = vld [vmem:[%s2358 + $0x81] sm:$0xff]
      %v2489 = vld [vmem:[%s2358 + $0x89] sm:$0x3f]
      %v2490 = vld [vmem:[%s2358 + $0x91] sm:$0xff]
      %v2491 = vld [vmem:[%s2358 + $0x99] sm:$0x3f]
      %v2492 = vld [vmem:[%s2358 + $0xa1] sm:$0xff]
      %v2493 = vld [vmem:[%s2358 + $0xa9] sm:$0x3f]
      %v2494 = vld [vmem:[%s2358 + $0xb1] sm:$0xff]
      %v2495 = vld [vmem:[%s2358 + $0xb9] sm:$0x3f]
      %v2496 = vld [vmem:[%s2358 + $0xc1] sm:$0xff]
      %v2497 = vld [vmem:[%s2358 + $0xc9] sm:$0x3f]
      %v2498 = vld [vmem:[%s2358 + $0xd1] sm:$0xff]
      %v2499 = vld [vmem:[%s2358 + $0xd9] sm:$0x3f]
      %v2500 = vld [vmem:[%s2358 + $0xe1] sm:$0xff]
      %v2501 = vld [vmem:[%s2358 + $0xe9] sm:$0x3f]
      %v2502 = vld [vmem:[%s2358 + $0xf1] sm:$0xff]
      %v2503 = vld [vmem:[%s2358 + $0xf9] sm:$0x3f]
      %v2504 = vld [vmem:[%s2358 + $0x101] sm:$0xff]
      %v2505 = vld [vmem:[%s2358 + $0x109] sm:$0x3f]
      %v2506 = vld [vmem:[%s2358 + $0x111] sm:$0xff]
      %v2507 = vld [vmem:[%s2358 + $0x119] sm:$0x3f]
      %v2508 = vld [vmem:[%s2358 + $0x121] sm:$0xff]
      %v2509 = vld [vmem:[%s2358 + $0x129] sm:$0x3f]
      %v2510 = vld [vmem:[%s2358 + $0x131] sm:$0xff]
      %v2511 = vld [vmem:[%s2358 + $0x139] sm:$0x3f]
      %v2512 = vld [vmem:[%s2358 + $0x141] sm:$0xff]
      %v2513 = vld [vmem:[%s2358 + $0x149] sm:$0x3f]
      %v2514 = vld [vmem:[%s2358 + $0x151] sm:$0xff]
      %v2515 = vld [vmem:[%s2358 + $0x159] sm:$0x3f]
      %v2516 = vld [vmem:[%s2358 + $0x161] sm:$0xff]
      %v2517 = vld [vmem:[%s2358 + $0x169] sm:$0x3f]
      %v2518 = vld [vmem:[%s2358 + $0x171] sm:$0xff]
      %v2519 = vld [vmem:[%s2358 + $0x179] sm:$0x3f]
      %v2520 = vld [vmem:[%s2358 + $0x181] sm:$0xff]
      %v2521 = vld [vmem:[%s2358 + $0x189] sm:$0x3f]
      %v2522 = vld [vmem:[%s2358 + $0x191] sm:$0xff]
      %v2523 = vld [vmem:[%s2358 + $0x199] sm:$0x3f]
      %v2524 = vld [vmem:[%s2358 + $0x1a1] sm:$0xff]
      %v2525 = vld [vmem:[%s2358 + $0x1a9] sm:$0x3f]
      %v2526 = vld [vmem:[%s2358 + $0x1b1] sm:$0xff]
      %v2527 = vld [vmem:[%s2358 + $0x1b9] sm:$0x3f]
      %v2528 = vld [vmem:[%s2415 + $0x1] sm:$0xff]
      %v2529 = vld [vmem:[%s2415 + $0x9] sm:$0x3f]
      %v2530 = vld [vmem:[%s2415 + $0x11] sm:$0xff]
      %v2531 = vld [vmem:[%s2415 + $0x19] sm:$0x3f]
      %v2532 = vld [vmem:[%s2415 + $0x21] sm:$0xff]
      %v2533 = vld [vmem:[%s2415 + $0x29] sm:$0x3f]
      %v2534 = vld [vmem:[%s2415 + $0x31] sm:$0xff]
      %v2535 = vld [vmem:[%s2415 + $0x39] sm:$0x3f]
      %v2536 = vld [vmem:[%s2415 + $0x41] sm:$0xff]
      %v2537 = vld [vmem:[%s2415 + $0x49] sm:$0x3f]
      %v2538 = vld [vmem:[%s2415 + $0x51] sm:$0xff]
      %v2539 = vld [vmem:[%s2415 + $0x59] sm:$0x3f]
      %v2540 = vld [vmem:[%s2415 + $0x61] sm:$0xff]
      %v2541 = vld [vmem:[%s2415 + $0x69] sm:$0x3f]
      %v2542 = vld [vmem:[%s2415 + $0x71] sm:$0xff]
      %v2543 = vld [vmem:[%s2415 + $0x79] sm:$0x3f]
      %v2544 = vld [vmem:[%s2415 + $0x81] sm:$0xff]
      %v2545 = vld [vmem:[%s2415 + $0x89] sm:$0x3f]
      %v2546 = vld [vmem:[%s2415 + $0x91] sm:$0xff]
      %v2547 = vld [vmem:[%s2415 + $0x99] sm:$0x3f]
      %v2548 = vld [vmem:[%s2415 + $0xa1] sm:$0xff]
      %v2549 = vld [vmem:[%s2415 + $0xa9] sm:$0x3f]
      %v2550 = vld [vmem:[%s2415 + $0xb1] sm:$0xff]
      %v2551 = vld [vmem:[%s2415 + $0xb9] sm:$0x3f]
      %v2552 = vld [vmem:[%s2415 + $0xc1] sm:$0xff]
      %v2553 = vld [vmem:[%s2415 + $0xc9] sm:$0x3f]
      %v2554 = vld [vmem:[%s2415 + $0xd1] sm:$0xff]
      %v2555 = vld [vmem:[%s2415 + $0xd9] sm:$0x3f]
      %v2556 = vld [vmem:[%s2415 + $0xe1] sm:$0xff]
      %v2557 = vld [vmem:[%s2415 + $0xe9] sm:$0x3f]
      %v2558 = vld [vmem:[%s2415 + $0xf1] sm:$0xff]
      %v2559 = vld [vmem:[%s2415 + $0xf9] sm:$0x3f]
      %v2560 = vld [vmem:[%s2415 + $0x101] sm:$0xff]
      %v2561 = vld [vmem:[%s2415 + $0x109] sm:$0x3f]
      %v2562 = vld [vmem:[%s2415 + $0x111] sm:$0xff]
      %v2563 = vld [vmem:[%s2415 + $0x119] sm:$0x3f]
      %v2564 = vld [vmem:[%s2415 + $0x121] sm:$0xff]
      %v2565 = vld [vmem:[%s2415 + $0x129] sm:$0x3f]
      %v2566 = vld [vmem:[%s2415 + $0x131] sm:$0xff]
      %v2567 = vld [vmem:[%s2415 + $0x139] sm:$0x3f]
      %v2568 = vld [vmem:[%s2415 + $0x141] sm:$0xff]
      %v2569 = vld [vmem:[%s2415 + $0x149] sm:$0x3f]
      %v2570 = vld [vmem:[%s2415 + $0x151] sm:$0xff]
      %v2571 = vld [vmem:[%s2415 + $0x159] sm:$0x3f]
      %v2572 = vld [vmem:[%s2415 + $0x161] sm:$0xff]
      %v2573 = vld [vmem:[%s2415 + $0x169] sm:$0x3f]
      %v2574 = vld [vmem:[%s2415 + $0x171] sm:$0xff]
      %v2575 = vld [vmem:[%s2415 + $0x179] sm:$0x3f]
      %v2576 = vld [vmem:[%s2415 + $0x181] sm:$0xff]
      %v2577 = vld [vmem:[%s2415 + $0x189] sm:$0x3f]
      %v2578 = vld [vmem:[%s2415 + $0x191] sm:$0xff]
      %v2579 = vld [vmem:[%s2415 + $0x199] sm:$0x3f]
      %v2580 = vld [vmem:[%s2415 + $0x1a1] sm:$0xff]
      %v2581 = vld [vmem:[%s2415 + $0x1a9] sm:$0x3f]
      %v2582 = vld [vmem:[%s2415 + $0x1b1] sm:$0xff]
      %v2583 = vld [vmem:[%s2415 + $0x1b9] sm:$0x3f]
      %v2584 = vld [vmem:[%s2 + $0x3] sm:$0x1]
      %v2585 = vld [vmem:[%s2 + $0x4] sm:$0x1]
      %v2586 = vld [vmem:[%s2 + $0x5] sm:$0x1]
      %2588 = vset.pattern.permute.xlu0 0
      %2589 = vperm.xlu0 %2588, %v2359
      %v2590 = vpop.permute.xlu0 %2589
      %2593 = vset.pattern.permute.xlu0 0
      %2594 = vperm.xlu0 %2593, %v2360
      %v2595 = vpop.permute.xlu0 %2594
      %2598 = vset.pattern.permute.xlu0 0
      %2599 = vperm.xlu0 %2598, %v2361
      %v2600 = vpop.permute.xlu0 %2599
      %2603 = vset.pattern.permute.xlu0 0
      %2604 = vperm.xlu0 %2603, %v2362
      %v2605 = vpop.permute.xlu0 %2604
      %2608 = vset.pattern.permute.xlu0 0
      %2609 = vperm.xlu0 %2608, %v2363
      %v2610 = vpop.permute.xlu0 %2609
      %2613 = vset.pattern.permute.xlu0 0
      %2614 = vperm.xlu0 %2613, %v2364
      %v2615 = vpop.permute.xlu0 %2614
      %2618 = vset.pattern.permute.xlu0 0
      %2619 = vperm.xlu0 %2618, %v2365
      %v2620 = vpop.permute.xlu0 %2619
      %2623 = vset.pattern.permute.xlu0 0
      %2624 = vperm.xlu0 %2623, %v2366
      %v2625 = vpop.permute.xlu0 %2624
      %2628 = vset.pattern.permute.xlu0 0
      %2629 = vperm.xlu0 %2628, %v2367
      %v2630 = vpop.permute.xlu0 %2629
      %2633 = vset.pattern.permute.xlu0 0
      %2634 = vperm.xlu0 %2633, %v2368
      %v2635 = vpop.permute.xlu0 %2634
      %2638 = vset.pattern.permute.xlu0 0
      %2639 = vperm.xlu0 %2638, %v2369
      %v2640 = vpop.permute.xlu0 %2639
      %2643 = vset.pattern.permute.xlu0 0
      %2644 = vperm.xlu0 %2643, %v2370
      %v2645 = vpop.permute.xlu0 %2644
      %2648 = vset.pattern.permute.xlu0 0
      %2649 = vperm.xlu0 %2648, %v2371
      %v2650 = vpop.permute.xlu0 %2649
      %2653 = vset.pattern.permute.xlu0 0
      %2654 = vperm.xlu0 %2653, %v2372
      %v2655 = vpop.permute.xlu0 %2654
      %2658 = vset.pattern.permute.xlu0 0
      %2659 = vperm.xlu0 %2658, %v2373
      %v2660 = vpop.permute.xlu0 %2659
      %2663 = vset.pattern.permute.xlu0 0
      %2664 = vperm.xlu0 %2663, %v2374
      %v2665 = vpop.permute.xlu0 %2664
      %2668 = vset.pattern.permute.xlu0 0
      %2669 = vperm.xlu0 %2668, %v2375
      %v2670 = vpop.permute.xlu0 %2669
      %2673 = vset.pattern.permute.xlu0 0
      %2674 = vperm.xlu0 %2673, %v2376
      %v2675 = vpop.permute.xlu0 %2674
      %2678 = vset.pattern.permute.xlu0 0
      %2679 = vperm.xlu0 %2678, %v2377
      %v2680 = vpop.permute.xlu0 %2679
      %2683 = vset.pattern.permute.xlu0 0
      %2684 = vperm.xlu0 %2683, %v2378
      %v2685 = vpop.permute.xlu0 %2684
      %2688 = vset.pattern.permute.xlu0 0
      %2689 = vperm.xlu0 %2688, %v2379
      %v2690 = vpop.permute.xlu0 %2689
      %2693 = vset.pattern.permute.xlu0 0
      %2694 = vperm.xlu0 %2693, %v2380
      %v2695 = vpop.permute.xlu0 %2694
      %2698 = vset.pattern.permute.xlu0 0
      %2699 = vperm.xlu0 %2698, %v2381
      %v2700 = vpop.permute.xlu0 %2699
      %2703 = vset.pattern.permute.xlu0 0
      %2704 = vperm.xlu0 %2703, %v2382
      %v2705 = vpop.permute.xlu0 %2704
      %2708 = vset.pattern.permute.xlu0 0
      %2709 = vperm.xlu0 %2708, %v2383
      %v2710 = vpop.permute.xlu0 %2709
      %2713 = vset.pattern.permute.xlu0 0
      %2714 = vperm.xlu0 %2713, %v2384
      %v2715 = vpop.permute.xlu0 %2714
      %2718 = vset.pattern.permute.xlu0 0
      %2719 = vperm.xlu0 %2718, %v2385
      %v2720 = vpop.permute.xlu0 %2719
      %2723 = vset.pattern.permute.xlu0 0
      %2724 = vperm.xlu0 %2723, %v2386
      %v2725 = vpop.permute.xlu0 %2724
      %2728 = vset.pattern.permute.xlu0 0
      %2729 = vperm.xlu0 %2728, %v2387
      %v2730 = vpop.permute.xlu0 %2729
      %2733 = vset.pattern.permute.xlu0 0
      %2734 = vperm.xlu0 %2733, %v2388
      %v2735 = vpop.permute.xlu0 %2734
      %2738 = vset.pattern.permute.xlu0 0
      %2739 = vperm.xlu0 %2738, %v2389
      %v2740 = vpop.permute.xlu0 %2739
      %2743 = vset.pattern.permute.xlu0 0
      %2744 = vperm.xlu0 %2743, %v2390
      %v2745 = vpop.permute.xlu0 %2744
      %2748 = vset.pattern.permute.xlu0 0
      %2749 = vperm.xlu0 %2748, %v2391
      %v2750 = vpop.permute.xlu0 %2749
      %2753 = vset.pattern.permute.xlu0 0
      %2754 = vperm.xlu0 %2753, %v2392
      %v2755 = vpop.permute.xlu0 %2754
      %2758 = vset.pattern.permute.xlu0 0
      %2759 = vperm.xlu0 %2758, %v2393
      %v2760 = vpop.permute.xlu0 %2759
      %2763 = vset.pattern.permute.xlu0 0
      %2764 = vperm.xlu0 %2763, %v2394
      %v2765 = vpop.permute.xlu0 %2764
      %2768 = vset.pattern.permute.xlu0 0
      %2769 = vperm.xlu0 %2768, %v2395
      %v2770 = vpop.permute.xlu0 %2769
      %2773 = vset.pattern.permute.xlu0 0
      %2774 = vperm.xlu0 %2773, %v2396
      %v2775 = vpop.permute.xlu0 %2774
      %2778 = vset.pattern.permute.xlu0 0
      %2779 = vperm.xlu0 %2778, %v2397
      %v2780 = vpop.permute.xlu0 %2779
      %2783 = vset.pattern.permute.xlu0 0
      %2784 = vperm.xlu0 %2783, %v2398
      %v2785 = vpop.permute.xlu0 %2784
      %2788 = vset.pattern.permute.xlu0 0
      %2789 = vperm.xlu0 %2788, %v2399
      %v2790 = vpop.permute.xlu0 %2789
      %2793 = vset.pattern.permute.xlu0 0
      %2794 = vperm.xlu0 %2793, %v2400
      %v2795 = vpop.permute.xlu0 %2794
      %2798 = vset.pattern.permute.xlu0 0
      %2799 = vperm.xlu0 %2798, %v2401
      %v2800 = vpop.permute.xlu0 %2799
      %2803 = vset.pattern.permute.xlu0 0
      %2804 = vperm.xlu0 %2803, %v2402
      %v2805 = vpop.permute.xlu0 %2804
      %2808 = vset.pattern.permute.xlu0 0
      %2809 = vperm.xlu0 %2808, %v2403
      %v2810 = vpop.permute.xlu0 %2809
      %2813 = vset.pattern.permute.xlu0 0
      %2814 = vperm.xlu0 %2813, %v2404
      %v2815 = vpop.permute.xlu0 %2814
      %2818 = vset.pattern.permute.xlu0 0
      %2819 = vperm.xlu0 %2818, %v2405
      %v2820 = vpop.permute.xlu0 %2819
      %2823 = vset.pattern.permute.xlu0 0
      %2824 = vperm.xlu0 %2823, %v2406
      %v2825 = vpop.permute.xlu0 %2824
      %2828 = vset.pattern.permute.xlu0 0
      %2829 = vperm.xlu0 %2828, %v2407
      %v2830 = vpop.permute.xlu0 %2829
      %2833 = vset.pattern.permute.xlu0 0
      %2834 = vperm.xlu0 %2833, %v2408
      %v2835 = vpop.permute.xlu0 %2834
      %2838 = vset.pattern.permute.xlu0 0
      %2839 = vperm.xlu0 %2838, %v2409
      %v2840 = vpop.permute.xlu0 %2839
      %2843 = vset.pattern.permute.xlu0 0
      %2844 = vperm.xlu0 %2843, %v2410
      %v2845 = vpop.permute.xlu0 %2844
      %2848 = vset.pattern.permute.xlu0 0
      %2849 = vperm.xlu0 %2848, %v2411
      %v2850 = vpop.permute.xlu0 %2849
      %2853 = vset.pattern.permute.xlu0 0
      %2854 = vperm.xlu0 %2853, %v2412
      %v2855 = vpop.permute.xlu0 %2854
      %2858 = vset.pattern.permute.xlu0 0
      %2859 = vperm.xlu0 %2858, %v2413
      %v2860 = vpop.permute.xlu0 %2859
      %2863 = vset.pattern.permute.xlu0 0
      %2864 = vperm.xlu0 %2863, %v2414
      %v2865 = vpop.permute.xlu0 %2864
      %v2867 = vlaneseq
      %v2868 = vshrl.u32 %v2867, 7
      %v2869 = vsub.s32 0, %v2868
      %v2870 = vrot.slane %v2584, %v2869
      %v2871 = vmul.f32 %v2590, %v2870
      %v2872 = vmul.f32 %v2595, %v2870
      %v2873 = vmul.f32 %v2600, %v2870
      %v2874 = vmul.f32 %v2605, %v2870
      %v2875 = vmul.f32 %v2610, %v2870
      %v2876 = vmul.f32 %v2615, %v2870
      %v2877 = vmul.f32 %v2620, %v2870
      %v2878 = vmul.f32 %v2625, %v2870
      %v2879 = vmul.f32 %v2630, %v2870
      %v2880 = vmul.f32 %v2635, %v2870
      %v2881 = vmul.f32 %v2640, %v2870
      %v2882 = vmul.f32 %v2645, %v2870
      %v2883 = vmul.f32 %v2650, %v2870
      %v2884 = vmul.f32 %v2655, %v2870
      %v2885 = vmul.f32 %v2660, %v2870
      %v2886 = vmul.f32 %v2665, %v2870
      %v2887 = vmul.f32 %v2670, %v2870
      %v2888 = vmul.f32 %v2675, %v2870
      %v2889 = vmul.f32 %v2680, %v2870
      %v2890 = vmul.f32 %v2685, %v2870
      %v2891 = vmul.f32 %v2690, %v2870
      %v2892 = vmul.f32 %v2695, %v2870
      %v2893 = vmul.f32 %v2700, %v2870
      %v2894 = vmul.f32 %v2705, %v2870
      %v2895 = vmul.f32 %v2710, %v2870
      %v2896 = vmul.f32 %v2715, %v2870
      %v2897 = vmul.f32 %v2720, %v2870
      %v2898 = vmul.f32 %v2725, %v2870
      %v2899 = vmul.f32 %v2730, %v2870
      %v2900 = vmul.f32 %v2735, %v2870
      %v2901 = vmul.f32 %v2740, %v2870
      %v2902 = vmul.f32 %v2745, %v2870
      %v2903 = vmul.f32 %v2750, %v2870
      %v2904 = vmul.f32 %v2755, %v2870
      %v2905 = vmul.f32 %v2760, %v2870
      %v2906 = vmul.f32 %v2765, %v2870
      %v2907 = vmul.f32 %v2770, %v2870
      %v2908 = vmul.f32 %v2775, %v2870
      %v2909 = vmul.f32 %v2780, %v2870
      %v2910 = vmul.f32 %v2785, %v2870
      %v2911 = vmul.f32 %v2790, %v2870
      %v2912 = vmul.f32 %v2795, %v2870
      %v2913 = vmul.f32 %v2800, %v2870
      %v2914 = vmul.f32 %v2805, %v2870
      %v2915 = vmul.f32 %v2810, %v2870
      %v2916 = vmul.f32 %v2815, %v2870
      %v2917 = vmul.f32 %v2820, %v2870
      %v2918 = vmul.f32 %v2825, %v2870
      %v2919 = vmul.f32 %v2830, %v2870
      %v2920 = vmul.f32 %v2835, %v2870
      %v2921 = vmul.f32 %v2840, %v2870
      %v2922 = vmul.f32 %v2845, %v2870
      %v2923 = vmul.f32 %v2850, %v2870
      %v2924 = vmul.f32 %v2855, %v2870
      %v2925 = vmul.f32 %v2860, %v2870
      %v2926 = vmul.f32 %v2865, %v2870
      %v2927 = vadd.f32 %v1686, %v2871
      %v2928 = vadd.f32 %v1687, %v2872
      %v2929 = vadd.f32 %v1688, %v2873
      %v2930 = vadd.f32 %v1689, %v2874
      %v2931 = vadd.f32 %v1690, %v2875
      %v2932 = vadd.f32 %v1691, %v2876
      %v2933 = vadd.f32 %v1692, %v2877
      %v2934 = vadd.f32 %v1693, %v2878
      %v2935 = vadd.f32 %v1694, %v2879
      %v2936 = vadd.f32 %v1695, %v2880
      %v2937 = vadd.f32 %v1696, %v2881
      %v2938 = vadd.f32 %v1697, %v2882
      %v2939 = vadd.f32 %v1698, %v2883
      %v2940 = vadd.f32 %v1699, %v2884
      %v2941 = vadd.f32 %v1700, %v2885
      %v2942 = vadd.f32 %v1701, %v2886
      %v2943 = vadd.f32 %v1702, %v2887
      %v2944 = vadd.f32 %v1703, %v2888
      %v2945 = vadd.f32 %v1704, %v2889
      %v2946 = vadd.f32 %v1705, %v2890
      %v2947 = vadd.f32 %v1706, %v2891
      %v2948 = vadd.f32 %v1707, %v2892
      %v2949 = vadd.f32 %v1708, %v2893
      %v2950 = vadd.f32 %v1709, %v2894
      %v2951 = vadd.f32 %v1710, %v2895
      %v2952 = vadd.f32 %v1711, %v2896
      %v2953 = vadd.f32 %v1712, %v2897
      %v2954 = vadd.f32 %v1713, %v2898
      %v2955 = vadd.f32 %v1714, %v2899
      %v2956 = vadd.f32 %v1715, %v2900
      %v2957 = vadd.f32 %v1716, %v2901
      %v2958 = vadd.f32 %v1717, %v2902
      %v2959 = vadd.f32 %v1718, %v2903
      %v2960 = vadd.f32 %v1719, %v2904
      %v2961 = vadd.f32 %v1720, %v2905
      %v2962 = vadd.f32 %v1721, %v2906
      %v2963 = vadd.f32 %v1722, %v2907
      %v2964 = vadd.f32 %v1723, %v2908
      %v2965 = vadd.f32 %v1724, %v2909
      %v2966 = vadd.f32 %v1725, %v2910
      %v2967 = vadd.f32 %v1726, %v2911
      %v2968 = vadd.f32 %v1727, %v2912
      %v2969 = vadd.f32 %v1728, %v2913
      %v2970 = vadd.f32 %v1729, %v2914
      %v2971 = vadd.f32 %v1730, %v2915
      %v2972 = vadd.f32 %v1731, %v2916
      %v2973 = vadd.f32 %v1732, %v2917
      %v2974 = vadd.f32 %v1733, %v2918
      %v2975 = vadd.f32 %v1734, %v2919
      %v2976 = vadd.f32 %v1735, %v2920
      %v2977 = vadd.f32 %v1736, %v2921
      %v2978 = vadd.f32 %v1737, %v2922
      %v2979 = vadd.f32 %v1738, %v2923
      %v2980 = vadd.f32 %v1739, %v2924
      %v2981 = vadd.f32 %v1740, %v2925
      %v2982 = vadd.f32 %v1741, %v2926
      %2984 = vset.pattern.permute.xlu0 0
      %2985 = vperm.xlu0 %2984, %v2416
      %v2986 = vpop.permute.xlu0 %2985
      %2989 = vset.pattern.permute.xlu0 0
      %2990 = vperm.xlu0 %2989, %v2417
      %v2991 = vpop.permute.xlu0 %2990
      %2994 = vset.pattern.permute.xlu0 0
      %2995 = vperm.xlu0 %2994, %v2418
      %v2996 = vpop.permute.xlu0 %2995
      %2999 = vset.pattern.permute.xlu0 0
      %3000 = vperm.xlu0 %2999, %v2419
      %v3001 = vpop.permute.xlu0 %3000
      %3004 = vset.pattern.permute.xlu0 0
      %3005 = vperm.xlu0 %3004, %v2420
      %v3006 = vpop.permute.xlu0 %3005
      %3009 = vset.pattern.permute.xlu0 0
      %3010 = vperm.xlu0 %3009, %v2421
      %v3011 = vpop.permute.xlu0 %3010
      %3014 = vset.pattern.permute.xlu0 0
      %3015 = vperm.xlu0 %3014, %v2422
      %v3016 = vpop.permute.xlu0 %3015
      %3019 = vset.pattern.permute.xlu0 0
      %3020 = vperm.xlu0 %3019, %v2423
      %v3021 = vpop.permute.xlu0 %3020
      %3024 = vset.pattern.permute.xlu0 0
      %3025 = vperm.xlu0 %3024, %v2424
      %v3026 = vpop.permute.xlu0 %3025
      %3029 = vset.pattern.permute.xlu0 0
      %3030 = vperm.xlu0 %3029, %v2425
      %v3031 = vpop.permute.xlu0 %3030
      %3034 = vset.pattern.permute.xlu0 0
      %3035 = vperm.xlu0 %3034, %v2426
      %v3036 = vpop.permute.xlu0 %3035
      %3039 = vset.pattern.permute.xlu0 0
      %3040 = vperm.xlu0 %3039, %v2427
      %v3041 = vpop.permute.xlu0 %3040
      %3044 = vset.pattern.permute.xlu0 0
      %3045 = vperm.xlu0 %3044, %v2428
      %v3046 = vpop.permute.xlu0 %3045
      %3049 = vset.pattern.permute.xlu0 0
      %3050 = vperm.xlu0 %3049, %v2429
      %v3051 = vpop.permute.xlu0 %3050
      %3054 = vset.pattern.permute.xlu0 0
      %3055 = vperm.xlu0 %3054, %v2430
      %v3056 = vpop.permute.xlu0 %3055
      %3059 = vset.pattern.permute.xlu0 0
      %3060 = vperm.xlu0 %3059, %v2431
      %v3061 = vpop.permute.xlu0 %3060
      %3064 = vset.pattern.permute.xlu0 0
      %3065 = vperm.xlu0 %3064, %v2432
      %v3066 = vpop.permute.xlu0 %3065
      %3069 = vset.pattern.permute.xlu0 0
      %3070 = vperm.xlu0 %3069, %v2433
      %v3071 = vpop.permute.xlu0 %3070
      %3074 = vset.pattern.permute.xlu0 0
      %3075 = vperm.xlu0 %3074, %v2434
      %v3076 = vpop.permute.xlu0 %3075
      %3079 = vset.pattern.permute.xlu0 0
      %3080 = vperm.xlu0 %3079, %v2435
      %v3081 = vpop.permute.xlu0 %3080
      %3084 = vset.pattern.permute.xlu0 0
      %3085 = vperm.xlu0 %3084, %v2436
      %v3086 = vpop.permute.xlu0 %3085
      %3089 = vset.pattern.permute.xlu0 0
      %3090 = vperm.xlu0 %3089, %v2437
      %v3091 = vpop.permute.xlu0 %3090
      %3094 = vset.pattern.permute.xlu0 0
      %3095 = vperm.xlu0 %3094, %v2438
      %v3096 = vpop.permute.xlu0 %3095
      %3099 = vset.pattern.permute.xlu0 0
      %3100 = vperm.xlu0 %3099, %v2439
      %v3101 = vpop.permute.xlu0 %3100
      %3104 = vset.pattern.permute.xlu0 0
      %3105 = vperm.xlu0 %3104, %v2440
      %v3106 = vpop.permute.xlu0 %3105
      %3109 = vset.pattern.permute.xlu0 0
      %3110 = vperm.xlu0 %3109, %v2441
      %v3111 = vpop.permute.xlu0 %3110
      %3114 = vset.pattern.permute.xlu0 0
      %3115 = vperm.xlu0 %3114, %v2442
      %v3116 = vpop.permute.xlu0 %3115
      %3119 = vset.pattern.permute.xlu0 0
      %3120 = vperm.xlu0 %3119, %v2443
      %v3121 = vpop.permute.xlu0 %3120
      %3124 = vset.pattern.permute.xlu0 0
      %3125 = vperm.xlu0 %3124, %v2444
      %v3126 = vpop.permute.xlu0 %3125
      %3129 = vset.pattern.permute.xlu0 0
      %3130 = vperm.xlu0 %3129, %v2445
      %v3131 = vpop.permute.xlu0 %3130
      %3134 = vset.pattern.permute.xlu0 0
      %3135 = vperm.xlu0 %3134, %v2446
      %v3136 = vpop.permute.xlu0 %3135
      %3139 = vset.pattern.permute.xlu0 0
      %3140 = vperm.xlu0 %3139, %v2447
      %v3141 = vpop.permute.xlu0 %3140
      %3144 = vset.pattern.permute.xlu0 0
      %3145 = vperm.xlu0 %3144, %v2448
      %v3146 = vpop.permute.xlu0 %3145
      %3149 = vset.pattern.permute.xlu0 0
      %3150 = vperm.xlu0 %3149, %v2449
      %v3151 = vpop.permute.xlu0 %3150
      %3154 = vset.pattern.permute.xlu0 0
      %3155 = vperm.xlu0 %3154, %v2450
      %v3156 = vpop.permute.xlu0 %3155
      %3159 = vset.pattern.permute.xlu0 0
      %3160 = vperm.xlu0 %3159, %v2451
      %v3161 = vpop.permute.xlu0 %3160
      %3164 = vset.pattern.permute.xlu0 0
      %3165 = vperm.xlu0 %3164, %v2452
      %v3166 = vpop.permute.xlu0 %3165
      %3169 = vset.pattern.permute.xlu0 0
      %3170 = vperm.xlu0 %3169, %v2453
      %v3171 = vpop.permute.xlu0 %3170
      %3174 = vset.pattern.permute.xlu0 0
      %3175 = vperm.xlu0 %3174, %v2454
      %v3176 = vpop.permute.xlu0 %3175
      %3179 = vset.pattern.permute.xlu0 0
      %3180 = vperm.xlu0 %3179, %v2455
      %v3181 = vpop.permute.xlu0 %3180
      %3184 = vset.pattern.permute.xlu0 0
      %3185 = vperm.xlu0 %3184, %v2456
      %v3186 = vpop.permute.xlu0 %3185
      %3189 = vset.pattern.permute.xlu0 0
      %3190 = vperm.xlu0 %3189, %v2457
      %v3191 = vpop.permute.xlu0 %3190
      %3194 = vset.pattern.permute.xlu0 0
      %3195 = vperm.xlu0 %3194, %v2458
      %v3196 = vpop.permute.xlu0 %3195
      %3199 = vset.pattern.permute.xlu0 0
      %3200 = vperm.xlu0 %3199, %v2459
      %v3201 = vpop.permute.xlu0 %3200
      %3204 = vset.pattern.permute.xlu0 0
      %3205 = vperm.xlu0 %3204, %v2460
      %v3206 = vpop.permute.xlu0 %3205
      %3209 = vset.pattern.permute.xlu0 0
      %3210 = vperm.xlu0 %3209, %v2461
      %v3211 = vpop.permute.xlu0 %3210
      %3214 = vset.pattern.permute.xlu0 0
      %3215 = vperm.xlu0 %3214, %v2462
      %v3216 = vpop.permute.xlu0 %3215
      %3219 = vset.pattern.permute.xlu0 0
      %3220 = vperm.xlu0 %3219, %v2463
      %v3221 = vpop.permute.xlu0 %3220
      %3224 = vset.pattern.permute.xlu0 0
      %3225 = vperm.xlu0 %3224, %v2464
      %v3226 = vpop.permute.xlu0 %3225
      %3229 = vset.pattern.permute.xlu0 0
      %3230 = vperm.xlu0 %3229, %v2465
      %v3231 = vpop.permute.xlu0 %3230
      %3234 = vset.pattern.permute.xlu0 0
      %3235 = vperm.xlu0 %3234, %v2466
      %v3236 = vpop.permute.xlu0 %3235
      %3239 = vset.pattern.permute.xlu0 0
      %3240 = vperm.xlu0 %3239, %v2467
      %v3241 = vpop.permute.xlu0 %3240
      %3244 = vset.pattern.permute.xlu0 0
      %3245 = vperm.xlu0 %3244, %v2468
      %v3246 = vpop.permute.xlu0 %3245
      %3249 = vset.pattern.permute.xlu0 0
      %3250 = vperm.xlu0 %3249, %v2469
      %v3251 = vpop.permute.xlu0 %3250
      %3254 = vset.pattern.permute.xlu0 0
      %3255 = vperm.xlu0 %3254, %v2470
      %v3256 = vpop.permute.xlu0 %3255
      %3259 = vset.pattern.permute.xlu0 0
      %3260 = vperm.xlu0 %3259, %v2471
      %v3261 = vpop.permute.xlu0 %3260
      %v3263 = vlaneseq
      %v3264 = vshrl.u32 %v3263, 7
      %v3265 = vsub.s32 0, %v3264
      %v3266 = vrot.slane %v2585, %v3265
      %v3267 = vmul.f32 %v2986, %v3266
      %v3268 = vmul.f32 %v2991, %v3266
      %v3269 = vmul.f32 %v2996, %v3266
      %v3270 = vmul.f32 %v3001, %v3266
      %v3271 = vmul.f32 %v3006, %v3266
      %v3272 = vmul.f32 %v3011, %v3266
      %v3273 = vmul.f32 %v3016, %v3266
      %v3274 = vmul.f32 %v3021, %v3266
      %v3275 = vmul.f32 %v3026, %v3266
      %v3276 = vmul.f32 %v3031, %v3266
      %v3277 = vmul.f32 %v3036, %v3266
      %v3278 = vmul.f32 %v3041, %v3266
      %v3279 = vmul.f32 %v3046, %v3266
      %v3280 = vmul.f32 %v3051, %v3266
      %v3281 = vmul.f32 %v3056, %v3266
      %v3282 = vmul.f32 %v3061, %v3266
      %v3283 = vmul.f32 %v3066, %v3266
      %v3284 = vmul.f32 %v3071, %v3266
      %v3285 = vmul.f32 %v3076, %v3266
      %v3286 = vmul.f32 %v3081, %v3266
      %v3287 = vmul.f32 %v3086, %v3266
      %v3288 = vmul.f32 %v3091, %v3266
      %v3289 = vmul.f32 %v3096, %v3266
      %v3290 = vmul.f32 %v3101, %v3266
      %v3291 = vmul.f32 %v3106, %v3266
      %v3292 = vmul.f32 %v3111, %v3266
      %v3293 = vmul.f32 %v3116, %v3266
      %v3294 = vmul.f32 %v3121, %v3266
      %v3295 = vmul.f32 %v3126, %v3266
      %v3296 = vmul.f32 %v3131, %v3266
      %v3297 = vmul.f32 %v3136, %v3266
      %v3298 = vmul.f32 %v3141, %v3266
      %v3299 = vmul.f32 %v3146, %v3266
      %v3300 = vmul.f32 %v3151, %v3266
      %v3301 = vmul.f32 %v3156, %v3266
      %v3302 = vmul.f32 %v3161, %v3266
      %v3303 = vmul.f32 %v3166, %v3266
      %v3304 = vmul.f32 %v3171, %v3266
      %v3305 = vmul.f32 %v3176, %v3266
      %v3306 = vmul.f32 %v3181, %v3266
      %v3307 = vmul.f32 %v3186, %v3266
      %v3308 = vmul.f32 %v3191, %v3266
      %v3309 = vmul.f32 %v3196, %v3266
      %v3310 = vmul.f32 %v3201, %v3266
      %v3311 = vmul.f32 %v3206, %v3266
      %v3312 = vmul.f32 %v3211, %v3266
      %v3313 = vmul.f32 %v3216, %v3266
      %v3314 = vmul.f32 %v3221, %v3266
      %v3315 = vmul.f32 %v3226, %v3266
      %v3316 = vmul.f32 %v3231, %v3266
      %v3317 = vmul.f32 %v3236, %v3266
      %v3318 = vmul.f32 %v3241, %v3266
      %v3319 = vmul.f32 %v3246, %v3266
      %v3320 = vmul.f32 %v3251, %v3266
      %v3321 = vmul.f32 %v3256, %v3266
      %v3322 = vmul.f32 %v3261, %v3266
      %v3323 = vadd.f32 %v2927, %v3267
      %v3324 = vadd.f32 %v2928, %v3268
      %v3325 = vadd.f32 %v2929, %v3269
      %v3326 = vadd.f32 %v2930, %v3270
      %v3327 = vadd.f32 %v2931, %v3271
      %v3328 = vadd.f32 %v2932, %v3272
      %v3329 = vadd.f32 %v2933, %v3273
      %v3330 = vadd.f32 %v2934, %v3274
      %v3331 = vadd.f32 %v2935, %v3275
      %v3332 = vadd.f32 %v2936, %v3276
      %v3333 = vadd.f32 %v2937, %v3277
      %v3334 = vadd.f32 %v2938, %v3278
      %v3335 = vadd.f32 %v2939, %v3279
      %v3336 = vadd.f32 %v2940, %v3280
      %v3337 = vadd.f32 %v2941, %v3281
      %v3338 = vadd.f32 %v2942, %v3282
      %v3339 = vadd.f32 %v2943, %v3283
      %v3340 = vadd.f32 %v2944, %v3284
      %v3341 = vadd.f32 %v2945, %v3285
      %v3342 = vadd.f32 %v2946, %v3286
      %v3343 = vadd.f32 %v2947, %v3287
      %v3344 = vadd.f32 %v2948, %v3288
      %v3345 = vadd.f32 %v2949, %v3289
      %v3346 = vadd.f32 %v2950, %v3290
      %v3347 = vadd.f32 %v2951, %v3291
      %v3348 = vadd.f32 %v2952, %v3292
      %v3349 = vadd.f32 %v2953, %v3293
      %v3350 = vadd.f32 %v2954, %v3294
      %v3351 = vadd.f32 %v2955, %v3295
      %v3352 = vadd.f32 %v2956, %v3296
      %v3353 = vadd.f32 %v2957, %v3297
      %v3354 = vadd.f32 %v2958, %v3298
      %v3355 = vadd.f32 %v2959, %v3299
      %v3356 = vadd.f32 %v2960, %v3300
      %v3357 = vadd.f32 %v2961, %v3301
      %v3358 = vadd.f32 %v2962, %v3302
      %v3359 = vadd.f32 %v2963, %v3303
      %v3360 = vadd.f32 %v2964, %v3304
      %v3361 = vadd.f32 %v2965, %v3305
      %v3362 = vadd.f32 %v2966, %v3306
      %v3363 = vadd.f32 %v2967, %v3307
      %v3364 = vadd.f32 %v2968, %v3308
      %v3365 = vadd.f32 %v2969, %v3309
      %v3366 = vadd.f32 %v2970, %v3310
      %v3367 = vadd.f32 %v2971, %v3311
      %v3368 = vadd.f32 %v2972, %v3312
      %v3369 = vadd.f32 %v2973, %v3313
      %v3370 = vadd.f32 %v2974, %v3314
      %v3371 = vadd.f32 %v2975, %v3315
      %v3372 = vadd.f32 %v2976, %v3316
      %v3373 = vadd.f32 %v2977, %v3317
      %v3374 = vadd.f32 %v2978, %v3318
      %v3375 = vadd.f32 %v2979, %v3319
      %v3376 = vadd.f32 %v2980, %v3320
      %v3377 = vadd.f32 %v2981, %v3321
      %v3378 = vadd.f32 %v2982, %v3322
      %3380 = vset.pattern.permute.xlu0 0
      %3381 = vperm.xlu0 %3380, %v2472
      %v3382 = vpop.permute.xlu0 %3381
      %3385 = vset.pattern.permute.xlu0 0
      %3386 = vperm.xlu0 %3385, %v2473
      %v3387 = vpop.permute.xlu0 %3386
      %3390 = vset.pattern.permute.xlu0 0
      %3391 = vperm.xlu0 %3390, %v2474
      %v3392 = vpop.permute.xlu0 %3391
      %3395 = vset.pattern.permute.xlu0 0
      %3396 = vperm.xlu0 %3395, %v2475
      %v3397 = vpop.permute.xlu0 %3396
      %3400 = vset.pattern.permute.xlu0 0
      %3401 = vperm.xlu0 %3400, %v2476
      %v3402 = vpop.permute.xlu0 %3401
      %3405 = vset.pattern.permute.xlu0 0
      %3406 = vperm.xlu0 %3405, %v2477
      %v3407 = vpop.permute.xlu0 %3406
      %3410 = vset.pattern.permute.xlu0 0
      %3411 = vperm.xlu0 %3410, %v2478
      %v3412 = vpop.permute.xlu0 %3411
      %3415 = vset.pattern.permute.xlu0 0
      %3416 = vperm.xlu0 %3415, %v2479
      %v3417 = vpop.permute.xlu0 %3416
      %3420 = vset.pattern.permute.xlu0 0
      %3421 = vperm.xlu0 %3420, %v2480
      %v3422 = vpop.permute.xlu0 %3421
      %3425 = vset.pattern.permute.xlu0 0
      %3426 = vperm.xlu0 %3425, %v2481
      %v3427 = vpop.permute.xlu0 %3426
      %3430 = vset.pattern.permute.xlu0 0
      %3431 = vperm.xlu0 %3430, %v2482
      %v3432 = vpop.permute.xlu0 %3431
      %3435 = vset.pattern.permute.xlu0 0
      %3436 = vperm.xlu0 %3435, %v2483
      %v3437 = vpop.permute.xlu0 %3436
      %3440 = vset.pattern.permute.xlu0 0
      %3441 = vperm.xlu0 %3440, %v2484
      %v3442 = vpop.permute.xlu0 %3441
      %3445 = vset.pattern.permute.xlu0 0
      %3446 = vperm.xlu0 %3445, %v2485
      %v3447 = vpop.permute.xlu0 %3446
      %3450 = vset.pattern.permute.xlu0 0
      %3451 = vperm.xlu0 %3450, %v2486
      %v3452 = vpop.permute.xlu0 %3451
      %3455 = vset.pattern.permute.xlu0 0
      %3456 = vperm.xlu0 %3455, %v2487
      %v3457 = vpop.permute.xlu0 %3456
      %3460 = vset.pattern.permute.xlu0 0
      %3461 = vperm.xlu0 %3460, %v2488
      %v3462 = vpop.permute.xlu0 %3461
      %3465 = vset.pattern.permute.xlu0 0
      %3466 = vperm.xlu0 %3465, %v2489
      %v3467 = vpop.permute.xlu0 %3466
      %3470 = vset.pattern.permute.xlu0 0
      %3471 = vperm.xlu0 %3470, %v2490
      %v3472 = vpop.permute.xlu0 %3471
      %3475 = vset.pattern.permute.xlu0 0
      %3476 = vperm.xlu0 %3475, %v2491
      %v3477 = vpop.permute.xlu0 %3476
      %3480 = vset.pattern.permute.xlu0 0
      %3481 = vperm.xlu0 %3480, %v2492
      %v3482 = vpop.permute.xlu0 %3481
      %3485 = vset.pattern.permute.xlu0 0
      %3486 = vperm.xlu0 %3485, %v2493
      %v3487 = vpop.permute.xlu0 %3486
      %3490 = vset.pattern.permute.xlu0 0
      %3491 = vperm.xlu0 %3490, %v2494
      %v3492 = vpop.permute.xlu0 %3491
      %3495 = vset.pattern.permute.xlu0 0
      %3496 = vperm.xlu0 %3495, %v2495
      %v3497 = vpop.permute.xlu0 %3496
      %3500 = vset.pattern.permute.xlu0 0
      %3501 = vperm.xlu0 %3500, %v2496
      %v3502 = vpop.permute.xlu0 %3501
      %3505 = vset.pattern.permute.xlu0 0
      %3506 = vperm.xlu0 %3505, %v2497
      %v3507 = vpop.permute.xlu0 %3506
      %3510 = vset.pattern.permute.xlu0 0
      %3511 = vperm.xlu0 %3510, %v2498
      %v3512 = vpop.permute.xlu0 %3511
      %3515 = vset.pattern.permute.xlu0 0
      %3516 = vperm.xlu0 %3515, %v2499
      %v3517 = vpop.permute.xlu0 %3516
      %3520 = vset.pattern.permute.xlu0 0
      %3521 = vperm.xlu0 %3520, %v2500
      %v3522 = vpop.permute.xlu0 %3521
      %3525 = vset.pattern.permute.xlu0 0
      %3526 = vperm.xlu0 %3525, %v2501
      %v3527 = vpop.permute.xlu0 %3526
      %3530 = vset.pattern.permute.xlu0 0
      %3531 = vperm.xlu0 %3530, %v2502
      %v3532 = vpop.permute.xlu0 %3531
      %3535 = vset.pattern.permute.xlu0 0
      %3536 = vperm.xlu0 %3535, %v2503
      %v3537 = vpop.permute.xlu0 %3536
      %3540 = vset.pattern.permute.xlu0 0
      %3541 = vperm.xlu0 %3540, %v2504
      %v3542 = vpop.permute.xlu0 %3541
      %3545 = vset.pattern.permute.xlu0 0
      %3546 = vperm.xlu0 %3545, %v2505
      %v3547 = vpop.permute.xlu0 %3546
      %3550 = vset.pattern.permute.xlu0 0
      %3551 = vperm.xlu0 %3550, %v2506
      %v3552 = vpop.permute.xlu0 %3551
      %3555 = vset.pattern.permute.xlu0 0
      %3556 = vperm.xlu0 %3555, %v2507
      %v3557 = vpop.permute.xlu0 %3556
      %3560 = vset.pattern.permute.xlu0 0
      %3561 = vperm.xlu0 %3560, %v2508
      %v3562 = vpop.permute.xlu0 %3561
      %3565 = vset.pattern.permute.xlu0 0
      %3566 = vperm.xlu0 %3565, %v2509
      %v3567 = vpop.permute.xlu0 %3566
      %3570 = vset.pattern.permute.xlu0 0
      %3571 = vperm.xlu0 %3570, %v2510
      %v3572 = vpop.permute.xlu0 %3571
      %3575 = vset.pattern.permute.xlu0 0
      %3576 = vperm.xlu0 %3575, %v2511
      %v3577 = vpop.permute.xlu0 %3576
      %3580 = vset.pattern.permute.xlu0 0
      %3581 = vperm.xlu0 %3580, %v2512
      %v3582 = vpop.permute.xlu0 %3581
      %3585 = vset.pattern.permute.xlu0 0
      %3586 = vperm.xlu0 %3585, %v2513
      %v3587 = vpop.permute.xlu0 %3586
      %3590 = vset.pattern.permute.xlu0 0
      %3591 = vperm.xlu0 %3590, %v2514
      %v3592 = vpop.permute.xlu0 %3591
      %3595 = vset.pattern.permute.xlu0 0
      %3596 = vperm.xlu0 %3595, %v2515
      %v3597 = vpop.permute.xlu0 %3596
      %3600 = vset.pattern.permute.xlu0 0
      %3601 = vperm.xlu0 %3600, %v2516
      %v3602 = vpop.permute.xlu0 %3601
      %3605 = vset.pattern.permute.xlu0 0
      %3606 = vperm.xlu0 %3605, %v2517
      %v3607 = vpop.permute.xlu0 %3606
      %3610 = vset.pattern.permute.xlu0 0
      %3611 = vperm.xlu0 %3610, %v2518
      %v3612 = vpop.permute.xlu0 %3611
      %3615 = vset.pattern.permute.xlu0 0
      %3616 = vperm.xlu0 %3615, %v2519
      %v3617 = vpop.permute.xlu0 %3616
      %3620 = vset.pattern.permute.xlu0 0
      %3621 = vperm.xlu0 %3620, %v2520
      %v3622 = vpop.permute.xlu0 %3621
      %3625 = vset.pattern.permute.xlu0 0
      %3626 = vperm.xlu0 %3625, %v2521
      %v3627 = vpop.permute.xlu0 %3626
      %3630 = vset.pattern.permute.xlu0 0
      %3631 = vperm.xlu0 %3630, %v2522
      %v3632 = vpop.permute.xlu0 %3631
      %3635 = vset.pattern.permute.xlu0 0
      %3636 = vperm.xlu0 %3635, %v2523
      %v3637 = vpop.permute.xlu0 %3636
      %3640 = vset.pattern.permute.xlu0 0
      %3641 = vperm.xlu0 %3640, %v2524
      %v3642 = vpop.permute.xlu0 %3641
      %3645 = vset.pattern.permute.xlu0 0
      %3646 = vperm.xlu0 %3645, %v2525
      %v3647 = vpop.permute.xlu0 %3646
      %3650 = vset.pattern.permute.xlu0 0
      %3651 = vperm.xlu0 %3650, %v2526
      %v3652 = vpop.permute.xlu0 %3651
      %3655 = vset.pattern.permute.xlu0 0
      %3656 = vperm.xlu0 %3655, %v2527
      %v3657 = vpop.permute.xlu0 %3656
      %v3659 = vlaneseq
      %v3660 = vshrl.u32 %v3659, 7
      %v3661 = vsub.s32 0, %v3660
      %v3662 = vrot.slane %v2586, %v3661
      %v3663 = vmul.f32 %v3382, %v3662
      %v3664 = vmul.f32 %v3387, %v3662
      %v3665 = vmul.f32 %v3392, %v3662
      %v3666 = vmul.f32 %v3397, %v3662
      %v3667 = vmul.f32 %v3402, %v3662
      %v3668 = vmul.f32 %v3407, %v3662
      %v3669 = vmul.f32 %v3412, %v3662
      %v3670 = vmul.f32 %v3417, %v3662
      %v3671 = vmul.f32 %v3422, %v3662
      %v3672 = vmul.f32 %v3427, %v3662
      %v3673 = vmul.f32 %v3432, %v3662
      %v3674 = vmul.f32 %v3437, %v3662
      %v3675 = vmul.f32 %v3442, %v3662
      %v3676 = vmul.f32 %v3447, %v3662
      %v3677 = vmul.f32 %v3452, %v3662
      %v3678 = vmul.f32 %v3457, %v3662
      %v3679 = vmul.f32 %v3462, %v3662
      %v3680 = vmul.f32 %v3467, %v3662
      %v3681 = vmul.f32 %v3472, %v3662
      %v3682 = vmul.f32 %v3477, %v3662
      %v3683 = vmul.f32 %v3482, %v3662
      %v3684 = vmul.f32 %v3487, %v3662
      %v3685 = vmul.f32 %v3492, %v3662
      %v3686 = vmul.f32 %v3497, %v3662
      %v3687 = vmul.f32 %v3502, %v3662
      %v3688 = vmul.f32 %v3507, %v3662
      %v3689 = vmul.f32 %v3512, %v3662
      %v3690 = vmul.f32 %v3517, %v3662
      %v3691 = vmul.f32 %v3522, %v3662
      %v3692 = vmul.f32 %v3527, %v3662
      %v3693 = vmul.f32 %v3532, %v3662
      %v3694 = vmul.f32 %v3537, %v3662
      %v3695 = vmul.f32 %v3542, %v3662
      %v3696 = vmul.f32 %v3547, %v3662
      %v3697 = vmul.f32 %v3552, %v3662
      %v3698 = vmul.f32 %v3557, %v3662
      %v3699 = vmul.f32 %v3562, %v3662
      %v3700 = vmul.f32 %v3567, %v3662
      %v3701 = vmul.f32 %v3572, %v3662
      %v3702 = vmul.f32 %v3577, %v3662
      %v3703 = vmul.f32 %v3582, %v3662
      %v3704 = vmul.f32 %v3587, %v3662
      %v3705 = vmul.f32 %v3592, %v3662
      %v3706 = vmul.f32 %v3597, %v3662
      %v3707 = vmul.f32 %v3602, %v3662
      %v3708 = vmul.f32 %v3607, %v3662
      %v3709 = vmul.f32 %v3612, %v3662
      %v3710 = vmul.f32 %v3617, %v3662
      %v3711 = vmul.f32 %v3622, %v3662
      %v3712 = vmul.f32 %v3627, %v3662
      %v3713 = vmul.f32 %v3632, %v3662
      %v3714 = vmul.f32 %v3637, %v3662
      %v3715 = vmul.f32 %v3642, %v3662
      %v3716 = vmul.f32 %v3647, %v3662
      %v3717 = vmul.f32 %v3652, %v3662
      %v3718 = vmul.f32 %v3657, %v3662
      %v3719 = vadd.f32 %v3323, %v3663
      %v3720 = vadd.f32 %v3324, %v3664
      %v3721 = vadd.f32 %v3325, %v3665
      %v3722 = vadd.f32 %v3326, %v3666
      %v3723 = vadd.f32 %v3327, %v3667
      %v3724 = vadd.f32 %v3328, %v3668
      %v3725 = vadd.f32 %v3329, %v3669
      %v3726 = vadd.f32 %v3330, %v3670
      %v3727 = vadd.f32 %v3331, %v3671
      %v3728 = vadd.f32 %v3332, %v3672
      %v3729 = vadd.f32 %v3333, %v3673
      %v3730 = vadd.f32 %v3334, %v3674
      %v3731 = vadd.f32 %v3335, %v3675
      %v3732 = vadd.f32 %v3336, %v3676
      %v3733 = vadd.f32 %v3337, %v3677
      %v3734 = vadd.f32 %v3338, %v3678
      %v3735 = vadd.f32 %v3339, %v3679
      %v3736 = vadd.f32 %v3340, %v3680
      %v3737 = vadd.f32 %v3341, %v3681
      %v3738 = vadd.f32 %v3342, %v3682
      %v3739 = vadd.f32 %v3343, %v3683
      %v3740 = vadd.f32 %v3344, %v3684
      %v3741 = vadd.f32 %v3345, %v3685
      %v3742 = vadd.f32 %v3346, %v3686
      %v3743 = vadd.f32 %v3347, %v3687
      %v3744 = vadd.f32 %v3348, %v3688
      %v3745 = vadd.f32 %v3349, %v3689
      %v3746 = vadd.f32 %v3350, %v3690
      %v3747 = vadd.f32 %v3351, %v3691
      %v3748 = vadd.f32 %v3352, %v3692
      %v3749 = vadd.f32 %v3353, %v3693
      %v3750 = vadd.f32 %v3354, %v3694
      %v3751 = vadd.f32 %v3355, %v3695
      %v3752 = vadd.f32 %v3356, %v3696
      %v3753 = vadd.f32 %v3357, %v3697
      %v3754 = vadd.f32 %v3358, %v3698
      %v3755 = vadd.f32 %v3359, %v3699
      %v3756 = vadd.f32 %v3360, %v3700
      %v3757 = vadd.f32 %v3361, %v3701
      %v3758 = vadd.f32 %v3362, %v3702
      %v3759 = vadd.f32 %v3363, %v3703
      %v3760 = vadd.f32 %v3364, %v3704
      %v3761 = vadd.f32 %v3365, %v3705
      %v3762 = vadd.f32 %v3366, %v3706
      %v3763 = vadd.f32 %v3367, %v3707
      %v3764 = vadd.f32 %v3368, %v3708
      %v3765 = vadd.f32 %v3369, %v3709
      %v3766 = vadd.f32 %v3370, %v3710
      %v3767 = vadd.f32 %v3371, %v3711
      %v3768 = vadd.f32 %v3372, %v3712
      %v3769 = vadd.f32 %v3373, %v3713
      %v3770 = vadd.f32 %v3374, %v3714
      %v3771 = vadd.f32 %v3375, %v3715
      %v3772 = vadd.f32 %v3376, %v3716
      %v3773 = vadd.f32 %v3377, %v3717
      %v3774 = vadd.f32 %v3378, %v3718
      %v3775 = vmul.f32 %v2986, %v2870
      %v3776 = vmul.f32 %v2991, %v2870
      %v3777 = vmul.f32 %v2996, %v2870
      %v3778 = vmul.f32 %v3001, %v2870
      %v3779 = vmul.f32 %v3006, %v2870
      %v3780 = vmul.f32 %v3011, %v2870
      %v3781 = vmul.f32 %v3016, %v2870
      %v3782 = vmul.f32 %v3021, %v2870
      %v3783 = vmul.f32 %v3026, %v2870
      %v3784 = vmul.f32 %v3031, %v2870
      %v3785 = vmul.f32 %v3036, %v2870
      %v3786 = vmul.f32 %v3041, %v2870
      %v3787 = vmul.f32 %v3046, %v2870
      %v3788 = vmul.f32 %v3051, %v2870
      %v3789 = vmul.f32 %v3056, %v2870
      %v3790 = vmul.f32 %v3061, %v2870
      %v3791 = vmul.f32 %v3066, %v2870
      %v3792 = vmul.f32 %v3071, %v2870
      %v3793 = vmul.f32 %v3076, %v2870
      %v3794 = vmul.f32 %v3081, %v2870
      %v3795 = vmul.f32 %v3086, %v2870
      %v3796 = vmul.f32 %v3091, %v2870
      %v3797 = vmul.f32 %v3096, %v2870
      %v3798 = vmul.f32 %v3101, %v2870
      %v3799 = vmul.f32 %v3106, %v2870
      %v3800 = vmul.f32 %v3111, %v2870
      %v3801 = vmul.f32 %v3116, %v2870
      %v3802 = vmul.f32 %v3121, %v2870
      %v3803 = vmul.f32 %v3126, %v2870
      %v3804 = vmul.f32 %v3131, %v2870
      %v3805 = vmul.f32 %v3136, %v2870
      %v3806 = vmul.f32 %v3141, %v2870
      %v3807 = vmul.f32 %v3146, %v2870
      %v3808 = vmul.f32 %v3151, %v2870
      %v3809 = vmul.f32 %v3156, %v2870
      %v3810 = vmul.f32 %v3161, %v2870
      %v3811 = vmul.f32 %v3166, %v2870
      %v3812 = vmul.f32 %v3171, %v2870
      %v3813 = vmul.f32 %v3176, %v2870
      %v3814 = vmul.f32 %v3181, %v2870
      %v3815 = vmul.f32 %v3186, %v2870
      %v3816 = vmul.f32 %v3191, %v2870
      %v3817 = vmul.f32 %v3196, %v2870
      %v3818 = vmul.f32 %v3201, %v2870
      %v3819 = vmul.f32 %v3206, %v2870
      %v3820 = vmul.f32 %v3211, %v2870
      %v3821 = vmul.f32 %v3216, %v2870
      %v3822 = vmul.f32 %v3221, %v2870
      %v3823 = vmul.f32 %v3226, %v2870
      %v3824 = vmul.f32 %v3231, %v2870
      %v3825 = vmul.f32 %v3236, %v2870
      %v3826 = vmul.f32 %v3241, %v2870
      %v3827 = vmul.f32 %v3246, %v2870
      %v3828 = vmul.f32 %v3251, %v2870
      %v3829 = vmul.f32 %v3256, %v2870
      %v3830 = vmul.f32 %v3261, %v2870
      %v3831 = vadd.f32 %v2302, %v3775
      %v3832 = vadd.f32 %v2303, %v3776
      %v3833 = vadd.f32 %v2304, %v3777
      %v3834 = vadd.f32 %v2305, %v3778
      %v3835 = vadd.f32 %v2306, %v3779
      %v3836 = vadd.f32 %v2307, %v3780
      %v3837 = vadd.f32 %v2308, %v3781
      %v3838 = vadd.f32 %v2309, %v3782
      %v3839 = vadd.f32 %v2310, %v3783
      %v3840 = vadd.f32 %v2311, %v3784
      %v3841 = vadd.f32 %v2312, %v3785
      %v3842 = vadd.f32 %v2313, %v3786
      %v3843 = vadd.f32 %v2314, %v3787
      %v3844 = vadd.f32 %v2315, %v3788
      %v3845 = vadd.f32 %v2316, %v3789
      %v3846 = vadd.f32 %v2317, %v3790
      %v3847 = vadd.f32 %v2318, %v3791
      %v3848 = vadd.f32 %v2319, %v3792
      %v3849 = vadd.f32 %v2320, %v3793
      %v3850 = vadd.f32 %v2321, %v3794
      %v3851 = vadd.f32 %v2322, %v3795
      %v3852 = vadd.f32 %v2323, %v3796
      %v3853 = vadd.f32 %v2324, %v3797
      %v3854 = vadd.f32 %v2325, %v3798
      %v3855 = vadd.f32 %v2326, %v3799
      %v3856 = vadd.f32 %v2327, %v3800
      %v3857 = vadd.f32 %v2328, %v3801
      %v3858 = vadd.f32 %v2329, %v3802
      %v3859 = vadd.f32 %v2330, %v3803
      %v3860 = vadd.f32 %v2331, %v3804
      %v3861 = vadd.f32 %v2332, %v3805
      %v3862 = vadd.f32 %v2333, %v3806
      %v3863 = vadd.f32 %v2334, %v3807
      %v3864 = vadd.f32 %v2335, %v3808
      %v3865 = vadd.f32 %v2336, %v3809
      %v3866 = vadd.f32 %v2337, %v3810
      %v3867 = vadd.f32 %v2338, %v3811
      %v3868 = vadd.f32 %v2339, %v3812
      %v3869 = vadd.f32 %v2340, %v3813
      %v3870 = vadd.f32 %v2341, %v3814
      %v3871 = vadd.f32 %v2342, %v3815
      %v3872 = vadd.f32 %v2343, %v3816
      %v3873 = vadd.f32 %v2344, %v3817
      %v3874 = vadd.f32 %v2345, %v3818
      %v3875 = vadd.f32 %v2346, %v3819
      %v3876 = vadd.f32 %v2347, %v3820
      %v3877 = vadd.f32 %v2348, %v3821
      %v3878 = vadd.f32 %v2349, %v3822
      %v3879 = vadd.f32 %v2350, %v3823
      %v3880 = vadd.f32 %v2351, %v3824
      %v3881 = vadd.f32 %v2352, %v3825
      %v3882 = vadd.f32 %v2353, %v3826
      %v3883 = vadd.f32 %v2354, %v3827
      %v3884 = vadd.f32 %v2355, %v3828
      %v3885 = vadd.f32 %v2356, %v3829
      %v3886 = vadd.f32 %v2357, %v3830
      %v3887 = vmul.f32 %v3382, %v3266
      %v3888 = vmul.f32 %v3387, %v3266
      %v3889 = vmul.f32 %v3392, %v3266
      %v3890 = vmul.f32 %v3397, %v3266
      %v3891 = vmul.f32 %v3402, %v3266
      %v3892 = vmul.f32 %v3407, %v3266
      %v3893 = vmul.f32 %v3412, %v3266
      %v3894 = vmul.f32 %v3417, %v3266
      %v3895 = vmul.f32 %v3422, %v3266
      %v3896 = vmul.f32 %v3427, %v3266
      %v3897 = vmul.f32 %v3432, %v3266
      %v3898 = vmul.f32 %v3437, %v3266
      %v3899 = vmul.f32 %v3442, %v3266
      %v3900 = vmul.f32 %v3447, %v3266
      %v3901 = vmul.f32 %v3452, %v3266
      %v3902 = vmul.f32 %v3457, %v3266
      %v3903 = vmul.f32 %v3462, %v3266
      %v3904 = vmul.f32 %v3467, %v3266
      %v3905 = vmul.f32 %v3472, %v3266
      %v3906 = vmul.f32 %v3477, %v3266
      %v3907 = vmul.f32 %v3482, %v3266
      %v3908 = vmul.f32 %v3487, %v3266
      %v3909 = vmul.f32 %v3492, %v3266
      %v3910 = vmul.f32 %v3497, %v3266
      %v3911 = vmul.f32 %v3502, %v3266
      %v3912 = vmul.f32 %v3507, %v3266
      %v3913 = vmul.f32 %v3512, %v3266
      %v3914 = vmul.f32 %v3517, %v3266
      %v3915 = vmul.f32 %v3522, %v3266
      %v3916 = vmul.f32 %v3527, %v3266
      %v3917 = vmul.f32 %v3532, %v3266
      %v3918 = vmul.f32 %v3537, %v3266
      %v3919 = vmul.f32 %v3542, %v3266
      %v3920 = vmul.f32 %v3547, %v3266
      %v3921 = vmul.f32 %v3552, %v3266
      %v3922 = vmul.f32 %v3557, %v3266
      %v3923 = vmul.f32 %v3562, %v3266
      %v3924 = vmul.f32 %v3567, %v3266
      %v3925 = vmul.f32 %v3572, %v3266
      %v3926 = vmul.f32 %v3577, %v3266
      %v3927 = vmul.f32 %v3582, %v3266
      %v3928 = vmul.f32 %v3587, %v3266
      %v3929 = vmul.f32 %v3592, %v3266
      %v3930 = vmul.f32 %v3597, %v3266
      %v3931 = vmul.f32 %v3602, %v3266
      %v3932 = vmul.f32 %v3607, %v3266
      %v3933 = vmul.f32 %v3612, %v3266
      %v3934 = vmul.f32 %v3617, %v3266
      %v3935 = vmul.f32 %v3622, %v3266
      %v3936 = vmul.f32 %v3627, %v3266
      %v3937 = vmul.f32 %v3632, %v3266
      %v3938 = vmul.f32 %v3637, %v3266
      %v3939 = vmul.f32 %v3642, %v3266
      %v3940 = vmul.f32 %v3647, %v3266
      %v3941 = vmul.f32 %v3652, %v3266
      %v3942 = vmul.f32 %v3657, %v3266
      %v3943 = vadd.f32 %v3831, %v3887
      %v3944 = vadd.f32 %v3832, %v3888
      %v3945 = vadd.f32 %v3833, %v3889
      %v3946 = vadd.f32 %v3834, %v3890
      %v3947 = vadd.f32 %v3835, %v3891
      %v3948 = vadd.f32 %v3836, %v3892
      %v3949 = vadd.f32 %v3837, %v3893
      %v3950 = vadd.f32 %v3838, %v3894
      %v3951 = vadd.f32 %v3839, %v3895
      %v3952 = vadd.f32 %v3840, %v3896
      %v3953 = vadd.f32 %v3841, %v3897
      %v3954 = vadd.f32 %v3842, %v3898
      %v3955 = vadd.f32 %v3843, %v3899
      %v3956 = vadd.f32 %v3844, %v3900
      %v3957 = vadd.f32 %v3845, %v3901
      %v3958 = vadd.f32 %v3846, %v3902
      %v3959 = vadd.f32 %v3847, %v3903
      %v3960 = vadd.f32 %v3848, %v3904
      %v3961 = vadd.f32 %v3849, %v3905
      %v3962 = vadd.f32 %v3850, %v3906
      %v3963 = vadd.f32 %v3851, %v3907
      %v3964 = vadd.f32 %v3852, %v3908
      %v3965 = vadd.f32 %v3853, %v3909
      %v3966 = vadd.f32 %v3854, %v3910
      %v3967 = vadd.f32 %v3855, %v3911
      %v3968 = vadd.f32 %v3856, %v3912
      %v3969 = vadd.f32 %v3857, %v3913
      %v3970 = vadd.f32 %v3858, %v3914
      %v3971 = vadd.f32 %v3859, %v3915
      %v3972 = vadd.f32 %v3860, %v3916
      %v3973 = vadd.f32 %v3861, %v3917
      %v3974 = vadd.f32 %v3862, %v3918
      %v3975 = vadd.f32 %v3863, %v3919
      %v3976 = vadd.f32 %v3864, %v3920
      %v3977 = vadd.f32 %v3865, %v3921
      %v3978 = vadd.f32 %v3866, %v3922
      %v3979 = vadd.f32 %v3867, %v3923
      %v3980 = vadd.f32 %v3868, %v3924
      %v3981 = vadd.f32 %v3869, %v3925
      %v3982 = vadd.f32 %v3870, %v3926
      %v3983 = vadd.f32 %v3871, %v3927
      %v3984 = vadd.f32 %v3872, %v3928
      %v3985 = vadd.f32 %v3873, %v3929
      %v3986 = vadd.f32 %v3874, %v3930
      %v3987 = vadd.f32 %v3875, %v3931
      %v3988 = vadd.f32 %v3876, %v3932
      %v3989 = vadd.f32 %v3877, %v3933
      %v3990 = vadd.f32 %v3878, %v3934
      %v3991 = vadd.f32 %v3879, %v3935
      %v3992 = vadd.f32 %v3880, %v3936
      %v3993 = vadd.f32 %v3881, %v3937
      %v3994 = vadd.f32 %v3882, %v3938
      %v3995 = vadd.f32 %v3883, %v3939
      %v3996 = vadd.f32 %v3884, %v3940
      %v3997 = vadd.f32 %v3885, %v3941
      %v3998 = vadd.f32 %v3886, %v3942
      %4000 = vset.pattern.permute.xlu0 0
      %4001 = vperm.xlu0 %4000, %v2528
      %v4002 = vpop.permute.xlu0 %4001
      %4005 = vset.pattern.permute.xlu0 0
      %4006 = vperm.xlu0 %4005, %v2529
      %v4007 = vpop.permute.xlu0 %4006
      %4010 = vset.pattern.permute.xlu0 0
      %4011 = vperm.xlu0 %4010, %v2530
      %v4012 = vpop.permute.xlu0 %4011
      %4015 = vset.pattern.permute.xlu0 0
      %4016 = vperm.xlu0 %4015, %v2531
      %v4017 = vpop.permute.xlu0 %4016
      %4020 = vset.pattern.permute.xlu0 0
      %4021 = vperm.xlu0 %4020, %v2532
      %v4022 = vpop.permute.xlu0 %4021
      %4025 = vset.pattern.permute.xlu0 0
      %4026 = vperm.xlu0 %4025, %v2533
      %v4027 = vpop.permute.xlu0 %4026
      %4030 = vset.pattern.permute.xlu0 0
      %4031 = vperm.xlu0 %4030, %v2534
      %v4032 = vpop.permute.xlu0 %4031
      %4035 = vset.pattern.permute.xlu0 0
      %4036 = vperm.xlu0 %4035, %v2535
      %v4037 = vpop.permute.xlu0 %4036
      %4040 = vset.pattern.permute.xlu0 0
      %4041 = vperm.xlu0 %4040, %v2536
      %v4042 = vpop.permute.xlu0 %4041
      %4045 = vset.pattern.permute.xlu0 0
      %4046 = vperm.xlu0 %4045, %v2537
      %v4047 = vpop.permute.xlu0 %4046
      %4050 = vset.pattern.permute.xlu0 0
      %4051 = vperm.xlu0 %4050, %v2538
      %v4052 = vpop.permute.xlu0 %4051
      %4055 = vset.pattern.permute.xlu0 0
      %4056 = vperm.xlu0 %4055, %v2539
      %v4057 = vpop.permute.xlu0 %4056
      %4060 = vset.pattern.permute.xlu0 0
      %4061 = vperm.xlu0 %4060, %v2540
      %v4062 = vpop.permute.xlu0 %4061
      %4065 = vset.pattern.permute.xlu0 0
      %4066 = vperm.xlu0 %4065, %v2541
      %v4067 = vpop.permute.xlu0 %4066
      %4070 = vset.pattern.permute.xlu0 0
      %4071 = vperm.xlu0 %4070, %v2542
      %v4072 = vpop.permute.xlu0 %4071
      %4075 = vset.pattern.permute.xlu0 0
      %4076 = vperm.xlu0 %4075, %v2543
      %v4077 = vpop.permute.xlu0 %4076
      %4080 = vset.pattern.permute.xlu0 0
      %4081 = vperm.xlu0 %4080, %v2544
      %v4082 = vpop.permute.xlu0 %4081
      %4085 = vset.pattern.permute.xlu0 0
      %4086 = vperm.xlu0 %4085, %v2545
      %v4087 = vpop.permute.xlu0 %4086
      %4090 = vset.pattern.permute.xlu0 0
      %4091 = vperm.xlu0 %4090, %v2546
      %v4092 = vpop.permute.xlu0 %4091
      %4095 = vset.pattern.permute.xlu0 0
      %4096 = vperm.xlu0 %4095, %v2547
      %v4097 = vpop.permute.xlu0 %4096
      %4100 = vset.pattern.permute.xlu0 0
      %4101 = vperm.xlu0 %4100, %v2548
      %v4102 = vpop.permute.xlu0 %4101
      %4105 = vset.pattern.permute.xlu0 0
      %4106 = vperm.xlu0 %4105, %v2549
      %v4107 = vpop.permute.xlu0 %4106
      %4110 = vset.pattern.permute.xlu0 0
      %4111 = vperm.xlu0 %4110, %v2550
      %v4112 = vpop.permute.xlu0 %4111
      %4115 = vset.pattern.permute.xlu0 0
      %4116 = vperm.xlu0 %4115, %v2551
      %v4117 = vpop.permute.xlu0 %4116
      %4120 = vset.pattern.permute.xlu0 0
      %4121 = vperm.xlu0 %4120, %v2552
      %v4122 = vpop.permute.xlu0 %4121
      %4125 = vset.pattern.permute.xlu0 0
      %4126 = vperm.xlu0 %4125, %v2553
      %v4127 = vpop.permute.xlu0 %4126
      %4130 = vset.pattern.permute.xlu0 0
      %4131 = vperm.xlu0 %4130, %v2554
      %v4132 = vpop.permute.xlu0 %4131
      %4135 = vset.pattern.permute.xlu0 0
      %4136 = vperm.xlu0 %4135, %v2555
      %v4137 = vpop.permute.xlu0 %4136
      %4140 = vset.pattern.permute.xlu0 0
      %4141 = vperm.xlu0 %4140, %v2556
      %v4142 = vpop.permute.xlu0 %4141
      %4145 = vset.pattern.permute.xlu0 0
      %4146 = vperm.xlu0 %4145, %v2557
      %v4147 = vpop.permute.xlu0 %4146
      %4150 = vset.pattern.permute.xlu0 0
      %4151 = vperm.xlu0 %4150, %v2558
      %v4152 = vpop.permute.xlu0 %4151
      %4155 = vset.pattern.permute.xlu0 0
      %4156 = vperm.xlu0 %4155, %v2559
      %v4157 = vpop.permute.xlu0 %4156
      %4160 = vset.pattern.permute.xlu0 0
      %4161 = vperm.xlu0 %4160, %v2560
      %v4162 = vpop.permute.xlu0 %4161
      %4165 = vset.pattern.permute.xlu0 0
      %4166 = vperm.xlu0 %4165, %v2561
      %v4167 = vpop.permute.xlu0 %4166
      %4170 = vset.pattern.permute.xlu0 0
      %4171 = vperm.xlu0 %4170, %v2562
      %v4172 = vpop.permute.xlu0 %4171
      %4175 = vset.pattern.permute.xlu0 0
      %4176 = vperm.xlu0 %4175, %v2563
      %v4177 = vpop.permute.xlu0 %4176
      %4180 = vset.pattern.permute.xlu0 0
      %4181 = vperm.xlu0 %4180, %v2564
      %v4182 = vpop.permute.xlu0 %4181
      %4185 = vset.pattern.permute.xlu0 0
      %4186 = vperm.xlu0 %4185, %v2565
      %v4187 = vpop.permute.xlu0 %4186
      %4190 = vset.pattern.permute.xlu0 0
      %4191 = vperm.xlu0 %4190, %v2566
      %v4192 = vpop.permute.xlu0 %4191
      %4195 = vset.pattern.permute.xlu0 0
      %4196 = vperm.xlu0 %4195, %v2567
      %v4197 = vpop.permute.xlu0 %4196
      %4200 = vset.pattern.permute.xlu0 0
      %4201 = vperm.xlu0 %4200, %v2568
      %v4202 = vpop.permute.xlu0 %4201
      %4205 = vset.pattern.permute.xlu0 0
      %4206 = vperm.xlu0 %4205, %v2569
      %v4207 = vpop.permute.xlu0 %4206
      %4210 = vset.pattern.permute.xlu0 0
      %4211 = vperm.xlu0 %4210, %v2570
      %v4212 = vpop.permute.xlu0 %4211
      %4215 = vset.pattern.permute.xlu0 0
      %4216 = vperm.xlu0 %4215, %v2571
      %v4217 = vpop.permute.xlu0 %4216
      %4220 = vset.pattern.permute.xlu0 0
      %4221 = vperm.xlu0 %4220, %v2572
      %v4222 = vpop.permute.xlu0 %4221
      %4225 = vset.pattern.permute.xlu0 0
      %4226 = vperm.xlu0 %4225, %v2573
      %v4227 = vpop.permute.xlu0 %4226
      %4230 = vset.pattern.permute.xlu0 0
      %4231 = vperm.xlu0 %4230, %v2574
      %v4232 = vpop.permute.xlu0 %4231
      %4235 = vset.pattern.permute.xlu0 0
      %4236 = vperm.xlu0 %4235, %v2575
      %v4237 = vpop.permute.xlu0 %4236
      %4240 = vset.pattern.permute.xlu0 0
      %4241 = vperm.xlu0 %4240, %v2576
      %v4242 = vpop.permute.xlu0 %4241
      %4245 = vset.pattern.permute.xlu0 0
      %4246 = vperm.xlu0 %4245, %v2577
      %v4247 = vpop.permute.xlu0 %4246
      %4250 = vset.pattern.permute.xlu0 0
      %4251 = vperm.xlu0 %4250, %v2578
      %v4252 = vpop.permute.xlu0 %4251
      %4255 = vset.pattern.permute.xlu0 0
      %4256 = vperm.xlu0 %4255, %v2579
      %v4257 = vpop.permute.xlu0 %4256
      %4260 = vset.pattern.permute.xlu0 0
      %4261 = vperm.xlu0 %4260, %v2580
      %v4262 = vpop.permute.xlu0 %4261
      %4265 = vset.pattern.permute.xlu0 0
      %4266 = vperm.xlu0 %4265, %v2581
      %v4267 = vpop.permute.xlu0 %4266
      %4270 = vset.pattern.permute.xlu0 0
      %4271 = vperm.xlu0 %4270, %v2582
      %v4272 = vpop.permute.xlu0 %4271
      %4275 = vset.pattern.permute.xlu0 0
      %4276 = vperm.xlu0 %4275, %v2583
      %v4277 = vpop.permute.xlu0 %4276
      %v4279 = vmul.f32 %v4002, %v3662
      %v4280 = vmul.f32 %v4007, %v3662
      %v4281 = vmul.f32 %v4012, %v3662
      %v4282 = vmul.f32 %v4017, %v3662
      %v4283 = vmul.f32 %v4022, %v3662
      %v4284 = vmul.f32 %v4027, %v3662
      %v4285 = vmul.f32 %v4032, %v3662
      %v4286 = vmul.f32 %v4037, %v3662
      %v4287 = vmul.f32 %v4042, %v3662
      %v4288 = vmul.f32 %v4047, %v3662
      %v4289 = vmul.f32 %v4052, %v3662
      %v4290 = vmul.f32 %v4057, %v3662
      %v4291 = vmul.f32 %v4062, %v3662
      %v4292 = vmul.f32 %v4067, %v3662
      %v4293 = vmul.f32 %v4072, %v3662
      %v4294 = vmul.f32 %v4077, %v3662
      %v4295 = vmul.f32 %v4082, %v3662
      %v4296 = vmul.f32 %v4087, %v3662
      %v4297 = vmul.f32 %v4092, %v3662
      %v4298 = vmul.f32 %v4097, %v3662
      %v4299 = vmul.f32 %v4102, %v3662
      %v4300 = vmul.f32 %v4107, %v3662
      %v4301 = vmul.f32 %v4112, %v3662
      %v4302 = vmul.f32 %v4117, %v3662
      %v4303 = vmul.f32 %v4122, %v3662
      %v4304 = vmul.f32 %v4127, %v3662
      %v4305 = vmul.f32 %v4132, %v3662
      %v4306 = vmul.f32 %v4137, %v3662
      %v4307 = vmul.f32 %v4142, %v3662
      %v4308 = vmul.f32 %v4147, %v3662
      %v4309 = vmul.f32 %v4152, %v3662
      %v4310 = vmul.f32 %v4157, %v3662
      %v4311 = vmul.f32 %v4162, %v3662
      %v4312 = vmul.f32 %v4167, %v3662
      %v4313 = vmul.f32 %v4172, %v3662
      %v4314 = vmul.f32 %v4177, %v3662
      %v4315 = vmul.f32 %v4182, %v3662
      %v4316 = vmul.f32 %v4187, %v3662
      %v4317 = vmul.f32 %v4192, %v3662
      %v4318 = vmul.f32 %v4197, %v3662
      %v4319 = vmul.f32 %v4202, %v3662
      %v4320 = vmul.f32 %v4207, %v3662
      %v4321 = vmul.f32 %v4212, %v3662
      %v4322 = vmul.f32 %v4217, %v3662
      %v4323 = vmul.f32 %v4222, %v3662
      %v4324 = vmul.f32 %v4227, %v3662
      %v4325 = vmul.f32 %v4232, %v3662
      %v4326 = vmul.f32 %v4237, %v3662
      %v4327 = vmul.f32 %v4242, %v3662
      %v4328 = vmul.f32 %v4247, %v3662
      %v4329 = vmul.f32 %v4252, %v3662
      %v4330 = vmul.f32 %v4257, %v3662
      %v4331 = vmul.f32 %v4262, %v3662
      %v4332 = vmul.f32 %v4267, %v3662
      %v4333 = vmul.f32 %v4272, %v3662
      %v4334 = vmul.f32 %v4277, %v3662
      %v4335 = vadd.f32 %v3943, %v4279
      %v4336 = vadd.f32 %v3944, %v4280
      %v4337 = vadd.f32 %v3945, %v4281
      %v4338 = vadd.f32 %v3946, %v4282
      %v4339 = vadd.f32 %v3947, %v4283
      %v4340 = vadd.f32 %v3948, %v4284
      %v4341 = vadd.f32 %v3949, %v4285
      %v4342 = vadd.f32 %v3950, %v4286
      %v4343 = vadd.f32 %v3951, %v4287
      %v4344 = vadd.f32 %v3952, %v4288
      %v4345 = vadd.f32 %v3953, %v4289
      %v4346 = vadd.f32 %v3954, %v4290
      %v4347 = vadd.f32 %v3955, %v4291
      %v4348 = vadd.f32 %v3956, %v4292
      %v4349 = vadd.f32 %v3957, %v4293
      %v4350 = vadd.f32 %v3958, %v4294
      %v4351 = vadd.f32 %v3959, %v4295
      %v4352 = vadd.f32 %v3960, %v4296
      %v4353 = vadd.f32 %v3961, %v4297
      %v4354 = vadd.f32 %v3962, %v4298
      %v4355 = vadd.f32 %v3963, %v4299
      %v4356 = vadd.f32 %v3964, %v4300
      %v4357 = vadd.f32 %v3965, %v4301
      %v4358 = vadd.f32 %v3966, %v4302
      %v4359 = vadd.f32 %v3967, %v4303
      %v4360 = vadd.f32 %v3968, %v4304
      %v4361 = vadd.f32 %v3969, %v4305
      %v4362 = vadd.f32 %v3970, %v4306
      %v4363 = vadd.f32 %v3971, %v4307
      %v4364 = vadd.f32 %v3972, %v4308
      %v4365 = vadd.f32 %v3973, %v4309
      %v4366 = vadd.f32 %v3974, %v4310
      %v4367 = vadd.f32 %v3975, %v4311
      %v4368 = vadd.f32 %v3976, %v4312
      %v4369 = vadd.f32 %v3977, %v4313
      %v4370 = vadd.f32 %v3978, %v4314
      %v4371 = vadd.f32 %v3979, %v4315
      %v4372 = vadd.f32 %v3980, %v4316
      %v4373 = vadd.f32 %v3981, %v4317
      %v4374 = vadd.f32 %v3982, %v4318
      %v4375 = vadd.f32 %v3983, %v4319
      %v4376 = vadd.f32 %v3984, %v4320
      %v4377 = vadd.f32 %v3985, %v4321
      %v4378 = vadd.f32 %v3986, %v4322
      %v4379 = vadd.f32 %v3987, %v4323
      %v4380 = vadd.f32 %v3988, %v4324
      %v4381 = vadd.f32 %v3989, %v4325
      %v4382 = vadd.f32 %v3990, %v4326
      %v4383 = vadd.f32 %v3991, %v4327
      %v4384 = vadd.f32 %v3992, %v4328
      %v4385 = vadd.f32 %v3993, %v4329
      %v4386 = vadd.f32 %v3994, %v4330
      %v4387 = vadd.f32 %v3995, %v4331
      %v4388 = vadd.f32 %v3996, %v4332
      %v4389 = vadd.f32 %v3997, %v4333
      %v4390 = vadd.f32 %v3998, %v4334
      %s4391 = scalar_lea.vmem %s315, 32
      %v4392 = vld [vmem:[%s4391] sm:$0xff]
      %v4393 = vld [vmem:[%s4391 + $0x8] sm:$0x3f]
      %v4394 = vld [vmem:[%s4391 + $0x10] sm:$0xff]
      %v4395 = vld [vmem:[%s4391 + $0x18] sm:$0x3f]
      %v4396 = vld [vmem:[%s4391 + $0x20] sm:$0xff]
      %v4397 = vld [vmem:[%s4391 + $0x28] sm:$0x3f]
      %v4398 = vld [vmem:[%s4391 + $0x30] sm:$0xff]
      %v4399 = vld [vmem:[%s4391 + $0x38] sm:$0x3f]
      %v4400 = vld [vmem:[%s4391 + $0x40] sm:$0xff]
      %v4401 = vld [vmem:[%s4391 + $0x48] sm:$0x3f]
      %v4402 = vld [vmem:[%s4391 + $0x50] sm:$0xff]
      %v4403 = vld [vmem:[%s4391 + $0x58] sm:$0x3f]
      %v4404 = vld [vmem:[%s4391 + $0x60] sm:$0xff]
      %v4405 = vld [vmem:[%s4391 + $0x68] sm:$0x3f]
      %v4406 = vld [vmem:[%s4391 + $0x70] sm:$0xff]
      %v4407 = vld [vmem:[%s4391 + $0x78] sm:$0x3f]
      %v4408 = vld [vmem:[%s4391 + $0x80] sm:$0xff]
      %v4409 = vld [vmem:[%s4391 + $0x88] sm:$0x3f]
      %v4410 = vld [vmem:[%s4391 + $0x90] sm:$0xff]
      %v4411 = vld [vmem:[%s4391 + $0x98] sm:$0x3f]
      %v4412 = vld [vmem:[%s4391 + $0xa0] sm:$0xff]
      %v4413 = vld [vmem:[%s4391 + $0xa8] sm:$0x3f]
      %v4414 = vld [vmem:[%s4391 + $0xb0] sm:$0xff]
      %v4415 = vld [vmem:[%s4391 + $0xb8] sm:$0x3f]
      %v4416 = vld [vmem:[%s4391 + $0xc0] sm:$0xff]
      %v4417 = vld [vmem:[%s4391 + $0xc8] sm:$0x3f]
      %v4418 = vld [vmem:[%s4391 + $0xd0] sm:$0xff]
      %v4419 = vld [vmem:[%s4391 + $0xd8] sm:$0x3f]
      %v4420 = vld [vmem:[%s4391 + $0xe0] sm:$0xff]
      %v4421 = vld [vmem:[%s4391 + $0xe8] sm:$0x3f]
      %v4422 = vld [vmem:[%s4391 + $0xf0] sm:$0xff]
      %v4423 = vld [vmem:[%s4391 + $0xf8] sm:$0x3f]
      %v4424 = vld [vmem:[%s4391 + $0x100] sm:$0xff]
      %v4425 = vld [vmem:[%s4391 + $0x108] sm:$0x3f]
      %v4426 = vld [vmem:[%s4391 + $0x110] sm:$0xff]
      %v4427 = vld [vmem:[%s4391 + $0x118] sm:$0x3f]
      %v4428 = vld [vmem:[%s4391 + $0x120] sm:$0xff]
      %v4429 = vld [vmem:[%s4391 + $0x128] sm:$0x3f]
      %v4430 = vld [vmem:[%s4391 + $0x130] sm:$0xff]
      %v4431 = vld [vmem:[%s4391 + $0x138] sm:$0x3f]
      %v4432 = vld [vmem:[%s4391 + $0x140] sm:$0xff]
      %v4433 = vld [vmem:[%s4391 + $0x148] sm:$0x3f]
      %v4434 = vld [vmem:[%s4391 + $0x150] sm:$0xff]
      %v4435 = vld [vmem:[%s4391 + $0x158] sm:$0x3f]
      %v4436 = vld [vmem:[%s4391 + $0x160] sm:$0xff]
      %v4437 = vld [vmem:[%s4391 + $0x168] sm:$0x3f]
      %v4438 = vld [vmem:[%s4391 + $0x170] sm:$0xff]
      %v4439 = vld [vmem:[%s4391 + $0x178] sm:$0x3f]
      %v4440 = vld [vmem:[%s4391 + $0x180] sm:$0xff]
      %v4441 = vld [vmem:[%s4391 + $0x188] sm:$0x3f]
      %v4442 = vld [vmem:[%s4391 + $0x190] sm:$0xff]
      %v4443 = vld [vmem:[%s4391 + $0x198] sm:$0x3f]
      %v4444 = vld [vmem:[%s4391 + $0x1a0] sm:$0xff]
      %v4445 = vld [vmem:[%s4391 + $0x1a8] sm:$0x3f]
      %v4446 = vld [vmem:[%s4391 + $0x1b0] sm:$0xff]
      %v4447 = vld [vmem:[%s4391 + $0x1b8] sm:$0x3f]
      %s4448 = scalar_lea.vmem %s320, 32
      %v4449 = vld [vmem:[%s4448] sm:$0xff]
      %v4450 = vld [vmem:[%s4448 + $0x8] sm:$0x3f]
      %v4451 = vld [vmem:[%s4448 + $0x10] sm:$0xff]
      %v4452 = vld [vmem:[%s4448 + $0x18] sm:$0x3f]
      %v4453 = vld [vmem:[%s4448 + $0x20] sm:$0xff]
      %v4454 = vld [vmem:[%s4448 + $0x28] sm:$0x3f]
      %v4455 = vld [vmem:[%s4448 + $0x30] sm:$0xff]
      %v4456 = vld [vmem:[%s4448 + $0x38] sm:$0x3f]
      %v4457 = vld [vmem:[%s4448 + $0x40] sm:$0xff]
      %v4458 = vld [vmem:[%s4448 + $0x48] sm:$0x3f]
      %v4459 = vld [vmem:[%s4448 + $0x50] sm:$0xff]
      %v4460 = vld [vmem:[%s4448 + $0x58] sm:$0x3f]
      %v4461 = vld [vmem:[%s4448 + $0x60] sm:$0xff]
      %v4462 = vld [vmem:[%s4448 + $0x68] sm:$0x3f]
      %v4463 = vld [vmem:[%s4448 + $0x70] sm:$0xff]
      %v4464 = vld [vmem:[%s4448 + $0x78] sm:$0x3f]
      %v4465 = vld [vmem:[%s4448 + $0x80] sm:$0xff]
      %v4466 = vld [vmem:[%s4448 + $0x88] sm:$0x3f]
      %v4467 = vld [vmem:[%s4448 + $0x90] sm:$0xff]
      %v4468 = vld [vmem:[%s4448 + $0x98] sm:$0x3f]
      %v4469 = vld [vmem:[%s4448 + $0xa0] sm:$0xff]
      %v4470 = vld [vmem:[%s4448 + $0xa8] sm:$0x3f]
      %v4471 = vld [vmem:[%s4448 + $0xb0] sm:$0xff]
      %v4472 = vld [vmem:[%s4448 + $0xb8] sm:$0x3f]
      %v4473 = vld [vmem:[%s4448 + $0xc0] sm:$0xff]
      %v4474 = vld [vmem:[%s4448 + $0xc8] sm:$0x3f]
      %v4475 = vld [vmem:[%s4448 + $0xd0] sm:$0xff]
      %v4476 = vld [vmem:[%s4448 + $0xd8] sm:$0x3f]
      %v4477 = vld [vmem:[%s4448 + $0xe0] sm:$0xff]
      %v4478 = vld [vmem:[%s4448 + $0xe8] sm:$0x3f]
      %v4479 = vld [vmem:[%s4448 + $0xf0] sm:$0xff]
      %v4480 = vld [vmem:[%s4448 + $0xf8] sm:$0x3f]
      %v4481 = vld [vmem:[%s4448 + $0x100] sm:$0xff]
      %v4482 = vld [vmem:[%s4448 + $0x108] sm:$0x3f]
      %v4483 = vld [vmem:[%s4448 + $0x110] sm:$0xff]
      %v4484 = vld [vmem:[%s4448 + $0x118] sm:$0x3f]
      %v4485 = vld [vmem:[%s4448 + $0x120] sm:$0xff]
      %v4486 = vld [vmem:[%s4448 + $0x128] sm:$0x3f]
      %v4487 = vld [vmem:[%s4448 + $0x130] sm:$0xff]
      %v4488 = vld [vmem:[%s4448 + $0x138] sm:$0x3f]
      %v4489 = vld [vmem:[%s4448 + $0x140] sm:$0xff]
      %v4490 = vld [vmem:[%s4448 + $0x148] sm:$0x3f]
      %v4491 = vld [vmem:[%s4448 + $0x150] sm:$0xff]
      %v4492 = vld [vmem:[%s4448 + $0x158] sm:$0x3f]
      %v4493 = vld [vmem:[%s4448 + $0x160] sm:$0xff]
      %v4494 = vld [vmem:[%s4448 + $0x168] sm:$0x3f]
      %v4495 = vld [vmem:[%s4448 + $0x170] sm:$0xff]
      %v4496 = vld [vmem:[%s4448 + $0x178] sm:$0x3f]
      %v4497 = vld [vmem:[%s4448 + $0x180] sm:$0xff]
      %v4498 = vld [vmem:[%s4448 + $0x188] sm:$0x3f]
      %v4499 = vld [vmem:[%s4448 + $0x190] sm:$0xff]
      %v4500 = vld [vmem:[%s4448 + $0x198] sm:$0x3f]
      %v4501 = vld [vmem:[%s4448 + $0x1a0] sm:$0xff]
      %v4502 = vld [vmem:[%s4448 + $0x1a8] sm:$0x3f]
      %v4503 = vld [vmem:[%s4448 + $0x1b0] sm:$0xff]
      %v4504 = vld [vmem:[%s4448 + $0x1b8] sm:$0x3f]
      %v4505 = vld [vmem:[%s4391 + $0x1] sm:$0xff]
      %v4506 = vld [vmem:[%s4391 + $0x9] sm:$0x3f]
      %v4507 = vld [vmem:[%s4391 + $0x11] sm:$0xff]
      %v4508 = vld [vmem:[%s4391 + $0x19] sm:$0x3f]
      %v4509 = vld [vmem:[%s4391 + $0x21] sm:$0xff]
      %v4510 = vld [vmem:[%s4391 + $0x29] sm:$0x3f]
      %v4511 = vld [vmem:[%s4391 + $0x31] sm:$0xff]
      %v4512 = vld [vmem:[%s4391 + $0x39] sm:$0x3f]
      %v4513 = vld [vmem:[%s4391 + $0x41] sm:$0xff]
      %v4514 = vld [vmem:[%s4391 + $0x49] sm:$0x3f]
      %v4515 = vld [vmem:[%s4391 + $0x51] sm:$0xff]
      %v4516 = vld [vmem:[%s4391 + $0x59] sm:$0x3f]
      %v4517 = vld [vmem:[%s4391 + $0x61] sm:$0xff]
      %v4518 = vld [vmem:[%s4391 + $0x69] sm:$0x3f]
      %v4519 = vld [vmem:[%s4391 + $0x71] sm:$0xff]
      %v4520 = vld [vmem:[%s4391 + $0x79] sm:$0x3f]
      %v4521 = vld [vmem:[%s4391 + $0x81] sm:$0xff]
      %v4522 = vld [vmem:[%s4391 + $0x89] sm:$0x3f]
      %v4523 = vld [vmem:[%s4391 + $0x91] sm:$0xff]
      %v4524 = vld [vmem:[%s4391 + $0x99] sm:$0x3f]
      %v4525 = vld [vmem:[%s4391 + $0xa1] sm:$0xff]
      %v4526 = vld [vmem:[%s4391 + $0xa9] sm:$0x3f]
      %v4527 = vld [vmem:[%s4391 + $0xb1] sm:$0xff]
      %v4528 = vld [vmem:[%s4391 + $0xb9] sm:$0x3f]
      %v4529 = vld [vmem:[%s4391 + $0xc1] sm:$0xff]
      %v4530 = vld [vmem:[%s4391 + $0xc9] sm:$0x3f]
      %v4531 = vld [vmem:[%s4391 + $0xd1] sm:$0xff]
      %v4532 = vld [vmem:[%s4391 + $0xd9] sm:$0x3f]
      %v4533 = vld [vmem:[%s4391 + $0xe1] sm:$0xff]
      %v4534 = vld [vmem:[%s4391 + $0xe9] sm:$0x3f]
      %v4535 = vld [vmem:[%s4391 + $0xf1] sm:$0xff]
      %v4536 = vld [vmem:[%s4391 + $0xf9] sm:$0x3f]
      %v4537 = vld [vmem:[%s4391 + $0x101] sm:$0xff]
      %v4538 = vld [vmem:[%s4391 + $0x109] sm:$0x3f]
      %v4539 = vld [vmem:[%s4391 + $0x111] sm:$0xff]
      %v4540 = vld [vmem:[%s4391 + $0x119] sm:$0x3f]
      %v4541 = vld [vmem:[%s4391 + $0x121] sm:$0xff]
      %v4542 = vld [vmem:[%s4391 + $0x129] sm:$0x3f]
      %v4543 = vld [vmem:[%s4391 + $0x131] sm:$0xff]
      %v4544 = vld [vmem:[%s4391 + $0x139] sm:$0x3f]
      %v4545 = vld [vmem:[%s4391 + $0x141] sm:$0xff]
      %v4546 = vld [vmem:[%s4391 + $0x149] sm:$0x3f]
      %v4547 = vld [vmem:[%s4391 + $0x151] sm:$0xff]
      %v4548 = vld [vmem:[%s4391 + $0x159] sm:$0x3f]
      %v4549 = vld [vmem:[%s4391 + $0x161] sm:$0xff]
      %v4550 = vld [vmem:[%s4391 + $0x169] sm:$0x3f]
      %v4551 = vld [vmem:[%s4391 + $0x171] sm:$0xff]
      %v4552 = vld [vmem:[%s4391 + $0x179] sm:$0x3f]
      %v4553 = vld [vmem:[%s4391 + $0x181] sm:$0xff]
      %v4554 = vld [vmem:[%s4391 + $0x189] sm:$0x3f]
      %v4555 = vld [vmem:[%s4391 + $0x191] sm:$0xff]
      %v4556 = vld [vmem:[%s4391 + $0x199] sm:$0x3f]
      %v4557 = vld [vmem:[%s4391 + $0x1a1] sm:$0xff]
      %v4558 = vld [vmem:[%s4391 + $0x1a9] sm:$0x3f]
      %v4559 = vld [vmem:[%s4391 + $0x1b1] sm:$0xff]
      %v4560 = vld [vmem:[%s4391 + $0x1b9] sm:$0x3f]
      %v4561 = vld [vmem:[%s4448 + $0x1] sm:$0xff]
      %v4562 = vld [vmem:[%s4448 + $0x9] sm:$0x3f]
      %v4563 = vld [vmem:[%s4448 + $0x11] sm:$0xff]
      %v4564 = vld [vmem:[%s4448 + $0x19] sm:$0x3f]
      %v4565 = vld [vmem:[%s4448 + $0x21] sm:$0xff]
      %v4566 = vld [vmem:[%s4448 + $0x29] sm:$0x3f]
      %v4567 = vld [vmem:[%s4448 + $0x31] sm:$0xff]
      %v4568 = vld [vmem:[%s4448 + $0x39] sm:$0x3f]
      %v4569 = vld [vmem:[%s4448 + $0x41] sm:$0xff]
      %v4570 = vld [vmem:[%s4448 + $0x49] sm:$0x3f]
      %v4571 = vld [vmem:[%s4448 + $0x51] sm:$0xff]
      %v4572 = vld [vmem:[%s4448 + $0x59] sm:$0x3f]
      %v4573 = vld [vmem:[%s4448 + $0x61] sm:$0xff]
      %v4574 = vld [vmem:[%s4448 + $0x69] sm:$0x3f]
      %v4575 = vld [vmem:[%s4448 + $0x71] sm:$0xff]
      %v4576 = vld [vmem:[%s4448 + $0x79] sm:$0x3f]
      %v4577 = vld [vmem:[%s4448 + $0x81] sm:$0xff]
      %v4578 = vld [vmem:[%s4448 + $0x89] sm:$0x3f]
      %v4579 = vld [vmem:[%s4448 + $0x91] sm:$0xff]
      %v4580 = vld [vmem:[%s4448 + $0x99] sm:$0x3f]
      %v4581 = vld [vmem:[%s4448 + $0xa1] sm:$0xff]
      %v4582 = vld [vmem:[%s4448 + $0xa9] sm:$0x3f]
      %v4583 = vld [vmem:[%s4448 + $0xb1] sm:$0xff]
      %v4584 = vld [vmem:[%s4448 + $0xb9] sm:$0x3f]
      %v4585 = vld [vmem:[%s4448 + $0xc1] sm:$0xff]
      %v4586 = vld [vmem:[%s4448 + $0xc9] sm:$0x3f]
      %v4587 = vld [vmem:[%s4448 + $0xd1] sm:$0xff]
      %v4588 = vld [vmem:[%s4448 + $0xd9] sm:$0x3f]
      %v4589 = vld [vmem:[%s4448 + $0xe1] sm:$0xff]
      %v4590 = vld [vmem:[%s4448 + $0xe9] sm:$0x3f]
      %v4591 = vld [vmem:[%s4448 + $0xf1] sm:$0xff]
      %v4592 = vld [vmem:[%s4448 + $0xf9] sm:$0x3f]
      %v4593 = vld [vmem:[%s4448 + $0x101] sm:$0xff]
      %v4594 = vld [vmem:[%s4448 + $0x109] sm:$0x3f]
      %v4595 = vld [vmem:[%s4448 + $0x111] sm:$0xff]
      %v4596 = vld [vmem:[%s4448 + $0x119] sm:$0x3f]
      %v4597 = vld [vmem:[%s4448 + $0x121] sm:$0xff]
      %v4598 = vld [vmem:[%s4448 + $0x129] sm:$0x3f]
      %v4599 = vld [vmem:[%s4448 + $0x131] sm:$0xff]
      %v4600 = vld [vmem:[%s4448 + $0x139] sm:$0x3f]
      %v4601 = vld [vmem:[%s4448 + $0x141] sm:$0xff]
      %v4602 = vld [vmem:[%s4448 + $0x149] sm:$0x3f]
      %v4603 = vld [vmem:[%s4448 + $0x151] sm:$0xff]
      %v4604 = vld [vmem:[%s4448 + $0x159] sm:$0x3f]
      %v4605 = vld [vmem:[%s4448 + $0x161] sm:$0xff]
      %v4606 = vld [vmem:[%s4448 + $0x169] sm:$0x3f]
      %v4607 = vld [vmem:[%s4448 + $0x171] sm:$0xff]
      %v4608 = vld [vmem:[%s4448 + $0x179] sm:$0x3f]
      %v4609 = vld [vmem:[%s4448 + $0x181] sm:$0xff]
      %v4610 = vld [vmem:[%s4448 + $0x189] sm:$0x3f]
      %v4611 = vld [vmem:[%s4448 + $0x191] sm:$0xff]
      %v4612 = vld [vmem:[%s4448 + $0x199] sm:$0x3f]
      %v4613 = vld [vmem:[%s4448 + $0x1a1] sm:$0xff]
      %v4614 = vld [vmem:[%s4448 + $0x1a9] sm:$0x3f]
      %v4615 = vld [vmem:[%s4448 + $0x1b1] sm:$0xff]
      %v4616 = vld [vmem:[%s4448 + $0x1b9] sm:$0x3f]
      %v4617 = vld [vmem:[%s2 + $0x6] sm:$0x1]
      %v4618 = vld [vmem:[%s2 + $0x7] sm:$0x1]
      %v4619 = vld [vmem:[%s2 + $0x8] sm:$0x1]
      %4621 = vset.pattern.permute.xlu0 0
      %4622 = vperm.xlu0 %4621, %v4392
      %v4623 = vpop.permute.xlu0 %4622
      %4626 = vset.pattern.permute.xlu0 0
      %4627 = vperm.xlu0 %4626, %v4393
      %v4628 = vpop.permute.xlu0 %4627
      %4631 = vset.pattern.permute.xlu0 0
      %4632 = vperm.xlu0 %4631, %v4394
      %v4633 = vpop.permute.xlu0 %4632
      %4636 = vset.pattern.permute.xlu0 0
      %4637 = vperm.xlu0 %4636, %v4395
      %v4638 = vpop.permute.xlu0 %4637
      %4641 = vset.pattern.permute.xlu0 0
      %4642 = vperm.xlu0 %4641, %v4396
      %v4643 = vpop.permute.xlu0 %4642
      %4646 = vset.pattern.permute.xlu0 0
      %4647 = vperm.xlu0 %4646, %v4397
      %v4648 = vpop.permute.xlu0 %4647
      %4651 = vset.pattern.permute.xlu0 0
      %4652 = vperm.xlu0 %4651, %v4398
      %v4653 = vpop.permute.xlu0 %4652
      %4656 = vset.pattern.permute.xlu0 0
      %4657 = vperm.xlu0 %4656, %v4399
      %v4658 = vpop.permute.xlu0 %4657
      %4661 = vset.pattern.permute.xlu0 0
      %4662 = vperm.xlu0 %4661, %v4400
      %v4663 = vpop.permute.xlu0 %4662
      %4666 = vset.pattern.permute.xlu0 0
      %4667 = vperm.xlu0 %4666, %v4401
      %v4668 = vpop.permute.xlu0 %4667
      %4671 = vset.pattern.permute.xlu0 0
      %4672 = vperm.xlu0 %4671, %v4402
      %v4673 = vpop.permute.xlu0 %4672
      %4676 = vset.pattern.permute.xlu0 0
      %4677 = vperm.xlu0 %4676, %v4403
      %v4678 = vpop.permute.xlu0 %4677
      %4681 = vset.pattern.permute.xlu0 0
      %4682 = vperm.xlu0 %4681, %v4404
      %v4683 = vpop.permute.xlu0 %4682
      %4686 = vset.pattern.permute.xlu0 0
      %4687 = vperm.xlu0 %4686, %v4405
      %v4688 = vpop.permute.xlu0 %4687
      %4691 = vset.pattern.permute.xlu0 0
      %4692 = vperm.xlu0 %4691, %v4406
      %v4693 = vpop.permute.xlu0 %4692
      %4696 = vset.pattern.permute.xlu0 0
      %4697 = vperm.xlu0 %4696, %v4407
      %v4698 = vpop.permute.xlu0 %4697
      %4701 = vset.pattern.permute.xlu0 0
      %4702 = vperm.xlu0 %4701, %v4408
      %v4703 = vpop.permute.xlu0 %4702
      %4706 = vset.pattern.permute.xlu0 0
      %4707 = vperm.xlu0 %4706, %v4409
      %v4708 = vpop.permute.xlu0 %4707
      %4711 = vset.pattern.permute.xlu0 0
      %4712 = vperm.xlu0 %4711, %v4410
      %v4713 = vpop.permute.xlu0 %4712
      %4716 = vset.pattern.permute.xlu0 0
      %4717 = vperm.xlu0 %4716, %v4411
      %v4718 = vpop.permute.xlu0 %4717
      %4721 = vset.pattern.permute.xlu0 0
      %4722 = vperm.xlu0 %4721, %v4412
      %v4723 = vpop.permute.xlu0 %4722
      %4726 = vset.pattern.permute.xlu0 0
      %4727 = vperm.xlu0 %4726, %v4413
      %v4728 = vpop.permute.xlu0 %4727
      %4731 = vset.pattern.permute.xlu0 0
      %4732 = vperm.xlu0 %4731, %v4414
      %v4733 = vpop.permute.xlu0 %4732
      %4736 = vset.pattern.permute.xlu0 0
      %4737 = vperm.xlu0 %4736, %v4415
      %v4738 = vpop.permute.xlu0 %4737
      %4741 = vset.pattern.permute.xlu0 0
      %4742 = vperm.xlu0 %4741, %v4416
      %v4743 = vpop.permute.xlu0 %4742
      %4746 = vset.pattern.permute.xlu0 0
      %4747 = vperm.xlu0 %4746, %v4417
      %v4748 = vpop.permute.xlu0 %4747
      %4751 = vset.pattern.permute.xlu0 0
      %4752 = vperm.xlu0 %4751, %v4418
      %v4753 = vpop.permute.xlu0 %4752
      %4756 = vset.pattern.permute.xlu0 0
      %4757 = vperm.xlu0 %4756, %v4419
      %v4758 = vpop.permute.xlu0 %4757
      %4761 = vset.pattern.permute.xlu0 0
      %4762 = vperm.xlu0 %4761, %v4420
      %v4763 = vpop.permute.xlu0 %4762
      %4766 = vset.pattern.permute.xlu0 0
      %4767 = vperm.xlu0 %4766, %v4421
      %v4768 = vpop.permute.xlu0 %4767
      %4771 = vset.pattern.permute.xlu0 0
      %4772 = vperm.xlu0 %4771, %v4422
      %v4773 = vpop.permute.xlu0 %4772
      %4776 = vset.pattern.permute.xlu0 0
      %4777 = vperm.xlu0 %4776, %v4423
      %v4778 = vpop.permute.xlu0 %4777
      %4781 = vset.pattern.permute.xlu0 0
      %4782 = vperm.xlu0 %4781, %v4424
      %v4783 = vpop.permute.xlu0 %4782
      %4786 = vset.pattern.permute.xlu0 0
      %4787 = vperm.xlu0 %4786, %v4425
      %v4788 = vpop.permute.xlu0 %4787
      %4791 = vset.pattern.permute.xlu0 0
      %4792 = vperm.xlu0 %4791, %v4426
      %v4793 = vpop.permute.xlu0 %4792
      %4796 = vset.pattern.permute.xlu0 0
      %4797 = vperm.xlu0 %4796, %v4427
      %v4798 = vpop.permute.xlu0 %4797
      %4801 = vset.pattern.permute.xlu0 0
      %4802 = vperm.xlu0 %4801, %v4428
      %v4803 = vpop.permute.xlu0 %4802
      %4806 = vset.pattern.permute.xlu0 0
      %4807 = vperm.xlu0 %4806, %v4429
      %v4808 = vpop.permute.xlu0 %4807
      %4811 = vset.pattern.permute.xlu0 0
      %4812 = vperm.xlu0 %4811, %v4430
      %v4813 = vpop.permute.xlu0 %4812
      %4816 = vset.pattern.permute.xlu0 0
      %4817 = vperm.xlu0 %4816, %v4431
      %v4818 = vpop.permute.xlu0 %4817
      %4821 = vset.pattern.permute.xlu0 0
      %4822 = vperm.xlu0 %4821, %v4432
      %v4823 = vpop.permute.xlu0 %4822
      %4826 = vset.pattern.permute.xlu0 0
      %4827 = vperm.xlu0 %4826, %v4433
      %v4828 = vpop.permute.xlu0 %4827
      %4831 = vset.pattern.permute.xlu0 0
      %4832 = vperm.xlu0 %4831, %v4434
      %v4833 = vpop.permute.xlu0 %4832
      %4836 = vset.pattern.permute.xlu0 0
      %4837 = vperm.xlu0 %4836, %v4435
      %v4838 = vpop.permute.xlu0 %4837
      %4841 = vset.pattern.permute.xlu0 0
      %4842 = vperm.xlu0 %4841, %v4436
      %v4843 = vpop.permute.xlu0 %4842
      %4846 = vset.pattern.permute.xlu0 0
      %4847 = vperm.xlu0 %4846, %v4437
      %v4848 = vpop.permute.xlu0 %4847
      %4851 = vset.pattern.permute.xlu0 0
      %4852 = vperm.xlu0 %4851, %v4438
      %v4853 = vpop.permute.xlu0 %4852
      %4856 = vset.pattern.permute.xlu0 0
      %4857 = vperm.xlu0 %4856, %v4439
      %v4858 = vpop.permute.xlu0 %4857
      %4861 = vset.pattern.permute.xlu0 0
      %4862 = vperm.xlu0 %4861, %v4440
      %v4863 = vpop.permute.xlu0 %4862
      %4866 = vset.pattern.permute.xlu0 0
      %4867 = vperm.xlu0 %4866, %v4441
      %v4868 = vpop.permute.xlu0 %4867
      %4871 = vset.pattern.permute.xlu0 0
      %4872 = vperm.xlu0 %4871, %v4442
      %v4873 = vpop.permute.xlu0 %4872
      %4876 = vset.pattern.permute.xlu0 0
      %4877 = vperm.xlu0 %4876, %v4443
      %v4878 = vpop.permute.xlu0 %4877
      %4881 = vset.pattern.permute.xlu0 0
      %4882 = vperm.xlu0 %4881, %v4444
      %v4883 = vpop.permute.xlu0 %4882
      %4886 = vset.pattern.permute.xlu0 0
      %4887 = vperm.xlu0 %4886, %v4445
      %v4888 = vpop.permute.xlu0 %4887
      %4891 = vset.pattern.permute.xlu0 0
      %4892 = vperm.xlu0 %4891, %v4446
      %v4893 = vpop.permute.xlu0 %4892
      %4896 = vset.pattern.permute.xlu0 0
      %4897 = vperm.xlu0 %4896, %v4447
      %v4898 = vpop.permute.xlu0 %4897
      %v4900 = vlaneseq
      %v4901 = vshrl.u32 %v4900, 7
      %v4902 = vsub.s32 0, %v4901
      %v4903 = vrot.slane %v4617, %v4902
      %v4904 = vmul.f32 %v4623, %v4903
      %v4905 = vmul.f32 %v4628, %v4903
      %v4906 = vmul.f32 %v4633, %v4903
      %v4907 = vmul.f32 %v4638, %v4903
      %v4908 = vmul.f32 %v4643, %v4903
      %v4909 = vmul.f32 %v4648, %v4903
      %v4910 = vmul.f32 %v4653, %v4903
      %v4911 = vmul.f32 %v4658, %v4903
      %v4912 = vmul.f32 %v4663, %v4903
      %v4913 = vmul.f32 %v4668, %v4903
      %v4914 = vmul.f32 %v4673, %v4903
      %v4915 = vmul.f32 %v4678, %v4903
      %v4916 = vmul.f32 %v4683, %v4903
      %v4917 = vmul.f32 %v4688, %v4903
      %v4918 = vmul.f32 %v4693, %v4903
      %v4919 = vmul.f32 %v4698, %v4903
      %v4920 = vmul.f32 %v4703, %v4903
      %v4921 = vmul.f32 %v4708, %v4903
      %v4922 = vmul.f32 %v4713, %v4903
      %v4923 = vmul.f32 %v4718, %v4903
      %v4924 = vmul.f32 %v4723, %v4903
      %v4925 = vmul.f32 %v4728, %v4903
      %v4926 = vmul.f32 %v4733, %v4903
      %v4927 = vmul.f32 %v4738, %v4903
      %v4928 = vmul.f32 %v4743, %v4903
      %v4929 = vmul.f32 %v4748, %v4903
      %v4930 = vmul.f32 %v4753, %v4903
      %v4931 = vmul.f32 %v4758, %v4903
      %v4932 = vmul.f32 %v4763, %v4903
      %v4933 = vmul.f32 %v4768, %v4903
      %v4934 = vmul.f32 %v4773, %v4903
      %v4935 = vmul.f32 %v4778, %v4903
      %v4936 = vmul.f32 %v4783, %v4903
      %v4937 = vmul.f32 %v4788, %v4903
      %v4938 = vmul.f32 %v4793, %v4903
      %v4939 = vmul.f32 %v4798, %v4903
      %v4940 = vmul.f32 %v4803, %v4903
      %v4941 = vmul.f32 %v4808, %v4903
      %v4942 = vmul.f32 %v4813, %v4903
      %v4943 = vmul.f32 %v4818, %v4903
      %v4944 = vmul.f32 %v4823, %v4903
      %v4945 = vmul.f32 %v4828, %v4903
      %v4946 = vmul.f32 %v4833, %v4903
      %v4947 = vmul.f32 %v4838, %v4903
      %v4948 = vmul.f32 %v4843, %v4903
      %v4949 = vmul.f32 %v4848, %v4903
      %v4950 = vmul.f32 %v4853, %v4903
      %v4951 = vmul.f32 %v4858, %v4903
      %v4952 = vmul.f32 %v4863, %v4903
      %v4953 = vmul.f32 %v4868, %v4903
      %v4954 = vmul.f32 %v4873, %v4903
      %v4955 = vmul.f32 %v4878, %v4903
      %v4956 = vmul.f32 %v4883, %v4903
      %v4957 = vmul.f32 %v4888, %v4903
      %v4958 = vmul.f32 %v4893, %v4903
      %v4959 = vmul.f32 %v4898, %v4903
      %v4960 = vadd.f32 %v3719, %v4904
      %v4961 = vadd.f32 %v3720, %v4905
      %v4962 = vadd.f32 %v3721, %v4906
      %v4963 = vadd.f32 %v3722, %v4907
      %v4964 = vadd.f32 %v3723, %v4908
      %v4965 = vadd.f32 %v3724, %v4909
      %v4966 = vadd.f32 %v3725, %v4910
      %v4967 = vadd.f32 %v3726, %v4911
      %v4968 = vadd.f32 %v3727, %v4912
      %v4969 = vadd.f32 %v3728, %v4913
      %v4970 = vadd.f32 %v3729, %v4914
      %v4971 = vadd.f32 %v3730, %v4915
      %v4972 = vadd.f32 %v3731, %v4916
      %v4973 = vadd.f32 %v3732, %v4917
      %v4974 = vadd.f32 %v3733, %v4918
      %v4975 = vadd.f32 %v3734, %v4919
      %v4976 = vadd.f32 %v3735, %v4920
      %v4977 = vadd.f32 %v3736, %v4921
      %v4978 = vadd.f32 %v3737, %v4922
      %v4979 = vadd.f32 %v3738, %v4923
      %v4980 = vadd.f32 %v3739, %v4924
      %v4981 = vadd.f32 %v3740, %v4925
      %v4982 = vadd.f32 %v3741, %v4926
      %v4983 = vadd.f32 %v3742, %v4927
      %v4984 = vadd.f32 %v3743, %v4928
      %v4985 = vadd.f32 %v3744, %v4929
      %v4986 = vadd.f32 %v3745, %v4930
      %v4987 = vadd.f32 %v3746, %v4931
      %v4988 = vadd.f32 %v3747, %v4932
      %v4989 = vadd.f32 %v3748, %v4933
      %v4990 = vadd.f32 %v3749, %v4934
      %v4991 = vadd.f32 %v3750, %v4935
      %v4992 = vadd.f32 %v3751, %v4936
      %v4993 = vadd.f32 %v3752, %v4937
      %v4994 = vadd.f32 %v3753, %v4938
      %v4995 = vadd.f32 %v3754, %v4939
      %v4996 = vadd.f32 %v3755, %v4940
      %v4997 = vadd.f32 %v3756, %v4941
      %v4998 = vadd.f32 %v3757, %v4942
      %v4999 = vadd.f32 %v3758, %v4943
      %v5000 = vadd.f32 %v3759, %v4944
      %v5001 = vadd.f32 %v3760, %v4945
      %v5002 = vadd.f32 %v3761, %v4946
      %v5003 = vadd.f32 %v3762, %v4947
      %v5004 = vadd.f32 %v3763, %v4948
      %v5005 = vadd.f32 %v3764, %v4949
      %v5006 = vadd.f32 %v3765, %v4950
      %v5007 = vadd.f32 %v3766, %v4951
      %v5008 = vadd.f32 %v3767, %v4952
      %v5009 = vadd.f32 %v3768, %v4953
      %v5010 = vadd.f32 %v3769, %v4954
      %v5011 = vadd.f32 %v3770, %v4955
      %v5012 = vadd.f32 %v3771, %v4956
      %v5013 = vadd.f32 %v3772, %v4957
      %v5014 = vadd.f32 %v3773, %v4958
      %v5015 = vadd.f32 %v3774, %v4959
      %5017 = vset.pattern.permute.xlu0 0
      %5018 = vperm.xlu0 %5017, %v4449
      %v5019 = vpop.permute.xlu0 %5018
      %5022 = vset.pattern.permute.xlu0 0
      %5023 = vperm.xlu0 %5022, %v4450
      %v5024 = vpop.permute.xlu0 %5023
      %5027 = vset.pattern.permute.xlu0 0
      %5028 = vperm.xlu0 %5027, %v4451
      %v5029 = vpop.permute.xlu0 %5028
      %5032 = vset.pattern.permute.xlu0 0
      %5033 = vperm.xlu0 %5032, %v4452
      %v5034 = vpop.permute.xlu0 %5033
      %5037 = vset.pattern.permute.xlu0 0
      %5038 = vperm.xlu0 %5037, %v4453
      %v5039 = vpop.permute.xlu0 %5038
      %5042 = vset.pattern.permute.xlu0 0
      %5043 = vperm.xlu0 %5042, %v4454
      %v5044 = vpop.permute.xlu0 %5043
      %5047 = vset.pattern.permute.xlu0 0
      %5048 = vperm.xlu0 %5047, %v4455
      %v5049 = vpop.permute.xlu0 %5048
      %5052 = vset.pattern.permute.xlu0 0
      %5053 = vperm.xlu0 %5052, %v4456
      %v5054 = vpop.permute.xlu0 %5053
      %5057 = vset.pattern.permute.xlu0 0
      %5058 = vperm.xlu0 %5057, %v4457
      %v5059 = vpop.permute.xlu0 %5058
      %5062 = vset.pattern.permute.xlu0 0
      %5063 = vperm.xlu0 %5062, %v4458
      %v5064 = vpop.permute.xlu0 %5063
      %5067 = vset.pattern.permute.xlu0 0
      %5068 = vperm.xlu0 %5067, %v4459
      %v5069 = vpop.permute.xlu0 %5068
      %5072 = vset.pattern.permute.xlu0 0
      %5073 = vperm.xlu0 %5072, %v4460
      %v5074 = vpop.permute.xlu0 %5073
      %5077 = vset.pattern.permute.xlu0 0
      %5078 = vperm.xlu0 %5077, %v4461
      %v5079 = vpop.permute.xlu0 %5078
      %5082 = vset.pattern.permute.xlu0 0
      %5083 = vperm.xlu0 %5082, %v4462
      %v5084 = vpop.permute.xlu0 %5083
      %5087 = vset.pattern.permute.xlu0 0
      %5088 = vperm.xlu0 %5087, %v4463
      %v5089 = vpop.permute.xlu0 %5088
      %5092 = vset.pattern.permute.xlu0 0
      %5093 = vperm.xlu0 %5092, %v4464
      %v5094 = vpop.permute.xlu0 %5093
      %5097 = vset.pattern.permute.xlu0 0
      %5098 = vperm.xlu0 %5097, %v4465
      %v5099 = vpop.permute.xlu0 %5098
      %5102 = vset.pattern.permute.xlu0 0
      %5103 = vperm.xlu0 %5102, %v4466
      %v5104 = vpop.permute.xlu0 %5103
      %5107 = vset.pattern.permute.xlu0 0
      %5108 = vperm.xlu0 %5107, %v4467
      %v5109 = vpop.permute.xlu0 %5108
      %5112 = vset.pattern.permute.xlu0 0
      %5113 = vperm.xlu0 %5112, %v4468
      %v5114 = vpop.permute.xlu0 %5113
      %5117 = vset.pattern.permute.xlu0 0
      %5118 = vperm.xlu0 %5117, %v4469
      %v5119 = vpop.permute.xlu0 %5118
      %5122 = vset.pattern.permute.xlu0 0
      %5123 = vperm.xlu0 %5122, %v4470
      %v5124 = vpop.permute.xlu0 %5123
      %5127 = vset.pattern.permute.xlu0 0
      %5128 = vperm.xlu0 %5127, %v4471
      %v5129 = vpop.permute.xlu0 %5128
      %5132 = vset.pattern.permute.xlu0 0
      %5133 = vperm.xlu0 %5132, %v4472
      %v5134 = vpop.permute.xlu0 %5133
      %5137 = vset.pattern.permute.xlu0 0
      %5138 = vperm.xlu0 %5137, %v4473
      %v5139 = vpop.permute.xlu0 %5138
      %5142 = vset.pattern.permute.xlu0 0
      %5143 = vperm.xlu0 %5142, %v4474
      %v5144 = vpop.permute.xlu0 %5143
      %5147 = vset.pattern.permute.xlu0 0
      %5148 = vperm.xlu0 %5147, %v4475
      %v5149 = vpop.permute.xlu0 %5148
      %5152 = vset.pattern.permute.xlu0 0
      %5153 = vperm.xlu0 %5152, %v4476
      %v5154 = vpop.permute.xlu0 %5153
      %5157 = vset.pattern.permute.xlu0 0
      %5158 = vperm.xlu0 %5157, %v4477
      %v5159 = vpop.permute.xlu0 %5158
      %5162 = vset.pattern.permute.xlu0 0
      %5163 = vperm.xlu0 %5162, %v4478
      %v5164 = vpop.permute.xlu0 %5163
      %5167 = vset.pattern.permute.xlu0 0
      %5168 = vperm.xlu0 %5167, %v4479
      %v5169 = vpop.permute.xlu0 %5168
      %5172 = vset.pattern.permute.xlu0 0
      %5173 = vperm.xlu0 %5172, %v4480
      %v5174 = vpop.permute.xlu0 %5173
      %5177 = vset.pattern.permute.xlu0 0
      %5178 = vperm.xlu0 %5177, %v4481
      %v5179 = vpop.permute.xlu0 %5178
      %5182 = vset.pattern.permute.xlu0 0
      %5183 = vperm.xlu0 %5182, %v4482
      %v5184 = vpop.permute.xlu0 %5183
      %5187 = vset.pattern.permute.xlu0 0
      %5188 = vperm.xlu0 %5187, %v4483
      %v5189 = vpop.permute.xlu0 %5188
      %5192 = vset.pattern.permute.xlu0 0
      %5193 = vperm.xlu0 %5192, %v4484
      %v5194 = vpop.permute.xlu0 %5193
      %5197 = vset.pattern.permute.xlu0 0
      %5198 = vperm.xlu0 %5197, %v4485
      %v5199 = vpop.permute.xlu0 %5198
      %5202 = vset.pattern.permute.xlu0 0
      %5203 = vperm.xlu0 %5202, %v4486
      %v5204 = vpop.permute.xlu0 %5203
      %5207 = vset.pattern.permute.xlu0 0
      %5208 = vperm.xlu0 %5207, %v4487
      %v5209 = vpop.permute.xlu0 %5208
      %5212 = vset.pattern.permute.xlu0 0
      %5213 = vperm.xlu0 %5212, %v4488
      %v5214 = vpop.permute.xlu0 %5213
      %5217 = vset.pattern.permute.xlu0 0
      %5218 = vperm.xlu0 %5217, %v4489
      %v5219 = vpop.permute.xlu0 %5218
      %5222 = vset.pattern.permute.xlu0 0
      %5223 = vperm.xlu0 %5222, %v4490
      %v5224 = vpop.permute.xlu0 %5223
      %5227 = vset.pattern.permute.xlu0 0
      %5228 = vperm.xlu0 %5227, %v4491
      %v5229 = vpop.permute.xlu0 %5228
      %5232 = vset.pattern.permute.xlu0 0
      %5233 = vperm.xlu0 %5232, %v4492
      %v5234 = vpop.permute.xlu0 %5233
      %5237 = vset.pattern.permute.xlu0 0
      %5238 = vperm.xlu0 %5237, %v4493
      %v5239 = vpop.permute.xlu0 %5238
      %5242 = vset.pattern.permute.xlu0 0
      %5243 = vperm.xlu0 %5242, %v4494
      %v5244 = vpop.permute.xlu0 %5243
      %5247 = vset.pattern.permute.xlu0 0
      %5248 = vperm.xlu0 %5247, %v4495
      %v5249 = vpop.permute.xlu0 %5248
      %5252 = vset.pattern.permute.xlu0 0
      %5253 = vperm.xlu0 %5252, %v4496
      %v5254 = vpop.permute.xlu0 %5253
      %5257 = vset.pattern.permute.xlu0 0
      %5258 = vperm.xlu0 %5257, %v4497
      %v5259 = vpop.permute.xlu0 %5258
      %5262 = vset.pattern.permute.xlu0 0
      %5263 = vperm.xlu0 %5262, %v4498
      %v5264 = vpop.permute.xlu0 %5263
      %5267 = vset.pattern.permute.xlu0 0
      %5268 = vperm.xlu0 %5267, %v4499
      %v5269 = vpop.permute.xlu0 %5268
      %5272 = vset.pattern.permute.xlu0 0
      %5273 = vperm.xlu0 %5272, %v4500
      %v5274 = vpop.permute.xlu0 %5273
      %5277 = vset.pattern.permute.xlu0 0
      %5278 = vperm.xlu0 %5277, %v4501
      %v5279 = vpop.permute.xlu0 %5278
      %5282 = vset.pattern.permute.xlu0 0
      %5283 = vperm.xlu0 %5282, %v4502
      %v5284 = vpop.permute.xlu0 %5283
      %5287 = vset.pattern.permute.xlu0 0
      %5288 = vperm.xlu0 %5287, %v4503
      %v5289 = vpop.permute.xlu0 %5288
      %5292 = vset.pattern.permute.xlu0 0
      %5293 = vperm.xlu0 %5292, %v4504
      %v5294 = vpop.permute.xlu0 %5293
      %v5296 = vlaneseq
      %v5297 = vshrl.u32 %v5296, 7
      %v5298 = vsub.s32 0, %v5297
      %v5299 = vrot.slane %v4618, %v5298
      %v5300 = vmul.f32 %v5019, %v5299
      %v5301 = vmul.f32 %v5024, %v5299
      %v5302 = vmul.f32 %v5029, %v5299
      %v5303 = vmul.f32 %v5034, %v5299
      %v5304 = vmul.f32 %v5039, %v5299
      %v5305 = vmul.f32 %v5044, %v5299
      %v5306 = vmul.f32 %v5049, %v5299
      %v5307 = vmul.f32 %v5054, %v5299
      %v5308 = vmul.f32 %v5059, %v5299
      %v5309 = vmul.f32 %v5064, %v5299
      %v5310 = vmul.f32 %v5069, %v5299
      %v5311 = vmul.f32 %v5074, %v5299
      %v5312 = vmul.f32 %v5079, %v5299
      %v5313 = vmul.f32 %v5084, %v5299
      %v5314 = vmul.f32 %v5089, %v5299
      %v5315 = vmul.f32 %v5094, %v5299
      %v5316 = vmul.f32 %v5099, %v5299
      %v5317 = vmul.f32 %v5104, %v5299
      %v5318 = vmul.f32 %v5109, %v5299
      %v5319 = vmul.f32 %v5114, %v5299
      %v5320 = vmul.f32 %v5119, %v5299
      %v5321 = vmul.f32 %v5124, %v5299
      %v5322 = vmul.f32 %v5129, %v5299
      %v5323 = vmul.f32 %v5134, %v5299
      %v5324 = vmul.f32 %v5139, %v5299
      %v5325 = vmul.f32 %v5144, %v5299
      %v5326 = vmul.f32 %v5149, %v5299
      %v5327 = vmul.f32 %v5154, %v5299
      %v5328 = vmul.f32 %v5159, %v5299
      %v5329 = vmul.f32 %v5164, %v5299
      %v5330 = vmul.f32 %v5169, %v5299
      %v5331 = vmul.f32 %v5174, %v5299
      %v5332 = vmul.f32 %v5179, %v5299
      %v5333 = vmul.f32 %v5184, %v5299
      %v5334 = vmul.f32 %v5189, %v5299
      %v5335 = vmul.f32 %v5194, %v5299
      %v5336 = vmul.f32 %v5199, %v5299
      %v5337 = vmul.f32 %v5204, %v5299
      %v5338 = vmul.f32 %v5209, %v5299
      %v5339 = vmul.f32 %v5214, %v5299
      %v5340 = vmul.f32 %v5219, %v5299
      %v5341 = vmul.f32 %v5224, %v5299
      %v5342 = vmul.f32 %v5229, %v5299
      %v5343 = vmul.f32 %v5234, %v5299
      %v5344 = vmul.f32 %v5239, %v5299
      %v5345 = vmul.f32 %v5244, %v5299
      %v5346 = vmul.f32 %v5249, %v5299
      %v5347 = vmul.f32 %v5254, %v5299
      %v5348 = vmul.f32 %v5259, %v5299
      %v5349 = vmul.f32 %v5264, %v5299
      %v5350 = vmul.f32 %v5269, %v5299
      %v5351 = vmul.f32 %v5274, %v5299
      %v5352 = vmul.f32 %v5279, %v5299
      %v5353 = vmul.f32 %v5284, %v5299
      %v5354 = vmul.f32 %v5289, %v5299
      %v5355 = vmul.f32 %v5294, %v5299
      %v5356 = vadd.f32 %v4960, %v5300
      %v5357 = vadd.f32 %v4961, %v5301
      %v5358 = vadd.f32 %v4962, %v5302
      %v5359 = vadd.f32 %v4963, %v5303
      %v5360 = vadd.f32 %v4964, %v5304
      %v5361 = vadd.f32 %v4965, %v5305
      %v5362 = vadd.f32 %v4966, %v5306
      %v5363 = vadd.f32 %v4967, %v5307
      %v5364 = vadd.f32 %v4968, %v5308
      %v5365 = vadd.f32 %v4969, %v5309
      %v5366 = vadd.f32 %v4970, %v5310
      %v5367 = vadd.f32 %v4971, %v5311
      %v5368 = vadd.f32 %v4972, %v5312
      %v5369 = vadd.f32 %v4973, %v5313
      %v5370 = vadd.f32 %v4974, %v5314
      %v5371 = vadd.f32 %v4975, %v5315
      %v5372 = vadd.f32 %v4976, %v5316
      %v5373 = vadd.f32 %v4977, %v5317
      %v5374 = vadd.f32 %v4978, %v5318
      %v5375 = vadd.f32 %v4979, %v5319
      %v5376 = vadd.f32 %v4980, %v5320
      %v5377 = vadd.f32 %v4981, %v5321
      %v5378 = vadd.f32 %v4982, %v5322
      %v5379 = vadd.f32 %v4983, %v5323
      %v5380 = vadd.f32 %v4984, %v5324
      %v5381 = vadd.f32 %v4985, %v5325
      %v5382 = vadd.f32 %v4986, %v5326
      %v5383 = vadd.f32 %v4987, %v5327
      %v5384 = vadd.f32 %v4988, %v5328
      %v5385 = vadd.f32 %v4989, %v5329
      %v5386 = vadd.f32 %v4990, %v5330
      %v5387 = vadd.f32 %v4991, %v5331
      %v5388 = vadd.f32 %v4992, %v5332
      %v5389 = vadd.f32 %v4993, %v5333
      %v5390 = vadd.f32 %v4994, %v5334
      %v5391 = vadd.f32 %v4995, %v5335
      %v5392 = vadd.f32 %v4996, %v5336
      %v5393 = vadd.f32 %v4997, %v5337
      %v5394 = vadd.f32 %v4998, %v5338
      %v5395 = vadd.f32 %v4999, %v5339
      %v5396 = vadd.f32 %v5000, %v5340
      %v5397 = vadd.f32 %v5001, %v5341
      %v5398 = vadd.f32 %v5002, %v5342
      %v5399 = vadd.f32 %v5003, %v5343
      %v5400 = vadd.f32 %v5004, %v5344
      %v5401 = vadd.f32 %v5005, %v5345
      %v5402 = vadd.f32 %v5006, %v5346
      %v5403 = vadd.f32 %v5007, %v5347
      %v5404 = vadd.f32 %v5008, %v5348
      %v5405 = vadd.f32 %v5009, %v5349
      %v5406 = vadd.f32 %v5010, %v5350
      %v5407 = vadd.f32 %v5011, %v5351
      %v5408 = vadd.f32 %v5012, %v5352
      %v5409 = vadd.f32 %v5013, %v5353
      %v5410 = vadd.f32 %v5014, %v5354
      %v5411 = vadd.f32 %v5015, %v5355
      %5413 = vset.pattern.permute.xlu0 0
      %5414 = vperm.xlu0 %5413, %v4505
      %v5415 = vpop.permute.xlu0 %5414
      %5418 = vset.pattern.permute.xlu0 0
      %5419 = vperm.xlu0 %5418, %v4506
      %v5420 = vpop.permute.xlu0 %5419
      %5423 = vset.pattern.permute.xlu0 0
      %5424 = vperm.xlu0 %5423, %v4507
      %v5425 = vpop.permute.xlu0 %5424
      %5428 = vset.pattern.permute.xlu0 0
      %5429 = vperm.xlu0 %5428, %v4508
      %v5430 = vpop.permute.xlu0 %5429
      %5433 = vset.pattern.permute.xlu0 0
      %5434 = vperm.xlu0 %5433, %v4509
      %v5435 = vpop.permute.xlu0 %5434
      %5438 = vset.pattern.permute.xlu0 0
      %5439 = vperm.xlu0 %5438, %v4510
      %v5440 = vpop.permute.xlu0 %5439
      %5443 = vset.pattern.permute.xlu0 0
      %5444 = vperm.xlu0 %5443, %v4511
      %v5445 = vpop.permute.xlu0 %5444
      %5448 = vset.pattern.permute.xlu0 0
      %5449 = vperm.xlu0 %5448, %v4512
      %v5450 = vpop.permute.xlu0 %5449
      %5453 = vset.pattern.permute.xlu0 0
      %5454 = vperm.xlu0 %5453, %v4513
      %v5455 = vpop.permute.xlu0 %5454
      %5458 = vset.pattern.permute.xlu0 0
      %5459 = vperm.xlu0 %5458, %v4514
      %v5460 = vpop.permute.xlu0 %5459
      %5463 = vset.pattern.permute.xlu0 0
      %5464 = vperm.xlu0 %5463, %v4515
      %v5465 = vpop.permute.xlu0 %5464
      %5468 = vset.pattern.permute.xlu0 0
      %5469 = vperm.xlu0 %5468, %v4516
      %v5470 = vpop.permute.xlu0 %5469
      %5473 = vset.pattern.permute.xlu0 0
      %5474 = vperm.xlu0 %5473, %v4517
      %v5475 = vpop.permute.xlu0 %5474
      %5478 = vset.pattern.permute.xlu0 0
      %5479 = vperm.xlu0 %5478, %v4518
      %v5480 = vpop.permute.xlu0 %5479
      %5483 = vset.pattern.permute.xlu0 0
      %5484 = vperm.xlu0 %5483, %v4519
      %v5485 = vpop.permute.xlu0 %5484
      %5488 = vset.pattern.permute.xlu0 0
      %5489 = vperm.xlu0 %5488, %v4520
      %v5490 = vpop.permute.xlu0 %5489
      %5493 = vset.pattern.permute.xlu0 0
      %5494 = vperm.xlu0 %5493, %v4521
      %v5495 = vpop.permute.xlu0 %5494
      %5498 = vset.pattern.permute.xlu0 0
      %5499 = vperm.xlu0 %5498, %v4522
      %v5500 = vpop.permute.xlu0 %5499
      %5503 = vset.pattern.permute.xlu0 0
      %5504 = vperm.xlu0 %5503, %v4523
      %v5505 = vpop.permute.xlu0 %5504
      %5508 = vset.pattern.permute.xlu0 0
      %5509 = vperm.xlu0 %5508, %v4524
      %v5510 = vpop.permute.xlu0 %5509
      %5513 = vset.pattern.permute.xlu0 0
      %5514 = vperm.xlu0 %5513, %v4525
      %v5515 = vpop.permute.xlu0 %5514
      %5518 = vset.pattern.permute.xlu0 0
      %5519 = vperm.xlu0 %5518, %v4526
      %v5520 = vpop.permute.xlu0 %5519
      %5523 = vset.pattern.permute.xlu0 0
      %5524 = vperm.xlu0 %5523, %v4527
      %v5525 = vpop.permute.xlu0 %5524
      %5528 = vset.pattern.permute.xlu0 0
      %5529 = vperm.xlu0 %5528, %v4528
      %v5530 = vpop.permute.xlu0 %5529
      %5533 = vset.pattern.permute.xlu0 0
      %5534 = vperm.xlu0 %5533, %v4529
      %v5535 = vpop.permute.xlu0 %5534
      %5538 = vset.pattern.permute.xlu0 0
      %5539 = vperm.xlu0 %5538, %v4530
      %v5540 = vpop.permute.xlu0 %5539
      %5543 = vset.pattern.permute.xlu0 0
      %5544 = vperm.xlu0 %5543, %v4531
      %v5545 = vpop.permute.xlu0 %5544
      %5548 = vset.pattern.permute.xlu0 0
      %5549 = vperm.xlu0 %5548, %v4532
      %v5550 = vpop.permute.xlu0 %5549
      %5553 = vset.pattern.permute.xlu0 0
      %5554 = vperm.xlu0 %5553, %v4533
      %v5555 = vpop.permute.xlu0 %5554
      %5558 = vset.pattern.permute.xlu0 0
      %5559 = vperm.xlu0 %5558, %v4534
      %v5560 = vpop.permute.xlu0 %5559
      %5563 = vset.pattern.permute.xlu0 0
      %5564 = vperm.xlu0 %5563, %v4535
      %v5565 = vpop.permute.xlu0 %5564
      %5568 = vset.pattern.permute.xlu0 0
      %5569 = vperm.xlu0 %5568, %v4536
      %v5570 = vpop.permute.xlu0 %5569
      %5573 = vset.pattern.permute.xlu0 0
      %5574 = vperm.xlu0 %5573, %v4537
      %v5575 = vpop.permute.xlu0 %5574
      %5578 = vset.pattern.permute.xlu0 0
      %5579 = vperm.xlu0 %5578, %v4538
      %v5580 = vpop.permute.xlu0 %5579
      %5583 = vset.pattern.permute.xlu0 0
      %5584 = vperm.xlu0 %5583, %v4539
      %v5585 = vpop.permute.xlu0 %5584
      %5588 = vset.pattern.permute.xlu0 0
      %5589 = vperm.xlu0 %5588, %v4540
      %v5590 = vpop.permute.xlu0 %5589
      %5593 = vset.pattern.permute.xlu0 0
      %5594 = vperm.xlu0 %5593, %v4541
      %v5595 = vpop.permute.xlu0 %5594
      %5598 = vset.pattern.permute.xlu0 0
      %5599 = vperm.xlu0 %5598, %v4542
      %v5600 = vpop.permute.xlu0 %5599
      %5603 = vset.pattern.permute.xlu0 0
      %5604 = vperm.xlu0 %5603, %v4543
      %v5605 = vpop.permute.xlu0 %5604
      %5608 = vset.pattern.permute.xlu0 0
      %5609 = vperm.xlu0 %5608, %v4544
      %v5610 = vpop.permute.xlu0 %5609
      %5613 = vset.pattern.permute.xlu0 0
      %5614 = vperm.xlu0 %5613, %v4545
      %v5615 = vpop.permute.xlu0 %5614
      %5618 = vset.pattern.permute.xlu0 0
      %5619 = vperm.xlu0 %5618, %v4546
      %v5620 = vpop.permute.xlu0 %5619
      %5623 = vset.pattern.permute.xlu0 0
      %5624 = vperm.xlu0 %5623, %v4547
      %v5625 = vpop.permute.xlu0 %5624
      %5628 = vset.pattern.permute.xlu0 0
      %5629 = vperm.xlu0 %5628, %v4548
      %v5630 = vpop.permute.xlu0 %5629
      %5633 = vset.pattern.permute.xlu0 0
      %5634 = vperm.xlu0 %5633, %v4549
      %v5635 = vpop.permute.xlu0 %5634
      %5638 = vset.pattern.permute.xlu0 0
      %5639 = vperm.xlu0 %5638, %v4550
      %v5640 = vpop.permute.xlu0 %5639
      %5643 = vset.pattern.permute.xlu0 0
      %5644 = vperm.xlu0 %5643, %v4551
      %v5645 = vpop.permute.xlu0 %5644
      %5648 = vset.pattern.permute.xlu0 0
      %5649 = vperm.xlu0 %5648, %v4552
      %v5650 = vpop.permute.xlu0 %5649
      %5653 = vset.pattern.permute.xlu0 0
      %5654 = vperm.xlu0 %5653, %v4553
      %v5655 = vpop.permute.xlu0 %5654
      %5658 = vset.pattern.permute.xlu0 0
      %5659 = vperm.xlu0 %5658, %v4554
      %v5660 = vpop.permute.xlu0 %5659
      %5663 = vset.pattern.permute.xlu0 0
      %5664 = vperm.xlu0 %5663, %v4555
      %v5665 = vpop.permute.xlu0 %5664
      %5668 = vset.pattern.permute.xlu0 0
      %5669 = vperm.xlu0 %5668, %v4556
      %v5670 = vpop.permute.xlu0 %5669
      %5673 = vset.pattern.permute.xlu0 0
      %5674 = vperm.xlu0 %5673, %v4557
      %v5675 = vpop.permute.xlu0 %5674
      %5678 = vset.pattern.permute.xlu0 0
      %5679 = vperm.xlu0 %5678, %v4558
      %v5680 = vpop.permute.xlu0 %5679
      %5683 = vset.pattern.permute.xlu0 0
      %5684 = vperm.xlu0 %5683, %v4559
      %v5685 = vpop.permute.xlu0 %5684
      %5688 = vset.pattern.permute.xlu0 0
      %5689 = vperm.xlu0 %5688, %v4560
      %v5690 = vpop.permute.xlu0 %5689
      %v5692 = vlaneseq
      %v5693 = vshrl.u32 %v5692, 7
      %v5694 = vsub.s32 0, %v5693
      %v5695 = vrot.slane %v4619, %v5694
      %v5696 = vmul.f32 %v5415, %v5695
      %v5697 = vmul.f32 %v5420, %v5695
      %v5698 = vmul.f32 %v5425, %v5695
      %v5699 = vmul.f32 %v5430, %v5695
      %v5700 = vmul.f32 %v5435, %v5695
      %v5701 = vmul.f32 %v5440, %v5695
      %v5702 = vmul.f32 %v5445, %v5695
      %v5703 = vmul.f32 %v5450, %v5695
      %v5704 = vmul.f32 %v5455, %v5695
      %v5705 = vmul.f32 %v5460, %v5695
      %v5706 = vmul.f32 %v5465, %v5695
      %v5707 = vmul.f32 %v5470, %v5695
      %v5708 = vmul.f32 %v5475, %v5695
      %v5709 = vmul.f32 %v5480, %v5695
      %v5710 = vmul.f32 %v5485, %v5695
      %v5711 = vmul.f32 %v5490, %v5695
      %v5712 = vmul.f32 %v5495, %v5695
      %v5713 = vmul.f32 %v5500, %v5695
      %v5714 = vmul.f32 %v5505, %v5695
      %v5715 = vmul.f32 %v5510, %v5695
      %v5716 = vmul.f32 %v5515, %v5695
      %v5717 = vmul.f32 %v5520, %v5695
      %v5718 = vmul.f32 %v5525, %v5695
      %v5719 = vmul.f32 %v5530, %v5695
      %v5720 = vmul.f32 %v5535, %v5695
      %v5721 = vmul.f32 %v5540, %v5695
      %v5722 = vmul.f32 %v5545, %v5695
      %v5723 = vmul.f32 %v5550, %v5695
      %v5724 = vmul.f32 %v5555, %v5695
      %v5725 = vmul.f32 %v5560, %v5695
      %v5726 = vmul.f32 %v5565, %v5695
      %v5727 = vmul.f32 %v5570, %v5695
      %v5728 = vmul.f32 %v5575, %v5695
      %v5729 = vmul.f32 %v5580, %v5695
      %v5730 = vmul.f32 %v5585, %v5695
      %v5731 = vmul.f32 %v5590, %v5695
      %v5732 = vmul.f32 %v5595, %v5695
      %v5733 = vmul.f32 %v5600, %v5695
      %v5734 = vmul.f32 %v5605, %v5695
      %v5735 = vmul.f32 %v5610, %v5695
      %v5736 = vmul.f32 %v5615, %v5695
      %v5737 = vmul.f32 %v5620, %v5695
      %v5738 = vmul.f32 %v5625, %v5695
      %v5739 = vmul.f32 %v5630, %v5695
      %v5740 = vmul.f32 %v5635, %v5695
      %v5741 = vmul.f32 %v5640, %v5695
      %v5742 = vmul.f32 %v5645, %v5695
      %v5743 = vmul.f32 %v5650, %v5695
      %v5744 = vmul.f32 %v5655, %v5695
      %v5745 = vmul.f32 %v5660, %v5695
      %v5746 = vmul.f32 %v5665, %v5695
      %v5747 = vmul.f32 %v5670, %v5695
      %v5748 = vmul.f32 %v5675, %v5695
      %v5749 = vmul.f32 %v5680, %v5695
      %v5750 = vmul.f32 %v5685, %v5695
      %v5751 = vmul.f32 %v5690, %v5695
      %v5752 = vadd.f32 %v5356, %v5696
      %v5753 = vadd.f32 %v5357, %v5697
      %v5754 = vadd.f32 %v5358, %v5698
      %v5755 = vadd.f32 %v5359, %v5699
      %v5756 = vadd.f32 %v5360, %v5700
      %v5757 = vadd.f32 %v5361, %v5701
      %v5758 = vadd.f32 %v5362, %v5702
      %v5759 = vadd.f32 %v5363, %v5703
      %v5760 = vadd.f32 %v5364, %v5704
      %v5761 = vadd.f32 %v5365, %v5705
      %v5762 = vadd.f32 %v5366, %v5706
      %v5763 = vadd.f32 %v5367, %v5707
      %v5764 = vadd.f32 %v5368, %v5708
      %v5765 = vadd.f32 %v5369, %v5709
      %v5766 = vadd.f32 %v5370, %v5710
      %v5767 = vadd.f32 %v5371, %v5711
      %v5768 = vadd.f32 %v5372, %v5712
      %v5769 = vadd.f32 %v5373, %v5713
      %v5770 = vadd.f32 %v5374, %v5714
      %v5771 = vadd.f32 %v5375, %v5715
      %v5772 = vadd.f32 %v5376, %v5716
      %v5773 = vadd.f32 %v5377, %v5717
      %v5774 = vadd.f32 %v5378, %v5718
      %v5775 = vadd.f32 %v5379, %v5719
      %v5776 = vadd.f32 %v5380, %v5720
      %v5777 = vadd.f32 %v5381, %v5721
      %v5778 = vadd.f32 %v5382, %v5722
      %v5779 = vadd.f32 %v5383, %v5723
      %v5780 = vadd.f32 %v5384, %v5724
      %v5781 = vadd.f32 %v5385, %v5725
      %v5782 = vadd.f32 %v5386, %v5726
      %v5783 = vadd.f32 %v5387, %v5727
      %v5784 = vadd.f32 %v5388, %v5728
      %v5785 = vadd.f32 %v5389, %v5729
      %v5786 = vadd.f32 %v5390, %v5730
      %v5787 = vadd.f32 %v5391, %v5731
      %v5788 = vadd.f32 %v5392, %v5732
      %v5789 = vadd.f32 %v5393, %v5733
      %v5790 = vadd.f32 %v5394, %v5734
      %v5791 = vadd.f32 %v5395, %v5735
      %v5792 = vadd.f32 %v5396, %v5736
      %v5793 = vadd.f32 %v5397, %v5737
      %v5794 = vadd.f32 %v5398, %v5738
      %v5795 = vadd.f32 %v5399, %v5739
      %v5796 = vadd.f32 %v5400, %v5740
      %v5797 = vadd.f32 %v5401, %v5741
      %v5798 = vadd.f32 %v5402, %v5742
      %v5799 = vadd.f32 %v5403, %v5743
      %v5800 = vadd.f32 %v5404, %v5744
      %v5801 = vadd.f32 %v5405, %v5745
      %v5802 = vadd.f32 %v5406, %v5746
      %v5803 = vadd.f32 %v5407, %v5747
      %v5804 = vadd.f32 %v5408, %v5748
      %v5805 = vadd.f32 %v5409, %v5749
      %v5806 = vadd.f32 %v5410, %v5750
      %v5807 = vadd.f32 %v5411, %v5751
      %v5808 = vmul.f32 %v5019, %v4903
      %v5809 = vmul.f32 %v5024, %v4903
      %v5810 = vmul.f32 %v5029, %v4903
      %v5811 = vmul.f32 %v5034, %v4903
      %v5812 = vmul.f32 %v5039, %v4903
      %v5813 = vmul.f32 %v5044, %v4903
      %v5814 = vmul.f32 %v5049, %v4903
      %v5815 = vmul.f32 %v5054, %v4903
      %v5816 = vmul.f32 %v5059, %v4903
      %v5817 = vmul.f32 %v5064, %v4903
      %v5818 = vmul.f32 %v5069, %v4903
      %v5819 = vmul.f32 %v5074, %v4903
      %v5820 = vmul.f32 %v5079, %v4903
      %v5821 = vmul.f32 %v5084, %v4903
      %v5822 = vmul.f32 %v5089, %v4903
      %v5823 = vmul.f32 %v5094, %v4903
      %v5824 = vmul.f32 %v5099, %v4903
      %v5825 = vmul.f32 %v5104, %v4903
      %v5826 = vmul.f32 %v5109, %v4903
      %v5827 = vmul.f32 %v5114, %v4903
      %v5828 = vmul.f32 %v5119, %v4903
      %v5829 = vmul.f32 %v5124, %v4903
      %v5830 = vmul.f32 %v5129, %v4903
      %v5831 = vmul.f32 %v5134, %v4903
      %v5832 = vmul.f32 %v5139, %v4903
      %v5833 = vmul.f32 %v5144, %v4903
      %v5834 = vmul.f32 %v5149, %v4903
      %v5835 = vmul.f32 %v5154, %v4903
      %v5836 = vmul.f32 %v5159, %v4903
      %v5837 = vmul.f32 %v5164, %v4903
      %v5838 = vmul.f32 %v5169, %v4903
      %v5839 = vmul.f32 %v5174, %v4903
      %v5840 = vmul.f32 %v5179, %v4903
      %v5841 = vmul.f32 %v5184, %v4903
      %v5842 = vmul.f32 %v5189, %v4903
      %v5843 = vmul.f32 %v5194, %v4903
      %v5844 = vmul.f32 %v5199, %v4903
      %v5845 = vmul.f32 %v5204, %v4903
      %v5846 = vmul.f32 %v5209, %v4903
      %v5847 = vmul.f32 %v5214, %v4903
      %v5848 = vmul.f32 %v5219, %v4903
      %v5849 = vmul.f32 %v5224, %v4903
      %v5850 = vmul.f32 %v5229, %v4903
      %v5851 = vmul.f32 %v5234, %v4903
      %v5852 = vmul.f32 %v5239, %v4903
      %v5853 = vmul.f32 %v5244, %v4903
      %v5854 = vmul.f32 %v5249, %v4903
      %v5855 = vmul.f32 %v5254, %v4903
      %v5856 = vmul.f32 %v5259, %v4903
      %v5857 = vmul.f32 %v5264, %v4903
      %v5858 = vmul.f32 %v5269, %v4903
      %v5859 = vmul.f32 %v5274, %v4903
      %v5860 = vmul.f32 %v5279, %v4903
      %v5861 = vmul.f32 %v5284, %v4903
      %v5862 = vmul.f32 %v5289, %v4903
      %v5863 = vmul.f32 %v5294, %v4903
      %v5864 = vadd.f32 %v4335, %v5808
      %v5865 = vadd.f32 %v4336, %v5809
      %v5866 = vadd.f32 %v4337, %v5810
      %v5867 = vadd.f32 %v4338, %v5811
      %v5868 = vadd.f32 %v4339, %v5812
      %v5869 = vadd.f32 %v4340, %v5813
      %v5870 = vadd.f32 %v4341, %v5814
      %v5871 = vadd.f32 %v4342, %v5815
      %v5872 = vadd.f32 %v4343, %v5816
      %v5873 = vadd.f32 %v4344, %v5817
      %v5874 = vadd.f32 %v4345, %v5818
      %v5875 = vadd.f32 %v4346, %v5819
      %v5876 = vadd.f32 %v4347, %v5820
      %v5877 = vadd.f32 %v4348, %v5821
      %v5878 = vadd.f32 %v4349, %v5822
      %v5879 = vadd.f32 %v4350, %v5823
      %v5880 = vadd.f32 %v4351, %v5824
      %v5881 = vadd.f32 %v4352, %v5825
      %v5882 = vadd.f32 %v4353, %v5826
      %v5883 = vadd.f32 %v4354, %v5827
      %v5884 = vadd.f32 %v4355, %v5828
      %v5885 = vadd.f32 %v4356, %v5829
      %v5886 = vadd.f32 %v4357, %v5830
      %v5887 = vadd.f32 %v4358, %v5831
      %v5888 = vadd.f32 %v4359, %v5832
      %v5889 = vadd.f32 %v4360, %v5833
      %v5890 = vadd.f32 %v4361, %v5834
      %v5891 = vadd.f32 %v4362, %v5835
      %v5892 = vadd.f32 %v4363, %v5836
      %v5893 = vadd.f32 %v4364, %v5837
      %v5894 = vadd.f32 %v4365, %v5838
      %v5895 = vadd.f32 %v4366, %v5839
      %v5896 = vadd.f32 %v4367, %v5840
      %v5897 = vadd.f32 %v4368, %v5841
      %v5898 = vadd.f32 %v4369, %v5842
      %v5899 = vadd.f32 %v4370, %v5843
      %v5900 = vadd.f32 %v4371, %v5844
      %v5901 = vadd.f32 %v4372, %v5845
      %v5902 = vadd.f32 %v4373, %v5846
      %v5903 = vadd.f32 %v4374, %v5847
      %v5904 = vadd.f32 %v4375, %v5848
      %v5905 = vadd.f32 %v4376, %v5849
      %v5906 = vadd.f32 %v4377, %v5850
      %v5907 = vadd.f32 %v4378, %v5851
      %v5908 = vadd.f32 %v4379, %v5852
      %v5909 = vadd.f32 %v4380, %v5853
      %v5910 = vadd.f32 %v4381, %v5854
      %v5911 = vadd.f32 %v4382, %v5855
      %v5912 = vadd.f32 %v4383, %v5856
      %v5913 = vadd.f32 %v4384, %v5857
      %v5914 = vadd.f32 %v4385, %v5858
      %v5915 = vadd.f32 %v4386, %v5859
      %v5916 = vadd.f32 %v4387, %v5860
      %v5917 = vadd.f32 %v4388, %v5861
      %v5918 = vadd.f32 %v4389, %v5862
      %v5919 = vadd.f32 %v4390, %v5863
      %v5920 = vmul.f32 %v5415, %v5299
      %v5921 = vmul.f32 %v5420, %v5299
      %v5922 = vmul.f32 %v5425, %v5299
      %v5923 = vmul.f32 %v5430, %v5299
      %v5924 = vmul.f32 %v5435, %v5299
      %v5925 = vmul.f32 %v5440, %v5299
      %v5926 = vmul.f32 %v5445, %v5299
      %v5927 = vmul.f32 %v5450, %v5299
      %v5928 = vmul.f32 %v5455, %v5299
      %v5929 = vmul.f32 %v5460, %v5299
      %v5930 = vmul.f32 %v5465, %v5299
      %v5931 = vmul.f32 %v5470, %v5299
      %v5932 = vmul.f32 %v5475, %v5299
      %v5933 = vmul.f32 %v5480, %v5299
      %v5934 = vmul.f32 %v5485, %v5299
      %v5935 = vmul.f32 %v5490, %v5299
      %v5936 = vmul.f32 %v5495, %v5299
      %v5937 = vmul.f32 %v5500, %v5299
      %v5938 = vmul.f32 %v5505, %v5299
      %v5939 = vmul.f32 %v5510, %v5299
      %v5940 = vmul.f32 %v5515, %v5299
      %v5941 = vmul.f32 %v5520, %v5299
      %v5942 = vmul.f32 %v5525, %v5299
      %v5943 = vmul.f32 %v5530, %v5299
      %v5944 = vmul.f32 %v5535, %v5299
      %v5945 = vmul.f32 %v5540, %v5299
      %v5946 = vmul.f32 %v5545, %v5299
      %v5947 = vmul.f32 %v5550, %v5299
      %v5948 = vmul.f32 %v5555, %v5299
      %v5949 = vmul.f32 %v5560, %v5299
      %v5950 = vmul.f32 %v5565, %v5299
      %v5951 = vmul.f32 %v5570, %v5299
      %v5952 = vmul.f32 %v5575, %v5299
      %v5953 = vmul.f32 %v5580, %v5299
      %v5954 = vmul.f32 %v5585, %v5299
      %v5955 = vmul.f32 %v5590, %v5299
      %v5956 = vmul.f32 %v5595, %v5299
      %v5957 = vmul.f32 %v5600, %v5299
      %v5958 = vmul.f32 %v5605, %v5299
      %v5959 = vmul.f32 %v5610, %v5299
      %v5960 = vmul.f32 %v5615, %v5299
      %v5961 = vmul.f32 %v5620, %v5299
      %v5962 = vmul.f32 %v5625, %v5299
      %v5963 = vmul.f32 %v5630, %v5299
      %v5964 = vmul.f32 %v5635, %v5299
      %v5965 = vmul.f32 %v5640, %v5299
      %v5966 = vmul.f32 %v5645, %v5299
      %v5967 = vmul.f32 %v5650, %v5299
      %v5968 = vmul.f32 %v5655, %v5299
      %v5969 = vmul.f32 %v5660, %v5299
      %v5970 = vmul.f32 %v5665, %v5299
      %v5971 = vmul.f32 %v5670, %v5299
      %v5972 = vmul.f32 %v5675, %v5299
      %v5973 = vmul.f32 %v5680, %v5299
      %v5974 = vmul.f32 %v5685, %v5299
      %v5975 = vmul.f32 %v5690, %v5299
      %v5976 = vadd.f32 %v5864, %v5920
      %v5977 = vadd.f32 %v5865, %v5921
      %v5978 = vadd.f32 %v5866, %v5922
      %v5979 = vadd.f32 %v5867, %v5923
      %v5980 = vadd.f32 %v5868, %v5924
      %v5981 = vadd.f32 %v5869, %v5925
      %v5982 = vadd.f32 %v5870, %v5926
      %v5983 = vadd.f32 %v5871, %v5927
      %v5984 = vadd.f32 %v5872, %v5928
      %v5985 = vadd.f32 %v5873, %v5929
      %v5986 = vadd.f32 %v5874, %v5930
      %v5987 = vadd.f32 %v5875, %v5931
      %v5988 = vadd.f32 %v5876, %v5932
      %v5989 = vadd.f32 %v5877, %v5933
      %v5990 = vadd.f32 %v5878, %v5934
      %v5991 = vadd.f32 %v5879, %v5935
      %v5992 = vadd.f32 %v5880, %v5936
      %v5993 = vadd.f32 %v5881, %v5937
      %v5994 = vadd.f32 %v5882, %v5938
      %v5995 = vadd.f32 %v5883, %v5939
      %v5996 = vadd.f32 %v5884, %v5940
      %v5997 = vadd.f32 %v5885, %v5941
      %v5998 = vadd.f32 %v5886, %v5942
      %v5999 = vadd.f32 %v5887, %v5943
      %v6000 = vadd.f32 %v5888, %v5944
      %v6001 = vadd.f32 %v5889, %v5945
      %v6002 = vadd.f32 %v5890, %v5946
      %v6003 = vadd.f32 %v5891, %v5947
      %v6004 = vadd.f32 %v5892, %v5948
      %v6005 = vadd.f32 %v5893, %v5949
      %v6006 = vadd.f32 %v5894, %v5950
      %v6007 = vadd.f32 %v5895, %v5951
      %v6008 = vadd.f32 %v5896, %v5952
      %v6009 = vadd.f32 %v5897, %v5953
      %v6010 = vadd.f32 %v5898, %v5954
      %v6011 = vadd.f32 %v5899, %v5955
      %v6012 = vadd.f32 %v5900, %v5956
      %v6013 = vadd.f32 %v5901, %v5957
      %v6014 = vadd.f32 %v5902, %v5958
      %v6015 = vadd.f32 %v5903, %v5959
      %v6016 = vadd.f32 %v5904, %v5960
      %v6017 = vadd.f32 %v5905, %v5961
      %v6018 = vadd.f32 %v5906, %v5962
      %v6019 = vadd.f32 %v5907, %v5963
      %v6020 = vadd.f32 %v5908, %v5964
      %v6021 = vadd.f32 %v5909, %v5965
      %v6022 = vadd.f32 %v5910, %v5966
      %v6023 = vadd.f32 %v5911, %v5967
      %v6024 = vadd.f32 %v5912, %v5968
      %v6025 = vadd.f32 %v5913, %v5969
      %v6026 = vadd.f32 %v5914, %v5970
      %v6027 = vadd.f32 %v5915, %v5971
      %v6028 = vadd.f32 %v5916, %v5972
      %v6029 = vadd.f32 %v5917, %v5973
      %v6030 = vadd.f32 %v5918, %v5974
      %v6031 = vadd.f32 %v5919, %v5975
      %6033 = vset.pattern.permute.xlu0 0
      %6034 = vperm.xlu0 %6033, %v4561
      %v6035 = vpop.permute.xlu0 %6034
      %6038 = vset.pattern.permute.xlu0 0
      %6039 = vperm.xlu0 %6038, %v4562
      %v6040 = vpop.permute.xlu0 %6039
      %6043 = vset.pattern.permute.xlu0 0
      %6044 = vperm.xlu0 %6043, %v4563
      %v6045 = vpop.permute.xlu0 %6044
      %6048 = vset.pattern.permute.xlu0 0
      %6049 = vperm.xlu0 %6048, %v4564
      %v6050 = vpop.permute.xlu0 %6049
      %6053 = vset.pattern.permute.xlu0 0
      %6054 = vperm.xlu0 %6053, %v4565
      %v6055 = vpop.permute.xlu0 %6054
      %6058 = vset.pattern.permute.xlu0 0
      %6059 = vperm.xlu0 %6058, %v4566
      %v6060 = vpop.permute.xlu0 %6059
      %6063 = vset.pattern.permute.xlu0 0
      %6064 = vperm.xlu0 %6063, %v4567
      %v6065 = vpop.permute.xlu0 %6064
      %6068 = vset.pattern.permute.xlu0 0
      %6069 = vperm.xlu0 %6068, %v4568
      %v6070 = vpop.permute.xlu0 %6069
      %6073 = vset.pattern.permute.xlu0 0
      %6074 = vperm.xlu0 %6073, %v4569
      %v6075 = vpop.permute.xlu0 %6074
      %6078 = vset.pattern.permute.xlu0 0
      %6079 = vperm.xlu0 %6078, %v4570
      %v6080 = vpop.permute.xlu0 %6079
      %6083 = vset.pattern.permute.xlu0 0
      %6084 = vperm.xlu0 %6083, %v4571
      %v6085 = vpop.permute.xlu0 %6084
      %6088 = vset.pattern.permute.xlu0 0
      %6089 = vperm.xlu0 %6088, %v4572
      %v6090 = vpop.permute.xlu0 %6089
      %6093 = vset.pattern.permute.xlu0 0
      %6094 = vperm.xlu0 %6093, %v4573
      %v6095 = vpop.permute.xlu0 %6094
      %6098 = vset.pattern.permute.xlu0 0
      %6099 = vperm.xlu0 %6098, %v4574
      %v6100 = vpop.permute.xlu0 %6099
      %6103 = vset.pattern.permute.xlu0 0
      %6104 = vperm.xlu0 %6103, %v4575
      %v6105 = vpop.permute.xlu0 %6104
      %6108 = vset.pattern.permute.xlu0 0
      %6109 = vperm.xlu0 %6108, %v4576
      %v6110 = vpop.permute.xlu0 %6109
      %6113 = vset.pattern.permute.xlu0 0
      %6114 = vperm.xlu0 %6113, %v4577
      %v6115 = vpop.permute.xlu0 %6114
      %6118 = vset.pattern.permute.xlu0 0
      %6119 = vperm.xlu0 %6118, %v4578
      %v6120 = vpop.permute.xlu0 %6119
      %6123 = vset.pattern.permute.xlu0 0
      %6124 = vperm.xlu0 %6123, %v4579
      %v6125 = vpop.permute.xlu0 %6124
      %6128 = vset.pattern.permute.xlu0 0
      %6129 = vperm.xlu0 %6128, %v4580
      %v6130 = vpop.permute.xlu0 %6129
      %6133 = vset.pattern.permute.xlu0 0
      %6134 = vperm.xlu0 %6133, %v4581
      %v6135 = vpop.permute.xlu0 %6134
      %6138 = vset.pattern.permute.xlu0 0
      %6139 = vperm.xlu0 %6138, %v4582
      %v6140 = vpop.permute.xlu0 %6139
      %6143 = vset.pattern.permute.xlu0 0
      %6144 = vperm.xlu0 %6143, %v4583
      %v6145 = vpop.permute.xlu0 %6144
      %6148 = vset.pattern.permute.xlu0 0
      %6149 = vperm.xlu0 %6148, %v4584
      %v6150 = vpop.permute.xlu0 %6149
      %6153 = vset.pattern.permute.xlu0 0
      %6154 = vperm.xlu0 %6153, %v4585
      %v6155 = vpop.permute.xlu0 %6154
      %6158 = vset.pattern.permute.xlu0 0
      %6159 = vperm.xlu0 %6158, %v4586
      %v6160 = vpop.permute.xlu0 %6159
      %6163 = vset.pattern.permute.xlu0 0
      %6164 = vperm.xlu0 %6163, %v4587
      %v6165 = vpop.permute.xlu0 %6164
      %6168 = vset.pattern.permute.xlu0 0
      %6169 = vperm.xlu0 %6168, %v4588
      %v6170 = vpop.permute.xlu0 %6169
      %6173 = vset.pattern.permute.xlu0 0
      %6174 = vperm.xlu0 %6173, %v4589
      %v6175 = vpop.permute.xlu0 %6174
      %6178 = vset.pattern.permute.xlu0 0
      %6179 = vperm.xlu0 %6178, %v4590
      %v6180 = vpop.permute.xlu0 %6179
      %6183 = vset.pattern.permute.xlu0 0
      %6184 = vperm.xlu0 %6183, %v4591
      %v6185 = vpop.permute.xlu0 %6184
      %6188 = vset.pattern.permute.xlu0 0
      %6189 = vperm.xlu0 %6188, %v4592
      %v6190 = vpop.permute.xlu0 %6189
      %6193 = vset.pattern.permute.xlu0 0
      %6194 = vperm.xlu0 %6193, %v4593
      %v6195 = vpop.permute.xlu0 %6194
      %6198 = vset.pattern.permute.xlu0 0
      %6199 = vperm.xlu0 %6198, %v4594
      %v6200 = vpop.permute.xlu0 %6199
      %6203 = vset.pattern.permute.xlu0 0
      %6204 = vperm.xlu0 %6203, %v4595
      %v6205 = vpop.permute.xlu0 %6204
      %6208 = vset.pattern.permute.xlu0 0
      %6209 = vperm.xlu0 %6208, %v4596
      %v6210 = vpop.permute.xlu0 %6209
      %6213 = vset.pattern.permute.xlu0 0
      %6214 = vperm.xlu0 %6213, %v4597
      %v6215 = vpop.permute.xlu0 %6214
      %6218 = vset.pattern.permute.xlu0 0
      %6219 = vperm.xlu0 %6218, %v4598
      %v6220 = vpop.permute.xlu0 %6219
      %6223 = vset.pattern.permute.xlu0 0
      %6224 = vperm.xlu0 %6223, %v4599
      %v6225 = vpop.permute.xlu0 %6224
      %6228 = vset.pattern.permute.xlu0 0
      %6229 = vperm.xlu0 %6228, %v4600
      %v6230 = vpop.permute.xlu0 %6229
      %6233 = vset.pattern.permute.xlu0 0
      %6234 = vperm.xlu0 %6233, %v4601
      %v6235 = vpop.permute.xlu0 %6234
      %6238 = vset.pattern.permute.xlu0 0
      %6239 = vperm.xlu0 %6238, %v4602
      %v6240 = vpop.permute.xlu0 %6239
      %6243 = vset.pattern.permute.xlu0 0
      %6244 = vperm.xlu0 %6243, %v4603
      %v6245 = vpop.permute.xlu0 %6244
      %6248 = vset.pattern.permute.xlu0 0
      %6249 = vperm.xlu0 %6248, %v4604
      %v6250 = vpop.permute.xlu0 %6249
      %6253 = vset.pattern.permute.xlu0 0
      %6254 = vperm.xlu0 %6253, %v4605
      %v6255 = vpop.permute.xlu0 %6254
      %6258 = vset.pattern.permute.xlu0 0
      %6259 = vperm.xlu0 %6258, %v4606
      %v6260 = vpop.permute.xlu0 %6259
      %6263 = vset.pattern.permute.xlu0 0
      %6264 = vperm.xlu0 %6263, %v4607
      %v6265 = vpop.permute.xlu0 %6264
      %6268 = vset.pattern.permute.xlu0 0
      %6269 = vperm.xlu0 %6268, %v4608
      %v6270 = vpop.permute.xlu0 %6269
      %6273 = vset.pattern.permute.xlu0 0
      %6274 = vperm.xlu0 %6273, %v4609
      %v6275 = vpop.permute.xlu0 %6274
      %6278 = vset.pattern.permute.xlu0 0
      %6279 = vperm.xlu0 %6278, %v4610
      %v6280 = vpop.permute.xlu0 %6279
      %6283 = vset.pattern.permute.xlu0 0
      %6284 = vperm.xlu0 %6283, %v4611
      %v6285 = vpop.permute.xlu0 %6284
      %6288 = vset.pattern.permute.xlu0 0
      %6289 = vperm.xlu0 %6288, %v4612
      %v6290 = vpop.permute.xlu0 %6289
      %6293 = vset.pattern.permute.xlu0 0
      %6294 = vperm.xlu0 %6293, %v4613
      %v6295 = vpop.permute.xlu0 %6294
      %6298 = vset.pattern.permute.xlu0 0
      %6299 = vperm.xlu0 %6298, %v4614
      %v6300 = vpop.permute.xlu0 %6299
      %6303 = vset.pattern.permute.xlu0 0
      %6304 = vperm.xlu0 %6303, %v4615
      %v6305 = vpop.permute.xlu0 %6304
      %6308 = vset.pattern.permute.xlu0 0
      %6309 = vperm.xlu0 %6308, %v4616
      %v6310 = vpop.permute.xlu0 %6309
      %v6312 = vmul.f32 %v6035, %v5695
      %v6313 = vmul.f32 %v6040, %v5695
      %v6314 = vmul.f32 %v6045, %v5695
      %v6315 = vmul.f32 %v6050, %v5695
      %v6316 = vmul.f32 %v6055, %v5695
      %v6317 = vmul.f32 %v6060, %v5695
      %v6318 = vmul.f32 %v6065, %v5695
      %v6319 = vmul.f32 %v6070, %v5695
      %v6320 = vmul.f32 %v6075, %v5695
      %v6321 = vmul.f32 %v6080, %v5695
      %v6322 = vmul.f32 %v6085, %v5695
      %v6323 = vmul.f32 %v6090, %v5695
      %v6324 = vmul.f32 %v6095, %v5695
      %v6325 = vmul.f32 %v6100, %v5695
      %v6326 = vmul.f32 %v6105, %v5695
      %v6327 = vmul.f32 %v6110, %v5695
      %v6328 = vmul.f32 %v6115, %v5695
      %v6329 = vmul.f32 %v6120, %v5695
      %v6330 = vmul.f32 %v6125, %v5695
      %v6331 = vmul.f32 %v6130, %v5695
      %v6332 = vmul.f32 %v6135, %v5695
      %v6333 = vmul.f32 %v6140, %v5695
      %v6334 = vmul.f32 %v6145, %v5695
      %v6335 = vmul.f32 %v6150, %v5695
      %v6336 = vmul.f32 %v6155, %v5695
      %v6337 = vmul.f32 %v6160, %v5695
      %v6338 = vmul.f32 %v6165, %v5695
      %v6339 = vmul.f32 %v6170, %v5695
      %v6340 = vmul.f32 %v6175, %v5695
      %v6341 = vmul.f32 %v6180, %v5695
      %v6342 = vmul.f32 %v6185, %v5695
      %v6343 = vmul.f32 %v6190, %v5695
      %v6344 = vmul.f32 %v6195, %v5695
      %v6345 = vmul.f32 %v6200, %v5695
      %v6346 = vmul.f32 %v6205, %v5695
      %v6347 = vmul.f32 %v6210, %v5695
      %v6348 = vmul.f32 %v6215, %v5695
      %v6349 = vmul.f32 %v6220, %v5695
      %v6350 = vmul.f32 %v6225, %v5695
      %v6351 = vmul.f32 %v6230, %v5695
      %v6352 = vmul.f32 %v6235, %v5695
      %v6353 = vmul.f32 %v6240, %v5695
      %v6354 = vmul.f32 %v6245, %v5695
      %v6355 = vmul.f32 %v6250, %v5695
      %v6356 = vmul.f32 %v6255, %v5695
      %v6357 = vmul.f32 %v6260, %v5695
      %v6358 = vmul.f32 %v6265, %v5695
      %v6359 = vmul.f32 %v6270, %v5695
      %v6360 = vmul.f32 %v6275, %v5695
      %v6361 = vmul.f32 %v6280, %v5695
      %v6362 = vmul.f32 %v6285, %v5695
      %v6363 = vmul.f32 %v6290, %v5695
      %v6364 = vmul.f32 %v6295, %v5695
      %v6365 = vmul.f32 %v6300, %v5695
      %v6366 = vmul.f32 %v6305, %v5695
      %v6367 = vmul.f32 %v6310, %v5695
      %v6368 = vadd.f32 %v5976, %v6312
      %v6369 = vadd.f32 %v5977, %v6313
      %v6370 = vadd.f32 %v5978, %v6314
      %v6371 = vadd.f32 %v5979, %v6315
      %v6372 = vadd.f32 %v5980, %v6316
      %v6373 = vadd.f32 %v5981, %v6317
      %v6374 = vadd.f32 %v5982, %v6318
      %v6375 = vadd.f32 %v5983, %v6319
      %v6376 = vadd.f32 %v5984, %v6320
      %v6377 = vadd.f32 %v5985, %v6321
      %v6378 = vadd.f32 %v5986, %v6322
      %v6379 = vadd.f32 %v5987, %v6323
      %v6380 = vadd.f32 %v5988, %v6324
      %v6381 = vadd.f32 %v5989, %v6325
      %v6382 = vadd.f32 %v5990, %v6326
      %v6383 = vadd.f32 %v5991, %v6327
      %v6384 = vadd.f32 %v5992, %v6328
      %v6385 = vadd.f32 %v5993, %v6329
      %v6386 = vadd.f32 %v5994, %v6330
      %v6387 = vadd.f32 %v5995, %v6331
      %v6388 = vadd.f32 %v5996, %v6332
      %v6389 = vadd.f32 %v5997, %v6333
      %v6390 = vadd.f32 %v5998, %v6334
      %v6391 = vadd.f32 %v5999, %v6335
      %v6392 = vadd.f32 %v6000, %v6336
      %v6393 = vadd.f32 %v6001, %v6337
      %v6394 = vadd.f32 %v6002, %v6338
      %v6395 = vadd.f32 %v6003, %v6339
      %v6396 = vadd.f32 %v6004, %v6340
      %v6397 = vadd.f32 %v6005, %v6341
      %v6398 = vadd.f32 %v6006, %v6342
      %v6399 = vadd.f32 %v6007, %v6343
      %v6400 = vadd.f32 %v6008, %v6344
      %v6401 = vadd.f32 %v6009, %v6345
      %v6402 = vadd.f32 %v6010, %v6346
      %v6403 = vadd.f32 %v6011, %v6347
      %v6404 = vadd.f32 %v6012, %v6348
      %v6405 = vadd.f32 %v6013, %v6349
      %v6406 = vadd.f32 %v6014, %v6350
      %v6407 = vadd.f32 %v6015, %v6351
      %v6408 = vadd.f32 %v6016, %v6352
      %v6409 = vadd.f32 %v6017, %v6353
      %v6410 = vadd.f32 %v6018, %v6354
      %v6411 = vadd.f32 %v6019, %v6355
      %v6412 = vadd.f32 %v6020, %v6356
      %v6413 = vadd.f32 %v6021, %v6357
      %v6414 = vadd.f32 %v6022, %v6358
      %v6415 = vadd.f32 %v6023, %v6359
      %v6416 = vadd.f32 %v6024, %v6360
      %v6417 = vadd.f32 %v6025, %v6361
      %v6418 = vadd.f32 %v6026, %v6362
      %v6419 = vadd.f32 %v6027, %v6363
      %v6420 = vadd.f32 %v6028, %v6364
      %v6421 = vadd.f32 %v6029, %v6365
      %v6422 = vadd.f32 %v6030, %v6366
      %v6423 = vadd.f32 %v6031, %v6367
      %v6424 = vmax.f32 %v5752, %v6368
      %v6425 = vmax.f32 %v5753, %v6369
      %v6426 = vmax.f32 %v5754, %v6370
      %v6427 = vmax.f32 %v5755, %v6371
      %v6428 = vmax.f32 %v5756, %v6372
      %v6429 = vmax.f32 %v5757, %v6373
      %v6430 = vmax.f32 %v5758, %v6374
      %v6431 = vmax.f32 %v5759, %v6375
      %v6432 = vmax.f32 %v5760, %v6376
      %v6433 = vmax.f32 %v5761, %v6377
      %v6434 = vmax.f32 %v5762, %v6378
      %v6435 = vmax.f32 %v5763, %v6379
      %v6436 = vmax.f32 %v5764, %v6380
      %v6437 = vmax.f32 %v5765, %v6381
      %v6438 = vmax.f32 %v5766, %v6382
      %v6439 = vmax.f32 %v5767, %v6383
      %v6440 = vmax.f32 %v5768, %v6384
      %v6441 = vmax.f32 %v5769, %v6385
      %v6442 = vmax.f32 %v5770, %v6386
      %v6443 = vmax.f32 %v5771, %v6387
      %v6444 = vmax.f32 %v5772, %v6388
      %v6445 = vmax.f32 %v5773, %v6389
      %v6446 = vmax.f32 %v5774, %v6390
      %v6447 = vmax.f32 %v5775, %v6391
      %v6448 = vmax.f32 %v5776, %v6392
      %v6449 = vmax.f32 %v5777, %v6393
      %v6450 = vmax.f32 %v5778, %v6394
      %v6451 = vmax.f32 %v5779, %v6395
      %v6452 = vmax.f32 %v5780, %v6396
      %v6453 = vmax.f32 %v5781, %v6397
      %v6454 = vmax.f32 %v5782, %v6398
      %v6455 = vmax.f32 %v5783, %v6399
      %v6456 = vmax.f32 %v5784, %v6400
      %v6457 = vmax.f32 %v5785, %v6401
      %v6458 = vmax.f32 %v5786, %v6402
      %v6459 = vmax.f32 %v5787, %v6403
      %v6460 = vmax.f32 %v5788, %v6404
      %v6461 = vmax.f32 %v5789, %v6405
      %v6462 = vmax.f32 %v5790, %v6406
      %v6463 = vmax.f32 %v5791, %v6407
      %v6464 = vmax.f32 %v5792, %v6408
      %v6465 = vmax.f32 %v5793, %v6409
      %v6466 = vmax.f32 %v5794, %v6410
      %v6467 = vmax.f32 %v5795, %v6411
      %v6468 = vmax.f32 %v5796, %v6412
      %v6469 = vmax.f32 %v5797, %v6413
      %v6470 = vmax.f32 %v5798, %v6414
      %v6471 = vmax.f32 %v5799, %v6415
      %v6472 = vmax.f32 %v5800, %v6416
      %v6473 = vmax.f32 %v5801, %v6417
      %v6474 = vmax.f32 %v5802, %v6418
      %v6475 = vmax.f32 %v5803, %v6419
      %v6476 = vmax.f32 %v5804, %v6420
      %v6477 = vmax.f32 %v5805, %v6421
      %v6478 = vmax.f32 %v5806, %v6422
      %v6479 = vmax.f32 %v5807, %v6423
      %vm6480 = vcmask 261120
      %v6481 = vsel %vm6480, %v6424, -inf
      %v6482 = vsel %vm6480, %v6426, -inf
      %v6483 = vmax.f32 %v6481, %v6482
      %vm6484 = vcmask 259072
      %v6485 = vsel %vm6484, %v6425, -inf
      %v6486 = vsel %vm6484, %v6427, -inf
      %v6487 = vmax.f32 %v6485, %v6486
      %v6488 = vsel %vm6480, %v6428, -inf
      %v6489 = vsel %vm6480, %v6430, -inf
      %v6490 = vmax.f32 %v6488, %v6489
      %v6491 = vsel %vm6484, %v6429, -inf
      %v6492 = vsel %vm6484, %v6431, -inf
      %v6493 = vmax.f32 %v6491, %v6492
      %v6494 = vsel %vm6480, %v6432, -inf
      %v6495 = vsel %vm6480, %v6434, -inf
      %v6496 = vmax.f32 %v6494, %v6495
      %v6497 = vsel %vm6484, %v6433, -inf
      %v6498 = vsel %vm6484, %v6435, -inf
      %v6499 = vmax.f32 %v6497, %v6498
      %v6500 = vsel %vm6480, %v6436, -inf
      %v6501 = vsel %vm6480, %v6438, -inf
      %v6502 = vmax.f32 %v6500, %v6501
      %v6503 = vsel %vm6484, %v6437, -inf
      %v6504 = vsel %vm6484, %v6439, -inf
      %v6505 = vmax.f32 %v6503, %v6504
      %v6506 = vsel %vm6480, %v6440, -inf
      %v6507 = vsel %vm6480, %v6442, -inf
      %v6508 = vmax.f32 %v6506, %v6507
      %v6509 = vsel %vm6484, %v6441, -inf
      %v6510 = vsel %vm6484, %v6443, -inf
      %v6511 = vmax.f32 %v6509, %v6510
      %v6512 = vsel %vm6480, %v6444, -inf
      %v6513 = vsel %vm6480, %v6446, -inf
      %v6514 = vmax.f32 %v6512, %v6513
      %v6515 = vsel %vm6484, %v6445, -inf
      %v6516 = vsel %vm6484, %v6447, -inf
      %v6517 = vmax.f32 %v6515, %v6516
      %v6518 = vsel %vm6480, %v6448, -inf
      %v6519 = vsel %vm6480, %v6450, -inf
      %v6520 = vmax.f32 %v6518, %v6519
      %v6521 = vsel %vm6484, %v6449, -inf
      %v6522 = vsel %vm6484, %v6451, -inf
      %v6523 = vmax.f32 %v6521, %v6522
      %v6524 = vsel %vm6480, %v6452, -inf
      %v6525 = vsel %vm6480, %v6454, -inf
      %v6526 = vmax.f32 %v6524, %v6525
      %v6527 = vsel %vm6484, %v6453, -inf
      %v6528 = vsel %vm6484, %v6455, -inf
      %v6529 = vmax.f32 %v6527, %v6528
      %v6530 = vsel %vm6480, %v6456, -inf
      %v6531 = vsel %vm6480, %v6458, -inf
      %v6532 = vmax.f32 %v6530, %v6531
      %v6533 = vsel %vm6484, %v6457, -inf
      %v6534 = vsel %vm6484, %v6459, -inf
      %v6535 = vmax.f32 %v6533, %v6534
      %v6536 = vsel %vm6480, %v6460, -inf
      %v6537 = vsel %vm6480, %v6462, -inf
      %v6538 = vmax.f32 %v6536, %v6537
      %v6539 = vsel %vm6484, %v6461, -inf
      %v6540 = vsel %vm6484, %v6463, -inf
      %v6541 = vmax.f32 %v6539, %v6540
      %v6542 = vsel %vm6480, %v6464, -inf
      %v6543 = vsel %vm6480, %v6466, -inf
      %v6544 = vmax.f32 %v6542, %v6543
      %v6545 = vsel %vm6484, %v6465, -inf
      %v6546 = vsel %vm6484, %v6467, -inf
      %v6547 = vmax.f32 %v6545, %v6546
      %v6548 = vsel %vm6480, %v6468, -inf
      %v6549 = vsel %vm6480, %v6470, -inf
      %v6550 = vmax.f32 %v6548, %v6549
      %v6551 = vsel %vm6484, %v6469, -inf
      %v6552 = vsel %vm6484, %v6471, -inf
      %v6553 = vmax.f32 %v6551, %v6552
      %v6554 = vsel %vm6480, %v6472, -inf
      %v6555 = vsel %vm6480, %v6474, -inf
      %v6556 = vmax.f32 %v6554, %v6555
      %v6557 = vsel %vm6484, %v6473, -inf
      %v6558 = vsel %vm6484, %v6475, -inf
      %v6559 = vmax.f32 %v6557, %v6558
      %v6560 = vsel %vm6480, %v6476, -inf
      %v6561 = vsel %vm6480, %v6478, -inf
      %v6562 = vmax.f32 %v6560, %v6561
      %v6563 = vsel %vm6484, %v6477, -inf
      %v6564 = vsel %vm6484, %v6479, -inf
      %v6565 = vmax.f32 %v6563, %v6564
      %v6566 = vld [vmem:[%s3] sm:$0x1]
      %v6568 = vlaneseq
      %v6569 = vshrl.u32 %v6568, 7
      %v6570 = vsub.s32 0, %v6569
      %v6571 = vrot.slane %v6566, %v6570
      %v6573 = vadd.f32 %v6483, %v6571
      %v6574 = vadd.f32 %v6487, %v6571
      %v6575 = vadd.f32 %v6490, %v6571
      %v6576 = vadd.f32 %v6493, %v6571
      %v6577 = vadd.f32 %v6496, %v6571
      %v6578 = vadd.f32 %v6499, %v6571
      %v6579 = vadd.f32 %v6502, %v6571
      %v6580 = vadd.f32 %v6505, %v6571
      %v6581 = vadd.f32 %v6508, %v6571
      %v6582 = vadd.f32 %v6511, %v6571
      %v6583 = vadd.f32 %v6514, %v6571
      %v6584 = vadd.f32 %v6517, %v6571
      %v6585 = vadd.f32 %v6520, %v6571
      %v6586 = vadd.f32 %v6523, %v6571
      %v6587 = vadd.f32 %v6526, %v6571
      %v6588 = vadd.f32 %v6529, %v6571
      %v6589 = vadd.f32 %v6532, %v6571
      %v6590 = vadd.f32 %v6535, %v6571
      %v6591 = vadd.f32 %v6538, %v6571
      %v6592 = vadd.f32 %v6541, %v6571
      %v6593 = vadd.f32 %v6544, %v6571
      %v6594 = vadd.f32 %v6547, %v6571
      %v6595 = vadd.f32 %v6550, %v6571
      %v6596 = vadd.f32 %v6553, %v6571
      %v6597 = vadd.f32 %v6556, %v6571
      %v6598 = vadd.f32 %v6559, %v6571
      %v6599 = vadd.f32 %v6562, %v6571
      %v6600 = vadd.f32 %v6565, %v6571
      %v6601 = vmax.f32 %v6573, 0.0
      %v6602 = vmax.f32 %v6574, 0.0
      %v6603 = vmax.f32 %v6575, 0.0
      %v6604 = vmax.f32 %v6576, 0.0
      %v6605 = vmax.f32 %v6577, 0.0
      %v6606 = vmax.f32 %v6578, 0.0
      %v6607 = vmax.f32 %v6579, 0.0
      %v6608 = vmax.f32 %v6580, 0.0
      %v6609 = vmax.f32 %v6581, 0.0
      %v6610 = vmax.f32 %v6582, 0.0
      %v6611 = vmax.f32 %v6583, 0.0
      %v6612 = vmax.f32 %v6584, 0.0
      %v6613 = vmax.f32 %v6585, 0.0
      %v6614 = vmax.f32 %v6586, 0.0
      %v6615 = vmax.f32 %v6587, 0.0
      %v6616 = vmax.f32 %v6588, 0.0
      %v6617 = vmax.f32 %v6589, 0.0
      %v6618 = vmax.f32 %v6590, 0.0
      %v6619 = vmax.f32 %v6591, 0.0
      %v6620 = vmax.f32 %v6592, 0.0
      %v6621 = vmax.f32 %v6593, 0.0
      %v6622 = vmax.f32 %v6594, 0.0
      %v6623 = vmax.f32 %v6595, 0.0
      %v6624 = vmax.f32 %v6596, 0.0
      %v6625 = vmax.f32 %v6597, 0.0
      %v6626 = vmax.f32 %v6598, 0.0
      %v6627 = vmax.f32 %v6599, 0.0
      %v6628 = vmax.f32 %v6600, 0.0
      %6629 = vst.msk [vmem:[#allocation2] sm:$0xff] %vm6480, 0.0
      %6630 = vst.msk [vmem:[#allocation2 + $0x8] sm:$0xff] %vm6480, 0.0
      %6631 = vst.msk [vmem:[#allocation2 + $0x10] sm:$0xff] %vm6480, 0.0
      %6632 = vst.msk [vmem:[#allocation2 + $0x18] sm:$0xff] %vm6480, 0.0
      %6633 = vst.msk [vmem:[#allocation2 + $0x20] sm:$0xff] %vm6480, 0.0
      %6634 = vst.msk [vmem:[#allocation2 + $0x28] sm:$0xff] %vm6480, 0.0
      %6635 = vst.msk [vmem:[#allocation2 + $0x30] sm:$0xff] %vm6480, 0.0
      %6636 = vst.msk [vmem:[#allocation2 + $0x38] sm:$0xff] %vm6480, 0.0
      %6637 = vst.msk [vmem:[#allocation2 + $0x40] sm:$0xff] %vm6480, 0.0
      %6638 = vst.msk [vmem:[#allocation2 + $0x48] sm:$0xff] %vm6480, 0.0
      %6639 = vst.msk [vmem:[#allocation2 + $0x50] sm:$0xff] %vm6480, 0.0
      %6640 = vst.msk [vmem:[#allocation2 + $0x58] sm:$0xff] %vm6480, 0.0
      %6641 = vst.msk [vmem:[#allocation2 + $0x60] sm:$0xff] %vm6480, 0.0
      %6642 = vst.msk [vmem:[#allocation2 + $0x68] sm:$0xff] %vm6480, 0.0
      %6643 = vst.msk [vmem:[#allocation2 + $0x70] sm:$0xff] %vm6480, 0.0
      %6644 = vst.msk [vmem:[#allocation2 + $0x78] sm:$0xff] %vm6480, 0.0
      %6645 = vst.msk [vmem:[#allocation2 + $0x80] sm:$0xff] %vm6480, 0.0
      %6646 = vst.msk [vmem:[#allocation2 + $0x88] sm:$0xff] %vm6480, 0.0
      %6647 = vst.msk [vmem:[#allocation2 + $0x90] sm:$0xff] %vm6480, 0.0
      %6648 = vst.msk [vmem:[#allocation2 + $0x98] sm:$0xff] %vm6480, 0.0
      %6649 = vst.msk [vmem:[#allocation2 + $0xa0] sm:$0xff] %vm6480, 0.0
      %6650 = vst.msk [vmem:[#allocation2 + $0xa8] sm:$0xff] %vm6480, 0.0
      %6651 = vst.msk [vmem:[#allocation2 + $0xb0] sm:$0xff] %vm6480, 0.0
      %6652 = vst.msk [vmem:[#allocation2 + $0xb8] sm:$0xff] %vm6480, 0.0
      %6653 = vst.msk [vmem:[#allocation2 + $0xc0] sm:$0xff] %vm6480, 0.0
      %6654 = vst.msk [vmem:[#allocation2 + $0xc8] sm:$0xff] %vm6480, 0.0
      %6655 = vst.msk [vmem:[#allocation2 + $0xd0] sm:$0xff] %vm6480, 0.0
      %6656 = vst.msk [vmem:[#allocation2 + $0xd8] sm:$0xff] %vm6480, 0.0
      %6657 = vst.msk [vmem:[#allocation2 + $0xe0] sm:$0xff] %vm6480, 0.0
      %6658 = vst.msk [vmem:[#allocation2 + $0xe8] sm:$0xff] %vm6480, 0.0
      %6659 = vst.msk [vmem:[#allocation2 + $0xf0] sm:$0xff] %vm6480, 0.0
      %6660 = vst.msk [vmem:[#allocation2 + $0xf8] sm:$0xff] %vm6480, 0.0
      %6661 = vst.msk [vmem:[#allocation2 + $0x100] sm:$0xff] %vm6480, 0.0
      %6662 = vst.msk [vmem:[#allocation2 + $0x108] sm:$0xff] %vm6480, 0.0
      %6663 = vst.msk [vmem:[#allocation2 + $0x110] sm:$0xff] %vm6480, 0.0
      %6664 = vst.msk [vmem:[#allocation2 + $0x118] sm:$0xff] %vm6480, 0.0
      %6665 = vst.msk [vmem:[#allocation2 + $0x11] sm:$0xff] %vm6480, %v6601
      %6666 = vst.msk [vmem:[#allocation2 + $0x19] sm:$0x3f] %vm6484, %v6602
      %6667 = vst.msk [vmem:[#allocation2 + $0x21] sm:$0xff] %vm6480, %v6603
      %6668 = vst.msk [vmem:[#allocation2 + $0x29] sm:$0x3f] %vm6484, %v6604
      %6669 = vst.msk [vmem:[#allocation2 + $0x31] sm:$0xff] %vm6480, %v6605
      %6670 = vst.msk [vmem:[#allocation2 + $0x39] sm:$0x3f] %vm6484, %v6606
      %6671 = vst.msk [vmem:[#allocation2 + $0x41] sm:$0xff] %vm6480, %v6607
      %6672 = vst.msk [vmem:[#allocation2 + $0x49] sm:$0x3f] %vm6484, %v6608
      %6673 = vst.msk [vmem:[#allocation2 + $0x51] sm:$0xff] %vm6480, %v6609
      %6674 = vst.msk [vmem:[#allocation2 + $0x59] sm:$0x3f] %vm6484, %v6610
      %6675 = vst.msk [vmem:[#allocation2 + $0x61] sm:$0xff] %vm6480, %v6611
      %6676 = vst.msk [vmem:[#allocation2 + $0x69] sm:$0x3f] %vm6484, %v6612
      %6677 = vst.msk [vmem:[#allocation2 + $0x71] sm:$0xff] %vm6480, %v6613
      %6678 = vst.msk [vmem:[#allocation2 + $0x79] sm:$0x3f] %vm6484, %v6614
      %6679 = vst.msk [vmem:[#allocation2 + $0x81] sm:$0xff] %vm6480, %v6615
      %6680 = vst.msk [vmem:[#allocation2 + $0x89] sm:$0x3f] %vm6484, %v6616
      %6681 = vst.msk [vmem:[#allocation2 + $0x91] sm:$0xff] %vm6480, %v6617
      %6682 = vst.msk [vmem:[#allocation2 + $0x99] sm:$0x3f] %vm6484, %v6618
      %6683 = vst.msk [vmem:[#allocation2 + $0xa1] sm:$0xff] %vm6480, %v6619
      %6684 = vst.msk [vmem:[#allocation2 + $0xa9] sm:$0x3f] %vm6484, %v6620
      %6685 = vst.msk [vmem:[#allocation2 + $0xb1] sm:$0xff] %vm6480, %v6621
      %6686 = vst.msk [vmem:[#allocation2 + $0xb9] sm:$0x3f] %vm6484, %v6622
      %6687 = vst.msk [vmem:[#allocation2 + $0xc1] sm:$0xff] %vm6480, %v6623
      %6688 = vst.msk [vmem:[#allocation2 + $0xc9] sm:$0x3f] %vm6484, %v6624
      %6689 = vst.msk [vmem:[#allocation2 + $0xd1] sm:$0xff] %vm6480, %v6625
      %6690 = vst.msk [vmem:[#allocation2 + $0xd9] sm:$0x3f] %vm6484, %v6626
      %6691 = vst.msk [vmem:[#allocation2 + $0xe1] sm:$0xff] %vm6480, %v6627
      %6692 = vst.msk [vmem:[#allocation2 + $0xe9] sm:$0x3f] %vm6484, %v6628
      %v6693 = vld [vmem:[#allocation2] sm:$0xff]
      %v6694 = vld [vmem:[#allocation2 + $0x8] sm:$0xff]
      %v6695 = vld [vmem:[#allocation2 + $0x10] sm:$0xff]
      %v6696 = vld [vmem:[#allocation2 + $0x18] sm:$0xff]
      %v6697 = vld [vmem:[#allocation2 + $0x20] sm:$0xff]
      %v6698 = vld [vmem:[#allocation2 + $0x28] sm:$0xff]
      %v6699 = vld [vmem:[#allocation2 + $0x30] sm:$0xff]
      %v6700 = vld [vmem:[#allocation2 + $0x38] sm:$0xff]
      %v6701 = vld [vmem:[#allocation2 + $0x40] sm:$0xff]
      %v6702 = vld [vmem:[#allocation2 + $0x48] sm:$0xff]
      %v6703 = vld [vmem:[#allocation2 + $0x50] sm:$0xff]
      %v6704 = vld [vmem:[#allocation2 + $0x58] sm:$0xff]
      %v6705 = vld [vmem:[#allocation2 + $0x60] sm:$0xff]
      %v6706 = vld [vmem:[#allocation2 + $0x68] sm:$0xff]
      %v6707 = vld [vmem:[#allocation2 + $0x70] sm:$0xff]
      %v6708 = vld [vmem:[#allocation2 + $0x78] sm:$0xff]
      %v6709 = vld [vmem:[#allocation2 + $0x80] sm:$0xff]
      %v6710 = vld [vmem:[#allocation2 + $0x88] sm:$0xff]
      %v6711 = vld [vmem:[#allocation2 + $0x90] sm:$0xff]
      %v6712 = vld [vmem:[#allocation2 + $0x98] sm:$0xff]
      %v6713 = vld [vmem:[#allocation2 + $0xa0] sm:$0xff]
      %v6714 = vld [vmem:[#allocation2 + $0xa8] sm:$0xff]
      %v6715 = vld [vmem:[#allocation2 + $0xb0] sm:$0xff]
      %v6716 = vld [vmem:[#allocation2 + $0xb8] sm:$0xff]
      %v6717 = vld [vmem:[#allocation2 + $0xc0] sm:$0xff]
      %v6718 = vld [vmem:[#allocation2 + $0xc8] sm:$0xff]
      %v6719 = vld [vmem:[#allocation2 + $0xd0] sm:$0xff]
      %v6720 = vld [vmem:[#allocation2 + $0xd8] sm:$0xff]
      %v6721 = vpack.c.bf16 %v6694, %v6693
      %v6722 = vpack.c.bf16 %v6696, %v6695
      %v6723 = vpack.c.bf16 %v6698, %v6697
      %v6724 = vpack.c.bf16 %v6700, %v6699
      %v6725 = vpack.c.bf16 %v6702, %v6701
      %v6726 = vpack.c.bf16 %v6704, %v6703
      %v6727 = vpack.c.bf16 %v6706, %v6705
      %v6728 = vpack.c.bf16 %v6708, %v6707
      %v6729 = vpack.c.bf16 %v6710, %v6709
      %v6730 = vpack.c.bf16 %v6712, %v6711
      %v6731 = vpack.c.bf16 %v6714, %v6713
      %v6732 = vpack.c.bf16 %v6716, %v6715
      %v6733 = vpack.c.bf16 %v6718, %v6717
      %v6734 = vpack.c.bf16 %v6720, %v6719
      %v6735 = vld [vmem:[%s4] sm:$0xf]
      %v6736 = vld [vmem:[%s4 + $0x4] sm:$0xf]
      %v6737 = vld [vmem:[%s4 + $0x8] sm:$0xf]
      %v6738 = vld [vmem:[%s4 + $0xc] sm:$0xf]
      %v6739 = vld [vmem:[#allocation2 + $0x1] sm:$0xff]
      %v6740 = vld [vmem:[#allocation2 + $0x9] sm:$0xff]
      %v6741 = vld [vmem:[#allocation2 + $0x11] sm:$0xff]
      %v6742 = vld [vmem:[#allocation2 + $0x19] sm:$0xff]
      %v6743 = vld [vmem:[#allocation2 + $0x21] sm:$0xff]
      %v6744 = vld [vmem:[#allocation2 + $0x29] sm:$0xff]
      %v6745 = vld [vmem:[#allocation2 + $0x31] sm:$0xff]
      %v6746 = vld [vmem:[#allocation2 + $0x39] sm:$0xff]
      %v6747 = vld [vmem:[#allocation2 + $0x41] sm:$0xff]
      %v6748 = vld [vmem:[#allocation2 + $0x49] sm:$0xff]
      %v6749 = vld [vmem:[#allocation2 + $0x51] sm:$0xff]
      %v6750 = vld [vmem:[#allocation2 + $0x59] sm:$0xff]
      %v6751 = vld [vmem:[#allocation2 + $0x61] sm:$0xff]
      %v6752 = vld [vmem:[#allocation2 + $0x69] sm:$0xff]
      %v6753 = vld [vmem:[#allocation2 + $0x71] sm:$0xff]
      %v6754 = vld [vmem:[#allocation2 + $0x79] sm:$0xff]
      %v6755 = vld [vmem:[#allocation2 + $0x81] sm:$0xff]
      %v6756 = vld [vmem:[#allocation2 + $0x89] sm:$0xff]
      %v6757 = vld [vmem:[#allocation2 + $0x91] sm:$0xff]
      %v6758 = vld [vmem:[#allocation2 + $0x99] sm:$0xff]
      %v6759 = vld [vmem:[#allocation2 + $0xa1] sm:$0xff]
      %v6760 = vld [vmem:[#allocation2 + $0xa9] sm:$0xff]
      %v6761 = vld [vmem:[#allocation2 + $0xb1] sm:$0xff]
      %v6762 = vld [vmem:[#allocation2 + $0xb9] sm:$0xff]
      %v6763 = vld [vmem:[#allocation2 + $0xc1] sm:$0xff]
      %v6764 = vld [vmem:[#allocation2 + $0xc9] sm:$0xff]
      %v6765 = vld [vmem:[#allocation2 + $0xd1] sm:$0xff]
      %v6766 = vld [vmem:[#allocation2 + $0xd9] sm:$0xff]
      %v6767 = vpack.c.bf16 %v6740, %v6739
      %v6768 = vpack.c.bf16 %v6742, %v6741
      %v6769 = vpack.c.bf16 %v6744, %v6743
      %v6770 = vpack.c.bf16 %v6746, %v6745
      %v6771 = vpack.c.bf16 %v6748, %v6747
      %v6772 = vpack.c.bf16 %v6750, %v6749
      %v6773 = vpack.c.bf16 %v6752, %v6751
      %v6774 = vpack.c.bf16 %v6754, %v6753
      %v6775 = vpack.c.bf16 %v6756, %v6755
      %v6776 = vpack.c.bf16 %v6758, %v6757
      %v6777 = vpack.c.bf16 %v6760, %v6759
      %v6778 = vpack.c.bf16 %v6762, %v6761
      %v6779 = vpack.c.bf16 %v6764, %v6763
      %v6780 = vpack.c.bf16 %v6766, %v6765
      %s6781 = scalar_lea.vmem %s4, 16
      %v6782 = vld [vmem:[%s6781] sm:$0xf]
      %v6783 = vld [vmem:[%s6781 + $0x4] sm:$0xf]
      %v6784 = vld [vmem:[%s6781 + $0x8] sm:$0xf]
      %v6785 = vld [vmem:[%s6781 + $0xc] sm:$0xf]
      %v6790 = vunpack.c.l.b16 %v6782
      %v6791 = vunpack.c.l.b16 %v6783
      %v6792 = vunpack.c.l.b16 %v6784
      %v6793 = vunpack.c.l.b16 %v6785
      %v6794 = vpack.c.b16 %v6791, %v6790
      %v6795 = vpack.c.b16 %v6793, %v6792
      %v6799 = vsel %vm6480, %v6767, 0
      %v6802 = vsel %vm6480, %v6768, 0
      %v6805 = vsel %vm6480, %v6769, 0
      %v6808 = vsel %vm6480, %v6770, 0
      %v6811 = vsel %vm6480, %v6771, 0
      %v6814 = vsel %vm6480, %v6772, 0
      %v6817 = vsel %vm6480, %v6773, 0
      %v6820 = vsel %vm6480, %v6774, 0
      %v6823 = vsel %vm6480, %v6775, 0
      %v6826 = vsel %vm6480, %v6776, 0
      %v6829 = vsel %vm6480, %v6777, 0
      %v6832 = vsel %vm6480, %v6778, 0
      %v6835 = vsel %vm6480, %v6779, 0
      %v6838 = vsel %vm6480, %v6780, 0
      %6840 = vmatprep.subr.bf16.mxu0 0
      %6841 = vmatpush1.bf16.msra.mxu0 %v6794
      %6842 = vmatprep.subr.bf16.mxu0 0
      %6843 = vmatpush1.bf16.msra.mxu0 %v6795
      %6844 = vmatprep.subr.bf16.mxu0 0
      %6845 = vmatpush1.bf16.msra.mxu0 0
      %6846 = vmatprep.subr.bf16.mxu0 0
      %6847 = vmatpush1.bf16.msra.mxu0 0
      %6848 = vmatprep.subr.bf16.mxu0 0
      %6849 = vmatpush1.bf16.msra.mxu0 0
      %6850 = vmatprep.subr.bf16.mxu0 0
      %6851 = vmatpush1.bf16.msra.mxu0 0
      %6852 = vmatprep.subr.bf16.mxu0 0
      %6853 = vmatpush1.bf16.msra.mxu0 0
      %6854 = vmatprep.subr.bf16.mxu0 0
      %6855 = vmatpush1.bf16.msra.mxu0 0
      %6856 = vmatprep.subr.bf16.mxu0 0
      %6857 = vmatpush1.bf16.msra.mxu0 0
      %6858 = vmatprep.subr.bf16.mxu0 0
      %6859 = vmatpush1.bf16.msra.mxu0 0
      %6860 = vmatprep.subr.bf16.mxu0 0
      %6861 = vmatpush1.bf16.msra.mxu0 0
      %6862 = vmatprep.subr.bf16.mxu0 0
      %6863 = vmatpush1.bf16.msra.mxu0 0
      %6864 = vmatprep.subr.bf16.mxu0 0
      %6865 = vmatpush1.bf16.msra.mxu0 0
      %6866 = vmatprep.subr.bf16.mxu0 0
      %6867 = vmatpush1.bf16.msra.mxu0 0
      %6868 = vmatprep.subr.bf16.mxu0 0
      %6869 = vmatpush1.bf16.msra.mxu0 0
      %6870 = vmatprep.subr.bf16.mxu0 0
      %6871 = vmatpush1.bf16.msra.mxu0 0
      %6872 = vmatprep.mubr.bf16.mxu0 0
      %6873 = vmatmul.mubr.bf16.gmra.mrb[0].mxu0 %v6799
      %v6874 = vpop.f32.mrb[0].mxu0
      %v6875 = vadd.f32 0.0, %v6874
      %v6876 = vpop.f32.mrb[0].mxu0
      %v6877 = vpop.f32.mrb[0].mxu0
      %v6878 = vadd.f32 0.0, %v6877
      %v6879 = vpop.f32.mrb[0].mxu0
      %6880 = vmatprep.mubr.bf16.mxu0 0
      %6881 = vmatmul.mubr.bf16.gmra.mrb[0].mxu0 %v6802
      %v6882 = vpop.f32.mrb[0].mxu0
      %v6883 = vadd.f32 0.0, %v6882
      %v6884 = vpop.f32.mrb[0].mxu0
      %v6885 = vpop.f32.mrb[0].mxu0
      %v6886 = vadd.f32 0.0, %v6885
      %v6887 = vpop.f32.mrb[0].mxu0
      %6888 = vmatprep.mubr.bf16.mxu0 0
      %6889 = vmatmul.mubr.bf16.gmra.mrb[0].mxu0 %v6805
      %v6890 = vpop.f32.mrb[0].mxu0
      %v6891 = vadd.f32 0.0, %v6890
      %v6892 = vpop.f32.mrb[0].mxu0
      %v6893 = vpop.f32.mrb[0].mxu0
      %v6894 = vadd.f32 0.0, %v6893
      %v6895 = vpop.f32.mrb[0].mxu0
      %6896 = vmatprep.mubr.bf16.mxu0 0
      %6897 = vmatmul.mubr.bf16.gmra.mrb[0].mxu0 %v6808
      %v6898 = vpop.f32.mrb[0].mxu0
      %v6899 = vadd.f32 0.0, %v6898
      %v6900 = vpop.f32.mrb[0].mxu0
      %v6901 = vpop.f32.mrb[0].mxu0
      %v6902 = vadd.f32 0.0, %v6901
      %v6903 = vpop.f32.mrb[0].mxu0
      %6904 = vmatprep.mubr.bf16.mxu0 0
      %6905 = vmatmul.mubr.bf16.gmra.mrb[0].mxu0 %v6811
      %v6906 = vpop.f32.mrb[0].mxu0
      %v6907 = vadd.f32 0.0, %v6906
      %v6908 = vpop.f32.mrb[0].mxu0
      %v6909 = vpop.f32.mrb[0].mxu0
      %v6910 = vadd.f32 0.0, %v6909
      %v6911 = vpop.f32.mrb[0].mxu0
      %6912 = vmatprep.mubr.bf16.mxu0 0
      %6913 = vmatmul.mubr.bf16.gmra.mrb[0].mxu0 %v6814
      %v6914 = vpop.f32.mrb[0].mxu0
      %v6915 = vadd.f32 0.0, %v6914
      %v6916 = vpop.f32.mrb[0].mxu0
      %v6917 = vpop.f32.mrb[0].mxu0
      %v6918 = vadd.f32 0.0, %v6917
      %v6919 = vpop.f32.mrb[0].mxu0
      %6920 = vmatprep.mubr.bf16.mxu0 0
      %6921 = vmatmul.mubr.bf16.gmra.mrb[0].mxu0 %v6817
      %v6922 = vpop.f32.mrb[0].mxu0
      %v6923 = vadd.f32 0.0, %v6922
      %v6924 = vpop.f32.mrb[0].mxu0
      %v6925 = vpop.f32.mrb[0].mxu0
      %v6926 = vadd.f32 0.0, %v6925
      %v6927 = vpop.f32.mrb[0].mxu0
      %6928 = vmatprep.mubr.bf16.mxu0 0
      %6929 = vmatmul.mubr.bf16.gmra.mrb[0].mxu0 %v6820
      %v6930 = vpop.f32.mrb[0].mxu0
      %v6931 = vadd.f32 0.0, %v6930
      %v6932 = vpop.f32.mrb[0].mxu0
      %v6933 = vpop.f32.mrb[0].mxu0
      %v6934 = vadd.f32 0.0, %v6933
      %v6935 = vpop.f32.mrb[0].mxu0
      %6936 = vmatprep.mubr.bf16.mxu0 0
      %6937 = vmatmul.mubr.bf16.gmra.mrb[0].mxu0 %v6823
      %v6938 = vpop.f32.mrb[0].mxu0
      %v6939 = vadd.f32 0.0, %v6938
      %v6940 = vpop.f32.mrb[0].mxu0
      %v6941 = vpop.f32.mrb[0].mxu0
      %v6942 = vadd.f32 0.0, %v6941
      %v6943 = vpop.f32.mrb[0].mxu0
      %6944 = vmatprep.mubr.bf16.mxu0 0
      %6945 = vmatmul.mubr.bf16.gmra.mrb[0].mxu0 %v6826
      %v6946 = vpop.f32.mrb[0].mxu0
      %v6947 = vadd.f32 0.0, %v6946
      %v6948 = vpop.f32.mrb[0].mxu0
      %v6949 = vpop.f32.mrb[0].mxu0
      %v6950 = vadd.f32 0.0, %v6949
      %v6951 = vpop.f32.mrb[0].mxu0
      %6952 = vmatprep.mubr.bf16.mxu0 0
      %6953 = vmatmul.mubr.bf16.gmra.mrb[0].mxu0 %v6829
      %v6954 = vpop.f32.mrb[0].mxu0
      %v6955 = vadd.f32 0.0, %v6954
      %v6956 = vpop.f32.mrb[0].mxu0
      %v6957 = vpop.f32.mrb[0].mxu0
      %v6958 = vadd.f32 0.0, %v6957
      %v6959 = vpop.f32.mrb[0].mxu0
      %6960 = vmatprep.mubr.bf16.mxu0 0
      %6961 = vmatmul.mubr.bf16.gmra.mrb[0].mxu0 %v6832
      %v6962 = vpop.f32.mrb[0].mxu0
      %v6963 = vadd.f32 0.0, %v6962
      %v6964 = vpop.f32.mrb[0].mxu0
      %v6965 = vpop.f32.mrb[0].mxu0
      %v6966 = vadd.f32 0.0, %v6965
      %v6967 = vpop.f32.mrb[0].mxu0
      %6968 = vmatprep.mubr.bf16.mxu0 0
      %6969 = vmatmul.mubr.bf16.gmra.mrb[0].mxu0 %v6835
      %v6970 = vpop.f32.mrb[0].mxu0
      %v6971 = vadd.f32 0.0, %v6970
      %v6972 = vpop.f32.mrb[0].mxu0
      %v6973 = vpop.f32.mrb[0].mxu0
      %v6974 = vadd.f32 0.0, %v6973
      %v6975 = vpop.f32.mrb[0].mxu0
      %6976 = vmatprep.mubr.bf16.mxu0 0
      %6977 = vmatmul.mubr.bf16.gmra.mrb[0].mxu0 %v6838
      %v6978 = vpop.f32.mrb[0].mxu0
      %v6979 = vadd.f32 0.0, %v6978
      %v6980 = vpop.f32.mrb[0].mxu0
      %v6981 = vpop.f32.mrb[0].mxu0
      %v6982 = vadd.f32 0.0, %v6981
      %v6983 = vpop.f32.mrb[0].mxu0
      %6984 = vdwg.mxu0
      %v6989 = vunpack.c.l.b16 %v6735
      %v6990 = vunpack.c.l.b16 %v6736
      %v6991 = vunpack.c.l.b16 %v6737
      %v6992 = vunpack.c.l.b16 %v6738
      %v6993 = vpack.c.b16 %v6990, %v6989
      %v6994 = vpack.c.b16 %v6992, %v6991
      %v6998 = vsel %vm6480, %v6721, 0
      %v7001 = vsel %vm6480, %v6722, 0
      %v7004 = vsel %vm6480, %v6723, 0
      %v7007 = vsel %vm6480, %v6724, 0
      %v7010 = vsel %vm6480, %v6725, 0
      %v7013 = vsel %vm6480, %v6726, 0
      %v7016 = vsel %vm6480, %v6727, 0
      %v7019 = vsel %vm6480, %v6728, 0
      %v7022 = vsel %vm6480, %v6729, 0
      %v7025 = vsel %vm6480, %v6730, 0
      %v7028 = vsel %vm6480, %v6731, 0
      %v7031 = vsel %vm6480, %v6732, 0
      %v7034 = vsel %vm6480, %v6733, 0
      %v7037 = vsel %vm6480, %v6734, 0
      %7039 = vmatprep.subr.bf16.mxu0 0
      %7040 = vmatpush1.bf16.msra.mxu0 %v6993
      %7041 = vmatprep.subr.bf16.mxu0 0
      %7042 = vmatpush1.bf16.msra.mxu0 %v6994
      %7043 = vmatprep.subr.bf16.mxu0 0
      %7044 = vmatpush1.bf16.msra.mxu0 0
      %7045 = vmatprep.subr.bf16.mxu0 0
      %7046 = vmatpush1.bf16.msra.mxu0 0
      %7047 = vmatprep.subr.bf16.mxu0 0
      %7048 = vmatpush1.bf16.msra.mxu0 0
      %7049 = vmatprep.subr.bf16.mxu0 0
      %7050 = vmatpush1.bf16.msra.mxu0 0
      %7051 = vmatprep.subr.bf16.mxu0 0
      %7052 = vmatpush1.bf16.msra.mxu0 0
      %7053 = vmatprep.subr.bf16.mxu0 0
      %7054 = vmatpush1.bf16.msra.mxu0 0
      %7055 = vmatprep.subr.bf16.mxu0 0
      %7056 = vmatpush1.bf16.msra.mxu0 0
      %7057 = vmatprep.subr.bf16.mxu0 0
      %7058 = vmatpush1.bf16.msra.mxu0 0
      %7059 = vmatprep.subr.bf16.mxu0 0
      %7060 = vmatpush1.bf16.msra.mxu0 0
      %7061 = vmatprep.subr.bf16.mxu0 0
      %7062 = vmatpush1.bf16.msra.mxu0 0
      %7063 = vmatprep.subr.bf16.mxu0 0
      %7064 = vmatpush1.bf16.msra.mxu0 0
      %7065 = vmatprep.subr.bf16.mxu0 0
      %7066 = vmatpush1.bf16.msra.mxu0 0
      %7067 = vmatprep.subr.bf16.mxu0 0
      %7068 = vmatpush1.bf16.msra.mxu0 0
      %7069 = vmatprep.subr.bf16.mxu0 0
      %7070 = vmatpush1.bf16.msra.mxu0 0
      %7071 = vmatprep.mubr.bf16.mxu0 0
      %7072 = vmatmul.mubr.bf16.gmra.mrb[0].mxu0 %v6998
      %v7073 = vpop.f32.mrb[0].mxu0
      %v7074 = vadd.f32 %v6875, %v7073
      %v7075 = vpop.f32.mrb[0].mxu0
      %v7076 = vpop.f32.mrb[0].mxu0
      %v7077 = vadd.f32 %v6878, %v7076
      %v7078 = vpop.f32.mrb[0].mxu0
      %7079 = vmatprep.mubr.bf16.mxu0 0
      %7080 = vmatmul.mubr.bf16.gmra.mrb[0].mxu0 %v7001
      %v7081 = vpop.f32.mrb[0].mxu0
      %v7082 = vadd.f32 %v6883, %v7081
      %v7083 = vpop.f32.mrb[0].mxu0
      %v7084 = vpop.f32.mrb[0].mxu0
      %v7085 = vadd.f32 %v6886, %v7084
      %v7086 = vpop.f32.mrb[0].mxu0
      %7087 = vmatprep.mubr.bf16.mxu0 0
      %7088 = vmatmul.mubr.bf16.gmra.mrb[0].mxu0 %v7004
      %v7089 = vpop.f32.mrb[0].mxu0
      %v7090 = vadd.f32 %v6891, %v7089
      %v7091 = vpop.f32.mrb[0].mxu0
      %v7092 = vpop.f32.mrb[0].mxu0
      %v7093 = vadd.f32 %v6894, %v7092
      %v7094 = vpop.f32.mrb[0].mxu0
      %7095 = vmatprep.mubr.bf16.mxu0 0
      %7096 = vmatmul.mubr.bf16.gmra.mrb[0].mxu0 %v7007
      %v7097 = vpop.f32.mrb[0].mxu0
      %v7098 = vadd.f32 %v6899, %v7097
      %v7099 = vpop.f32.mrb[0].mxu0
      %v7100 = vpop.f32.mrb[0].mxu0
      %v7101 = vadd.f32 %v6902, %v7100
      %v7102 = vpop.f32.mrb[0].mxu0
      %7103 = vmatprep.mubr.bf16.mxu0 0
      %7104 = vmatmul.mubr.bf16.gmra.mrb[0].mxu0 %v7010
      %v7105 = vpop.f32.mrb[0].mxu0
      %v7106 = vadd.f32 %v6907, %v7105
      %v7107 = vpop.f32.mrb[0].mxu0
      %v7108 = vpop.f32.mrb[0].mxu0
      %v7109 = vadd.f32 %v6910, %v7108
      %v7110 = vpop.f32.mrb[0].mxu0
      %7111 = vmatprep.mubr.bf16.mxu0 0
      %7112 = vmatmul.mubr.bf16.gmra.mrb[0].mxu0 %v7013
      %v7113 = vpop.f32.mrb[0].mxu0
      %v7114 = vadd.f32 %v6915, %v7113
      %v7115 = vpop.f32.mrb[0].mxu0
      %v7116 = vpop.f32.mrb[0].mxu0
      %v7117 = vadd.f32 %v6918, %v7116
      %v7118 = vpop.f32.mrb[0].mxu0
      %7119 = vmatprep.mubr.bf16.mxu0 0
      %7120 = vmatmul.mubr.bf16.gmra.mrb[0].mxu0 %v7016
      %v7121 = vpop.f32.mrb[0].mxu0
      %v7122 = vadd.f32 %v6923, %v7121
      %v7123 = vpop.f32.mrb[0].mxu0
      %v7124 = vpop.f32.mrb[0].mxu0
      %v7125 = vadd.f32 %v6926, %v7124
      %v7126 = vpop.f32.mrb[0].mxu0
      %7127 = vmatprep.mubr.bf16.mxu0 0
      %7128 = vmatmul.mubr.bf16.gmra.mrb[0].mxu0 %v7019
      %v7129 = vpop.f32.mrb[0].mxu0
      %v7130 = vadd.f32 %v6931, %v7129
      %v7131 = vpop.f32.mrb[0].mxu0
      %v7132 = vpop.f32.mrb[0].mxu0
      %v7133 = vadd.f32 %v6934, %v7132
      %v7134 = vpop.f32.mrb[0].mxu0
      %7135 = vmatprep.mubr.bf16.mxu0 0
      %7136 = vmatmul.mubr.bf16.gmra.mrb[0].mxu0 %v7022
      %v7137 = vpop.f32.mrb[0].mxu0
      %v7138 = vadd.f32 %v6939, %v7137
      %v7139 = vpop.f32.mrb[0].mxu0
      %v7140 = vpop.f32.mrb[0].mxu0
      %v7141 = vadd.f32 %v6942, %v7140
      %v7142 = vpop.f32.mrb[0].mxu0
      %7143 = vmatprep.mubr.bf16.mxu0 0
      %7144 = vmatmul.mubr.bf16.gmra.mrb[0].mxu0 %v7025
      %v7145 = vpop.f32.mrb[0].mxu0
      %v7146 = vadd.f32 %v6947, %v7145
      %v7147 = vpop.f32.mrb[0].mxu0
      %v7148 = vpop.f32.mrb[0].mxu0
      %v7149 = vadd.f32 %v6950, %v7148
      %v7150 = vpop.f32.mrb[0].mxu0
      %7151 = vmatprep.mubr.bf16.mxu0 0
      %7152 = vmatmul.mubr.bf16.gmra.mrb[0].mxu0 %v7028
      %v7153 = vpop.f32.mrb[0].mxu0
      %v7154 = vadd.f32 %v6955, %v7153
      %v7155 = vpop.f32.mrb[0].mxu0
      %v7156 = vpop.f32.mrb[0].mxu0
      %v7157 = vadd.f32 %v6958, %v7156
      %v7158 = vpop.f32.mrb[0].mxu0
      %7159 = vmatprep.mubr.bf16.mxu0 0
      %7160 = vmatmul.mubr.bf16.gmra.mrb[0].mxu0 %v7031
      %v7161 = vpop.f32.mrb[0].mxu0
      %v7162 = vadd.f32 %v6963, %v7161
      %v7163 = vpop.f32.mrb[0].mxu0
      %v7164 = vpop.f32.mrb[0].mxu0
      %v7165 = vadd.f32 %v6966, %v7164
      %v7166 = vpop.f32.mrb[0].mxu0
      %7167 = vmatprep.mubr.bf16.mxu0 0
      %7168 = vmatmul.mubr.bf16.gmra.mrb[0].mxu0 %v7034
      %v7169 = vpop.f32.mrb[0].mxu0
      %v7170 = vadd.f32 %v6971, %v7169
      %v7171 = vpop.f32.mrb[0].mxu0
      %v7172 = vpop.f32.mrb[0].mxu0
      %v7173 = vadd.f32 %v6974, %v7172
      %v7174 = vpop.f32.mrb[0].mxu0
      %7175 = vmatprep.mubr.bf16.mxu0 0
      %7176 = vmatmul.mubr.bf16.gmra.mrb[0].mxu0 %v7037
      %v7177 = vpop.f32.mrb[0].mxu0
      %v7178 = vadd.f32 %v6979, %v7177
      %v7179 = vpop.f32.mrb[0].mxu0
      %v7180 = vpop.f32.mrb[0].mxu0
      %v7181 = vadd.f32 %v6982, %v7180
      %v7182 = vpop.f32.mrb[0].mxu0
      %7183 = vdwg.mxu0
      %v7184 = vld [vmem:[#allocation2 + $0x2] sm:$0xff]
      %v7185 = vld [vmem:[#allocation2 + $0xa] sm:$0xff]
      %v7186 = vld [vmem:[#allocation2 + $0x12] sm:$0xff]
      %v7187 = vld [vmem:[#allocation2 + $0x1a] sm:$0xff]
      %v7188 = vld [vmem:[#allocation2 + $0x22] sm:$0xff]
      %v7189 = vld [vmem:[#allocation2 + $0x2a] sm:$0xff]
      %v7190 = vld [vmem:[#allocation2 + $0x32] sm:$0xff]
      %v7191 = vld [vmem:[#allocation2 + $0x3a] sm:$0xff]
      %v7192 = vld [vmem:[#allocation2 + $0x42] sm:$0xff]
      %v7193 = vld [vmem:[#allocation2 + $0x4a] sm:$0xff]
      %v7194 = vld [vmem:[#allocation2 + $0x52] sm:$0xff]
      %v7195 = vld [vmem:[#allocation2 + $0x5a] sm:$0xff]
      %v7196 = vld [vmem:[#allocation2 + $0x62] sm:$0xff]
      %v7197 = vld [vmem:[#allocation2 + $0x6a] sm:$0xff]
      %v7198 = vld [vmem:[#allocation2 + $0x72] sm:$0xff]
      %v7199 = vld [vmem:[#allocation2 + $0x7a] sm:$0xff]
      %v7200 = vld [vmem:[#allocation2 + $0x82] sm:$0xff]
      %v7201 = vld [vmem:[#allocation2 + $0x8a] sm:$0xff]
      %v7202 = vld [vmem:[#allocation2 + $0x92] sm:$0xff]
      %v7203 = vld [vmem:[#allocation2 + $0x9a] sm:$0xff]
      %v7204 = vld [vmem:[#allocation2 + $0xa2] sm:$0xff]
      %v7205 = vld [vmem:[#allocation2 + $0xaa] sm:$0xff]
      %v7206 = vld [vmem:[#allocation2 + $0xb2] sm:$0xff]
      %v7207 = vld [vmem:[#allocation2 + $0xba] sm:$0xff]
      %v7208 = vld [vmem:[#allocation2 + $0xc2] sm:$0xff]
      %v7209 = vld [vmem:[#allocation2 + $0xca] sm:$0xff]
      %v7210 = vld [vmem:[#allocation2 + $0xd2] sm:$0xff]
      %v7211 = vld [vmem:[#allocation2 + $0xda] sm:$0xff]
      %v7212 = vpack.c.bf16 %v7185, %v7184
      %v7213 = vpack.c.bf16 %v7187, %v7186
      %v7214 = vpack.c.bf16 %v7189, %v7188
      %v7215 = vpack.c.bf16 %v7191, %v7190
      %v7216 = vpack.c.bf16 %v7193, %v7192
      %v7217 = vpack.c.bf16 %v7195, %v7194
      %v7218 = vpack.c.bf16 %v7197, %v7196
      %v7219 = vpack.c.bf16 %v7199, %v7198
      %v7220 = vpack.c.bf16 %v7201, %v7200
      %v7221 = vpack.c.bf16 %v7203, %v7202
      %v7222 = vpack.c.bf16 %v7205, %v7204
      %v7223 = vpack.c.bf16 %v7207, %v7206
      %v7224 = vpack.c.bf16 %v7209, %v7208
      %v7225 = vpack.c.bf16 %v7211, %v7210
      %s7226 = scalar_lea.vmem %s4, 32
      %v7227 = vld [vmem:[%s7226] sm:$0xf]
      %v7228 = vld [vmem:[%s7226 + $0x4] sm:$0xf]
      %v7229 = vld [vmem:[%s7226 + $0x8] sm:$0xf]
      %v7230 = vld [vmem:[%s7226 + $0xc] sm:$0xf]
      %v7235 = vunpack.c.l.b16 %v7227
      %v7236 = vunpack.c.l.b16 %v7228
      %v7237 = vunpack.c.l.b16 %v7229
      %v7238 = vunpack.c.l.b16 %v7230
      %v7239 = vpack.c.b16 %v7236, %v7235
      %v7240 = vpack.c.b16 %v7238, %v7237
      %v7244 = vsel %vm6480, %v7212, 0
      %v7247 = vsel %vm6480, %v7213, 0
      %v7250 = vsel %vm6480, %v7214, 0
      %v7253 = vsel %vm6480, %v7215, 0
      %v7256 = vsel %vm6480, %v7216, 0
      %v7259 = vsel %vm6480, %v7217, 0
      %v7262 = vsel %vm6480, %v7218, 0
      %v7265 = vsel %vm6480, %v7219, 0
      %v7268 = vsel %vm6480, %v7220, 0
      %v7271 = vsel %vm6480, %v7221, 0
      %v7274 = vsel %vm6480, %v7222, 0
      %v7277 = vsel %vm6480, %v7223, 0
      %v7280 = vsel %vm6480, %v7224, 0
      %v7283 = vsel %vm6480, %v7225, 0
      %7285 = vmatprep.subr.bf16.mxu0 0
      %7286 = vmatpush1.bf16.msra.mxu0 %v7239
      %7287 = vmatprep.subr.bf16.mxu0 0
      %7288 = vmatpush1.bf16.msra.mxu0 %v7240
      %7289 = vmatprep.subr.bf16.mxu0 0
      %7290 = vmatpush1.bf16.msra.mxu0 0
      %7291 = vmatprep.subr.bf16.mxu0 0
      %7292 = vmatpush1.bf16.msra.mxu0 0
      %7293 = vmatprep.subr.bf16.mxu0 0
      %7294 = vmatpush1.bf16.msra.mxu0 0
      %7295 = vmatprep.subr.bf16.mxu0 0
      %7296 = vmatpush1.bf16.msra.mxu0 0
      %7297 = vmatprep.subr.bf16.mxu0 0
      %7298 = vmatpush1.bf16.msra.mxu0 0
      %7299 = vmatprep.subr.bf16.mxu0 0
      %7300 = vmatpush1.bf16.msra.mxu0 0
      %7301 = vmatprep.subr.bf16.mxu0 0
      %7302 = vmatpush1.bf16.msra.mxu0 0
      %7303 = vmatprep.subr.bf16.mxu0 0
      %7304 = vmatpush1.bf16.msra.mxu0 0
      %7305 = vmatprep.subr.bf16.mxu0 0
      %7306 = vmatpush1.bf16.msra.mxu0 0
      %7307 = vmatprep.subr.bf16.mxu0 0
      %7308 = vmatpush1.bf16.msra.mxu0 0
      %7309 = vmatprep.subr.bf16.mxu0 0
      %7310 = vmatpush1.bf16.msra.mxu0 0
      %7311 = vmatprep.subr.bf16.mxu0 0
      %7312 = vmatpush1.bf16.msra.mxu0 0
      %7313 = vmatprep.subr.bf16.mxu0 0
      %7314 = vmatpush1.bf16.msra.mxu0 0
      %7315 = vmatprep.subr.bf16.mxu0 0
      %7316 = vmatpush1.bf16.msra.mxu0 0
      %7317 = vmatprep.mubr.bf16.mxu0 0
      %7318 = vmatmul.mubr.bf16.gmra.mrb[0].mxu0 %v7244
      %v7319 = vpop.f32.mrb[0].mxu0
      %v7320 = vadd.f32 0.0, %v7319
      %v7321 = vpop.f32.mrb[0].mxu0
      %v7322 = vpop.f32.mrb[0].mxu0
      %v7323 = vadd.f32 0.0, %v7322
      %v7324 = vpop.f32.mrb[0].mxu0
      %7325 = vmatprep.mubr.bf16.mxu0 0
      %7326 = vmatmul.mubr.bf16.gmra.mrb[0].mxu0 %v7247
      %v7327 = vpop.f32.mrb[0].mxu0
      %v7328 = vadd.f32 0.0, %v7327
      %v7329 = vpop.f32.mrb[0].mxu0
      %v7330 = vpop.f32.mrb[0].mxu0
      %v7331 = vadd.f32 0.0, %v7330
      %v7332 = vpop.f32.mrb[0].mxu0
      %7333 = vmatprep.mubr.bf16.mxu0 0
      %7334 = vmatmul.mubr.bf16.gmra.mrb[0].mxu0 %v7250
      %v7335 = vpop.f32.mrb[0].mxu0
      %v7336 = vadd.f32 0.0, %v7335
      %v7337 = vpop.f32.mrb[0].mxu0
      %v7338 = vpop.f32.mrb[0].mxu0
      %v7339 = vadd.f32 0.0, %v7338
      %v7340 = vpop.f32.mrb[0].mxu0
      %7341 = vmatprep.mubr.bf16.mxu0 0
      %7342 = vmatmul.mubr.bf16.gmra.mrb[0].mxu0 %v7253
      %v7343 = vpop.f32.mrb[0].mxu0
      %v7344 = vadd.f32 0.0, %v7343
      %v7345 = vpop.f32.mrb[0].mxu0
      %v7346 = vpop.f32.mrb[0].mxu0
      %v7347 = vadd.f32 0.0, %v7346
      %v7348 = vpop.f32.mrb[0].mxu0
      %7349 = vmatprep.mubr.bf16.mxu0 0
      %7350 = vmatmul.mubr.bf16.gmra.mrb[0].mxu0 %v7256
      %v7351 = vpop.f32.mrb[0].mxu0
      %v7352 = vadd.f32 0.0, %v7351
      %v7353 = vpop.f32.mrb[0].mxu0
      %v7354 = vpop.f32.mrb[0].mxu0
      %v7355 = vadd.f32 0.0, %v7354
      %v7356 = vpop.f32.mrb[0].mxu0
      %7357 = vmatprep.mubr.bf16.mxu0 0
      %7358 = vmatmul.mubr.bf16.gmra.mrb[0].mxu0 %v7259
      %v7359 = vpop.f32.mrb[0].mxu0
      %v7360 = vadd.f32 0.0, %v7359
      %v7361 = vpop.f32.mrb[0].mxu0
      %v7362 = vpop.f32.mrb[0].mxu0
      %v7363 = vadd.f32 0.0, %v7362
      %v7364 = vpop.f32.mrb[0].mxu0
      %7365 = vmatprep.mubr.bf16.mxu0 0
      %7366 = vmatmul.mubr.bf16.gmra.mrb[0].mxu0 %v7262
      %v7367 = vpop.f32.mrb[0].mxu0
      %v7368 = vadd.f32 0.0, %v7367
      %v7369 = vpop.f32.mrb[0].mxu0
      %v7370 = vpop.f32.mrb[0].mxu0
      %v7371 = vadd.f32 0.0, %v7370
      %v7372 = vpop.f32.mrb[0].mxu0
      %7373 = vmatprep.mubr.bf16.mxu0 0
      %7374 = vmatmul.mubr.bf16.gmra.mrb[0].mxu0 %v7265
      %v7375 = vpop.f32.mrb[0].mxu0
      %v7376 = vadd.f32 0.0, %v7375
      %v7377 = vpop.f32.mrb[0].mxu0
      %v7378 = vpop.f32.mrb[0].mxu0
      %v7379 = vadd.f32 0.0, %v7378
      %v7380 = vpop.f32.mrb[0].mxu0
      %7381 = vmatprep.mubr.bf16.mxu0 0
      %7382 = vmatmul.mubr.bf16.gmra.mrb[0].mxu0 %v7268
      %v7383 = vpop.f32.mrb[0].mxu0
      %v7384 = vadd.f32 0.0, %v7383
      %v7385 = vpop.f32.mrb[0].mxu0
      %v7386 = vpop.f32.mrb[0].mxu0
      %v7387 = vadd.f32 0.0, %v7386
      %v7388 = vpop.f32.mrb[0].mxu0
      %7389 = vmatprep.mubr.bf16.mxu0 0
      %7390 = vmatmul.mubr.bf16.gmra.mrb[0].mxu0 %v7271
      %v7391 = vpop.f32.mrb[0].mxu0
      %v7392 = vadd.f32 0.0, %v7391
      %v7393 = vpop.f32.mrb[0].mxu0
      %v7394 = vpop.f32.mrb[0].mxu0
      %v7395 = vadd.f32 0.0, %v7394
      %v7396 = vpop.f32.mrb[0].mxu0
      %7397 = vmatprep.mubr.bf16.mxu0 0
      %7398 = vmatmul.mubr.bf16.gmra.mrb[0].mxu0 %v7274
      %v7399 = vpop.f32.mrb[0].mxu0
      %v7400 = vadd.f32 0.0, %v7399
      %v7401 = vpop.f32.mrb[0].mxu0
      %v7402 = vpop.f32.mrb[0].mxu0
      %v7403 = vadd.f32 0.0, %v7402
      %v7404 = vpop.f32.mrb[0].mxu0
      %7405 = vmatprep.mubr.bf16.mxu0 0
      %7406 = vmatmul.mubr.bf16.gmra.mrb[0].mxu0 %v7277
      %v7407 = vpop.f32.mrb[0].mxu0
      %v7408 = vadd.f32 0.0, %v7407
      %v7409 = vpop.f32.mrb[0].mxu0
      %v7410 = vpop.f32.mrb[0].mxu0
      %v7411 = vadd.f32 0.0, %v7410
      %v7412 = vpop.f32.mrb[0].mxu0
      %7413 = vmatprep.mubr.bf16.mxu0 0
      %7414 = vmatmul.mubr.bf16.gmra.mrb[0].mxu0 %v7280
      %v7415 = vpop.f32.mrb[0].mxu0
      %v7416 = vadd.f32 0.0, %v7415
      %v7417 = vpop.f32.mrb[0].mxu0
      %v7418 = vpop.f32.mrb[0].mxu0
      %v7419 = vadd.f32 0.0, %v7418
      %v7420 = vpop.f32.mrb[0].mxu0
      %7421 = vmatprep.mubr.bf16.mxu0 0
      %7422 = vmatmul.mubr.bf16.gmra.mrb[0].mxu0 %v7283
      %v7423 = vpop.f32.mrb[0].mxu0
      %v7424 = vadd.f32 0.0, %v7423
      %v7425 = vpop.f32.mrb[0].mxu0
      %v7426 = vpop.f32.mrb[0].mxu0
      %v7427 = vadd.f32 0.0, %v7426
      %v7428 = vpop.f32.mrb[0].mxu0
      %7429 = vdwg.mxu0
      %v7430 = vadd.f32 %v7074, %v7320
      %v7431 = vadd.f32 %v7077, %v7323
      %v7432 = vadd.f32 %v7082, %v7328
      %v7433 = vadd.f32 %v7085, %v7331
      %v7434 = vadd.f32 %v7090, %v7336
      %v7435 = vadd.f32 %v7093, %v7339
      %v7436 = vadd.f32 %v7098, %v7344
      %v7437 = vadd.f32 %v7101, %v7347
      %v7438 = vadd.f32 %v7106, %v7352
      %v7439 = vadd.f32 %v7109, %v7355
      %v7440 = vadd.f32 %v7114, %v7360
      %v7441 = vadd.f32 %v7117, %v7363
      %v7442 = vadd.f32 %v7122, %v7368
      %v7443 = vadd.f32 %v7125, %v7371
      %v7444 = vadd.f32 %v7130, %v7376
      %v7445 = vadd.f32 %v7133, %v7379
      %v7446 = vadd.f32 %v7138, %v7384
      %v7447 = vadd.f32 %v7141, %v7387
      %v7448 = vadd.f32 %v7146, %v7392
      %v7449 = vadd.f32 %v7149, %v7395
      %v7450 = vadd.f32 %v7154, %v7400
      %v7451 = vadd.f32 %v7157, %v7403
      %v7452 = vadd.f32 %v7162, %v7408
      %v7453 = vadd.f32 %v7165, %v7411
      %v7454 = vadd.f32 %v7170, %v7416
      %v7455 = vadd.f32 %v7173, %v7419
      %v7456 = vadd.f32 %v7178, %v7424
      %v7457 = vadd.f32 %v7181, %v7427
      %v7458 = vld [vmem:[#allocation2 + $0x10] sm:$0xff]
      %v7459 = vld [vmem:[#allocation2 + $0x18] sm:$0xff]
      %v7460 = vld [vmem:[#allocation2 + $0x20] sm:$0xff]
      %v7461 = vld [vmem:[#allocation2 + $0x28] sm:$0xff]
      %v7462 = vld [vmem:[#allocation2 + $0x30] sm:$0xff]
      %v7463 = vld [vmem:[#allocation2 + $0x38] sm:$0xff]
      %v7464 = vld [vmem:[#allocation2 + $0x40] sm:$0xff]
      %v7465 = vld [vmem:[#allocation2 + $0x48] sm:$0xff]
      %v7466 = vld [vmem:[#allocation2 + $0x50] sm:$0xff]
      %v7467 = vld [vmem:[#allocation2 + $0x58] sm:$0xff]
      %v7468 = vld [vmem:[#allocation2 + $0x60] sm:$0xff]
      %v7469 = vld [vmem:[#allocation2 + $0x68] sm:$0xff]
      %v7470 = vld [vmem:[#allocation2 + $0x70] sm:$0xff]
      %v7471 = vld [vmem:[#allocation2 + $0x78] sm:$0xff]
      %v7472 = vld [vmem:[#allocation2 + $0x80] sm:$0xff]
      %v7473 = vld [vmem:[#allocation2 + $0x88] sm:$0xff]
      %v7474 = vld [vmem:[#allocation2 + $0x90] sm:$0xff]
      %v7475 = vld [vmem:[#allocation2 + $0x98] sm:$0xff]
      %v7476 = vld [vmem:[#allocation2 + $0xa0] sm:$0xff]
      %v7477 = vld [vmem:[#allocation2 + $0xa8] sm:$0xff]
      %v7478 = vld [vmem:[#allocation2 + $0xb0] sm:$0xff]
      %v7479 = vld [vmem:[#allocation2 + $0xb8] sm:$0xff]
      %v7480 = vld [vmem:[#allocation2 + $0xc0] sm:$0xff]
      %v7481 = vld [vmem:[#allocation2 + $0xc8] sm:$0xff]
      %v7482 = vld [vmem:[#allocation2 + $0xd0] sm:$0xff]
      %v7483 = vld [vmem:[#allocation2 + $0xd8] sm:$0xff]
      %v7484 = vld [vmem:[#allocation2 + $0xe0] sm:$0xff]
      %v7485 = vld [vmem:[#allocation2 + $0xe8] sm:$0xff]
      %v7486 = vpack.c.bf16 %v7459, %v7458
      %v7487 = vpack.c.bf16 %v7461, %v7460
      %v7488 = vpack.c.bf16 %v7463, %v7462
      %v7489 = vpack.c.bf16 %v7465, %v7464
      %v7490 = vpack.c.bf16 %v7467, %v7466
      %v7491 = vpack.c.bf16 %v7469, %v7468
      %v7492 = vpack.c.bf16 %v7471, %v7470
      %v7493 = vpack.c.bf16 %v7473, %v7472
      %v7494 = vpack.c.bf16 %v7475, %v7474
      %v7495 = vpack.c.bf16 %v7477, %v7476
      %v7496 = vpack.c.bf16 %v7479, %v7478
      %v7497 = vpack.c.bf16 %v7481, %v7480
      %v7498 = vpack.c.bf16 %v7483, %v7482
      %v7499 = vpack.c.bf16 %v7485, %v7484
      %s7500 = scalar_lea.vmem %s4, 48
      %v7501 = vld [vmem:[%s7500] sm:$0xf]
      %v7502 = vld [vmem:[%s7500 + $0x4] sm:$0xf]
      %v7503 = vld [vmem:[%s7500 + $0x8] sm:$0xf]
      %v7504 = vld [vmem:[%s7500 + $0xc] sm:$0xf]
      %v7509 = vunpack.c.l.b16 %v7501
      %v7510 = vunpack.c.l.b16 %v7502
      %v7511 = vunpack.c.l.b16 %v7503
      %v7512 = vunpack.c.l.b16 %v7504
      %v7513 = vpack.c.b16 %v7510, %v7509
      %v7514 = vpack.c.b16 %v7512, %v7511
      %v7518 = vsel %vm6480, %v7486, 0
      %v7521 = vsel %vm6480, %v7487, 0
      %v7524 = vsel %vm6480, %v7488, 0
      %v7527 = vsel %vm6480, %v7489, 0
      %v7530 = vsel %vm6480, %v7490, 0
      %v7533 = vsel %vm6480, %v7491, 0
      %v7536 = vsel %vm6480, %v7492, 0
      %v7539 = vsel %vm6480, %v7493, 0
      %v7542 = vsel %vm6480, %v7494, 0
      %v7545 = vsel %vm6480, %v7495, 0
      %v7548 = vsel %vm6480, %v7496, 0
      %v7551 = vsel %vm6480, %v7497, 0
      %v7554 = vsel %vm6480, %v7498, 0
      %v7557 = vsel %vm6480, %v7499, 0
      %7559 = vmatprep.subr.bf16.mxu0 0
      %7560 = vmatpush1.bf16.msra.mxu0 %v7513
      %7561 = vmatprep.subr.bf16.mxu0 0
      %7562 = vmatpush1.bf16.msra.mxu0 %v7514
      %7563 = vmatprep.subr.bf16.mxu0 0
      %7564 = vmatpush1.bf16.msra.mxu0 0
      %7565 = vmatprep.subr.bf16.mxu0 0
      %7566 = vmatpush1.bf16.msra.mxu0 0
      %7567 = vmatprep.subr.bf16.mxu0 0
      %7568 = vmatpush1.bf16.msra.mxu0 0
      %7569 = vmatprep.subr.bf16.mxu0 0
      %7570 = vmatpush1.bf16.msra.mxu0 0
      %7571 = vmatprep.subr.bf16.mxu0 0
      %7572 = vmatpush1.bf16.msra.mxu0 0
      %7573 = vmatprep.subr.bf16.mxu0 0
      %7574 = vmatpush1.bf16.msra.mxu0 0
      %7575 = vmatprep.subr.bf16.mxu0 0
      %7576 = vmatpush1.bf16.msra.mxu0 0
      %7577 = vmatprep.subr.bf16.mxu0 0
      %7578 = vmatpush1.bf16.msra.mxu0 0
      %7579 = vmatprep.subr.bf16.mxu0 0
      %7580 = vmatpush1.bf16.msra.mxu0 0
      %7581 = vmatprep.subr.bf16.mxu0 0
      %7582 = vmatpush1.bf16.msra.mxu0 0
      %7583 = vmatprep.subr.bf16.mxu0 0
      %7584 = vmatpush1.bf16.msra.mxu0 0
      %7585 = vmatprep.subr.bf16.mxu0 0
      %7586 = vmatpush1.bf16.msra.mxu0 0
      %7587 = vmatprep.subr.bf16.mxu0 0
      %7588 = vmatpush1.bf16.msra.mxu0 0
      %7589 = vmatprep.subr.bf16.mxu0 0
      %7590 = vmatpush1.bf16.msra.mxu0 0
      %7591 = vmatprep.mubr.bf16.mxu0 0
      %7592 = vmatmul.mubr.bf16.gmra.mrb[0].mxu0 %v7518
      %v7593 = vpop.f32.mrb[0].mxu0
      %v7594 = vadd.f32 0.0, %v7593
      %v7595 = vpop.f32.mrb[0].mxu0
      %v7596 = vpop.f32.mrb[0].mxu0
      %v7597 = vadd.f32 0.0, %v7596
      %v7598 = vpop.f32.mrb[0].mxu0
      %7599 = vmatprep.mubr.bf16.mxu0 0
      %7600 = vmatmul.mubr.bf16.gmra.mrb[0].mxu0 %v7521
      %v7601 = vpop.f32.mrb[0].mxu0
      %v7602 = vadd.f32 0.0, %v7601
      %v7603 = vpop.f32.mrb[0].mxu0
      %v7604 = vpop.f32.mrb[0].mxu0
      %v7605 = vadd.f32 0.0, %v7604
      %v7606 = vpop.f32.mrb[0].mxu0
      %7607 = vmatprep.mubr.bf16.mxu0 0
      %7608 = vmatmul.mubr.bf16.gmra.mrb[0].mxu0 %v7524
      %v7609 = vpop.f32.mrb[0].mxu0
      %v7610 = vadd.f32 0.0, %v7609
      %v7611 = vpop.f32.mrb[0].mxu0
      %v7612 = vpop.f32.mrb[0].mxu0
      %v7613 = vadd.f32 0.0, %v7612
      %v7614 = vpop.f32.mrb[0].mxu0
      %7615 = vmatprep.mubr.bf16.mxu0 0
      %7616 = vmatmul.mubr.bf16.gmra.mrb[0].mxu0 %v7527
      %v7617 = vpop.f32.mrb[0].mxu0
      %v7618 = vadd.f32 0.0, %v7617
      %v7619 = vpop.f32.mrb[0].mxu0
      %v7620 = vpop.f32.mrb[0].mxu0
      %v7621 = vadd.f32 0.0, %v7620
      %v7622 = vpop.f32.mrb[0].mxu0
      %7623 = vmatprep.mubr.bf16.mxu0 0
      %7624 = vmatmul.mubr.bf16.gmra.mrb[0].mxu0 %v7530
      %v7625 = vpop.f32.mrb[0].mxu0
      %v7626 = vadd.f32 0.0, %v7625
      %v7627 = vpop.f32.mrb[0].mxu0
      %v7628 = vpop.f32.mrb[0].mxu0
      %v7629 = vadd.f32 0.0, %v7628
      %v7630 = vpop.f32.mrb[0].mxu0
      %7631 = vmatprep.mubr.bf16.mxu0 0
      %7632 = vmatmul.mubr.bf16.gmra.mrb[0].mxu0 %v7533
      %v7633 = vpop.f32.mrb[0].mxu0
      %v7634 = vadd.f32 0.0, %v7633
      %v7635 = vpop.f32.mrb[0].mxu0
      %v7636 = vpop.f32.mrb[0].mxu0
      %v7637 = vadd.f32 0.0, %v7636
      %v7638 = vpop.f32.mrb[0].mxu0
      %7639 = vmatprep.mubr.bf16.mxu0 0
      %7640 = vmatmul.mubr.bf16.gmra.mrb[0].mxu0 %v7536
      %v7641 = vpop.f32.mrb[0].mxu0
      %v7642 = vadd.f32 0.0, %v7641
      %v7643 = vpop.f32.mrb[0].mxu0
      %v7644 = vpop.f32.mrb[0].mxu0
      %v7645 = vadd.f32 0.0, %v7644
      %v7646 = vpop.f32.mrb[0].mxu0
      %7647 = vmatprep.mubr.bf16.mxu0 0
      %7648 = vmatmul.mubr.bf16.gmra.mrb[0].mxu0 %v7539
      %v7649 = vpop.f32.mrb[0].mxu0
      %v7650 = vadd.f32 0.0, %v7649
      %v7651 = vpop.f32.mrb[0].mxu0
      %v7652 = vpop.f32.mrb[0].mxu0
      %v7653 = vadd.f32 0.0, %v7652
      %v7654 = vpop.f32.mrb[0].mxu0
      %7655 = vmatprep.mubr.bf16.mxu0 0
      %7656 = vmatmul.mubr.bf16.gmra.mrb[0].mxu0 %v7542
      %v7657 = vpop.f32.mrb[0].mxu0
      %v7658 = vadd.f32 0.0, %v7657
      %v7659 = vpop.f32.mrb[0].mxu0
      %v7660 = vpop.f32.mrb[0].mxu0
      %v7661 = vadd.f32 0.0, %v7660
      %v7662 = vpop.f32.mrb[0].mxu0
      %7663 = vmatprep.mubr.bf16.mxu0 0
      %7664 = vmatmul.mubr.bf16.gmra.mrb[0].mxu0 %v7545
      %v7665 = vpop.f32.mrb[0].mxu0
      %v7666 = vadd.f32 0.0, %v7665
      %v7667 = vpop.f32.mrb[0].mxu0
      %v7668 = vpop.f32.mrb[0].mxu0
      %v7669 = vadd.f32 0.0, %v7668
      %v7670 = vpop.f32.mrb[0].mxu0
      %7671 = vmatprep.mubr.bf16.mxu0 0
      %7672 = vmatmul.mubr.bf16.gmra.mrb[0].mxu0 %v7548
      %v7673 = vpop.f32.mrb[0].mxu0
      %v7674 = vadd.f32 0.0, %v7673
      %v7675 = vpop.f32.mrb[0].mxu0
      %v7676 = vpop.f32.mrb[0].mxu0
      %v7677 = vadd.f32 0.0, %v7676
      %v7678 = vpop.f32.mrb[0].mxu0
      %7679 = vmatprep.mubr.bf16.mxu0 0
      %7680 = vmatmul.mubr.bf16.gmra.mrb[0].mxu0 %v7551
      %v7681 = vpop.f32.mrb[0].mxu0
      %v7682 = vadd.f32 0.0, %v7681
      %v7683 = vpop.f32.mrb[0].mxu0
      %v7684 = vpop.f32.mrb[0].mxu0
      %v7685 = vadd.f32 0.0, %v7684
      %v7686 = vpop.f32.mrb[0].mxu0
      %7687 = vmatprep.mubr.bf16.mxu0 0
      %7688 = vmatmul.mubr.bf16.gmra.mrb[0].mxu0 %v7554
      %v7689 = vpop.f32.mrb[0].mxu0
      %v7690 = vadd.f32 0.0, %v7689
      %v7691 = vpop.f32.mrb[0].mxu0
      %v7692 = vpop.f32.mrb[0].mxu0
      %v7693 = vadd.f32 0.0, %v7692
      %v7694 = vpop.f32.mrb[0].mxu0
      %7695 = vmatprep.mubr.bf16.mxu0 0
      %7696 = vmatmul.mubr.bf16.gmra.mrb[0].mxu0 %v7557
      %v7697 = vpop.f32.mrb[0].mxu0
      %v7698 = vadd.f32 0.0, %v7697
      %v7699 = vpop.f32.mrb[0].mxu0
      %v7700 = vpop.f32.mrb[0].mxu0
      %v7701 = vadd.f32 0.0, %v7700
      %v7702 = vpop.f32.mrb[0].mxu0
      %7703 = vdwg.mxu0
      %v7704 = vadd.f32 %v7430, %v7594
      %v7705 = vadd.f32 %v7431, %v7597
      %v7706 = vadd.f32 %v7432, %v7602
      %v7707 = vadd.f32 %v7433, %v7605
      %v7708 = vadd.f32 %v7434, %v7610
      %v7709 = vadd.f32 %v7435, %v7613
      %v7710 = vadd.f32 %v7436, %v7618
      %v7711 = vadd.f32 %v7437, %v7621
      %v7712 = vadd.f32 %v7438, %v7626
      %v7713 = vadd.f32 %v7439, %v7629
      %v7714 = vadd.f32 %v7440, %v7634
      %v7715 = vadd.f32 %v7441, %v7637
      %v7716 = vadd.f32 %v7442, %v7642
      %v7717 = vadd.f32 %v7443, %v7645
      %v7718 = vadd.f32 %v7444, %v7650
      %v7719 = vadd.f32 %v7445, %v7653
      %v7720 = vadd.f32 %v7446, %v7658
      %v7721 = vadd.f32 %v7447, %v7661
      %v7722 = vadd.f32 %v7448, %v7666
      %v7723 = vadd.f32 %v7449, %v7669
      %v7724 = vadd.f32 %v7450, %v7674
      %v7725 = vadd.f32 %v7451, %v7677
      %v7726 = vadd.f32 %v7452, %v7682
      %v7727 = vadd.f32 %v7453, %v7685
      %v7728 = vadd.f32 %v7454, %v7690
      %v7729 = vadd.f32 %v7455, %v7693
      %v7730 = vadd.f32 %v7456, %v7698
      %v7731 = vadd.f32 %v7457, %v7701
      %v7732 = vld [vmem:[#allocation2 + $0x11] sm:$0xff]
      %v7733 = vld [vmem:[#allocation2 + $0x19] sm:$0xff]
      %v7734 = vld [vmem:[#allocation2 + $0x21] sm:$0xff]
      %v7735 = vld [vmem:[#allocation2 + $0x29] sm:$0xff]
      %v7736 = vld [vmem:[#allocation2 + $0x31] sm:$0xff]
      %v7737 = vld [vmem:[#allocation2 + $0x39] sm:$0xff]
      %v7738 = vld [vmem:[#allocation2 + $0x41] sm:$0xff]
      %v7739 = vld [vmem:[#allocation2 + $0x49] sm:$0xff]
      %v7740 = vld [vmem:[#allocation2 + $0x51] sm:$0xff]
      %v7741 = vld [vmem:[#allocation2 + $0x59] sm:$0xff]
      %v7742 = vld [vmem:[#allocation2 + $0x61] sm:$0xff]
      %v7743 = vld [vmem:[#allocation2 + $0x69] sm:$0xff]
      %v7744 = vld [vmem:[#allocation2 + $0x71] sm:$0xff]
      %v7745 = vld [vmem:[#allocation2 + $0x79] sm:$0xff]
      %v7746 = vld [vmem:[#allocation2 + $0x81] sm:$0xff]
      %v7747 = vld [vmem:[#allocation2 + $0x89] sm:$0xff]
      %v7748 = vld [vmem:[#allocation2 + $0x91] sm:$0xff]
      %v7749 = vld [vmem:[#allocation2 + $0x99] sm:$0xff]
      %v7750 = vld [vmem:[#allocation2 + $0xa1] sm:$0xff]
      %v7751 = vld [vmem:[#allocation2 + $0xa9] sm:$0xff]
      %v7752 = vld [vmem:[#allocation2 + $0xb1] sm:$0xff]
      %v7753 = vld [vmem:[#allocation2 + $0xb9] sm:$0xff]
      %v7754 = vld [vmem:[#allocation2 + $0xc1] sm:$0xff]
      %v7755 = vld [vmem:[#allocation2 + $0xc9] sm:$0xff]
      %v7756 = vld [vmem:[#allocation2 + $0xd1] sm:$0xff]
      %v7757 = vld [vmem:[#allocation2 + $0xd9] sm:$0xff]
      %v7758 = vld [vmem:[#allocation2 + $0xe1] sm:$0xff]
      %v7759 = vld [vmem:[#allocation2 + $0xe9] sm:$0xff]
      %v7760 = vpack.c.bf16 %v7733, %v7732
      %v7761 = vpack.c.bf16 %v7735, %v7734
      %v7762 = vpack.c.bf16 %v7737, %v7736
      %v7763 = vpack.c.bf16 %v7739, %v7738
      %v7764 = vpack.c.bf16 %v7741, %v7740
      %v7765 = vpack.c.bf16 %v7743, %v7742
      %v7766 = vpack.c.bf16 %v7745, %v7744
      %v7767 = vpack.c.bf16 %v7747, %v7746
      %v7768 = vpack.c.bf16 %v7749, %v7748
      %v7769 = vpack.c.bf16 %v7751, %v7750
      %v7770 = vpack.c.bf16 %v7753, %v7752
      %v7771 = vpack.c.bf16 %v7755, %v7754
      %v7772 = vpack.c.bf16 %v7757, %v7756
      %v7773 = vpack.c.bf16 %v7759, %v7758
      %s7774 = scalar_lea.vmem %s4, 64
      %v7775 = vld [vmem:[%s7774] sm:$0xf]
      %v7776 = vld [vmem:[%s7774 + $0x4] sm:$0xf]
      %v7777 = vld [vmem:[%s7774 + $0x8] sm:$0xf]
      %v7778 = vld [vmem:[%s7774 + $0xc] sm:$0xf]
      %v7783 = vunpack.c.l.b16 %v7775
      %v7784 = vunpack.c.l.b16 %v7776
      %v7785 = vunpack.c.l.b16 %v7777
      %v7786 = vunpack.c.l.b16 %v7778
      %v7787 = vpack.c.b16 %v7784, %v7783
      %v7788 = vpack.c.b16 %v7786, %v7785
      %v7792 = vsel %vm6480, %v7760, 0
      %v7795 = vsel %vm6480, %v7761, 0
      %v7798 = vsel %vm6480, %v7762, 0
      %v7801 = vsel %vm6480, %v7763, 0
      %v7804 = vsel %vm6480, %v7764, 0
      %v7807 = vsel %vm6480, %v7765, 0
      %v7810 = vsel %vm6480, %v7766, 0
      %v7813 = vsel %vm6480, %v7767, 0
      %v7816 = vsel %vm6480, %v7768, 0
      %v7819 = vsel %vm6480, %v7769, 0
      %v7822 = vsel %vm6480, %v7770, 0
      %v7825 = vsel %vm6480, %v7771, 0
      %v7828 = vsel %vm6480, %v7772, 0
      %v7831 = vsel %vm6480, %v7773, 0
      %7833 = vmatprep.subr.bf16.mxu0 0
      %7834 = vmatpush1.bf16.msra.mxu0 %v7787
      %7835 = vmatprep.subr.bf16.mxu0 0
      %7836 = vmatpush1.bf16.msra.mxu0 %v7788
      %7837 = vmatprep.subr.bf16.mxu0 0
      %7838 = vmatpush1.bf16.msra.mxu0 0
      %7839 = vmatprep.subr.bf16.mxu0 0
      %7840 = vmatpush1.bf16.msra.mxu0 0
      %7841 = vmatprep.subr.bf16.mxu0 0
      %7842 = vmatpush1.bf16.msra.mxu0 0
      %7843 = vmatprep.subr.bf16.mxu0 0
      %7844 = vmatpush1.bf16.msra.mxu0 0
      %7845 = vmatprep.subr.bf16.mxu0 0
      %7846 = vmatpush1.bf16.msra.mxu0 0
      %7847 = vmatprep.subr.bf16.mxu0 0
      %7848 = vmatpush1.bf16.msra.mxu0 0
      %7849 = vmatprep.subr.bf16.mxu0 0
      %7850 = vmatpush1.bf16.msra.mxu0 0
      %7851 = vmatprep.subr.bf16.mxu0 0
      %7852 = vmatpush1.bf16.msra.mxu0 0
      %7853 = vmatprep.subr.bf16.mxu0 0
      %7854 = vmatpush1.bf16.msra.mxu0 0
      %7855 = vmatprep.subr.bf16.mxu0 0
      %7856 = vmatpush1.bf16.msra.mxu0 0
      %7857 = vmatprep.subr.bf16.mxu0 0
      %7858 = vmatpush1.bf16.msra.mxu0 0
      %7859 = vmatprep.subr.bf16.mxu0 0
      %7860 = vmatpush1.bf16.msra.mxu0 0
      %7861 = vmatprep.subr.bf16.mxu0 0
      %7862 = vmatpush1.bf16.msra.mxu0 0
      %7863 = vmatprep.subr.bf16.mxu0 0
      %7864 = vmatpush1.bf16.msra.mxu0 0
      %7865 = vmatprep.mubr.bf16.mxu0 0
      %7866 = vmatmul.mubr.bf16.gmra.mrb[0].mxu0 %v7792
      %v7867 = vpop.f32.mrb[0].mxu0
      %v7868 = vadd.f32 0.0, %v7867
      %v7869 = vpop.f32.mrb[0].mxu0
      %v7870 = vpop.f32.mrb[0].mxu0
      %v7871 = vadd.f32 0.0, %v7870
      %v7872 = vpop.f32.mrb[0].mxu0
      %7873 = vmatprep.mubr.bf16.mxu0 0
      %7874 = vmatmul.mubr.bf16.gmra.mrb[0].mxu0 %v7795
      %v7875 = vpop.f32.mrb[0].mxu0
      %v7876 = vadd.f32 0.0, %v7875
      %v7877 = vpop.f32.mrb[0].mxu0
      %v7878 = vpop.f32.mrb[0].mxu0
      %v7879 = vadd.f32 0.0, %v7878
      %v7880 = vpop.f32.mrb[0].mxu0
      %7881 = vmatprep.mubr.bf16.mxu0 0
      %7882 = vmatmul.mubr.bf16.gmra.mrb[0].mxu0 %v7798
      %v7883 = vpop.f32.mrb[0].mxu0
      %v7884 = vadd.f32 0.0, %v7883
      %v7885 = vpop.f32.mrb[0].mxu0
      %v7886 = vpop.f32.mrb[0].mxu0
      %v7887 = vadd.f32 0.0, %v7886
      %v7888 = vpop.f32.mrb[0].mxu0
      %7889 = vmatprep.mubr.bf16.mxu0 0
      %7890 = vmatmul.mubr.bf16.gmra.mrb[0].mxu0 %v7801
      %v7891 = vpop.f32.mrb[0].mxu0
      %v7892 = vadd.f32 0.0, %v7891
      %v7893 = vpop.f32.mrb[0].mxu0
      %v7894 = vpop.f32.mrb[0].mxu0
      %v7895 = vadd.f32 0.0, %v7894
      %v7896 = vpop.f32.mrb[0].mxu0
      %7897 = vmatprep.mubr.bf16.mxu0 0
      %7898 = vmatmul.mubr.bf16.gmra.mrb[0].mxu0 %v7804
      %v7899 = vpop.f32.mrb[0].mxu0
      %v7900 = vadd.f32 0.0, %v7899
      %v7901 = vpop.f32.mrb[0].mxu0
      %v7902 = vpop.f32.mrb[0].mxu0
      %v7903 = vadd.f32 0.0, %v7902
      %v7904 = vpop.f32.mrb[0].mxu0
      %7905 = vmatprep.mubr.bf16.mxu0 0
      %7906 = vmatmul.mubr.bf16.gmra.mrb[0].mxu0 %v7807
      %v7907 = vpop.f32.mrb[0].mxu0
      %v7908 = vadd.f32 0.0, %v7907
      %v7909 = vpop.f32.mrb[0].mxu0
      %v7910 = vpop.f32.mrb[0].mxu0
      %v7911 = vadd.f32 0.0, %v7910
      %v7912 = vpop.f32.mrb[0].mxu0
      %7913 = vmatprep.mubr.bf16.mxu0 0
      %7914 = vmatmul.mubr.bf16.gmra.mrb[0].mxu0 %v7810
      %v7915 = vpop.f32.mrb[0].mxu0
      %v7916 = vadd.f32 0.0, %v7915
      %v7917 = vpop.f32.mrb[0].mxu0
      %v7918 = vpop.f32.mrb[0].mxu0
      %v7919 = vadd.f32 0.0, %v7918
      %v7920 = vpop.f32.mrb[0].mxu0
      %7921 = vmatprep.mubr.bf16.mxu0 0
      %7922 = vmatmul.mubr.bf16.gmra.mrb[0].mxu0 %v7813
      %v7923 = vpop.f32.mrb[0].mxu0
      %v7924 = vadd.f32 0.0, %v7923
      %v7925 = vpop.f32.mrb[0].mxu0
      %v7926 = vpop.f32.mrb[0].mxu0
      %v7927 = vadd.f32 0.0, %v7926
      %v7928 = vpop.f32.mrb[0].mxu0
      %7929 = vmatprep.mubr.bf16.mxu0 0
      %7930 = vmatmul.mubr.bf16.gmra.mrb[0].mxu0 %v7816
      %v7931 = vpop.f32.mrb[0].mxu0
      %v7932 = vadd.f32 0.0, %v7931
      %v7933 = vpop.f32.mrb[0].mxu0
      %v7934 = vpop.f32.mrb[0].mxu0
      %v7935 = vadd.f32 0.0, %v7934
      %v7936 = vpop.f32.mrb[0].mxu0
      %7937 = vmatprep.mubr.bf16.mxu0 0
      %7938 = vmatmul.mubr.bf16.gmra.mrb[0].mxu0 %v7819
      %v7939 = vpop.f32.mrb[0].mxu0
      %v7940 = vadd.f32 0.0, %v7939
      %v7941 = vpop.f32.mrb[0].mxu0
      %v7942 = vpop.f32.mrb[0].mxu0
      %v7943 = vadd.f32 0.0, %v7942
      %v7944 = vpop.f32.mrb[0].mxu0
      %7945 = vmatprep.mubr.bf16.mxu0 0
      %7946 = vmatmul.mubr.bf16.gmra.mrb[0].mxu0 %v7822
      %v7947 = vpop.f32.mrb[0].mxu0
      %v7948 = vadd.f32 0.0, %v7947
      %v7949 = vpop.f32.mrb[0].mxu0
      %v7950 = vpop.f32.mrb[0].mxu0
      %v7951 = vadd.f32 0.0, %v7950
      %v7952 = vpop.f32.mrb[0].mxu0
      %7953 = vmatprep.mubr.bf16.mxu0 0
      %7954 = vmatmul.mubr.bf16.gmra.mrb[0].mxu0 %v7825
      %v7955 = vpop.f32.mrb[0].mxu0
      %v7956 = vadd.f32 0.0, %v7955
      %v7957 = vpop.f32.mrb[0].mxu0
      %v7958 = vpop.f32.mrb[0].mxu0
      %v7959 = vadd.f32 0.0, %v7958
      %v7960 = vpop.f32.mrb[0].mxu0
      %7961 = vmatprep.mubr.bf16.mxu0 0
      %7962 = vmatmul.mubr.bf16.gmra.mrb[0].mxu0 %v7828
      %v7963 = vpop.f32.mrb[0].mxu0
      %v7964 = vadd.f32 0.0, %v7963
      %v7965 = vpop.f32.mrb[0].mxu0
      %v7966 = vpop.f32.mrb[0].mxu0
      %v7967 = vadd.f32 0.0, %v7966
      %v7968 = vpop.f32.mrb[0].mxu0
      %7969 = vmatprep.mubr.bf16.mxu0 0
      %7970 = vmatmul.mubr.bf16.gmra.mrb[0].mxu0 %v7831
      %v7971 = vpop.f32.mrb[0].mxu0
      %v7972 = vadd.f32 0.0, %v7971
      %v7973 = vpop.f32.mrb[0].mxu0
      %v7974 = vpop.f32.mrb[0].mxu0
      %v7975 = vadd.f32 0.0, %v7974
      %v7976 = vpop.f32.mrb[0].mxu0
      %7977 = vdwg.mxu0
      %v7978 = vadd.f32 %v7704, %v7868
      %v7979 = vadd.f32 %v7705, %v7871
      %v7980 = vadd.f32 %v7706, %v7876
      %v7981 = vadd.f32 %v7707, %v7879
      %v7982 = vadd.f32 %v7708, %v7884
      %v7983 = vadd.f32 %v7709, %v7887
      %v7984 = vadd.f32 %v7710, %v7892
      %v7985 = vadd.f32 %v7711, %v7895
      %v7986 = vadd.f32 %v7712, %v7900
      %v7987 = vadd.f32 %v7713, %v7903
      %v7988 = vadd.f32 %v7714, %v7908
      %v7989 = vadd.f32 %v7715, %v7911
      %v7990 = vadd.f32 %v7716, %v7916
      %v7991 = vadd.f32 %v7717, %v7919
      %v7992 = vadd.f32 %v7718, %v7924
      %v7993 = vadd.f32 %v7719, %v7927
      %v7994 = vadd.f32 %v7720, %v7932
      %v7995 = vadd.f32 %v7721, %v7935
      %v7996 = vadd.f32 %v7722, %v7940
      %v7997 = vadd.f32 %v7723, %v7943
      %v7998 = vadd.f32 %v7724, %v7948
      %v7999 = vadd.f32 %v7725, %v7951
      %v8000 = vadd.f32 %v7726, %v7956
      %v8001 = vadd.f32 %v7727, %v7959
      %v8002 = vadd.f32 %v7728, %v7964
      %v8003 = vadd.f32 %v7729, %v7967
      %v8004 = vadd.f32 %v7730, %v7972
      %v8005 = vadd.f32 %v7731, %v7975
      %v8006 = vld [vmem:[#allocation2 + $0x12] sm:$0xff]
      %v8007 = vld [vmem:[#allocation2 + $0x1a] sm:$0xff]
      %v8008 = vld [vmem:[#allocation2 + $0x22] sm:$0xff]
      %v8009 = vld [vmem:[#allocation2 + $0x2a] sm:$0xff]
      %v8010 = vld [vmem:[#allocation2 + $0x32] sm:$0xff]
      %v8011 = vld [vmem:[#allocation2 + $0x3a] sm:$0xff]
      %v8012 = vld [vmem:[#allocation2 + $0x42] sm:$0xff]
      %v8013 = vld [vmem:[#allocation2 + $0x4a] sm:$0xff]
      %v8014 = vld [vmem:[#allocation2 + $0x52] sm:$0xff]
      %v8015 = vld [vmem:[#allocation2 + $0x5a] sm:$0xff]
      %v8016 = vld [vmem:[#allocation2 + $0x62] sm:$0xff]
      %v8017 = vld [vmem:[#allocation2 + $0x6a] sm:$0xff]
      %v8018 = vld [vmem:[#allocation2 + $0x72] sm:$0xff]
      %v8019 = vld [vmem:[#allocation2 + $0x7a] sm:$0xff]
      %v8020 = vld [vmem:[#allocation2 + $0x82] sm:$0xff]
      %v8021 = vld [vmem:[#allocation2 + $0x8a] sm:$0xff]
      %v8022 = vld [vmem:[#allocation2 + $0x92] sm:$0xff]
      %v8023 = vld [vmem:[#allocation2 + $0x9a] sm:$0xff]
      %v8024 = vld [vmem:[#allocation2 + $0xa2] sm:$0xff]
      %v8025 = vld [vmem:[#allocation2 + $0xaa] sm:$0xff]
      %v8026 = vld [vmem:[#allocation2 + $0xb2] sm:$0xff]
      %v8027 = vld [vmem:[#allocation2 + $0xba] sm:$0xff]
      %v8028 = vld [vmem:[#allocation2 + $0xc2] sm:$0xff]
      %v8029 = vld [vmem:[#allocation2 + $0xca] sm:$0xff]
      %v8030 = vld [vmem:[#allocation2 + $0xd2] sm:$0xff]
      %v8031 = vld [vmem:[#allocation2 + $0xda] sm:$0xff]
      %v8032 = vld [vmem:[#allocation2 + $0xe2] sm:$0xff]
      %v8033 = vld [vmem:[#allocation2 + $0xea] sm:$0xff]
      %v8034 = vpack.c.bf16 %v8007, %v8006
      %v8035 = vpack.c.bf16 %v8009, %v8008
      %v8036 = vpack.c.bf16 %v8011, %v8010
      %v8037 = vpack.c.bf16 %v8013, %v8012
      %v8038 = vpack.c.bf16 %v8015, %v8014
      %v8039 = vpack.c.bf16 %v8017, %v8016
      %v8040 = vpack.c.bf16 %v8019, %v8018
      %v8041 = vpack.c.bf16 %v8021, %v8020
      %v8042 = vpack.c.bf16 %v8023, %v8022
      %v8043 = vpack.c.bf16 %v8025, %v8024
      %v8044 = vpack.c.bf16 %v8027, %v8026
      %v8045 = vpack.c.bf16 %v8029, %v8028
      %v8046 = vpack.c.bf16 %v8031, %v8030
      %v8047 = vpack.c.bf16 %v8033, %v8032
      %s8048 = scalar_lea.vmem %s4, 80
      %v8049 = vld [vmem:[%s8048] sm:$0xf]
      %v8050 = vld [vmem:[%s8048 + $0x4] sm:$0xf]
      %v8051 = vld [vmem:[%s8048 + $0x8] sm:$0xf]
      %v8052 = vld [vmem:[%s8048 + $0xc] sm:$0xf]
      %v8057 = vunpack.c.l.b16 %v8049
      %v8058 = vunpack.c.l.b16 %v8050
      %v8059 = vunpack.c.l.b16 %v8051
      %v8060 = vunpack.c.l.b16 %v8052
      %v8061 = vpack.c.b16 %v8058, %v8057
      %v8062 = vpack.c.b16 %v8060, %v8059
      %v8066 = vsel %vm6480, %v8034, 0
      %v8069 = vsel %vm6480, %v8035, 0
      %v8072 = vsel %vm6480, %v8036, 0
      %v8075 = vsel %vm6480, %v8037, 0
      %v8078 = vsel %vm6480, %v8038, 0
      %v8081 = vsel %vm6480, %v8039, 0
      %v8084 = vsel %vm6480, %v8040, 0
      %v8087 = vsel %vm6480, %v8041, 0
      %v8090 = vsel %vm6480, %v8042, 0
      %v8093 = vsel %vm6480, %v8043, 0
      %v8096 = vsel %vm6480, %v8044, 0
      %v8099 = vsel %vm6480, %v8045, 0
      %v8102 = vsel %vm6480, %v8046, 0
      %v8105 = vsel %vm6480, %v8047, 0
      %8107 = vmatprep.subr.bf16.mxu0 0
      %8108 = vmatpush1.bf16.msra.mxu0 %v8061
      %8109 = vmatprep.subr.bf16.mxu0 0
      %8110 = vmatpush1.bf16.msra.mxu0 %v8062
      %8111 = vmatprep.subr.bf16.mxu0 0
      %8112 = vmatpush1.bf16.msra.mxu0 0
      %8113 = vmatprep.subr.bf16.mxu0 0
      %8114 = vmatpush1.bf16.msra.mxu0 0
      %8115 = vmatprep.subr.bf16.mxu0 0
      %8116 = vmatpush1.bf16.msra.mxu0 0
      %8117 = vmatprep.subr.bf16.mxu0 0
      %8118 = vmatpush1.bf16.msra.mxu0 0
      %8119 = vmatprep.subr.bf16.mxu0 0
      %8120 = vmatpush1.bf16.msra.mxu0 0
      %8121 = vmatprep.subr.bf16.mxu0 0
      %8122 = vmatpush1.bf16.msra.mxu0 0
      %8123 = vmatprep.subr.bf16.mxu0 0
      %8124 = vmatpush1.bf16.msra.mxu0 0
      %8125 = vmatprep.subr.bf16.mxu0 0
      %8126 = vmatpush1.bf16.msra.mxu0 0
      %8127 = vmatprep.subr.bf16.mxu0 0
      %8128 = vmatpush1.bf16.msra.mxu0 0
      %8129 = vmatprep.subr.bf16.mxu0 0
      %8130 = vmatpush1.bf16.msra.mxu0 0
      %8131 = vmatprep.subr.bf16.mxu0 0
      %8132 = vmatpush1.bf16.msra.mxu0 0
      %8133 = vmatprep.subr.bf16.mxu0 0
      %8134 = vmatpush1.bf16.msra.mxu0 0
      %8135 = vmatprep.subr.bf16.mxu0 0
      %8136 = vmatpush1.bf16.msra.mxu0 0
      %8137 = vmatprep.subr.bf16.mxu0 0
      %8138 = vmatpush1.bf16.msra.mxu0 0
      %8139 = vmatprep.mubr.bf16.mxu0 0
      %8140 = vmatmul.mubr.bf16.gmra.mrb[0].mxu0 %v8066
      %v8141 = vpop.f32.mrb[0].mxu0
      %v8142 = vadd.f32 0.0, %v8141
      %v8143 = vpop.f32.mrb[0].mxu0
      %v8144 = vpop.f32.mrb[0].mxu0
      %v8145 = vadd.f32 0.0, %v8144
      %v8146 = vpop.f32.mrb[0].mxu0
      %8147 = vmatprep.mubr.bf16.mxu0 0
      %8148 = vmatmul.mubr.bf16.gmra.mrb[0].mxu0 %v8069
      %v8149 = vpop.f32.mrb[0].mxu0
      %v8150 = vadd.f32 0.0, %v8149
      %v8151 = vpop.f32.mrb[0].mxu0
      %v8152 = vpop.f32.mrb[0].mxu0
      %v8153 = vadd.f32 0.0, %v8152
      %v8154 = vpop.f32.mrb[0].mxu0
      %8155 = vmatprep.mubr.bf16.mxu0 0
      %8156 = vmatmul.mubr.bf16.gmra.mrb[0].mxu0 %v8072
      %v8157 = vpop.f32.mrb[0].mxu0
      %v8158 = vadd.f32 0.0, %v8157
      %v8159 = vpop.f32.mrb[0].mxu0
      %v8160 = vpop.f32.mrb[0].mxu0
      %v8161 = vadd.f32 0.0, %v8160
      %v8162 = vpop.f32.mrb[0].mxu0
      %8163 = vmatprep.mubr.bf16.mxu0 0
      %8164 = vmatmul.mubr.bf16.gmra.mrb[0].mxu0 %v8075
      %v8165 = vpop.f32.mrb[0].mxu0
      %v8166 = vadd.f32 0.0, %v8165
      %v8167 = vpop.f32.mrb[0].mxu0
      %v8168 = vpop.f32.mrb[0].mxu0
      %v8169 = vadd.f32 0.0, %v8168
      %v8170 = vpop.f32.mrb[0].mxu0
      %8171 = vmatprep.mubr.bf16.mxu0 0
      %8172 = vmatmul.mubr.bf16.gmra.mrb[0].mxu0 %v8078
      %v8173 = vpop.f32.mrb[0].mxu0
      %v8174 = vadd.f32 0.0, %v8173
      %v8175 = vpop.f32.mrb[0].mxu0
      %v8176 = vpop.f32.mrb[0].mxu0
      %v8177 = vadd.f32 0.0, %v8176
      %v8178 = vpop.f32.mrb[0].mxu0
      %8179 = vmatprep.mubr.bf16.mxu0 0
      %8180 = vmatmul.mubr.bf16.gmra.mrb[0].mxu0 %v8081
      %v8181 = vpop.f32.mrb[0].mxu0
      %v8182 = vadd.f32 0.0, %v8181
      %v8183 = vpop.f32.mrb[0].mxu0
      %v8184 = vpop.f32.mrb[0].mxu0
      %v8185 = vadd.f32 0.0, %v8184
      %v8186 = vpop.f32.mrb[0].mxu0
      %8187 = vmatprep.mubr.bf16.mxu0 0
      %8188 = vmatmul.mubr.bf16.gmra.mrb[0].mxu0 %v8084
      %v8189 = vpop.f32.mrb[0].mxu0
      %v8190 = vadd.f32 0.0, %v8189
      %v8191 = vpop.f32.mrb[0].mxu0
      %v8192 = vpop.f32.mrb[0].mxu0
      %v8193 = vadd.f32 0.0, %v8192
      %v8194 = vpop.f32.mrb[0].mxu0
      %8195 = vmatprep.mubr.bf16.mxu0 0
      %8196 = vmatmul.mubr.bf16.gmra.mrb[0].mxu0 %v8087
      %v8197 = vpop.f32.mrb[0].mxu0
      %v8198 = vadd.f32 0.0, %v8197
      %v8199 = vpop.f32.mrb[0].mxu0
      %v8200 = vpop.f32.mrb[0].mxu0
      %v8201 = vadd.f32 0.0, %v8200
      %v8202 = vpop.f32.mrb[0].mxu0
      %8203 = vmatprep.mubr.bf16.mxu0 0
      %8204 = vmatmul.mubr.bf16.gmra.mrb[0].mxu0 %v8090
      %v8205 = vpop.f32.mrb[0].mxu0
      %v8206 = vadd.f32 0.0, %v8205
      %v8207 = vpop.f32.mrb[0].mxu0
      %v8208 = vpop.f32.mrb[0].mxu0
      %v8209 = vadd.f32 0.0, %v8208
      %v8210 = vpop.f32.mrb[0].mxu0
      %8211 = vmatprep.mubr.bf16.mxu0 0
      %8212 = vmatmul.mubr.bf16.gmra.mrb[0].mxu0 %v8093
      %v8213 = vpop.f32.mrb[0].mxu0
      %v8214 = vadd.f32 0.0, %v8213
      %v8215 = vpop.f32.mrb[0].mxu0
      %v8216 = vpop.f32.mrb[0].mxu0
      %v8217 = vadd.f32 0.0, %v8216
      %v8218 = vpop.f32.mrb[0].mxu0
      %8219 = vmatprep.mubr.bf16.mxu0 0
      %8220 = vmatmul.mubr.bf16.gmra.mrb[0].mxu0 %v8096
      %v8221 = vpop.f32.mrb[0].mxu0
      %v8222 = vadd.f32 0.0, %v8221
      %v8223 = vpop.f32.mrb[0].mxu0
      %v8224 = vpop.f32.mrb[0].mxu0
      %v8225 = vadd.f32 0.0, %v8224
      %v8226 = vpop.f32.mrb[0].mxu0
      %8227 = vmatprep.mubr.bf16.mxu0 0
      %8228 = vmatmul.mubr.bf16.gmra.mrb[0].mxu0 %v8099
      %v8229 = vpop.f32.mrb[0].mxu0
      %v8230 = vadd.f32 0.0, %v8229
      %v8231 = vpop.f32.mrb[0].mxu0
      %v8232 = vpop.f32.mrb[0].mxu0
      %v8233 = vadd.f32 0.0, %v8232
      %v8234 = vpop.f32.mrb[0].mxu0
      %8235 = vmatprep.mubr.bf16.mxu0 0
      %8236 = vmatmul.mubr.bf16.gmra.mrb[0].mxu0 %v8102
      %v8237 = vpop.f32.mrb[0].mxu0
      %v8238 = vadd.f32 0.0, %v8237
      %v8239 = vpop.f32.mrb[0].mxu0
      %v8240 = vpop.f32.mrb[0].mxu0
      %v8241 = vadd.f32 0.0, %v8240
      %v8242 = vpop.f32.mrb[0].mxu0
      %8243 = vmatprep.mubr.bf16.mxu0 0
      %8244 = vmatmul.mubr.bf16.gmra.mrb[0].mxu0 %v8105
      %v8245 = vpop.f32.mrb[0].mxu0
      %v8246 = vadd.f32 0.0, %v8245
      %v8247 = vpop.f32.mrb[0].mxu0
      %v8248 = vpop.f32.mrb[0].mxu0
      %v8249 = vadd.f32 0.0, %v8248
      %v8250 = vpop.f32.mrb[0].mxu0
      %8251 = vdwg.mxu0
      %v8252 = vadd.f32 %v7978, %v8142
      %v8253 = vadd.f32 %v7979, %v8145
      %v8254 = vadd.f32 %v7980, %v8150
      %v8255 = vadd.f32 %v7981, %v8153
      %v8256 = vadd.f32 %v7982, %v8158
      %v8257 = vadd.f32 %v7983, %v8161
      %v8258 = vadd.f32 %v7984, %v8166
      %v8259 = vadd.f32 %v7985, %v8169
      %v8260 = vadd.f32 %v7986, %v8174
      %v8261 = vadd.f32 %v7987, %v8177
      %v8262 = vadd.f32 %v7988, %v8182
      %v8263 = vadd.f32 %v7989, %v8185
      %v8264 = vadd.f32 %v7990, %v8190
      %v8265 = vadd.f32 %v7991, %v8193
      %v8266 = vadd.f32 %v7992, %v8198
      %v8267 = vadd.f32 %v7993, %v8201
      %v8268 = vadd.f32 %v7994, %v8206
      %v8269 = vadd.f32 %v7995, %v8209
      %v8270 = vadd.f32 %v7996, %v8214
      %v8271 = vadd.f32 %v7997, %v8217
      %v8272 = vadd.f32 %v7998, %v8222
      %v8273 = vadd.f32 %v7999, %v8225
      %v8274 = vadd.f32 %v8000, %v8230
      %v8275 = vadd.f32 %v8001, %v8233
      %v8276 = vadd.f32 %v8002, %v8238
      %v8277 = vadd.f32 %v8003, %v8241
      %v8278 = vadd.f32 %v8004, %v8246
      %v8279 = vadd.f32 %v8005, %v8249
      %v8280 = vld [vmem:[#allocation2 + $0x20] sm:$0xff]
      %v8281 = vld [vmem:[#allocation2 + $0x28] sm:$0xff]
      %v8282 = vld [vmem:[#allocation2 + $0x30] sm:$0xff]
      %v8283 = vld [vmem:[#allocation2 + $0x38] sm:$0xff]
      %v8284 = vld [vmem:[#allocation2 + $0x40] sm:$0xff]
      %v8285 = vld [vmem:[#allocation2 + $0x48] sm:$0xff]
      %v8286 = vld [vmem:[#allocation2 + $0x50] sm:$0xff]
      %v8287 = vld [vmem:[#allocation2 + $0x58] sm:$0xff]
      %v8288 = vld [vmem:[#allocation2 + $0x60] sm:$0xff]
      %v8289 = vld [vmem:[#allocation2 + $0x68] sm:$0xff]
      %v8290 = vld [vmem:[#allocation2 + $0x70] sm:$0xff]
      %v8291 = vld [vmem:[#allocation2 + $0x78] sm:$0xff]
      %v8292 = vld [vmem:[#allocation2 + $0x80] sm:$0xff]
      %v8293 = vld [vmem:[#allocation2 + $0x88] sm:$0xff]
      %v8294 = vld [vmem:[#allocation2 + $0x90] sm:$0xff]
      %v8295 = vld [vmem:[#allocation2 + $0x98] sm:$0xff]
      %v8296 = vld [vmem:[#allocation2 + $0xa0] sm:$0xff]
      %v8297 = vld [vmem:[#allocation2 + $0xa8] sm:$0xff]
      %v8298 = vld [vmem:[#allocation2 + $0xb0] sm:$0xff]
      %v8299 = vld [vmem:[#allocation2 + $0xb8] sm:$0xff]
      %v8300 = vld [vmem:[#allocation2 + $0xc0] sm:$0xff]
      %v8301 = vld [vmem:[#allocation2 + $0xc8] sm:$0xff]
      %v8302 = vld [vmem:[#allocation2 + $0xd0] sm:$0xff]
      %v8303 = vld [vmem:[#allocation2 + $0xd8] sm:$0xff]
      %v8304 = vld [vmem:[#allocation2 + $0xe0] sm:$0xff]
      %v8305 = vld [vmem:[#allocation2 + $0xe8] sm:$0xff]
      %v8306 = vld [vmem:[#allocation2 + $0xf0] sm:$0xff]
      %v8307 = vld [vmem:[#allocation2 + $0xf8] sm:$0xff]
      %v8308 = vpack.c.bf16 %v8281, %v8280
      %v8309 = vpack.c.bf16 %v8283, %v8282
      %v8310 = vpack.c.bf16 %v8285, %v8284
      %v8311 = vpack.c.bf16 %v8287, %v8286
      %v8312 = vpack.c.bf16 %v8289, %v8288
      %v8313 = vpack.c.bf16 %v8291, %v8290
      %v8314 = vpack.c.bf16 %v8293, %v8292
      %v8315 = vpack.c.bf16 %v8295, %v8294
      %v8316 = vpack.c.bf16 %v8297, %v8296
      %v8317 = vpack.c.bf16 %v8299, %v8298
      %v8318 = vpack.c.bf16 %v8301, %v8300
      %v8319 = vpack.c.bf16 %v8303, %v8302
      %v8320 = vpack.c.bf16 %v8305, %v8304
      %v8321 = vpack.c.bf16 %v8307, %v8306
      %s8322 = scalar_lea.vmem %s4, 96
      %v8323 = vld [vmem:[%s8322] sm:$0xf]
      %v8324 = vld [vmem:[%s8322 + $0x4] sm:$0xf]
      %v8325 = vld [vmem:[%s8322 + $0x8] sm:$0xf]
      %v8326 = vld [vmem:[%s8322 + $0xc] sm:$0xf]
      %v8331 = vunpack.c.l.b16 %v8323
      %v8332 = vunpack.c.l.b16 %v8324
      %v8333 = vunpack.c.l.b16 %v8325
      %v8334 = vunpack.c.l.b16 %v8326
      %v8335 = vpack.c.b16 %v8332, %v8331
      %v8336 = vpack.c.b16 %v8334, %v8333
      %v8340 = vsel %vm6480, %v8308, 0
      %v8343 = vsel %vm6480, %v8309, 0
      %v8346 = vsel %vm6480, %v8310, 0
      %v8349 = vsel %vm6480, %v8311, 0
      %v8352 = vsel %vm6480, %v8312, 0
      %v8355 = vsel %vm6480, %v8313, 0
      %v8358 = vsel %vm6480, %v8314, 0
      %v8361 = vsel %vm6480, %v8315, 0
      %v8364 = vsel %vm6480, %v8316, 0
      %v8367 = vsel %vm6480, %v8317, 0
      %v8370 = vsel %vm6480, %v8318, 0
      %v8373 = vsel %vm6480, %v8319, 0
      %v8376 = vsel %vm6480, %v8320, 0
      %v8379 = vsel %vm6480, %v8321, 0
      %8381 = vmatprep.subr.bf16.mxu0 0
      %8382 = vmatpush1.bf16.msra.mxu0 %v8335
      %8383 = vmatprep.subr.bf16.mxu0 0
      %8384 = vmatpush1.bf16.msra.mxu0 %v8336
      %8385 = vmatprep.subr.bf16.mxu0 0
      %8386 = vmatpush1.bf16.msra.mxu0 0
      %8387 = vmatprep.subr.bf16.mxu0 0
      %8388 = vmatpush1.bf16.msra.mxu0 0
      %8389 = vmatprep.subr.bf16.mxu0 0
      %8390 = vmatpush1.bf16.msra.mxu0 0
      %8391 = vmatprep.subr.bf16.mxu0 0
      %8392 = vmatpush1.bf16.msra.mxu0 0
      %8393 = vmatprep.subr.bf16.mxu0 0
      %8394 = vmatpush1.bf16.msra.mxu0 0
      %8395 = vmatprep.subr.bf16.mxu0 0
      %8396 = vmatpush1.bf16.msra.mxu0 0
      %8397 = vmatprep.subr.bf16.mxu0 0
      %8398 = vmatpush1.bf16.msra.mxu0 0
      %8399 = vmatprep.subr.bf16.mxu0 0
      %8400 = vmatpush1.bf16.msra.mxu0 0
      %8401 = vmatprep.subr.bf16.mxu0 0
      %8402 = vmatpush1.bf16.msra.mxu0 0
      %8403 = vmatprep.subr.bf16.mxu0 0
      %8404 = vmatpush1.bf16.msra.mxu0 0
      %8405 = vmatprep.subr.bf16.mxu0 0
      %8406 = vmatpush1.bf16.msra.mxu0 0
      %8407 = vmatprep.subr.bf16.mxu0 0
      %8408 = vmatpush1.bf16.msra.mxu0 0
      %8409 = vmatprep.subr.bf16.mxu0 0
      %8410 = vmatpush1.bf16.msra.mxu0 0
      %8411 = vmatprep.subr.bf16.mxu0 0
      %8412 = vmatpush1.bf16.msra.mxu0 0
      %8413 = vmatprep.mubr.bf16.mxu0 0
      %8414 = vmatmul.mubr.bf16.gmra.mrb[0].mxu0 %v8340
      %v8415 = vpop.f32.mrb[0].mxu0
      %v8416 = vadd.f32 0.0, %v8415
      %v8417 = vpop.f32.mrb[0].mxu0
      %v8418 = vpop.f32.mrb[0].mxu0
      %v8419 = vadd.f32 0.0, %v8418
      %v8420 = vpop.f32.mrb[0].mxu0
      %8421 = vmatprep.mubr.bf16.mxu0 0
      %8422 = vmatmul.mubr.bf16.gmra.mrb[0].mxu0 %v8343
      %v8423 = vpop.f32.mrb[0].mxu0
      %v8424 = vadd.f32 0.0, %v8423
      %v8425 = vpop.f32.mrb[0].mxu0
      %v8426 = vpop.f32.mrb[0].mxu0
      %v8427 = vadd.f32 0.0, %v8426
      %v8428 = vpop.f32.mrb[0].mxu0
      %8429 = vmatprep.mubr.bf16.mxu0 0
      %8430 = vmatmul.mubr.bf16.gmra.mrb[0].mxu0 %v8346
      %v8431 = vpop.f32.mrb[0].mxu0
      %v8432 = vadd.f32 0.0, %v8431
      %v8433 = vpop.f32.mrb[0].mxu0
      %v8434 = vpop.f32.mrb[0].mxu0
      %v8435 = vadd.f32 0.0, %v8434
      %v8436 = vpop.f32.mrb[0].mxu0
      %8437 = vmatprep.mubr.bf16.mxu0 0
      %8438 = vmatmul.mubr.bf16.gmra.mrb[0].mxu0 %v8349
      %v8439 = vpop.f32.mrb[0].mxu0
      %v8440 = vadd.f32 0.0, %v8439
      %v8441 = vpop.f32.mrb[0].mxu0
      %v8442 = vpop.f32.mrb[0].mxu0
      %v8443 = vadd.f32 0.0, %v8442
      %v8444 = vpop.f32.mrb[0].mxu0
      %8445 = vmatprep.mubr.bf16.mxu0 0
      %8446 = vmatmul.mubr.bf16.gmra.mrb[0].mxu0 %v8352
      %v8447 = vpop.f32.mrb[0].mxu0
      %v8448 = vadd.f32 0.0, %v8447
      %v8449 = vpop.f32.mrb[0].mxu0
      %v8450 = vpop.f32.mrb[0].mxu0
      %v8451 = vadd.f32 0.0, %v8450
      %v8452 = vpop.f32.mrb[0].mxu0
      %8453 = vmatprep.mubr.bf16.mxu0 0
      %8454 = vmatmul.mubr.bf16.gmra.mrb[0].mxu0 %v8355
      %v8455 = vpop.f32.mrb[0].mxu0
      %v8456 = vadd.f32 0.0, %v8455
      %v8457 = vpop.f32.mrb[0].mxu0
      %v8458 = vpop.f32.mrb[0].mxu0
      %v8459 = vadd.f32 0.0, %v8458
      %v8460 = vpop.f32.mrb[0].mxu0
      %8461 = vmatprep.mubr.bf16.mxu0 0
      %8462 = vmatmul.mubr.bf16.gmra.mrb[0].mxu0 %v8358
      %v8463 = vpop.f32.mrb[0].mxu0
      %v8464 = vadd.f32 0.0, %v8463
      %v8465 = vpop.f32.mrb[0].mxu0
      %v8466 = vpop.f32.mrb[0].mxu0
      %v8467 = vadd.f32 0.0, %v8466
      %v8468 = vpop.f32.mrb[0].mxu0
      %8469 = vmatprep.mubr.bf16.mxu0 0
      %8470 = vmatmul.mubr.bf16.gmra.mrb[0].mxu0 %v8361
      %v8471 = vpop.f32.mrb[0].mxu0
      %v8472 = vadd.f32 0.0, %v8471
      %v8473 = vpop.f32.mrb[0].mxu0
      %v8474 = vpop.f32.mrb[0].mxu0
      %v8475 = vadd.f32 0.0, %v8474
      %v8476 = vpop.f32.mrb[0].mxu0
      %8477 = vmatprep.mubr.bf16.mxu0 0
      %8478 = vmatmul.mubr.bf16.gmra.mrb[0].mxu0 %v8364
      %v8479 = vpop.f32.mrb[0].mxu0
      %v8480 = vadd.f32 0.0, %v8479
      %v8481 = vpop.f32.mrb[0].mxu0
      %v8482 = vpop.f32.mrb[0].mxu0
      %v8483 = vadd.f32 0.0, %v8482
      %v8484 = vpop.f32.mrb[0].mxu0
      %8485 = vmatprep.mubr.bf16.mxu0 0
      %8486 = vmatmul.mubr.bf16.gmra.mrb[0].mxu0 %v8367
      %v8487 = vpop.f32.mrb[0].mxu0
      %v8488 = vadd.f32 0.0, %v8487
      %v8489 = vpop.f32.mrb[0].mxu0
      %v8490 = vpop.f32.mrb[0].mxu0
      %v8491 = vadd.f32 0.0, %v8490
      %v8492 = vpop.f32.mrb[0].mxu0
      %8493 = vmatprep.mubr.bf16.mxu0 0
      %8494 = vmatmul.mubr.bf16.gmra.mrb[0].mxu0 %v8370
      %v8495 = vpop.f32.mrb[0].mxu0
      %v8496 = vadd.f32 0.0, %v8495
      %v8497 = vpop.f32.mrb[0].mxu0
      %v8498 = vpop.f32.mrb[0].mxu0
      %v8499 = vadd.f32 0.0, %v8498
      %v8500 = vpop.f32.mrb[0].mxu0
      %8501 = vmatprep.mubr.bf16.mxu0 0
      %8502 = vmatmul.mubr.bf16.gmra.mrb[0].mxu0 %v8373
      %v8503 = vpop.f32.mrb[0].mxu0
      %v8504 = vadd.f32 0.0, %v8503
      %v8505 = vpop.f32.mrb[0].mxu0
      %v8506 = vpop.f32.mrb[0].mxu0
      %v8507 = vadd.f32 0.0, %v8506
      %v8508 = vpop.f32.mrb[0].mxu0
      %8509 = vmatprep.mubr.bf16.mxu0 0
      %8510 = vmatmul.mubr.bf16.gmra.mrb[0].mxu0 %v8376
      %v8511 = vpop.f32.mrb[0].mxu0
      %v8512 = vadd.f32 0.0, %v8511
      %v8513 = vpop.f32.mrb[0].mxu0
      %v8514 = vpop.f32.mrb[0].mxu0
      %v8515 = vadd.f32 0.0, %v8514
      %v8516 = vpop.f32.mrb[0].mxu0
      %8517 = vmatprep.mubr.bf16.mxu0 0
      %8518 = vmatmul.mubr.bf16.gmra.mrb[0].mxu0 %v8379
      %v8519 = vpop.f32.mrb[0].mxu0
      %v8520 = vadd.f32 0.0, %v8519
      %v8521 = vpop.f32.mrb[0].mxu0
      %v8522 = vpop.f32.mrb[0].mxu0
      %v8523 = vadd.f32 0.0, %v8522
      %v8524 = vpop.f32.mrb[0].mxu0
      %8525 = vdwg.mxu0
      %v8526 = vadd.f32 %v8252, %v8416
      %v8527 = vadd.f32 %v8253, %v8419
      %v8528 = vadd.f32 %v8254, %v8424
      %v8529 = vadd.f32 %v8255, %v8427
      %v8530 = vadd.f32 %v8256, %v8432
      %v8531 = vadd.f32 %v8257, %v8435
      %v8532 = vadd.f32 %v8258, %v8440
      %v8533 = vadd.f32 %v8259, %v8443
      %v8534 = vadd.f32 %v8260, %v8448
      %v8535 = vadd.f32 %v8261, %v8451
      %v8536 = vadd.f32 %v8262, %v8456
      %v8537 = vadd.f32 %v8263, %v8459
      %v8538 = vadd.f32 %v8264, %v8464
      %v8539 = vadd.f32 %v8265, %v8467
      %v8540 = vadd.f32 %v8266, %v8472
      %v8541 = vadd.f32 %v8267, %v8475
      %v8542 = vadd.f32 %v8268, %v8480
      %v8543 = vadd.f32 %v8269, %v8483
      %v8544 = vadd.f32 %v8270, %v8488
      %v8545 = vadd.f32 %v8271, %v8491
      %v8546 = vadd.f32 %v8272, %v8496
      %v8547 = vadd.f32 %v8273, %v8499
      %v8548 = vadd.f32 %v8274, %v8504
      %v8549 = vadd.f32 %v8275, %v8507
      %v8550 = vadd.f32 %v8276, %v8512
      %v8551 = vadd.f32 %v8277, %v8515
      %v8552 = vadd.f32 %v8278, %v8520
      %v8553 = vadd.f32 %v8279, %v8523
      %v8554 = vld [vmem:[#allocation2 + $0x21] sm:$0xff]
      %v8555 = vld [vmem:[#allocation2 + $0x29] sm:$0xff]
      %v8556 = vld [vmem:[#allocation2 + $0x31] sm:$0xff]
      %v8557 = vld [vmem:[#allocation2 + $0x39] sm:$0xff]
      %v8558 = vld [vmem:[#allocation2 + $0x41] sm:$0xff]
      %v8559 = vld [vmem:[#allocation2 + $0x49] sm:$0xff]
      %v8560 = vld [vmem:[#allocation2 + $0x51] sm:$0xff]
      %v8561 = vld [vmem:[#allocation2 + $0x59] sm:$0xff]
      %v8562 = vld [vmem:[#allocation2 + $0x61] sm:$0xff]
      %v8563 = vld [vmem:[#allocation2 + $0x69] sm:$0xff]
      %v8564 = vld [vmem:[#allocation2 + $0x71] sm:$0xff]
      %v8565 = vld [vmem:[#allocation2 + $0x79] sm:$0xff]
      %v8566 = vld [vmem:[#allocation2 + $0x81] sm:$0xff]
      %v8567 = vld [vmem:[#allocation2 + $0x89] sm:$0xff]
      %v8568 = vld [vmem:[#allocation2 + $0x91] sm:$0xff]
      %v8569 = vld [vmem:[#allocation2 + $0x99] sm:$0xff]
      %v8570 = vld [vmem:[#allocation2 + $0xa1] sm:$0xff]
      %v8571 = vld [vmem:[#allocation2 + $0xa9] sm:$0xff]
      %v8572 = vld [vmem:[#allocation2 + $0xb1] sm:$0xff]
      %v8573 = vld [vmem:[#allocation2 + $0xb9] sm:$0xff]
      %v8574 = vld [vmem:[#allocation2 + $0xc1] sm:$0xff]
      %v8575 = vld [vmem:[#allocation2 + $0xc9] sm:$0xff]
      %v8576 = vld [vmem:[#allocation2 + $0xd1] sm:$0xff]
      %v8577 = vld [vmem:[#allocation2 + $0xd9] sm:$0xff]
      %v8578 = vld [vmem:[#allocation2 + $0xe1] sm:$0xff]
      %v8579 = vld [vmem:[#allocation2 + $0xe9] sm:$0xff]
      %v8580 = vld [vmem:[#allocation2 + $0xf1] sm:$0xff]
      %v8581 = vld [vmem:[#allocation2 + $0xf9] sm:$0xff]
      %v8582 = vpack.c.bf16 %v8555, %v8554
      %v8583 = vpack.c.bf16 %v8557, %v8556
      %v8584 = vpack.c.bf16 %v8559, %v8558
      %v8585 = vpack.c.bf16 %v8561, %v8560
      %v8586 = vpack.c.bf16 %v8563, %v8562
      %v8587 = vpack.c.bf16 %v8565, %v8564
      %v8588 = vpack.c.bf16 %v8567, %v8566
      %v8589 = vpack.c.bf16 %v8569, %v8568
      %v8590 = vpack.c.bf16 %v8571, %v8570
      %v8591 = vpack.c.bf16 %v8573, %v8572
      %v8592 = vpack.c.bf16 %v8575, %v8574
      %v8593 = vpack.c.bf16 %v8577, %v8576
      %v8594 = vpack.c.bf16 %v8579, %v8578
      %v8595 = vpack.c.bf16 %v8581, %v8580
      %s8596 = scalar_lea.vmem %s4, 112
      %v8597 = vld [vmem:[%s8596] sm:$0xf]
      %v8598 = vld [vmem:[%s8596 + $0x4] sm:$0xf]
      %v8599 = vld [vmem:[%s8596 + $0x8] sm:$0xf]
      %v8600 = vld [vmem:[%s8596 + $0xc] sm:$0xf]
      %v8605 = vunpack.c.l.b16 %v8597
      %v8606 = vunpack.c.l.b16 %v8598
      %v8607 = vunpack.c.l.b16 %v8599
      %v8608 = vunpack.c.l.b16 %v8600
      %v8609 = vpack.c.b16 %v8606, %v8605
      %v8610 = vpack.c.b16 %v8608, %v8607
      %v8614 = vsel %vm6480, %v8582, 0
      %v8617 = vsel %vm6480, %v8583, 0
      %v8620 = vsel %vm6480, %v8584, 0
      %v8623 = vsel %vm6480, %v8585, 0
      %v8626 = vsel %vm6480, %v8586, 0
      %v8629 = vsel %vm6480, %v8587, 0
      %v8632 = vsel %vm6480, %v8588, 0
      %v8635 = vsel %vm6480, %v8589, 0
      %v8638 = vsel %vm6480, %v8590, 0
      %v8641 = vsel %vm6480, %v8591, 0
      %v8644 = vsel %vm6480, %v8592, 0
      %v8647 = vsel %vm6480, %v8593, 0
      %v8650 = vsel %vm6480, %v8594, 0
      %v8653 = vsel %vm6480, %v8595, 0
      %8655 = vmatprep.subr.bf16.mxu0 0
      %8656 = vmatpush1.bf16.msra.mxu0 %v8609
      %8657 = vmatprep.subr.bf16.mxu0 0
      %8658 = vmatpush1.bf16.msra.mxu0 %v8610
      %8659 = vmatprep.subr.bf16.mxu0 0
      %8660 = vmatpush1.bf16.msra.mxu0 0
      %8661 = vmatprep.subr.bf16.mxu0 0
      %8662 = vmatpush1.bf16.msra.mxu0 0
      %8663 = vmatprep.subr.bf16.mxu0 0
      %8664 = vmatpush1.bf16.msra.mxu0 0
      %8665 = vmatprep.subr.bf16.mxu0 0
      %8666 = vmatpush1.bf16.msra.mxu0 0
      %8667 = vmatprep.subr.bf16.mxu0 0
      %8668 = vmatpush1.bf16.msra.mxu0 0
      %8669 = vmatprep.subr.bf16.mxu0 0
      %8670 = vmatpush1.bf16.msra.mxu0 0
      %8671 = vmatprep.subr.bf16.mxu0 0
      %8672 = vmatpush1.bf16.msra.mxu0 0
      %8673 = vmatprep.subr.bf16.mxu0 0
      %8674 = vmatpush1.bf16.msra.mxu0 0
      %8675 = vmatprep.subr.bf16.mxu0 0
      %8676 = vmatpush1.bf16.msra.mxu0 0
      %8677 = vmatprep.subr.bf16.mxu0 0
      %8678 = vmatpush1.bf16.msra.mxu0 0
      %8679 = vmatprep.subr.bf16.mxu0 0
      %8680 = vmatpush1.bf16.msra.mxu0 0
      %8681 = vmatprep.subr.bf16.mxu0 0
      %8682 = vmatpush1.bf16.msra.mxu0 0
      %8683 = vmatprep.subr.bf16.mxu0 0
      %8684 = vmatpush1.bf16.msra.mxu0 0
      %8685 = vmatprep.subr.bf16.mxu0 0
      %8686 = vmatpush1.bf16.msra.mxu0 0
      %8687 = vmatprep.mubr.bf16.mxu0 0
      %8688 = vmatmul.mubr.bf16.gmra.mrb[0].mxu0 %v8614
      %v8689 = vpop.f32.mrb[0].mxu0
      %v8690 = vadd.f32 0.0, %v8689
      %v8691 = vpop.f32.mrb[0].mxu0
      %v8692 = vpop.f32.mrb[0].mxu0
      %v8693 = vadd.f32 0.0, %v8692
      %v8694 = vpop.f32.mrb[0].mxu0
      %8695 = vmatprep.mubr.bf16.mxu0 0
      %8696 = vmatmul.mubr.bf16.gmra.mrb[0].mxu0 %v8617
      %v8697 = vpop.f32.mrb[0].mxu0
      %v8698 = vadd.f32 0.0, %v8697
      %v8699 = vpop.f32.mrb[0].mxu0
      %v8700 = vpop.f32.mrb[0].mxu0
      %v8701 = vadd.f32 0.0, %v8700
      %v8702 = vpop.f32.mrb[0].mxu0
      %8703 = vmatprep.mubr.bf16.mxu0 0
      %8704 = vmatmul.mubr.bf16.gmra.mrb[0].mxu0 %v8620
      %v8705 = vpop.f32.mrb[0].mxu0
      %v8706 = vadd.f32 0.0, %v8705
      %v8707 = vpop.f32.mrb[0].mxu0
      %v8708 = vpop.f32.mrb[0].mxu0
      %v8709 = vadd.f32 0.0, %v8708
      %v8710 = vpop.f32.mrb[0].mxu0
      %8711 = vmatprep.mubr.bf16.mxu0 0
      %8712 = vmatmul.mubr.bf16.gmra.mrb[0].mxu0 %v8623
      %v8713 = vpop.f32.mrb[0].mxu0
      %v8714 = vadd.f32 0.0, %v8713
      %v8715 = vpop.f32.mrb[0].mxu0
      %v8716 = vpop.f32.mrb[0].mxu0
      %v8717 = vadd.f32 0.0, %v8716
      %v8718 = vpop.f32.mrb[0].mxu0
      %8719 = vmatprep.mubr.bf16.mxu0 0
      %8720 = vmatmul.mubr.bf16.gmra.mrb[0].mxu0 %v8626
      %v8721 = vpop.f32.mrb[0].mxu0
      %v8722 = vadd.f32 0.0, %v8721
      %v8723 = vpop.f32.mrb[0].mxu0
      %v8724 = vpop.f32.mrb[0].mxu0
      %v8725 = vadd.f32 0.0, %v8724
      %v8726 = vpop.f32.mrb[0].mxu0
      %8727 = vmatprep.mubr.bf16.mxu0 0
      %8728 = vmatmul.mubr.bf16.gmra.mrb[0].mxu0 %v8629
      %v8729 = vpop.f32.mrb[0].mxu0
      %v8730 = vadd.f32 0.0, %v8729
      %v8731 = vpop.f32.mrb[0].mxu0
      %v8732 = vpop.f32.mrb[0].mxu0
      %v8733 = vadd.f32 0.0, %v8732
      %v8734 = vpop.f32.mrb[0].mxu0
      %8735 = vmatprep.mubr.bf16.mxu0 0
      %8736 = vmatmul.mubr.bf16.gmra.mrb[0].mxu0 %v8632
      %v8737 = vpop.f32.mrb[0].mxu0
      %v8738 = vadd.f32 0.0, %v8737
      %v8739 = vpop.f32.mrb[0].mxu0
      %v8740 = vpop.f32.mrb[0].mxu0
      %v8741 = vadd.f32 0.0, %v8740
      %v8742 = vpop.f32.mrb[0].mxu0
      %8743 = vmatprep.mubr.bf16.mxu0 0
      %8744 = vmatmul.mubr.bf16.gmra.mrb[0].mxu0 %v8635
      %v8745 = vpop.f32.mrb[0].mxu0
      %v8746 = vadd.f32 0.0, %v8745
      %v8747 = vpop.f32.mrb[0].mxu0
      %v8748 = vpop.f32.mrb[0].mxu0
      %v8749 = vadd.f32 0.0, %v8748
      %v8750 = vpop.f32.mrb[0].mxu0
      %8751 = vmatprep.mubr.bf16.mxu0 0
      %8752 = vmatmul.mubr.bf16.gmra.mrb[0].mxu0 %v8638
      %v8753 = vpop.f32.mrb[0].mxu0
      %v8754 = vadd.f32 0.0, %v8753
      %v8755 = vpop.f32.mrb[0].mxu0
      %v8756 = vpop.f32.mrb[0].mxu0
      %v8757 = vadd.f32 0.0, %v8756
      %v8758 = vpop.f32.mrb[0].mxu0
      %8759 = vmatprep.mubr.bf16.mxu0 0
      %8760 = vmatmul.mubr.bf16.gmra.mrb[0].mxu0 %v8641
      %v8761 = vpop.f32.mrb[0].mxu0
      %v8762 = vadd.f32 0.0, %v8761
      %v8763 = vpop.f32.mrb[0].mxu0
      %v8764 = vpop.f32.mrb[0].mxu0
      %v8765 = vadd.f32 0.0, %v8764
      %v8766 = vpop.f32.mrb[0].mxu0
      %8767 = vmatprep.mubr.bf16.mxu0 0
      %8768 = vmatmul.mubr.bf16.gmra.mrb[0].mxu0 %v8644
      %v8769 = vpop.f32.mrb[0].mxu0
      %v8770 = vadd.f32 0.0, %v8769
      %v8771 = vpop.f32.mrb[0].mxu0
      %v8772 = vpop.f32.mrb[0].mxu0
      %v8773 = vadd.f32 0.0, %v8772
      %v8774 = vpop.f32.mrb[0].mxu0
      %8775 = vmatprep.mubr.bf16.mxu0 0
      %8776 = vmatmul.mubr.bf16.gmra.mrb[0].mxu0 %v8647
      %v8777 = vpop.f32.mrb[0].mxu0
      %v8778 = vadd.f32 0.0, %v8777
      %v8779 = vpop.f32.mrb[0].mxu0
      %v8780 = vpop.f32.mrb[0].mxu0
      %v8781 = vadd.f32 0.0, %v8780
      %v8782 = vpop.f32.mrb[0].mxu0
      %8783 = vmatprep.mubr.bf16.mxu0 0
      %8784 = vmatmul.mubr.bf16.gmra.mrb[0].mxu0 %v8650
      %v8785 = vpop.f32.mrb[0].mxu0
      %v8786 = vadd.f32 0.0, %v8785
      %v8787 = vpop.f32.mrb[0].mxu0
      %v8788 = vpop.f32.mrb[0].mxu0
      %v8789 = vadd.f32 0.0, %v8788
      %v8790 = vpop.f32.mrb[0].mxu0
      %8791 = vmatprep.mubr.bf16.mxu0 0
      %8792 = vmatmul.mubr.bf16.gmra.mrb[0].mxu0 %v8653
      %v8793 = vpop.f32.mrb[0].mxu0
      %v8794 = vadd.f32 0.0, %v8793
      %v8795 = vpop.f32.mrb[0].mxu0
      %v8796 = vpop.f32.mrb[0].mxu0
      %v8797 = vadd.f32 0.0, %v8796
      %v8798 = vpop.f32.mrb[0].mxu0
      %8799 = vdwg.mxu0
      %v8800 = vadd.f32 %v8526, %v8690
      %v8801 = vadd.f32 %v8527, %v8693
      %v8802 = vadd.f32 %v8528, %v8698
      %v8803 = vadd.f32 %v8529, %v8701
      %v8804 = vadd.f32 %v8530, %v8706
      %v8805 = vadd.f32 %v8531, %v8709
      %v8806 = vadd.f32 %v8532, %v8714
      %v8807 = vadd.f32 %v8533, %v8717
      %v8808 = vadd.f32 %v8534, %v8722
      %v8809 = vadd.f32 %v8535, %v8725
      %v8810 = vadd.f32 %v8536, %v8730
      %v8811 = vadd.f32 %v8537, %v8733
      %v8812 = vadd.f32 %v8538, %v8738
      %v8813 = vadd.f32 %v8539, %v8741
      %v8814 = vadd.f32 %v8540, %v8746
      %v8815 = vadd.f32 %v8541, %v8749
      %v8816 = vadd.f32 %v8542, %v8754
      %v8817 = vadd.f32 %v8543, %v8757
      %v8818 = vadd.f32 %v8544, %v8762
      %v8819 = vadd.f32 %v8545, %v8765
      %v8820 = vadd.f32 %v8546, %v8770
      %v8821 = vadd.f32 %v8547, %v8773
      %v8822 = vadd.f32 %v8548, %v8778
      %v8823 = vadd.f32 %v8549, %v8781
      %v8824 = vadd.f32 %v8550, %v8786
      %v8825 = vadd.f32 %v8551, %v8789
      %v8826 = vadd.f32 %v8552, %v8794
      %v8827 = vadd.f32 %v8553, %v8797
      %v8828 = vld [vmem:[#allocation2 + $0x22] sm:$0xff]
      %v8829 = vld [vmem:[#allocation2 + $0x2a] sm:$0xff]
      %v8830 = vld [vmem:[#allocation2 + $0x32] sm:$0xff]
      %v8831 = vld [vmem:[#allocation2 + $0x3a] sm:$0xff]
      %v8832 = vld [vmem:[#allocation2 + $0x42] sm:$0xff]
      %v8833 = vld [vmem:[#allocation2 + $0x4a] sm:$0xff]
      %v8834 = vld [vmem:[#allocation2 + $0x52] sm:$0xff]
      %v8835 = vld [vmem:[#allocation2 + $0x5a] sm:$0xff]
      %v8836 = vld [vmem:[#allocation2 + $0x62] sm:$0xff]
      %v8837 = vld [vmem:[#allocation2 + $0x6a] sm:$0xff]
      %v8838 = vld [vmem:[#allocation2 + $0x72] sm:$0xff]
      %v8839 = vld [vmem:[#allocation2 + $0x7a] sm:$0xff]
      %v8840 = vld [vmem:[#allocation2 + $0x82] sm:$0xff]
      %v8841 = vld [vmem:[#allocation2 + $0x8a] sm:$0xff]
      %v8842 = vld [vmem:[#allocation2 + $0x92] sm:$0xff]
      %v8843 = vld [vmem:[#allocation2 + $0x9a] sm:$0xff]
      %v8844 = vld [vmem:[#allocation2 + $0xa2] sm:$0xff]
      %v8845 = vld [vmem:[#allocation2 + $0xaa] sm:$0xff]
      %v8846 = vld [vmem:[#allocation2 + $0xb2] sm:$0xff]
      %v8847 = vld [vmem:[#allocation2 + $0xba] sm:$0xff]
      %v8848 = vld [vmem:[#allocation2 + $0xc2] sm:$0xff]
      %v8849 = vld [vmem:[#allocation2 + $0xca] sm:$0xff]
      %v8850 = vld [vmem:[#allocation2 + $0xd2] sm:$0xff]
      %v8851 = vld [vmem:[#allocation2 + $0xda] sm:$0xff]
      %v8852 = vld [vmem:[#allocation2 + $0xe2] sm:$0xff]
      %v8853 = vld [vmem:[#allocation2 + $0xea] sm:$0xff]
      %v8854 = vld [vmem:[#allocation2 + $0xf2] sm:$0xff]
      %v8855 = vld [vmem:[#allocation2 + $0xfa] sm:$0xff]
      %v8856 = vpack.c.bf16 %v8829, %v8828
      %v8857 = vpack.c.bf16 %v8831, %v8830
      %v8858 = vpack.c.bf16 %v8833, %v8832
      %v8859 = vpack.c.bf16 %v8835, %v8834
      %v8860 = vpack.c.bf16 %v8837, %v8836
      %v8861 = vpack.c.bf16 %v8839, %v8838
      %v8862 = vpack.c.bf16 %v8841, %v8840
      %v8863 = vpack.c.bf16 %v8843, %v8842
      %v8864 = vpack.c.bf16 %v8845, %v8844
      %v8865 = vpack.c.bf16 %v8847, %v8846
      %v8866 = vpack.c.bf16 %v8849, %v8848
      %v8867 = vpack.c.bf16 %v8851, %v8850
      %v8868 = vpack.c.bf16 %v8853, %v8852
      %v8869 = vpack.c.bf16 %v8855, %v8854
      %s8870 = scalar_lea.vmem %s4, 128
      %v8871 = vld [vmem:[%s8870] sm:$0xf]
      %v8872 = vld [vmem:[%s8870 + $0x4] sm:$0xf]
      %v8873 = vld [vmem:[%s8870 + $0x8] sm:$0xf]
      %v8874 = vld [vmem:[%s8870 + $0xc] sm:$0xf]
      %v8879 = vunpack.c.l.b16 %v8871
      %v8880 = vunpack.c.l.b16 %v8872
      %v8881 = vunpack.c.l.b16 %v8873
      %v8882 = vunpack.c.l.b16 %v8874
      %v8883 = vpack.c.b16 %v8880, %v8879
      %v8884 = vpack.c.b16 %v8882, %v8881
      %v8888 = vsel %vm6480, %v8856, 0
      %v8891 = vsel %vm6480, %v8857, 0
      %v8894 = vsel %vm6480, %v8858, 0
      %v8897 = vsel %vm6480, %v8859, 0
      %v8900 = vsel %vm6480, %v8860, 0
      %v8903 = vsel %vm6480, %v8861, 0
      %v8906 = vsel %vm6480, %v8862, 0
      %v8909 = vsel %vm6480, %v8863, 0
      %v8912 = vsel %vm6480, %v8864, 0
      %v8915 = vsel %vm6480, %v8865, 0
      %v8918 = vsel %vm6480, %v8866, 0
      %v8921 = vsel %vm6480, %v8867, 0
      %v8924 = vsel %vm6480, %v8868, 0
      %v8927 = vsel %vm6480, %v8869, 0
      %8929 = vmatprep.subr.bf16.mxu0 0
      %8930 = vmatpush1.bf16.msra.mxu0 %v8883
      %8931 = vmatprep.subr.bf16.mxu0 0
      %8932 = vmatpush1.bf16.msra.mxu0 %v8884
      %8933 = vmatprep.subr.bf16.mxu0 0
      %8934 = vmatpush1.bf16.msra.mxu0 0
      %8935 = vmatprep.subr.bf16.mxu0 0
      %8936 = vmatpush1.bf16.msra.mxu0 0
      %8937 = vmatprep.subr.bf16.mxu0 0
      %8938 = vmatpush1.bf16.msra.mxu0 0
      %8939 = vmatprep.subr.bf16.mxu0 0
      %8940 = vmatpush1.bf16.msra.mxu0 0
      %8941 = vmatprep.subr.bf16.mxu0 0
      %8942 = vmatpush1.bf16.msra.mxu0 0
      %8943 = vmatprep.subr.bf16.mxu0 0
      %8944 = vmatpush1.bf16.msra.mxu0 0
      %8945 = vmatprep.subr.bf16.mxu0 0
      %8946 = vmatpush1.bf16.msra.mxu0 0
      %8947 = vmatprep.subr.bf16.mxu0 0
      %8948 = vmatpush1.bf16.msra.mxu0 0
      %8949 = vmatprep.subr.bf16.mxu0 0
      %8950 = vmatpush1.bf16.msra.mxu0 0
      %8951 = vmatprep.subr.bf16.mxu0 0
      %8952 = vmatpush1.bf16.msra.mxu0 0
      %8953 = vmatprep.subr.bf16.mxu0 0
      %8954 = vmatpush1.bf16.msra.mxu0 0
      %8955 = vmatprep.subr.bf16.mxu0 0
      %8956 = vmatpush1.bf16.msra.mxu0 0
      %8957 = vmatprep.subr.bf16.mxu0 0
      %8958 = vmatpush1.bf16.msra.mxu0 0
      %8959 = vmatprep.subr.bf16.mxu0 0
      %8960 = vmatpush1.bf16.msra.mxu0 0
      %8961 = vmatprep.mubr.bf16.mxu0 0
      %8962 = vmatmul.mubr.bf16.gmra.mrb[0].mxu0 %v8888
      %v8963 = vpop.f32.mrb[0].mxu0
      %v8964 = vadd.f32 0.0, %v8963
      %v8965 = vpop.f32.mrb[0].mxu0
      %v8966 = vpop.f32.mrb[0].mxu0
      %v8967 = vadd.f32 0.0, %v8966
      %v8968 = vpop.f32.mrb[0].mxu0
      %8969 = vmatprep.mubr.bf16.mxu0 0
      %8970 = vmatmul.mubr.bf16.gmra.mrb[0].mxu0 %v8891
      %v8971 = vpop.f32.mrb[0].mxu0
      %v8972 = vadd.f32 0.0, %v8971
      %v8973 = vpop.f32.mrb[0].mxu0
      %v8974 = vpop.f32.mrb[0].mxu0
      %v8975 = vadd.f32 0.0, %v8974
      %v8976 = vpop.f32.mrb[0].mxu0
      %8977 = vmatprep.mubr.bf16.mxu0 0
      %8978 = vmatmul.mubr.bf16.gmra.mrb[0].mxu0 %v8894
      %v8979 = vpop.f32.mrb[0].mxu0
      %v8980 = vadd.f32 0.0, %v8979
      %v8981 = vpop.f32.mrb[0].mxu0
      %v8982 = vpop.f32.mrb[0].mxu0
      %v8983 = vadd.f32 0.0, %v8982
      %v8984 = vpop.f32.mrb[0].mxu0
      %8985 = vmatprep.mubr.bf16.mxu0 0
      %8986 = vmatmul.mubr.bf16.gmra.mrb[0].mxu0 %v8897
      %v8987 = vpop.f32.mrb[0].mxu0
      %v8988 = vadd.f32 0.0, %v8987
      %v8989 = vpop.f32.mrb[0].mxu0
      %v8990 = vpop.f32.mrb[0].mxu0
      %v8991 = vadd.f32 0.0, %v8990
      %v8992 = vpop.f32.mrb[0].mxu0
      %8993 = vmatprep.mubr.bf16.mxu0 0
      %8994 = vmatmul.mubr.bf16.gmra.mrb[0].mxu0 %v8900
      %v8995 = vpop.f32.mrb[0].mxu0
      %v8996 = vadd.f32 0.0, %v8995
      %v8997 = vpop.f32.mrb[0].mxu0
      %v8998 = vpop.f32.mrb[0].mxu0
      %v8999 = vadd.f32 0.0, %v8998
      %v9000 = vpop.f32.mrb[0].mxu0
      %9001 = vmatprep.mubr.bf16.mxu0 0
      %9002 = vmatmul.mubr.bf16.gmra.mrb[0].mxu0 %v8903
      %v9003 = vpop.f32.mrb[0].mxu0
      %v9004 = vadd.f32 0.0, %v9003
      %v9005 = vpop.f32.mrb[0].mxu0
      %v9006 = vpop.f32.mrb[0].mxu0
      %v9007 = vadd.f32 0.0, %v9006
      %v9008 = vpop.f32.mrb[0].mxu0
      %9009 = vmatprep.mubr.bf16.mxu0 0
      %9010 = vmatmul.mubr.bf16.gmra.mrb[0].mxu0 %v8906
      %v9011 = vpop.f32.mrb[0].mxu0
      %v9012 = vadd.f32 0.0, %v9011
      %v9013 = vpop.f32.mrb[0].mxu0
      %v9014 = vpop.f32.mrb[0].mxu0
      %v9015 = vadd.f32 0.0, %v9014
      %v9016 = vpop.f32.mrb[0].mxu0
      %9017 = vmatprep.mubr.bf16.mxu0 0
      %9018 = vmatmul.mubr.bf16.gmra.mrb[0].mxu0 %v8909
      %v9019 = vpop.f32.mrb[0].mxu0
      %v9020 = vadd.f32 0.0, %v9019
      %v9021 = vpop.f32.mrb[0].mxu0
      %v9022 = vpop.f32.mrb[0].mxu0
      %v9023 = vadd.f32 0.0, %v9022
      %v9024 = vpop.f32.mrb[0].mxu0
      %9025 = vmatprep.mubr.bf16.mxu0 0
      %9026 = vmatmul.mubr.bf16.gmra.mrb[0].mxu0 %v8912
      %v9027 = vpop.f32.mrb[0].mxu0
      %v9028 = vadd.f32 0.0, %v9027
      %v9029 = vpop.f32.mrb[0].mxu0
      %v9030 = vpop.f32.mrb[0].mxu0
      %v9031 = vadd.f32 0.0, %v9030
      %v9032 = vpop.f32.mrb[0].mxu0
      %9033 = vmatprep.mubr.bf16.mxu0 0
      %9034 = vmatmul.mubr.bf16.gmra.mrb[0].mxu0 %v8915
      %v9035 = vpop.f32.mrb[0].mxu0
      %v9036 = vadd.f32 0.0, %v9035
      %v9037 = vpop.f32.mrb[0].mxu0
      %v9038 = vpop.f32.mrb[0].mxu0
      %v9039 = vadd.f32 0.0, %v9038
      %v9040 = vpop.f32.mrb[0].mxu0
      %9041 = vmatprep.mubr.bf16.mxu0 0
      %9042 = vmatmul.mubr.bf16.gmra.mrb[0].mxu0 %v8918
      %v9043 = vpop.f32.mrb[0].mxu0
      %v9044 = vadd.f32 0.0, %v9043
      %v9045 = vpop.f32.mrb[0].mxu0
      %v9046 = vpop.f32.mrb[0].mxu0
      %v9047 = vadd.f32 0.0, %v9046
      %v9048 = vpop.f32.mrb[0].mxu0
      %9049 = vmatprep.mubr.bf16.mxu0 0
      %9050 = vmatmul.mubr.bf16.gmra.mrb[0].mxu0 %v8921
      %v9051 = vpop.f32.mrb[0].mxu0
      %v9052 = vadd.f32 0.0, %v9051
      %v9053 = vpop.f32.mrb[0].mxu0
      %v9054 = vpop.f32.mrb[0].mxu0
      %v9055 = vadd.f32 0.0, %v9054
      %v9056 = vpop.f32.mrb[0].mxu0
      %9057 = vmatprep.mubr.bf16.mxu0 0
      %9058 = vmatmul.mubr.bf16.gmra.mrb[0].mxu0 %v8924
      %v9059 = vpop.f32.mrb[0].mxu0
      %v9060 = vadd.f32 0.0, %v9059
      %v9061 = vpop.f32.mrb[0].mxu0
      %v9062 = vpop.f32.mrb[0].mxu0
      %v9063 = vadd.f32 0.0, %v9062
      %v9064 = vpop.f32.mrb[0].mxu0
      %9065 = vmatprep.mubr.bf16.mxu0 0
      %9066 = vmatmul.mubr.bf16.gmra.mrb[0].mxu0 %v8927
      %v9067 = vpop.f32.mrb[0].mxu0
      %v9068 = vadd.f32 0.0, %v9067
      %v9069 = vpop.f32.mrb[0].mxu0
      %v9070 = vpop.f32.mrb[0].mxu0
      %v9071 = vadd.f32 0.0, %v9070
      %v9072 = vpop.f32.mrb[0].mxu0
      %9073 = vdwg.mxu0
      %v9074 = vadd.f32 %v8800, %v8964
      %v9075 = vadd.f32 %v8801, %v8967
      %v9076 = vadd.f32 %v8802, %v8972
      %v9077 = vadd.f32 %v8803, %v8975
      %v9078 = vadd.f32 %v8804, %v8980
      %v9079 = vadd.f32 %v8805, %v8983
      %v9080 = vadd.f32 %v8806, %v8988
      %v9081 = vadd.f32 %v8807, %v8991
      %v9082 = vadd.f32 %v8808, %v8996
      %v9083 = vadd.f32 %v8809, %v8999
      %v9084 = vadd.f32 %v8810, %v9004
      %v9085 = vadd.f32 %v8811, %v9007
      %v9086 = vadd.f32 %v8812, %v9012
      %v9087 = vadd.f32 %v8813, %v9015
      %v9088 = vadd.f32 %v8814, %v9020
      %v9089 = vadd.f32 %v8815, %v9023
      %v9090 = vadd.f32 %v8816, %v9028
      %v9091 = vadd.f32 %v8817, %v9031
      %v9092 = vadd.f32 %v8818, %v9036
      %v9093 = vadd.f32 %v8819, %v9039
      %v9094 = vadd.f32 %v8820, %v9044
      %v9095 = vadd.f32 %v8821, %v9047
      %v9096 = vadd.f32 %v8822, %v9052
      %v9097 = vadd.f32 %v8823, %v9055
      %v9098 = vadd.f32 %v8824, %v9060
      %v9099 = vadd.f32 %v8825, %v9063
      %v9100 = vadd.f32 %v8826, %v9068
      %v9101 = vadd.f32 %v8827, %v9071
      %v9102 = vld [vmem:[%s5] sm:$0x1]
      %v9104 = vlaneseq
      %v9105 = vshrl.u32 %v9104, 7
      %v9106 = vsub.s32 0, %v9105
      %v9107 = vrot.slane %v9102, %v9106
      %v9109 = vadd.f32 %v9074, %v9107
      %v9110 = vadd.f32 %v9075, %v9107
      %v9111 = vadd.f32 %v9076, %v9107
      %v9112 = vadd.f32 %v9077, %v9107
      %v9113 = vadd.f32 %v9078, %v9107
      %v9114 = vadd.f32 %v9079, %v9107
      %v9115 = vadd.f32 %v9080, %v9107
      %v9116 = vadd.f32 %v9081, %v9107
      %v9117 = vadd.f32 %v9082, %v9107
      %v9118 = vadd.f32 %v9083, %v9107
      %v9119 = vadd.f32 %v9084, %v9107
      %v9120 = vadd.f32 %v9085, %v9107
      %v9121 = vadd.f32 %v9086, %v9107
      %v9122 = vadd.f32 %v9087, %v9107
      %v9123 = vadd.f32 %v9088, %v9107
      %v9124 = vadd.f32 %v9089, %v9107
      %v9125 = vadd.f32 %v9090, %v9107
      %v9126 = vadd.f32 %v9091, %v9107
      %v9127 = vadd.f32 %v9092, %v9107
      %v9128 = vadd.f32 %v9093, %v9107
      %v9129 = vadd.f32 %v9094, %v9107
      %v9130 = vadd.f32 %v9095, %v9107
      %v9131 = vadd.f32 %v9096, %v9107
      %v9132 = vadd.f32 %v9097, %v9107
      %v9133 = vadd.f32 %v9098, %v9107
      %v9134 = vadd.f32 %v9099, %v9107
      %v9135 = vadd.f32 %v9100, %v9107
      %v9136 = vadd.f32 %v9101, %v9107
      %v9137 = vmax.f32 %v9109, 0.0
      %v9138 = vmax.f32 %v9110, 0.0
      %v9139 = vmax.f32 %v9111, 0.0
      %v9140 = vmax.f32 %v9112, 0.0
      %v9141 = vmax.f32 %v9113, 0.0
      %v9142 = vmax.f32 %v9114, 0.0
      %v9143 = vmax.f32 %v9115, 0.0
      %v9144 = vmax.f32 %v9116, 0.0
      %v9145 = vmax.f32 %v9117, 0.0
      %v9146 = vmax.f32 %v9118, 0.0
      %v9147 = vmax.f32 %v9119, 0.0
      %v9148 = vmax.f32 %v9120, 0.0
      %v9149 = vmax.f32 %v9121, 0.0
      %v9150 = vmax.f32 %v9122, 0.0
      %v9151 = vmax.f32 %v9123, 0.0
      %v9152 = vmax.f32 %v9124, 0.0
      %v9153 = vmax.f32 %v9125, 0.0
      %v9154 = vmax.f32 %v9126, 0.0
      %v9155 = vmax.f32 %v9127, 0.0
      %v9156 = vmax.f32 %v9128, 0.0
      %v9157 = vmax.f32 %v9129, 0.0
      %v9158 = vmax.f32 %v9130, 0.0
      %v9159 = vmax.f32 %v9131, 0.0
      %v9160 = vmax.f32 %v9132, 0.0
      %v9161 = vmax.f32 %v9133, 0.0
      %v9162 = vmax.f32 %v9134, 0.0
      %v9163 = vmax.f32 %v9135, 0.0
      %v9164 = vmax.f32 %v9136, 0.0
      %vm9165 = vcmask 523264
      %9166 = vst.msk [vmem:[#allocation3] sm:$0xff] %vm9165, %v9137
      %9167 = vst.msk [vmem:[#allocation3 + $0x8] sm:$0xff] %vm9165, %v9138
      %9168 = vst.msk [vmem:[#allocation3 + $0x10] sm:$0xff] %vm9165, %v9139
      %9169 = vst.msk [vmem:[#allocation3 + $0x18] sm:$0xff] %vm9165, %v9140
      %9170 = vst.msk [vmem:[#allocation3 + $0x20] sm:$0xff] %vm9165, %v9141
      %9171 = vst.msk [vmem:[#allocation3 + $0x28] sm:$0xff] %vm9165, %v9142
      %9172 = vst.msk [vmem:[#allocation3 + $0x30] sm:$0xff] %vm9165, %v9143
      %9173 = vst.msk [vmem:[#allocation3 + $0x38] sm:$0xff] %vm9165, %v9144
      %9174 = vst.msk [vmem:[#allocation3 + $0x40] sm:$0xff] %vm9165, %v9145
      %9175 = vst.msk [vmem:[#allocation3 + $0x48] sm:$0xff] %vm9165, %v9146
      %9176 = vst.msk [vmem:[#allocation3 + $0x50] sm:$0xff] %vm9165, %v9147
      %9177 = vst.msk [vmem:[#allocation3 + $0x58] sm:$0xff] %vm9165, %v9148
      %9178 = vst.msk [vmem:[#allocation3 + $0x60] sm:$0xff] %vm9165, %v9149
      %9179 = vst.msk [vmem:[#allocation3 + $0x68] sm:$0xff] %vm9165, %v9150
      %9180 = vst.msk [vmem:[#allocation3 + $0x70] sm:$0xff] %vm9165, %v9151
      %9181 = vst.msk [vmem:[#allocation3 + $0x78] sm:$0xff] %vm9165, %v9152
      %9182 = vst.msk [vmem:[#allocation3 + $0x80] sm:$0xff] %vm9165, %v9153
      %9183 = vst.msk [vmem:[#allocation3 + $0x88] sm:$0xff] %vm9165, %v9154
      %9184 = vst.msk [vmem:[#allocation3 + $0x90] sm:$0xff] %vm9165, %v9155
      %9185 = vst.msk [vmem:[#allocation3 + $0x98] sm:$0xff] %vm9165, %v9156
      %9186 = vst.msk [vmem:[#allocation3 + $0xa0] sm:$0xff] %vm9165, %v9157
      %9187 = vst.msk [vmem:[#allocation3 + $0xa8] sm:$0xff] %vm9165, %v9158
      %9188 = vst.msk [vmem:[#allocation3 + $0xb0] sm:$0xff] %vm9165, %v9159
      %9189 = vst.msk [vmem:[#allocation3 + $0xb8] sm:$0xff] %vm9165, %v9160
      %9190 = vst.msk [vmem:[#allocation3 + $0xc0] sm:$0xff] %vm9165, %v9161
      %9191 = vst.msk [vmem:[#allocation3 + $0xc8] sm:$0xff] %vm9165, %v9162
      %9192 = vst.msk [vmem:[#allocation3 + $0xd0] sm:$0xff] %vm9165, %v9163
      %9193 = vst.msk [vmem:[#allocation3 + $0xd8] sm:$0xff] %vm9165, %v9164
      %9194 = vst.msk [vmem:[#allocation3 + $0xe0] sm:$0xff] %vm9165, 0.0
      %9195 = vst.msk [vmem:[#allocation3 + $0xe8] sm:$0xff] %vm9165, 0.0
      %9196 = vst.msk [vmem:[#allocation3 + $0xf0] sm:$0xff] %vm9165, 0.0
      %9197 = vst.msk [vmem:[#allocation3 + $0xf8] sm:$0xff] %vm9165, 0.0
      %v9198 = vld [vmem:[#allocation3] sm:$0xff]
      %v9199 = vld [vmem:[#allocation3 + $0x8] sm:$0xff]
      %v9200 = vld [vmem:[#allocation3 + $0x10] sm:$0xff]
      %v9201 = vld [vmem:[#allocation3 + $0x18] sm:$0xff]
      %v9202 = vld [vmem:[#allocation3 + $0x20] sm:$0xff]
      %v9203 = vld [vmem:[#allocation3 + $0x28] sm:$0xff]
      %v9204 = vld [vmem:[#allocation3 + $0x30] sm:$0xff]
      %v9205 = vld [vmem:[#allocation3 + $0x38] sm:$0xff]
      %v9206 = vld [vmem:[#allocation3 + $0x40] sm:$0xff]
      %v9207 = vld [vmem:[#allocation3 + $0x48] sm:$0xff]
      %v9208 = vld [vmem:[#allocation3 + $0x50] sm:$0xff]
      %v9209 = vld [vmem:[#allocation3 + $0x58] sm:$0xff]
      %v9210 = vld [vmem:[#allocation3 + $0x60] sm:$0xff]
      %v9211 = vld [vmem:[#allocation3 + $0x68] sm:$0xff]
      %v9212 = vld [vmem:[#allocation3 + $0x70] sm:$0xff]
      %v9213 = vld [vmem:[#allocation3 + $0x78] sm:$0xff]
      %v9214 = vld [vmem:[#allocation3 + $0x80] sm:$0xff]
      %v9215 = vld [vmem:[#allocation3 + $0x88] sm:$0xff]
      %v9216 = vld [vmem:[#allocation3 + $0x90] sm:$0xff]
      %v9217 = vld [vmem:[#allocation3 + $0x98] sm:$0xff]
      %v9218 = vld [vmem:[#allocation3 + $0xa0] sm:$0xff]
      %v9219 = vld [vmem:[#allocation3 + $0xa8] sm:$0xff]
      %v9220 = vld [vmem:[#allocation3 + $0xb0] sm:$0xff]
      %v9221 = vld [vmem:[#allocation3 + $0xb8] sm:$0xff]
      %v9222 = vld [vmem:[#allocation3 + $0xc0] sm:$0xff]
      %v9223 = vld [vmem:[#allocation3 + $0xc8] sm:$0xff]
      %v9224 = vld [vmem:[#allocation3 + $0xd0] sm:$0xff]
      %v9225 = vld [vmem:[#allocation3 + $0xd8] sm:$0xff]
      %v9226 = vld [vmem:[#allocation3 + $0x1] sm:$0xff]
      %v9227 = vld [vmem:[#allocation3 + $0x9] sm:$0xff]
      %v9228 = vld [vmem:[#allocation3 + $0x11] sm:$0xff]
      %v9229 = vld [vmem:[#allocation3 + $0x19] sm:$0xff]
      %v9230 = vld [vmem:[#allocation3 + $0x21] sm:$0xff]
      %v9231 = vld [vmem:[#allocation3 + $0x29] sm:$0xff]
      %v9232 = vld [vmem:[#allocation3 + $0x31] sm:$0xff]
      %v9233 = vld [vmem:[#allocation3 + $0x39] sm:$0xff]
      %v9234 = vld [vmem:[#allocation3 + $0x41] sm:$0xff]
      %v9235 = vld [vmem:[#allocation3 + $0x49] sm:$0xff]
      %v9236 = vld [vmem:[#allocation3 + $0x51] sm:$0xff]
      %v9237 = vld [vmem:[#allocation3 + $0x59] sm:$0xff]
      %v9238 = vld [vmem:[#allocation3 + $0x61] sm:$0xff]
      %v9239 = vld [vmem:[#allocation3 + $0x69] sm:$0xff]
      %v9240 = vld [vmem:[#allocation3 + $0x71] sm:$0xff]
      %v9241 = vld [vmem:[#allocation3 + $0x79] sm:$0xff]
      %v9242 = vld [vmem:[#allocation3 + $0x81] sm:$0xff]
      %v9243 = vld [vmem:[#allocation3 + $0x89] sm:$0xff]
      %v9244 = vld [vmem:[#allocation3 + $0x91] sm:$0xff]
      %v9245 = vld [vmem:[#allocation3 + $0x99] sm:$0xff]
      %v9246 = vld [vmem:[#allocation3 + $0xa1] sm:$0xff]
      %v9247 = vld [vmem:[#allocation3 + $0xa9] sm:$0xff]
      %v9248 = vld [vmem:[#allocation3 + $0xb1] sm:$0xff]
      %v9249 = vld [vmem:[#allocation3 + $0xb9] sm:$0xff]
      %v9250 = vld [vmem:[#allocation3 + $0xc1] sm:$0xff]
      %v9251 = vld [vmem:[#allocation3 + $0xc9] sm:$0xff]
      %v9252 = vld [vmem:[#allocation3 + $0xd1] sm:$0xff]
      %v9253 = vld [vmem:[#allocation3 + $0xd9] sm:$0xff]
      %v9254 = vmax.f32 %v9198, %v9226
      %v9255 = vmax.f32 %v9199, %v9227
      %v9256 = vmax.f32 %v9200, %v9228
      %v9257 = vmax.f32 %v9201, %v9229
      %v9258 = vmax.f32 %v9202, %v9230
      %v9259 = vmax.f32 %v9203, %v9231
      %v9260 = vmax.f32 %v9204, %v9232
      %v9261 = vmax.f32 %v9205, %v9233
      %v9262 = vmax.f32 %v9206, %v9234
      %v9263 = vmax.f32 %v9207, %v9235
      %v9264 = vmax.f32 %v9208, %v9236
      %v9265 = vmax.f32 %v9209, %v9237
      %v9266 = vmax.f32 %v9210, %v9238
      %v9267 = vmax.f32 %v9211, %v9239
      %v9268 = vmax.f32 %v9212, %v9240
      %v9269 = vmax.f32 %v9213, %v9241
      %v9270 = vmax.f32 %v9214, %v9242
      %v9271 = vmax.f32 %v9215, %v9243
      %v9272 = vmax.f32 %v9216, %v9244
      %v9273 = vmax.f32 %v9217, %v9245
      %v9274 = vmax.f32 %v9218, %v9246
      %v9275 = vmax.f32 %v9219, %v9247
      %v9276 = vmax.f32 %v9220, %v9248
      %v9277 = vmax.f32 %v9221, %v9249
      %v9278 = vmax.f32 %v9222, %v9250
      %v9279 = vmax.f32 %v9223, %v9251
      %v9280 = vmax.f32 %v9224, %v9252
      %v9281 = vmax.f32 %v9225, %v9253
      %v9282 = vld [vmem:[#allocation3 + $0xe0] sm:$0xff]
      %v9283 = vld [vmem:[#allocation3 + $0xe8] sm:$0xff]
      %v9284 = vld [vmem:[#allocation3 + $0xe1] sm:$0xff]
      %v9285 = vld [vmem:[#allocation3 + $0xe9] sm:$0xff]
      %v9286 = vmax.f32 %v9282, %v9284
      %v9287 = vmax.f32 %v9283, %v9285
      %v9288 = vmax.f32 %v9254, %v9256
      %v9289 = vmax.f32 %v9255, %v9257
      %v9290 = vmax.f32 %v9256, %v9258
      %v9291 = vmax.f32 %v9257, %v9259
      %v9292 = vmax.f32 %v9258, %v9260
      %v9293 = vmax.f32 %v9259, %v9261
      %v9294 = vmax.f32 %v9260, %v9262
      %v9295 = vmax.f32 %v9261, %v9263
      %v9296 = vmax.f32 %v9262, %v9264
      %v9297 = vmax.f32 %v9263, %v9265
      %v9298 = vmax.f32 %v9264, %v9266
      %v9299 = vmax.f32 %v9265, %v9267
      %v9300 = vmax.f32 %v9266, %v9268
      %v9301 = vmax.f32 %v9267, %v9269
      %v9302 = vmax.f32 %v9268, %v9270
      %v9303 = vmax.f32 %v9269, %v9271
      %v9304 = vmax.f32 %v9270, %v9272
      %v9305 = vmax.f32 %v9271, %v9273
      %v9306 = vmax.f32 %v9272, %v9274
      %v9307 = vmax.f32 %v9273, %v9275
      %v9308 = vmax.f32 %v9274, %v9276
      %v9309 = vmax.f32 %v9275, %v9277
      %v9310 = vmax.f32 %v9276, %v9278
      %v9311 = vmax.f32 %v9277, %v9279
      %v9312 = vmax.f32 %v9278, %v9280
      %v9313 = vmax.f32 %v9279, %v9281
      %v9314 = vmax.f32 %v9280, %v9286
      %v9315 = vmax.f32 %v9281, %v9287
      %v9316 = vld [vmem:[%s6] sm:$0xff]
      %v9317 = vld [vmem:[%s6 + $0x8] sm:$0xff]
      %v9318 = vld [vmem:[%s6 + $0x10] sm:$0xff]
      %v9319 = vld [vmem:[%s6 + $0x18] sm:$0xff]
      %v9320 = vld [vmem:[%s6 + $0x20] sm:$0xff]
      %v9321 = vld [vmem:[%s6 + $0x28] sm:$0xff]
      %v9322 = vld [vmem:[%s6 + $0x30] sm:$0xff]
      %v9323 = vld [vmem:[%s6 + $0x38] sm:$0xff]
      %v9324 = vld [vmem:[%s6 + $0x40] sm:$0xff]
      %v9325 = vld [vmem:[%s6 + $0x48] sm:$0xff]
      %v9326 = vld [vmem:[%s6 + $0x50] sm:$0xff]
      %v9327 = vld [vmem:[%s6 + $0x58] sm:$0xff]
      %v9328 = vld [vmem:[%s6 + $0x60] sm:$0xff]
      %v9329 = vld [vmem:[%s6 + $0x68] sm:$0xff]
      %v9330 = vld [vmem:[%s6 + $0x70] sm:$0xff]
      %v9331 = vld [vmem:[%s6 + $0x78] sm:$0xff]
      %v9332 = vld [vmem:[%s6 + $0x80] sm:$0xff]
      %v9333 = vld [vmem:[%s6 + $0x88] sm:$0xff]
      %v9334 = vld [vmem:[%s6 + $0x90] sm:$0xff]
      %v9335 = vld [vmem:[%s6 + $0x98] sm:$0xff]
      %v9336 = vld [vmem:[%s6 + $0xa0] sm:$0xff]
      %v9337 = vld [vmem:[%s6 + $0xa8] sm:$0xff]
      %v9338 = vld [vmem:[%s6 + $0xb0] sm:$0xff]
      %v9339 = vld [vmem:[%s6 + $0xb8] sm:$0xff]
      %v9340 = vld [vmem:[%s6 + $0xc0] sm:$0xff]
      %v9341 = vld [vmem:[%s6 + $0xc8] sm:$0xff]
      %v9342 = vld [vmem:[%s6 + $0xd0] sm:$0xff]
      %v9343 = vld [vmem:[%s6 + $0xd8] sm:$0xff]
      %v9344 = vld [vmem:[%s6 + $0xe0] sm:$0xff]
      %v9345 = vld [vmem:[%s6 + $0xe8] sm:$0xff]
      %v9346 = vld [vmem:[%s6 + $0xf0] sm:$0xff]
      %v9347 = vld [vmem:[%s6 + $0xf8] sm:$0xff]
      %v9348 = vld [vmem:[%s6 + $0x100] sm:$0xff]
      %v9349 = vld [vmem:[%s6 + $0x108] sm:$0xff]
      %v9350 = vld [vmem:[%s6 + $0x110] sm:$0xff]
      %v9351 = vld [vmem:[%s6 + $0x118] sm:$0xff]
      %v9352 = vld [vmem:[%s6 + $0x120] sm:$0xff]
      %v9353 = vld [vmem:[%s6 + $0x128] sm:$0xff]
      %v9354 = vld [vmem:[%s6 + $0x130] sm:$0xff]
      %v9355 = vld [vmem:[%s6 + $0x138] sm:$0xff]
      %v9356 = vld [vmem:[%s6 + $0x140] sm:$0xff]
      %v9357 = vld [vmem:[%s6 + $0x148] sm:$0xff]
      %v9358 = vld [vmem:[%s6 + $0x150] sm:$0xff]
      %v9359 = vld [vmem:[%s6 + $0x158] sm:$0xff]
      %v9360 = vld [vmem:[%s6 + $0x160] sm:$0xff]
      %v9361 = vld [vmem:[%s6 + $0x168] sm:$0xff]
      %v9362 = vld [vmem:[%s6 + $0x170] sm:$0xff]
      %v9363 = vld [vmem:[%s6 + $0x178] sm:$0xff]
      %v9364 = vld [vmem:[%s6 + $0x180] sm:$0xff]
      %v9365 = vld [vmem:[%s6 + $0x188] sm:$0xff]
      %v9366 = vld [vmem:[%s6 + $0x190] sm:$0xff]
      %v9367 = vld [vmem:[%s6 + $0x198] sm:$0xff]
      %v9368 = vld [vmem:[%s6 + $0x1a0] sm:$0xff]
      %v9369 = vld [vmem:[%s6 + $0x1a8] sm:$0xff]
      %v9370 = vld [vmem:[%s6 + $0x1b0] sm:$0xff]
      %v9371 = vld [vmem:[%s6 + $0x1b8] sm:$0xff]
      %v9372 = vld [vmem:[%s6 + $0x1c0] sm:$0xff]
      %v9373 = vld [vmem:[%s6 + $0x1c8] sm:$0xff]
      %v9374 = vld [vmem:[%s6 + $0x1d0] sm:$0xff]
      %v9375 = vld [vmem:[%s6 + $0x1d8] sm:$0xff]
      %v9376 = vld [vmem:[%s6 + $0x1e0] sm:$0xff]
      %v9377 = vld [vmem:[%s6 + $0x1e8] sm:$0xff]
      %v9378 = vld [vmem:[%s6 + $0x1f0] sm:$0xff]
      %v9379 = vld [vmem:[%s6 + $0x1f8] sm:$0xff]
      %v9380 = vld [vmem:[%s6 + $0x200] sm:$0xff]
      %v9381 = vld [vmem:[%s6 + $0x208] sm:$0xff]
      %v9382 = vld [vmem:[%s6 + $0x210] sm:$0xff]
      %v9383 = vld [vmem:[%s6 + $0x218] sm:$0xff]
      %v9384 = vld [vmem:[%s6 + $0x220] sm:$0xff]
      %v9385 = vld [vmem:[%s6 + $0x228] sm:$0xff]
      %v9386 = vld [vmem:[%s6 + $0x230] sm:$0xff]
      %v9387 = vld [vmem:[%s6 + $0x238] sm:$0xff]
      %v9388 = vld [vmem:[%s6 + $0x240] sm:$0xff]
      %v9389 = vld [vmem:[%s6 + $0x248] sm:$0xff]
      %v9390 = vld [vmem:[%s6 + $0x250] sm:$0xff]
      %v9391 = vld [vmem:[%s6 + $0x258] sm:$0xff]
      %v9392 = vld [vmem:[%s6 + $0x260] sm:$0xff]
      %v9393 = vld [vmem:[%s6 + $0x268] sm:$0xff]
      %v9394 = vld [vmem:[%s6 + $0x270] sm:$0xff]
      %v9395 = vld [vmem:[%s6 + $0x278] sm:$0xff]
      %v9396 = vld [vmem:[%s6 + $0x280] sm:$0xff]
      %v9397 = vld [vmem:[%s6 + $0x288] sm:$0xff]
      %v9398 = vld [vmem:[%s6 + $0x290] sm:$0xff]
      %v9399 = vld [vmem:[%s6 + $0x298] sm:$0xff]
      %v9400 = vld [vmem:[%s6 + $0x2a0] sm:$0xff]
      %v9401 = vld [vmem:[%s6 + $0x2a8] sm:$0xff]
      %v9402 = vld [vmem:[%s6 + $0x2b0] sm:$0xff]
      %v9403 = vld [vmem:[%s6 + $0x2b8] sm:$0xff]
      %v9404 = vld [vmem:[%s6 + $0x2c0] sm:$0xff]
      %v9405 = vld [vmem:[%s6 + $0x2c8] sm:$0xff]
      %v9406 = vld [vmem:[%s6 + $0x2d0] sm:$0xff]
      %v9407 = vld [vmem:[%s6 + $0x2d8] sm:$0xff]
      %v9408 = vld [vmem:[%s6 + $0x2e0] sm:$0xff]
      %v9409 = vld [vmem:[%s6 + $0x2e8] sm:$0xff]
      %v9410 = vld [vmem:[%s6 + $0x2f0] sm:$0xff]
      %v9411 = vld [vmem:[%s6 + $0x2f8] sm:$0xff]
      %v9412 = vld [vmem:[%s6 + $0x300] sm:$0xff]
      %v9413 = vld [vmem:[%s6 + $0x308] sm:$0xff]
      %v9414 = vld [vmem:[%s6 + $0x310] sm:$0xff]
      %v9415 = vld [vmem:[%s6 + $0x318] sm:$0xff]
      %v9416 = vld [vmem:[%s6 + $0x320] sm:$0xff]
      %v9417 = vld [vmem:[%s6 + $0x328] sm:$0xff]
      %v9418 = vld [vmem:[%s6 + $0x330] sm:$0xff]
      %v9419 = vld [vmem:[%s6 + $0x338] sm:$0xff]
      %v9420 = vld [vmem:[%s6 + $0x340] sm:$0xff]
      %v9421 = vld [vmem:[%s6 + $0x348] sm:$0xff]
      %v9422 = vld [vmem:[%s6 + $0x350] sm:$0xff]
      %v9423 = vld [vmem:[%s6 + $0x358] sm:$0xff]
      %v9424 = vld [vmem:[%s6 + $0x360] sm:$0xff]
      %v9425 = vld [vmem:[%s6 + $0x368] sm:$0xff]
      %v9426 = vld [vmem:[%s6 + $0x370] sm:$0xff]
      %v9427 = vld [vmem:[%s6 + $0x378] sm:$0xff]
      %v9428 = vld [vmem:[%s6 + $0x380] sm:$0xff]
      %v9429 = vld [vmem:[%s6 + $0x388] sm:$0xff]
      %v9430 = vld [vmem:[%s6 + $0x390] sm:$0xff]
      %v9431 = vld [vmem:[%s6 + $0x398] sm:$0xff]
      %v9432 = vld [vmem:[%s6 + $0x3a0] sm:$0xff]
      %v9433 = vld [vmem:[%s6 + $0x3a8] sm:$0xff]
      %v9434 = vld [vmem:[%s6 + $0x3b0] sm:$0xff]
      %v9435 = vld [vmem:[%s6 + $0x3b8] sm:$0xff]
      %v9436 = vld [vmem:[%s6 + $0x3c0] sm:$0xff]
      %v9437 = vld [vmem:[%s6 + $0x3c8] sm:$0xff]
      %v9438 = vld [vmem:[%s6 + $0x3d0] sm:$0xff]
      %v9439 = vld [vmem:[%s6 + $0x3d8] sm:$0xff]
      %v9440 = vld [vmem:[%s6 + $0x3e0] sm:$0xff]
      %v9441 = vld [vmem:[%s6 + $0x3e8] sm:$0xff]
      %v9442 = vld [vmem:[%s6 + $0x3f0] sm:$0xff]
      %v9443 = vld [vmem:[%s6 + $0x3f8] sm:$0xff]
      %v9444 = vld [vmem:[%s6 + $0x400] sm:$0xff]
      %v9445 = vld [vmem:[%s6 + $0x408] sm:$0xff]
      %v9446 = vld [vmem:[%s6 + $0x410] sm:$0xff]
      %v9447 = vld [vmem:[%s6 + $0x418] sm:$0xff]
      %v9448 = vld [vmem:[%s6 + $0x420] sm:$0xff]
      %v9449 = vld [vmem:[%s6 + $0x428] sm:$0xff]
      %v9450 = vld [vmem:[%s6 + $0x430] sm:$0xff]
      %v9451 = vld [vmem:[%s6 + $0x438] sm:$0xff]
      %v9452 = vld [vmem:[%s6 + $0x440] sm:$0xff]
      %v9453 = vld [vmem:[%s6 + $0x448] sm:$0xff]
      %v9454 = vld [vmem:[%s6 + $0x450] sm:$0xff]
      %v9455 = vld [vmem:[%s6 + $0x458] sm:$0xff]
      %v9456 = vld [vmem:[%s6 + $0x460] sm:$0xff]
      %v9457 = vld [vmem:[%s6 + $0x468] sm:$0xff]
      %v9458 = vld [vmem:[%s6 + $0x470] sm:$0xff]
      %v9459 = vld [vmem:[%s6 + $0x478] sm:$0xff]
      %v9460 = vld [vmem:[%s6 + $0x480] sm:$0xff]
      %v9461 = vld [vmem:[%s6 + $0x488] sm:$0xff]
      %v9462 = vld [vmem:[%s6 + $0x490] sm:$0xff]
      %v9463 = vld [vmem:[%s6 + $0x498] sm:$0xff]
      %v9464 = vld [vmem:[%s6 + $0x4a0] sm:$0xff]
      %v9465 = vld [vmem:[%s6 + $0x4a8] sm:$0xff]
      %v9466 = vld [vmem:[%s6 + $0x4b0] sm:$0xff]
      %v9467 = vld [vmem:[%s6 + $0x4b8] sm:$0xff]
      %v9468 = vld [vmem:[%s6 + $0x4c0] sm:$0xff]
      %v9469 = vld [vmem:[%s6 + $0x4c8] sm:$0xff]
      %v9470 = vld [vmem:[%s6 + $0x4d0] sm:$0xff]
      %v9471 = vld [vmem:[%s6 + $0x4d8] sm:$0xff]
      %v9472 = vld [vmem:[%s6 + $0x4e0] sm:$0xff]
      %v9473 = vld [vmem:[%s6 + $0x4e8] sm:$0xff]
      %v9474 = vld [vmem:[%s6 + $0x4f0] sm:$0xff]
      %v9475 = vld [vmem:[%s6 + $0x4f8] sm:$0xff]
      %v9476 = vld [vmem:[%s6 + $0x500] sm:$0xff]
      %v9477 = vld [vmem:[%s6 + $0x508] sm:$0xff]
      %v9478 = vld [vmem:[%s6 + $0x510] sm:$0xff]
      %v9479 = vld [vmem:[%s6 + $0x518] sm:$0xff]
      %v9480 = vld [vmem:[%s6 + $0x520] sm:$0xff]
      %v9481 = vld [vmem:[%s6 + $0x528] sm:$0xff]
      %v9482 = vld [vmem:[%s6 + $0x530] sm:$0xff]
      %v9483 = vld [vmem:[%s6 + $0x538] sm:$0xff]
      %v9484 = vld [vmem:[%s6 + $0x540] sm:$0xff]
      %v9485 = vld [vmem:[%s6 + $0x548] sm:$0xff]
      %v9486 = vld [vmem:[%s6 + $0x550] sm:$0xff]
      %v9487 = vld [vmem:[%s6 + $0x558] sm:$0xff]
      %v9488 = vld [vmem:[%s6 + $0x560] sm:$0xff]
      %v9489 = vld [vmem:[%s6 + $0x568] sm:$0xff]
      %v9490 = vld [vmem:[%s6 + $0x570] sm:$0xff]
      %v9491 = vld [vmem:[%s6 + $0x578] sm:$0xff]
      %v9492 = vld [vmem:[%s6 + $0x580] sm:$0xff]
      %v9493 = vld [vmem:[%s6 + $0x588] sm:$0xff]
      %v9494 = vld [vmem:[%s6 + $0x590] sm:$0xff]
      %v9495 = vld [vmem:[%s6 + $0x598] sm:$0xff]
      %v9496 = vld [vmem:[%s6 + $0x5a0] sm:$0xff]
      %v9497 = vld [vmem:[%s6 + $0x5a8] sm:$0xff]
      %v9498 = vld [vmem:[%s6 + $0x5b0] sm:$0xff]
      %v9499 = vld [vmem:[%s6 + $0x5b8] sm:$0xff]
      %v9500 = vld [vmem:[%s6 + $0x5c0] sm:$0xff]
      %v9501 = vld [vmem:[%s6 + $0x5c8] sm:$0xff]
      %v9502 = vld [vmem:[%s6 + $0x5d0] sm:$0xff]
      %v9503 = vld [vmem:[%s6 + $0x5d8] sm:$0xff]
      %v9504 = vld [vmem:[%s6 + $0x5e0] sm:$0xff]
      %v9505 = vld [vmem:[%s6 + $0x5e8] sm:$0xff]
      %v9506 = vld [vmem:[%s6 + $0x5f0] sm:$0xff]
      %v9507 = vld [vmem:[%s6 + $0x5f8] sm:$0xff]
      %v9508 = vld [vmem:[%s6 + $0x600] sm:$0xff]
      %v9509 = vld [vmem:[%s6 + $0x608] sm:$0xff]
      %v9510 = vld [vmem:[%s6 + $0x610] sm:$0xff]
      %v9511 = vld [vmem:[%s6 + $0x618] sm:$0xff]
      %v9512 = vld [vmem:[%s6 + $0x620] sm:$0xff]
      %v9513 = vld [vmem:[%s6 + $0x628] sm:$0xff]
      %v9514 = vld [vmem:[%s6 + $0x630] sm:$0xff]
      %v9515 = vld [vmem:[%s6 + $0x638] sm:$0xff]
      %v9516 = vld [vmem:[%s6 + $0x640] sm:$0xff]
      %v9517 = vld [vmem:[%s6 + $0x648] sm:$0xff]
      %v9518 = vld [vmem:[%s6 + $0x650] sm:$0xff]
      %v9519 = vld [vmem:[%s6 + $0x658] sm:$0xff]
      %v9520 = vld [vmem:[%s6 + $0x660] sm:$0xff]
      %v9521 = vld [vmem:[%s6 + $0x668] sm:$0xff]
      %v9522 = vld [vmem:[%s6 + $0x670] sm:$0xff]
      %v9523 = vld [vmem:[%s6 + $0x678] sm:$0xff]
      %v9524 = vld [vmem:[%s6 + $0x680] sm:$0xff]
      %v9525 = vld [vmem:[%s6 + $0x688] sm:$0xff]
      %v9526 = vld [vmem:[%s6 + $0x690] sm:$0xff]
      %v9527 = vld [vmem:[%s6 + $0x698] sm:$0xff]
      %v9528 = vld [vmem:[%s6 + $0x6a0] sm:$0xff]
      %v9529 = vld [vmem:[%s6 + $0x6a8] sm:$0xff]
      %v9530 = vld [vmem:[%s6 + $0x6b0] sm:$0xff]
      %v9531 = vld [vmem:[%s6 + $0x6b8] sm:$0xff]
      %v9532 = vld [vmem:[%s6 + $0x6c0] sm:$0xff]
      %v9533 = vld [vmem:[%s6 + $0x6c8] sm:$0xff]
      %v9534 = vld [vmem:[%s6 + $0x6d0] sm:$0xff]
      %v9535 = vld [vmem:[%s6 + $0x6d8] sm:$0xff]
      %v9536 = vld [vmem:[%s6 + $0x6e0] sm:$0xff]
      %v9537 = vld [vmem:[%s6 + $0x6e8] sm:$0xff]
      %v9538 = vld [vmem:[%s6 + $0x6f0] sm:$0xff]
      %v9539 = vld [vmem:[%s6 + $0x6f8] sm:$0xff]
      %v9540 = vld [vmem:[%s6 + $0x700] sm:$0xff]
      %v9541 = vld [vmem:[%s6 + $0x708] sm:$0xff]
      %v9542 = vld [vmem:[%s6 + $0x710] sm:$0xff]
      %v9543 = vld [vmem:[%s6 + $0x718] sm:$0xff]
      %v9544 = vld [vmem:[%s6 + $0x720] sm:$0xff]
      %v9545 = vld [vmem:[%s6 + $0x728] sm:$0xff]
      %v9546 = vld [vmem:[%s6 + $0x730] sm:$0xff]
      %v9547 = vld [vmem:[%s6 + $0x738] sm:$0xff]
      %v9548 = vld [vmem:[%s6 + $0x740] sm:$0xff]
      %v9549 = vld [vmem:[%s6 + $0x748] sm:$0xff]
      %v9550 = vld [vmem:[%s6 + $0x750] sm:$0xff]
      %v9551 = vld [vmem:[%s6 + $0x758] sm:$0xff]
      %v9552 = vld [vmem:[%s6 + $0x760] sm:$0xff]
      %v9553 = vld [vmem:[%s6 + $0x768] sm:$0xff]
      %v9554 = vld [vmem:[%s6 + $0x770] sm:$0xff]
      %v9555 = vld [vmem:[%s6 + $0x778] sm:$0xff]
      %v9556 = vld [vmem:[%s6 + $0x780] sm:$0xff]
      %v9557 = vld [vmem:[%s6 + $0x788] sm:$0xff]
      %v9558 = vld [vmem:[%s6 + $0x790] sm:$0xff]
      %v9559 = vld [vmem:[%s6 + $0x798] sm:$0xff]
      %v9560 = vld [vmem:[%s6 + $0x7a0] sm:$0xff]
      %v9561 = vld [vmem:[%s6 + $0x7a8] sm:$0xff]
      %v9562 = vld [vmem:[%s6 + $0x7b0] sm:$0xff]
      %v9563 = vld [vmem:[%s6 + $0x7b8] sm:$0xff]
      %v9564 = vld [vmem:[%s6 + $0x7c0] sm:$0xff]
      %v9565 = vld [vmem:[%s6 + $0x7c8] sm:$0xff]
      %v9566 = vld [vmem:[%s6 + $0x7d0] sm:$0xff]
      %v9567 = vld [vmem:[%s6 + $0x7d8] sm:$0xff]
      %v9568 = vld [vmem:[%s6 + $0x7e0] sm:$0xff]
      %v9569 = vld [vmem:[%s6 + $0x7e8] sm:$0xff]
      %v9570 = vld [vmem:[%s6 + $0x7f0] sm:$0xff]
      %v9571 = vld [vmem:[%s6 + $0x7f8] sm:$0xff]
      %v9572 = vld [vmem:[%s6 + $0x800] sm:$0xff]
      %v9573 = vld [vmem:[%s6 + $0x808] sm:$0xff]
      %v9574 = vld [vmem:[%s6 + $0x810] sm:$0xff]
      %v9575 = vld [vmem:[%s6 + $0x818] sm:$0xff]
      %v9576 = vld [vmem:[%s6 + $0x820] sm:$0xff]
      %v9577 = vld [vmem:[%s6 + $0x828] sm:$0xff]
      %v9578 = vld [vmem:[%s6 + $0x830] sm:$0xff]
      %v9579 = vld [vmem:[%s6 + $0x838] sm:$0xff]
      %v9580 = vld [vmem:[%s6 + $0x840] sm:$0xff]
      %v9581 = vld [vmem:[%s6 + $0x848] sm:$0xff]
      %v9582 = vld [vmem:[%s6 + $0x850] sm:$0xff]
      %v9583 = vld [vmem:[%s6 + $0x858] sm:$0xff]
      %v9584 = vld [vmem:[%s6 + $0x860] sm:$0xff]
      %v9585 = vld [vmem:[%s6 + $0x868] sm:$0xff]
      %v9586 = vld [vmem:[%s6 + $0x870] sm:$0xff]
      %v9587 = vld [vmem:[%s6 + $0x878] sm:$0xff]
      %v9588 = vld [vmem:[%s6 + $0x880] sm:$0xff]
      %v9589 = vld [vmem:[%s6 + $0x888] sm:$0xff]
      %v9590 = vld [vmem:[%s6 + $0x890] sm:$0xff]
      %v9591 = vld [vmem:[%s6 + $0x898] sm:$0xff]
      %v9592 = vld [vmem:[%s6 + $0x8a0] sm:$0xff]
      %v9593 = vld [vmem:[%s6 + $0x8a8] sm:$0xff]
      %v9594 = vld [vmem:[%s6 + $0x8b0] sm:$0xff]
      %v9595 = vld [vmem:[%s6 + $0x8b8] sm:$0xff]
      %v9596 = vld [vmem:[%s6 + $0x8c0] sm:$0xff]
      %v9597 = vld [vmem:[%s6 + $0x8c8] sm:$0xff]
      %v9598 = vld [vmem:[%s6 + $0x8d0] sm:$0xff]
      %v9599 = vld [vmem:[%s6 + $0x8d8] sm:$0xff]
      %v9600 = vld [vmem:[%s6 + $0x8e0] sm:$0xff]
      %v9601 = vld [vmem:[%s6 + $0x8e8] sm:$0xff]
      %v9602 = vld [vmem:[%s6 + $0x8f0] sm:$0xff]
      %v9603 = vld [vmem:[%s6 + $0x8f8] sm:$0xff]
      %v9604 = vld [vmem:[%s6 + $0x900] sm:$0xff]
      %v9605 = vld [vmem:[%s6 + $0x908] sm:$0xff]
      %v9606 = vld [vmem:[%s6 + $0x910] sm:$0xff]
      %v9607 = vld [vmem:[%s6 + $0x918] sm:$0xff]
      %v9608 = vld [vmem:[%s6 + $0x920] sm:$0xff]
      %v9609 = vld [vmem:[%s6 + $0x928] sm:$0xff]
      %v9610 = vld [vmem:[%s6 + $0x930] sm:$0xff]
      %v9611 = vld [vmem:[%s6 + $0x938] sm:$0xff]
      %v9612 = vld [vmem:[%s6 + $0x940] sm:$0xff]
      %v9613 = vld [vmem:[%s6 + $0x948] sm:$0xff]
      %v9614 = vld [vmem:[%s6 + $0x950] sm:$0xff]
      %v9615 = vld [vmem:[%s6 + $0x958] sm:$0xff]
      %v9616 = vld [vmem:[%s6 + $0x960] sm:$0xff]
      %v9617 = vld [vmem:[%s6 + $0x968] sm:$0xff]
      %v9618 = vld [vmem:[%s6 + $0x970] sm:$0xff]
      %v9619 = vld [vmem:[%s6 + $0x978] sm:$0xff]
      %v9620 = vld [vmem:[%s6 + $0x980] sm:$0xff]
      %v9621 = vld [vmem:[%s6 + $0x988] sm:$0xff]
      %v9622 = vld [vmem:[%s6 + $0x990] sm:$0xff]
      %v9623 = vld [vmem:[%s6 + $0x998] sm:$0xff]
      %v9624 = vld [vmem:[%s6 + $0x9a0] sm:$0xff]
      %v9625 = vld [vmem:[%s6 + $0x9a8] sm:$0xff]
      %v9626 = vld [vmem:[%s6 + $0x9b0] sm:$0xff]
      %v9627 = vld [vmem:[%s6 + $0x9b8] sm:$0xff]
      %v9628 = vld [vmem:[%s6 + $0x9c0] sm:$0xff]
      %v9629 = vld [vmem:[%s6 + $0x9c8] sm:$0xff]
      %v9630 = vld [vmem:[%s6 + $0x9d0] sm:$0xff]
      %v9631 = vld [vmem:[%s6 + $0x9d8] sm:$0xff]
      %v9632 = vld [vmem:[%s6 + $0x9e0] sm:$0xff]
      %v9633 = vld [vmem:[%s6 + $0x9e8] sm:$0xff]
      %v9634 = vld [vmem:[%s6 + $0x9f0] sm:$0xff]
      %v9635 = vld [vmem:[%s6 + $0x9f8] sm:$0xff]
      %v9636 = vld [vmem:[%s6 + $0xa00] sm:$0xff]
      %v9637 = vld [vmem:[%s6 + $0xa08] sm:$0xff]
      %v9638 = vld [vmem:[%s6 + $0xa10] sm:$0xff]
      %v9639 = vld [vmem:[%s6 + $0xa18] sm:$0xff]
      %v9640 = vld [vmem:[%s6 + $0xa20] sm:$0xff]
      %v9641 = vld [vmem:[%s6 + $0xa28] sm:$0xff]
      %v9642 = vld [vmem:[%s6 + $0xa30] sm:$0xff]
      %v9643 = vld [vmem:[%s6 + $0xa38] sm:$0xff]
      %v9644 = vld [vmem:[%s6 + $0xa40] sm:$0xff]
      %v9645 = vld [vmem:[%s6 + $0xa48] sm:$0xff]
      %v9646 = vld [vmem:[%s6 + $0xa50] sm:$0xff]
      %v9647 = vld [vmem:[%s6 + $0xa58] sm:$0xff]
      %v9648 = vld [vmem:[%s6 + $0xa60] sm:$0xff]
      %v9649 = vld [vmem:[%s6 + $0xa68] sm:$0xff]
      %v9650 = vld [vmem:[%s6 + $0xa70] sm:$0xff]
      %v9651 = vld [vmem:[%s6 + $0xa78] sm:$0xff]
      %v9652 = vld [vmem:[%s6 + $0xa80] sm:$0xff]
      %v9653 = vld [vmem:[%s6 + $0xa88] sm:$0xff]
      %v9654 = vld [vmem:[%s6 + $0xa90] sm:$0xff]
      %v9655 = vld [vmem:[%s6 + $0xa98] sm:$0xff]
      %v9656 = vld [vmem:[%s6 + $0xaa0] sm:$0xff]
      %v9657 = vld [vmem:[%s6 + $0xaa8] sm:$0xff]
      %v9658 = vld [vmem:[%s6 + $0xab0] sm:$0xff]
      %v9659 = vld [vmem:[%s6 + $0xab8] sm:$0xff]
      %v9660 = vld [vmem:[%s6 + $0xac0] sm:$0xff]
      %v9661 = vld [vmem:[%s6 + $0xac8] sm:$0xff]
      %v9662 = vld [vmem:[%s6 + $0xad0] sm:$0xff]
      %v9663 = vld [vmem:[%s6 + $0xad8] sm:$0xff]
      %v9664 = vld [vmem:[%s6 + $0xae0] sm:$0xff]
      %v9665 = vld [vmem:[%s6 + $0xae8] sm:$0xff]
      %v9666 = vld [vmem:[%s6 + $0xaf0] sm:$0xff]
      %v9667 = vld [vmem:[%s6 + $0xaf8] sm:$0xff]
      %v9668 = vld [vmem:[%s6 + $0xb00] sm:$0xff]
      %v9669 = vld [vmem:[%s6 + $0xb08] sm:$0xff]
      %v9670 = vld [vmem:[%s6 + $0xb10] sm:$0xff]
      %v9671 = vld [vmem:[%s6 + $0xb18] sm:$0xff]
      %v9672 = vld [vmem:[%s6 + $0xb20] sm:$0xff]
      %v9673 = vld [vmem:[%s6 + $0xb28] sm:$0xff]
      %v9674 = vld [vmem:[%s6 + $0xb30] sm:$0xff]
      %v9675 = vld [vmem:[%s6 + $0xb38] sm:$0xff]
      %v9676 = vld [vmem:[%s6 + $0xb40] sm:$0xff]
      %v9677 = vld [vmem:[%s6 + $0xb48] sm:$0xff]
      %v9678 = vld [vmem:[%s6 + $0xb50] sm:$0xff]
      %v9679 = vld [vmem:[%s6 + $0xb58] sm:$0xff]
      %v9680 = vld [vmem:[%s6 + $0xb60] sm:$0xff]
      %v9681 = vld [vmem:[%s6 + $0xb68] sm:$0xff]
      %v9682 = vld [vmem:[%s6 + $0xb70] sm:$0xff]
      %v9683 = vld [vmem:[%s6 + $0xb78] sm:$0xff]
      %v9684 = vld [vmem:[%s6 + $0xb80] sm:$0xff]
      %v9685 = vld [vmem:[%s6 + $0xb88] sm:$0xff]
      %v9686 = vld [vmem:[%s6 + $0xb90] sm:$0xff]
      %v9687 = vld [vmem:[%s6 + $0xb98] sm:$0xff]
      %v9688 = vld [vmem:[%s6 + $0xba0] sm:$0xff]
      %v9689 = vld [vmem:[%s6 + $0xba8] sm:$0xff]
      %v9690 = vld [vmem:[%s6 + $0xbb0] sm:$0xff]
      %v9691 = vld [vmem:[%s6 + $0xbb8] sm:$0xff]
      %v9692 = vld [vmem:[%s6 + $0xbc0] sm:$0xff]
      %v9693 = vld [vmem:[%s6 + $0xbc8] sm:$0xff]
      %v9694 = vld [vmem:[%s6 + $0xbd0] sm:$0xff]
      %v9695 = vld [vmem:[%s6 + $0xbd8] sm:$0xff]
      %v9696 = vld [vmem:[%s6 + $0xbe0] sm:$0xff]
      %v9697 = vld [vmem:[%s6 + $0xbe8] sm:$0xff]
      %v9698 = vld [vmem:[%s6 + $0xbf0] sm:$0xff]
      %v9699 = vld [vmem:[%s6 + $0xbf8] sm:$0xff]
      %v9700 = vld [vmem:[%s6 + $0xc00] sm:$0xff]
      %v9701 = vld [vmem:[%s6 + $0xc08] sm:$0xff]
      %v9702 = vld [vmem:[%s6 + $0xc10] sm:$0xff]
      %v9703 = vld [vmem:[%s6 + $0xc18] sm:$0xff]
      %v9704 = vld [vmem:[%s6 + $0xc20] sm:$0xff]
      %v9705 = vld [vmem:[%s6 + $0xc28] sm:$0xff]
      %v9706 = vld [vmem:[%s6 + $0xc30] sm:$0xff]
      %v9707 = vld [vmem:[%s6 + $0xc38] sm:$0xff]
      %v9708 = vld [vmem:[%s6 + $0xc40] sm:$0xff]
      %v9709 = vld [vmem:[%s6 + $0xc48] sm:$0xff]
      %v9710 = vld [vmem:[%s6 + $0xc50] sm:$0xff]
      %v9711 = vld [vmem:[%s6 + $0xc58] sm:$0xff]
      %v9712 = vld [vmem:[%s6 + $0xc60] sm:$0xff]
      %v9713 = vld [vmem:[%s6 + $0xc68] sm:$0xff]
      %v9714 = vld [vmem:[%s6 + $0xc70] sm:$0xff]
      %v9715 = vld [vmem:[%s6 + $0xc78] sm:$0xff]
      %v9716 = vld [vmem:[%s6 + $0xc80] sm:$0xff]
      %v9717 = vld [vmem:[%s6 + $0xc88] sm:$0xff]
      %v9718 = vld [vmem:[%s6 + $0xc90] sm:$0xff]
      %v9719 = vld [vmem:[%s6 + $0xc98] sm:$0xff]
      %v9720 = vld [vmem:[%s6 + $0xca0] sm:$0xff]
      %v9721 = vld [vmem:[%s6 + $0xca8] sm:$0xff]
      %v9722 = vld [vmem:[%s6 + $0xcb0] sm:$0xff]
      %v9723 = vld [vmem:[%s6 + $0xcb8] sm:$0xff]
      %v9724 = vld [vmem:[%s6 + $0xcc0] sm:$0xff]
      %v9725 = vld [vmem:[%s6 + $0xcc8] sm:$0xff]
      %v9726 = vld [vmem:[%s6 + $0xcd0] sm:$0xff]
      %v9727 = vld [vmem:[%s6 + $0xcd8] sm:$0xff]
      %v9728 = vld [vmem:[%s6 + $0xce0] sm:$0xff]
      %v9729 = vld [vmem:[%s6 + $0xce8] sm:$0xff]
      %v9730 = vld [vmem:[%s6 + $0xcf0] sm:$0xff]
      %v9731 = vld [vmem:[%s6 + $0xcf8] sm:$0xff]
      %v9732 = vld [vmem:[%s6 + $0xd00] sm:$0xff]
      %v9733 = vld [vmem:[%s6 + $0xd08] sm:$0xff]
      %v9734 = vld [vmem:[%s6 + $0xd10] sm:$0xff]
      %v9735 = vld [vmem:[%s6 + $0xd18] sm:$0xff]
      %v9736 = vld [vmem:[%s6 + $0xd20] sm:$0xff]
      %v9737 = vld [vmem:[%s6 + $0xd28] sm:$0xff]
      %v9738 = vld [vmem:[%s6 + $0xd30] sm:$0xff]
      %v9739 = vld [vmem:[%s6 + $0xd38] sm:$0xff]
      %v9740 = vld [vmem:[%s6 + $0xd40] sm:$0xff]
      %v9741 = vld [vmem:[%s6 + $0xd48] sm:$0xff]
      %v9742 = vld [vmem:[%s6 + $0xd50] sm:$0xff]
      %v9743 = vld [vmem:[%s6 + $0xd58] sm:$0xff]
      %v9744 = vld [vmem:[%s6 + $0xd60] sm:$0xff]
      %v9745 = vld [vmem:[%s6 + $0xd68] sm:$0xff]
      %v9746 = vld [vmem:[%s6 + $0xd70] sm:$0xff]
      %v9747 = vld [vmem:[%s6 + $0xd78] sm:$0xff]
      %v9748 = vld [vmem:[%s6 + $0xd80] sm:$0xff]
      %v9749 = vld [vmem:[%s6 + $0xd88] sm:$0xff]
      %v9750 = vld [vmem:[%s6 + $0xd90] sm:$0xff]
      %v9751 = vld [vmem:[%s6 + $0xd98] sm:$0xff]
      %v9752 = vld [vmem:[%s6 + $0xda0] sm:$0xff]
      %v9753 = vld [vmem:[%s6 + $0xda8] sm:$0xff]
      %v9754 = vld [vmem:[%s6 + $0xdb0] sm:$0xff]
      %v9755 = vld [vmem:[%s6 + $0xdb8] sm:$0xff]
      %v9756 = vld [vmem:[%s6 + $0xdc0] sm:$0xff]
      %v9757 = vld [vmem:[%s6 + $0xdc8] sm:$0xff]
      %v9758 = vld [vmem:[%s6 + $0xdd0] sm:$0xff]
      %v9759 = vld [vmem:[%s6 + $0xdd8] sm:$0xff]
      %v9760 = vld [vmem:[%s6 + $0xde0] sm:$0xff]
      %v9761 = vld [vmem:[%s6 + $0xde8] sm:$0xff]
      %v9762 = vld [vmem:[%s6 + $0xdf0] sm:$0xff]
      %v9763 = vld [vmem:[%s6 + $0xdf8] sm:$0xff]
      %v9764 = vmul.f32 %v9288, %v9316
      %v9765 = vmul.f32 %v9289, %v9317
      %v9766 = vmul.f32 %v9290, %v9318
      %v9767 = vmul.f32 %v9291, %v9319
      %v9768 = vmul.f32 %v9292, %v9320
      %v9769 = vmul.f32 %v9293, %v9321
      %v9770 = vmul.f32 %v9294, %v9322
      %v9771 = vmul.f32 %v9295, %v9323
      %v9772 = vmul.f32 %v9296, %v9324
      %v9773 = vmul.f32 %v9297, %v9325
      %v9774 = vmul.f32 %v9298, %v9326
      %v9775 = vmul.f32 %v9299, %v9327
      %v9776 = vmul.f32 %v9300, %v9328
      %v9777 = vmul.f32 %v9301, %v9329
      %v9778 = vmul.f32 %v9302, %v9330
      %v9779 = vmul.f32 %v9303, %v9331
      %v9780 = vmul.f32 %v9304, %v9332
      %v9781 = vmul.f32 %v9305, %v9333
      %v9782 = vmul.f32 %v9306, %v9334
      %v9783 = vmul.f32 %v9307, %v9335
      %v9784 = vmul.f32 %v9308, %v9336
      %v9785 = vmul.f32 %v9309, %v9337
      %v9786 = vmul.f32 %v9310, %v9338
      %v9787 = vmul.f32 %v9311, %v9339
      %v9788 = vmul.f32 %v9312, %v9340
      %v9789 = vmul.f32 %v9313, %v9341
      %v9790 = vmul.f32 %v9314, %v9342
      %v9791 = vmul.f32 %v9315, %v9343
      %v9792 = vmul.f32 %v9288, %v9344
      %v9793 = vmul.f32 %v9289, %v9345
      %v9794 = vmul.f32 %v9290, %v9346
      %v9795 = vmul.f32 %v9291, %v9347
      %v9796 = vmul.f32 %v9292, %v9348
      %v9797 = vmul.f32 %v9293, %v9349
      %v9798 = vmul.f32 %v9294, %v9350
      %v9799 = vmul.f32 %v9295, %v9351
      %v9800 = vmul.f32 %v9296, %v9352
      %v9801 = vmul.f32 %v9297, %v9353
      %v9802 = vmul.f32 %v9298, %v9354
      %v9803 = vmul.f32 %v9299, %v9355
      %v9804 = vmul.f32 %v9300, %v9356
      %v9805 = vmul.f32 %v9301, %v9357
      %v9806 = vmul.f32 %v9302, %v9358
      %v9807 = vmul.f32 %v9303, %v9359
      %v9808 = vmul.f32 %v9304, %v9360
      %v9809 = vmul.f32 %v9305, %v9361
      %v9810 = vmul.f32 %v9306, %v9362
      %v9811 = vmul.f32 %v9307, %v9363
      %v9812 = vmul.f32 %v9308, %v9364
      %v9813 = vmul.f32 %v9309, %v9365
      %v9814 = vmul.f32 %v9310, %v9366
      %v9815 = vmul.f32 %v9311, %v9367
      %v9816 = vmul.f32 %v9312, %v9368
      %v9817 = vmul.f32 %v9313, %v9369
      %v9818 = vmul.f32 %v9314, %v9370
      %v9819 = vmul.f32 %v9315, %v9371
      %v9820 = vmul.f32 %v9288, %v9372
      %v9821 = vmul.f32 %v9289, %v9373
      %v9822 = vmul.f32 %v9290, %v9374
      %v9823 = vmul.f32 %v9291, %v9375
      %v9824 = vmul.f32 %v9292, %v9376
      %v9825 = vmul.f32 %v9293, %v9377
      %v9826 = vmul.f32 %v9294, %v9378
      %v9827 = vmul.f32 %v9295, %v9379
      %v9828 = vmul.f32 %v9296, %v9380
      %v9829 = vmul.f32 %v9297, %v9381
      %v9830 = vmul.f32 %v9298, %v9382
      %v9831 = vmul.f32 %v9299, %v9383
      %v9832 = vmul.f32 %v9300, %v9384
      %v9833 = vmul.f32 %v9301, %v9385
      %v9834 = vmul.f32 %v9302, %v9386
      %v9835 = vmul.f32 %v9303, %v9387
      %v9836 = vmul.f32 %v9304, %v9388
      %v9837 = vmul.f32 %v9305, %v9389
      %v9838 = vmul.f32 %v9306, %v9390
      %v9839 = vmul.f32 %v9307, %v9391
      %v9840 = vmul.f32 %v9308, %v9392
      %v9841 = vmul.f32 %v9309, %v9393
      %v9842 = vmul.f32 %v9310, %v9394
      %v9843 = vmul.f32 %v9311, %v9395
      %v9844 = vmul.f32 %v9312, %v9396
      %v9845 = vmul.f32 %v9313, %v9397
      %v9846 = vmul.f32 %v9314, %v9398
      %v9847 = vmul.f32 %v9315, %v9399
      %v9848 = vmul.f32 %v9288, %v9400
      %v9849 = vmul.f32 %v9289, %v9401
      %v9850 = vmul.f32 %v9290, %v9402
      %v9851 = vmul.f32 %v9291, %v9403
      %v9852 = vmul.f32 %v9292, %v9404
      %v9853 = vmul.f32 %v9293, %v9405
      %v9854 = vmul.f32 %v9294, %v9406
      %v9855 = vmul.f32 %v9295, %v9407
      %v9856 = vmul.f32 %v9296, %v9408
      %v9857 = vmul.f32 %v9297, %v9409
      %v9858 = vmul.f32 %v9298, %v9410
      %v9859 = vmul.f32 %v9299, %v9411
      %v9860 = vmul.f32 %v9300, %v9412
      %v9861 = vmul.f32 %v9301, %v9413
      %v9862 = vmul.f32 %v9302, %v9414
      %v9863 = vmul.f32 %v9303, %v9415
      %v9864 = vmul.f32 %v9304, %v9416
      %v9865 = vmul.f32 %v9305, %v9417
      %v9866 = vmul.f32 %v9306, %v9418
      %v9867 = vmul.f32 %v9307, %v9419
      %v9868 = vmul.f32 %v9308, %v9420
      %v9869 = vmul.f32 %v9309, %v9421
      %v9870 = vmul.f32 %v9310, %v9422
      %v9871 = vmul.f32 %v9311, %v9423
      %v9872 = vmul.f32 %v9312, %v9424
      %v9873 = vmul.f32 %v9313, %v9425
      %v9874 = vmul.f32 %v9314, %v9426
      %v9875 = vmul.f32 %v9315, %v9427
      %v9876 = vmul.f32 %v9288, %v9428
      %v9877 = vmul.f32 %v9289, %v9429
      %v9878 = vmul.f32 %v9290, %v9430
      %v9879 = vmul.f32 %v9291, %v9431
      %v9880 = vmul.f32 %v9292, %v9432
      %v9881 = vmul.f32 %v9293, %v9433
      %v9882 = vmul.f32 %v9294, %v9434
      %v9883 = vmul.f32 %v9295, %v9435
      %v9884 = vmul.f32 %v9296, %v9436
      %v9885 = vmul.f32 %v9297, %v9437
      %v9886 = vmul.f32 %v9298, %v9438
      %v9887 = vmul.f32 %v9299, %v9439
      %v9888 = vmul.f32 %v9300, %v9440
      %v9889 = vmul.f32 %v9301, %v9441
      %v9890 = vmul.f32 %v9302, %v9442
      %v9891 = vmul.f32 %v9303, %v9443
      %v9892 = vmul.f32 %v9304, %v9444
      %v9893 = vmul.f32 %v9305, %v9445
      %v9894 = vmul.f32 %v9306, %v9446
      %v9895 = vmul.f32 %v9307, %v9447
      %v9896 = vmul.f32 %v9308, %v9448
      %v9897 = vmul.f32 %v9309, %v9449
      %v9898 = vmul.f32 %v9310, %v9450
      %v9899 = vmul.f32 %v9311, %v9451
      %v9900 = vmul.f32 %v9312, %v9452
      %v9901 = vmul.f32 %v9313, %v9453
      %v9902 = vmul.f32 %v9314, %v9454
      %v9903 = vmul.f32 %v9315, %v9455
      %v9904 = vmul.f32 %v9288, %v9456
      %v9905 = vmul.f32 %v9289, %v9457
      %v9906 = vmul.f32 %v9290, %v9458
      %v9907 = vmul.f32 %v9291, %v9459
      %v9908 = vmul.f32 %v9292, %v9460
      %v9909 = vmul.f32 %v9293, %v9461
      %v9910 = vmul.f32 %v9294, %v9462
      %v9911 = vmul.f32 %v9295, %v9463
      %v9912 = vmul.f32 %v9296, %v9464
      %v9913 = vmul.f32 %v9297, %v9465
      %v9914 = vmul.f32 %v9298, %v9466
      %v9915 = vmul.f32 %v9299, %v9467
      %v9916 = vmul.f32 %v9300, %v9468
      %v9917 = vmul.f32 %v9301, %v9469
      %v9918 = vmul.f32 %v9302, %v9470
      %v9919 = vmul.f32 %v9303, %v9471
      %v9920 = vmul.f32 %v9304, %v9472
      %v9921 = vmul.f32 %v9305, %v9473
      %v9922 = vmul.f32 %v9306, %v9474
      %v9923 = vmul.f32 %v9307, %v9475
      %v9924 = vmul.f32 %v9308, %v9476
      %v9925 = vmul.f32 %v9309, %v9477
      %v9926 = vmul.f32 %v9310, %v9478
      %v9927 = vmul.f32 %v9311, %v9479
      %v9928 = vmul.f32 %v9312, %v9480
      %v9929 = vmul.f32 %v9313, %v9481
      %v9930 = vmul.f32 %v9314, %v9482
      %v9931 = vmul.f32 %v9315, %v9483
      %v9932 = vmul.f32 %v9288, %v9484
      %v9933 = vmul.f32 %v9289, %v9485
      %v9934 = vmul.f32 %v9290, %v9486
      %v9935 = vmul.f32 %v9291, %v9487
      %v9936 = vmul.f32 %v9292, %v9488
      %v9937 = vmul.f32 %v9293, %v9489
      %v9938 = vmul.f32 %v9294, %v9490
      %v9939 = vmul.f32 %v9295, %v9491
      %v9940 = vmul.f32 %v9296, %v9492
      %v9941 = vmul.f32 %v9297, %v9493
      %v9942 = vmul.f32 %v9298, %v9494
      %v9943 = vmul.f32 %v9299, %v9495
      %v9944 = vmul.f32 %v9300, %v9496
      %v9945 = vmul.f32 %v9301, %v9497
      %v9946 = vmul.f32 %v9302, %v9498
      %v9947 = vmul.f32 %v9303, %v9499
      %v9948 = vmul.f32 %v9304, %v9500
      %v9949 = vmul.f32 %v9305, %v9501
      %v9950 = vmul.f32 %v9306, %v9502
      %v9951 = vmul.f32 %v9307, %v9503
      %v9952 = vmul.f32 %v9308, %v9504
      %v9953 = vmul.f32 %v9309, %v9505
      %v9954 = vmul.f32 %v9310, %v9506
      %v9955 = vmul.f32 %v9311, %v9507
      %v9956 = vmul.f32 %v9312, %v9508
      %v9957 = vmul.f32 %v9313, %v9509
      %v9958 = vmul.f32 %v9314, %v9510
      %v9959 = vmul.f32 %v9315, %v9511
      %v9960 = vmul.f32 %v9288, %v9512
      %v9961 = vmul.f32 %v9289, %v9513
      %v9962 = vmul.f32 %v9290, %v9514
      %v9963 = vmul.f32 %v9291, %v9515
      %v9964 = vmul.f32 %v9292, %v9516
      %v9965 = vmul.f32 %v9293, %v9517
      %v9966 = vmul.f32 %v9294, %v9518
      %v9967 = vmul.f32 %v9295, %v9519
      %v9968 = vmul.f32 %v9296, %v9520
      %v9969 = vmul.f32 %v9297, %v9521
      %v9970 = vmul.f32 %v9298, %v9522
      %v9971 = vmul.f32 %v9299, %v9523
      %v9972 = vmul.f32 %v9300, %v9524
      %v9973 = vmul.f32 %v9301, %v9525
      %v9974 = vmul.f32 %v9302, %v9526
      %v9975 = vmul.f32 %v9303, %v9527
      %v9976 = vmul.f32 %v9304, %v9528
      %v9977 = vmul.f32 %v9305, %v9529
      %v9978 = vmul.f32 %v9306, %v9530
      %v9979 = vmul.f32 %v9307, %v9531
      %v9980 = vmul.f32 %v9308, %v9532
      %v9981 = vmul.f32 %v9309, %v9533
      %v9982 = vmul.f32 %v9310, %v9534
      %v9983 = vmul.f32 %v9311, %v9535
      %v9984 = vmul.f32 %v9312, %v9536
      %v9985 = vmul.f32 %v9313, %v9537
      %v9986 = vmul.f32 %v9314, %v9538
      %v9987 = vmul.f32 %v9315, %v9539
      %v9988 = vmul.f32 %v9288, %v9540
      %v9989 = vmul.f32 %v9289, %v9541
      %v9990 = vmul.f32 %v9290, %v9542
      %v9991 = vmul.f32 %v9291, %v9543
      %v9992 = vmul.f32 %v9292, %v9544
      %v9993 = vmul.f32 %v9293, %v9545
      %v9994 = vmul.f32 %v9294, %v9546
      %v9995 = vmul.f32 %v9295, %v9547
      %v9996 = vmul.f32 %v9296, %v9548
      %v9997 = vmul.f32 %v9297, %v9549
      %v9998 = vmul.f32 %v9298, %v9550
      %v9999 = vmul.f32 %v9299, %v9551
      %v10000 = vmul.f32 %v9300, %v9552
      %v10001 = vmul.f32 %v9301, %v9553
      %v10002 = vmul.f32 %v9302, %v9554
      %v10003 = vmul.f32 %v9303, %v9555
      %v10004 = vmul.f32 %v9304, %v9556
      %v10005 = vmul.f32 %v9305, %v9557
      %v10006 = vmul.f32 %v9306, %v9558
      %v10007 = vmul.f32 %v9307, %v9559
      %v10008 = vmul.f32 %v9308, %v9560
      %v10009 = vmul.f32 %v9309, %v9561
      %v10010 = vmul.f32 %v9310, %v9562
      %v10011 = vmul.f32 %v9311, %v9563
      %v10012 = vmul.f32 %v9312, %v9564
      %v10013 = vmul.f32 %v9313, %v9565
      %v10014 = vmul.f32 %v9314, %v9566
      %v10015 = vmul.f32 %v9315, %v9567
      %v10016 = vmul.f32 %v9288, %v9568
      %v10017 = vmul.f32 %v9289, %v9569
      %v10018 = vmul.f32 %v9290, %v9570
      %v10019 = vmul.f32 %v9291, %v9571
      %v10020 = vmul.f32 %v9292, %v9572
      %v10021 = vmul.f32 %v9293, %v9573
      %v10022 = vmul.f32 %v9294, %v9574
      %v10023 = vmul.f32 %v9295, %v9575
      %v10024 = vmul.f32 %v9296, %v9576
      %v10025 = vmul.f32 %v9297, %v9577
      %v10026 = vmul.f32 %v9298, %v9578
      %v10027 = vmul.f32 %v9299, %v9579
      %v10028 = vmul.f32 %v9300, %v9580
      %v10029 = vmul.f32 %v9301, %v9581
      %v10030 = vmul.f32 %v9302, %v9582
      %v10031 = vmul.f32 %v9303, %v9583
      %v10032 = vmul.f32 %v9304, %v9584
      %v10033 = vmul.f32 %v9305, %v9585
      %v10034 = vmul.f32 %v9306, %v9586
      %v10035 = vmul.f32 %v9307, %v9587
      %v10036 = vmul.f32 %v9308, %v9588
      %v10037 = vmul.f32 %v9309, %v9589
      %v10038 = vmul.f32 %v9310, %v9590
      %v10039 = vmul.f32 %v9311, %v9591
      %v10040 = vmul.f32 %v9312, %v9592
      %v10041 = vmul.f32 %v9313, %v9593
      %v10042 = vmul.f32 %v9314, %v9594
      %v10043 = vmul.f32 %v9315, %v9595
      %v10044 = vmul.f32 %v9288, %v9596
      %v10045 = vmul.f32 %v9289, %v9597
      %v10046 = vmul.f32 %v9290, %v9598
      %v10047 = vmul.f32 %v9291, %v9599
      %v10048 = vmul.f32 %v9292, %v9600
      %v10049 = vmul.f32 %v9293, %v9601
      %v10050 = vmul.f32 %v9294, %v9602
      %v10051 = vmul.f32 %v9295, %v9603
      %v10052 = vmul.f32 %v9296, %v9604
      %v10053 = vmul.f32 %v9297, %v9605
      %v10054 = vmul.f32 %v9298, %v9606
      %v10055 = vmul.f32 %v9299, %v9607
      %v10056 = vmul.f32 %v9300, %v9608
      %v10057 = vmul.f32 %v9301, %v9609
      %v10058 = vmul.f32 %v9302, %v9610
      %v10059 = vmul.f32 %v9303, %v9611
      %v10060 = vmul.f32 %v9304, %v9612
      %v10061 = vmul.f32 %v9305, %v9613
      %v10062 = vmul.f32 %v9306, %v9614
      %v10063 = vmul.f32 %v9307, %v9615
      %v10064 = vmul.f32 %v9308, %v9616
      %v10065 = vmul.f32 %v9309, %v9617
      %v10066 = vmul.f32 %v9310, %v9618
      %v10067 = vmul.f32 %v9311, %v9619
      %v10068 = vmul.f32 %v9312, %v9620
      %v10069 = vmul.f32 %v9313, %v9621
      %v10070 = vmul.f32 %v9314, %v9622
      %v10071 = vmul.f32 %v9315, %v9623
      %v10072 = vmul.f32 %v9288, %v9624
      %v10073 = vmul.f32 %v9289, %v9625
      %v10074 = vmul.f32 %v9290, %v9626
      %v10075 = vmul.f32 %v9291, %v9627
      %v10076 = vmul.f32 %v9292, %v9628
      %v10077 = vmul.f32 %v9293, %v9629
      %v10078 = vmul.f32 %v9294, %v9630
      %v10079 = vmul.f32 %v9295, %v9631
      %v10080 = vmul.f32 %v9296, %v9632
      %v10081 = vmul.f32 %v9297, %v9633
      %v10082 = vmul.f32 %v9298, %v9634
      %v10083 = vmul.f32 %v9299, %v9635
      %v10084 = vmul.f32 %v9300, %v9636
      %v10085 = vmul.f32 %v9301, %v9637
      %v10086 = vmul.f32 %v9302, %v9638
      %v10087 = vmul.f32 %v9303, %v9639
      %v10088 = vmul.f32 %v9304, %v9640
      %v10089 = vmul.f32 %v9305, %v9641
      %v10090 = vmul.f32 %v9306, %v9642
      %v10091 = vmul.f32 %v9307, %v9643
      %v10092 = vmul.f32 %v9308, %v9644
      %v10093 = vmul.f32 %v9309, %v9645
      %v10094 = vmul.f32 %v9310, %v9646
      %v10095 = vmul.f32 %v9311, %v9647
      %v10096 = vmul.f32 %v9312, %v9648
      %v10097 = vmul.f32 %v9313, %v9649
      %v10098 = vmul.f32 %v9314, %v9650
      %v10099 = vmul.f32 %v9315, %v9651
      %v10100 = vmul.f32 %v9288, %v9652
      %v10101 = vmul.f32 %v9289, %v9653
      %v10102 = vmul.f32 %v9290, %v9654
      %v10103 = vmul.f32 %v9291, %v9655
      %v10104 = vmul.f32 %v9292, %v9656
      %v10105 = vmul.f32 %v9293, %v9657
      %v10106 = vmul.f32 %v9294, %v9658
      %v10107 = vmul.f32 %v9295, %v9659
      %v10108 = vmul.f32 %v9296, %v9660
      %v10109 = vmul.f32 %v9297, %v9661
      %v10110 = vmul.f32 %v9298, %v9662
      %v10111 = vmul.f32 %v9299, %v9663
      %v10112 = vmul.f32 %v9300, %v9664
      %v10113 = vmul.f32 %v9301, %v9665
      %v10114 = vmul.f32 %v9302, %v9666
      %v10115 = vmul.f32 %v9303, %v9667
      %v10116 = vmul.f32 %v9304, %v9668
      %v10117 = vmul.f32 %v9305, %v9669
      %v10118 = vmul.f32 %v9306, %v9670
      %v10119 = vmul.f32 %v9307, %v9671
      %v10120 = vmul.f32 %v9308, %v9672
      %v10121 = vmul.f32 %v9309, %v9673
      %v10122 = vmul.f32 %v9310, %v9674
      %v10123 = vmul.f32 %v9311, %v9675
      %v10124 = vmul.f32 %v9312, %v9676
      %v10125 = vmul.f32 %v9313, %v9677
      %v10126 = vmul.f32 %v9314, %v9678
      %v10127 = vmul.f32 %v9315, %v9679
      %v10128 = vmul.f32 %v9288, %v9680
      %v10129 = vmul.f32 %v9289, %v9681
      %v10130 = vmul.f32 %v9290, %v9682
      %v10131 = vmul.f32 %v9291, %v9683
      %v10132 = vmul.f32 %v9292, %v9684
      %v10133 = vmul.f32 %v9293, %v9685
      %v10134 = vmul.f32 %v9294, %v9686
      %v10135 = vmul.f32 %v9295, %v9687
      %v10136 = vmul.f32 %v9296, %v9688
      %v10137 = vmul.f32 %v9297, %v9689
      %v10138 = vmul.f32 %v9298, %v9690
      %v10139 = vmul.f32 %v9299, %v9691
      %v10140 = vmul.f32 %v9300, %v9692
      %v10141 = vmul.f32 %v9301, %v9693
      %v10142 = vmul.f32 %v9302, %v9694
      %v10143 = vmul.f32 %v9303, %v9695
      %v10144 = vmul.f32 %v9304, %v9696
      %v10145 = vmul.f32 %v9305, %v9697
      %v10146 = vmul.f32 %v9306, %v9698
      %v10147 = vmul.f32 %v9307, %v9699
      %v10148 = vmul.f32 %v9308, %v9700
      %v10149 = vmul.f32 %v9309, %v9701
      %v10150 = vmul.f32 %v9310, %v9702
      %v10151 = vmul.f32 %v9311, %v9703
      %v10152 = vmul.f32 %v9312, %v9704
      %v10153 = vmul.f32 %v9313, %v9705
      %v10154 = vmul.f32 %v9314, %v9706
      %v10155 = vmul.f32 %v9315, %v9707
      %v10156 = vmul.f32 %v9288, %v9708
      %v10157 = vmul.f32 %v9289, %v9709
      %v10158 = vmul.f32 %v9290, %v9710
      %v10159 = vmul.f32 %v9291, %v9711
      %v10160 = vmul.f32 %v9292, %v9712
      %v10161 = vmul.f32 %v9293, %v9713
      %v10162 = vmul.f32 %v9294, %v9714
      %v10163 = vmul.f32 %v9295, %v9715
      %v10164 = vmul.f32 %v9296, %v9716
      %v10165 = vmul.f32 %v9297, %v9717
      %v10166 = vmul.f32 %v9298, %v9718
      %v10167 = vmul.f32 %v9299, %v9719
      %v10168 = vmul.f32 %v9300, %v9720
      %v10169 = vmul.f32 %v9301, %v9721
      %v10170 = vmul.f32 %v9302, %v9722
      %v10171 = vmul.f32 %v9303, %v9723
      %v10172 = vmul.f32 %v9304, %v9724
      %v10173 = vmul.f32 %v9305, %v9725
      %v10174 = vmul.f32 %v9306, %v9726
      %v10175 = vmul.f32 %v9307, %v9727
      %v10176 = vmul.f32 %v9308, %v9728
      %v10177 = vmul.f32 %v9309, %v9729
      %v10178 = vmul.f32 %v9310, %v9730
      %v10179 = vmul.f32 %v9311, %v9731
      %v10180 = vmul.f32 %v9312, %v9732
      %v10181 = vmul.f32 %v9313, %v9733
      %v10182 = vmul.f32 %v9314, %v9734
      %v10183 = vmul.f32 %v9315, %v9735
      %v10184 = vmul.f32 %v9288, %v9736
      %v10185 = vmul.f32 %v9289, %v9737
      %v10186 = vmul.f32 %v9290, %v9738
      %v10187 = vmul.f32 %v9291, %v9739
      %v10188 = vmul.f32 %v9292, %v9740
      %v10189 = vmul.f32 %v9293, %v9741
      %v10190 = vmul.f32 %v9294, %v9742
      %v10191 = vmul.f32 %v9295, %v9743
      %v10192 = vmul.f32 %v9296, %v9744
      %v10193 = vmul.f32 %v9297, %v9745
      %v10194 = vmul.f32 %v9298, %v9746
      %v10195 = vmul.f32 %v9299, %v9747
      %v10196 = vmul.f32 %v9300, %v9748
      %v10197 = vmul.f32 %v9301, %v9749
      %v10198 = vmul.f32 %v9302, %v9750
      %v10199 = vmul.f32 %v9303, %v9751
      %v10200 = vmul.f32 %v9304, %v9752
      %v10201 = vmul.f32 %v9305, %v9753
      %v10202 = vmul.f32 %v9306, %v9754
      %v10203 = vmul.f32 %v9307, %v9755
      %v10204 = vmul.f32 %v9308, %v9756
      %v10205 = vmul.f32 %v9309, %v9757
      %v10206 = vmul.f32 %v9310, %v9758
      %v10207 = vmul.f32 %v9311, %v9759
      %v10208 = vmul.f32 %v9312, %v9760
      %v10209 = vmul.f32 %v9313, %v9761
      %v10210 = vmul.f32 %v9314, %v9762
      %v10211 = vmul.f32 %v9315, %v9763
      %v10212 = vsel %vm9165, %v9764, 0.0
      %v10213 = vsel %vm9165, %v9765, 0.0
      %v10214 = vadd.f32 %v10212, %v10213
      %v10215 = vsel %vm9165, %v9766, 0.0
      %v10216 = vadd.f32 %v10214, %v10215
      %v10217 = vsel %vm9165, %v9767, 0.0
      %v10218 = vadd.f32 %v10216, %v10217
      %v10219 = vsel %vm9165, %v9768, 0.0
      %v10220 = vadd.f32 %v10218, %v10219
      %v10221 = vsel %vm9165, %v9769, 0.0
      %v10222 = vadd.f32 %v10220, %v10221
      %v10223 = vsel %vm9165, %v9770, 0.0
      %v10224 = vadd.f32 %v10222, %v10223
      %v10225 = vsel %vm9165, %v9771, 0.0
      %v10226 = vadd.f32 %v10224, %v10225
      %v10227 = vsel %vm9165, %v9772, 0.0
      %v10228 = vadd.f32 %v10226, %v10227
      %v10229 = vsel %vm9165, %v9773, 0.0
      %v10230 = vadd.f32 %v10228, %v10229
      %v10231 = vsel %vm9165, %v9774, 0.0
      %v10232 = vadd.f32 %v10230, %v10231
      %v10233 = vsel %vm9165, %v9775, 0.0
      %v10234 = vadd.f32 %v10232, %v10233
      %v10235 = vsel %vm9165, %v9776, 0.0
      %v10236 = vadd.f32 %v10234, %v10235
      %v10237 = vsel %vm9165, %v9777, 0.0
      %v10238 = vadd.f32 %v10236, %v10237
      %v10239 = vsel %vm9165, %v9778, 0.0
      %v10240 = vadd.f32 %v10238, %v10239
      %v10241 = vsel %vm9165, %v9779, 0.0
      %v10242 = vadd.f32 %v10240, %v10241
      %v10243 = vsel %vm9165, %v9780, 0.0
      %v10244 = vadd.f32 %v10242, %v10243
      %v10245 = vsel %vm9165, %v9781, 0.0
      %v10246 = vadd.f32 %v10244, %v10245
      %v10247 = vsel %vm9165, %v9782, 0.0
      %v10248 = vadd.f32 %v10246, %v10247
      %v10249 = vsel %vm9165, %v9783, 0.0
      %v10250 = vadd.f32 %v10248, %v10249
      %v10251 = vsel %vm9165, %v9784, 0.0
      %v10252 = vadd.f32 %v10250, %v10251
      %v10253 = vsel %vm9165, %v9785, 0.0
      %v10254 = vadd.f32 %v10252, %v10253
      %v10255 = vsel %vm9165, %v9786, 0.0
      %v10256 = vadd.f32 %v10254, %v10255
      %v10257 = vsel %vm9165, %v9787, 0.0
      %v10258 = vadd.f32 %v10256, %v10257
      %v10259 = vsel %vm9165, %v9788, 0.0
      %v10260 = vadd.f32 %v10258, %v10259
      %v10261 = vsel %vm9165, %v9789, 0.0
      %v10262 = vadd.f32 %v10260, %v10261
      %v10263 = vsel %vm9165, %v9790, 0.0
      %v10264 = vadd.f32 %v10262, %v10263
      %v10265 = vsel %vm9165, %v9791, 0.0
      %v10266 = vadd.f32 %v10264, %v10265
      %v10267 = vrot.slane %v10266, 4
      %v10268 = vadd.f32 %v10266, %v10267
      %v10269 = vrot.slane %v10268, 2
      %v10270 = vadd.f32 %v10268, %v10269
      %v10271 = vrot.slane %v10270, 1
      %v10272 = vadd.f32 %v10270, %v10271
      %v10273 = vsel %vm9165, %v9792, 0.0
      %v10274 = vsel %vm9165, %v9793, 0.0
      %v10275 = vadd.f32 %v10273, %v10274
      %v10276 = vsel %vm9165, %v9794, 0.0
      %v10277 = vadd.f32 %v10275, %v10276
      %v10278 = vsel %vm9165, %v9795, 0.0
      %v10279 = vadd.f32 %v10277, %v10278
      %v10280 = vsel %vm9165, %v9796, 0.0
      %v10281 = vadd.f32 %v10279, %v10280
      %v10282 = vsel %vm9165, %v9797, 0.0
      %v10283 = vadd.f32 %v10281, %v10282
      %v10284 = vsel %vm9165, %v9798, 0.0
      %v10285 = vadd.f32 %v10283, %v10284
      %v10286 = vsel %vm9165, %v9799, 0.0
      %v10287 = vadd.f32 %v10285, %v10286
      %v10288 = vsel %vm9165, %v9800, 0.0
      %v10289 = vadd.f32 %v10287, %v10288
      %v10290 = vsel %vm9165, %v9801, 0.0
      %v10291 = vadd.f32 %v10289, %v10290
      %v10292 = vsel %vm9165, %v9802, 0.0
      %v10293 = vadd.f32 %v10291, %v10292
      %v10294 = vsel %vm9165, %v9803, 0.0
      %v10295 = vadd.f32 %v10293, %v10294
      %v10296 = vsel %vm9165, %v9804, 0.0
      %v10297 = vadd.f32 %v10295, %v10296
      %v10298 = vsel %vm9165, %v9805, 0.0
      %v10299 = vadd.f32 %v10297, %v10298
      %v10300 = vsel %vm9165, %v9806, 0.0
      %v10301 = vadd.f32 %v10299, %v10300
      %v10302 = vsel %vm9165, %v9807, 0.0
      %v10303 = vadd.f32 %v10301, %v10302
      %v10304 = vsel %vm9165, %v9808, 0.0
      %v10305 = vadd.f32 %v10303, %v10304
      %v10306 = vsel %vm9165, %v9809, 0.0
      %v10307 = vadd.f32 %v10305, %v10306
      %v10308 = vsel %vm9165, %v9810, 0.0
      %v10309 = vadd.f32 %v10307, %v10308
      %v10310 = vsel %vm9165, %v9811, 0.0
      %v10311 = vadd.f32 %v10309, %v10310
      %v10312 = vsel %vm9165, %v9812, 0.0
      %v10313 = vadd.f32 %v10311, %v10312
      %v10314 = vsel %vm9165, %v9813, 0.0
      %v10315 = vadd.f32 %v10313, %v10314
      %v10316 = vsel %vm9165, %v9814, 0.0
      %v10317 = vadd.f32 %v10315, %v10316
      %v10318 = vsel %vm9165, %v9815, 0.0
      %v10319 = vadd.f32 %v10317, %v10318
      %v10320 = vsel %vm9165, %v9816, 0.0
      %v10321 = vadd.f32 %v10319, %v10320
      %v10322 = vsel %vm9165, %v9817, 0.0
      %v10323 = vadd.f32 %v10321, %v10322
      %v10324 = vsel %vm9165, %v9818, 0.0
      %v10325 = vadd.f32 %v10323, %v10324
      %v10326 = vsel %vm9165, %v9819, 0.0
      %v10327 = vadd.f32 %v10325, %v10326
      %v10328 = vrot.slane %v10327, 4
      %v10329 = vadd.f32 %v10327, %v10328
      %v10330 = vrot.slane %v10329, 2
      %v10331 = vadd.f32 %v10329, %v10330
      %v10332 = vrot.slane %v10331, 1
      %v10333 = vadd.f32 %v10331, %v10332
      %v10334 = vsel %vm9165, %v9820, 0.0
      %v10335 = vsel %vm9165, %v9821, 0.0
      %v10336 = vadd.f32 %v10334, %v10335
      %v10337 = vsel %vm9165, %v9822, 0.0
      %v10338 = vadd.f32 %v10336, %v10337
      %v10339 = vsel %vm9165, %v9823, 0.0
      %v10340 = vadd.f32 %v10338, %v10339
      %v10341 = vsel %vm9165, %v9824, 0.0
      %v10342 = vadd.f32 %v10340, %v10341
      %v10343 = vsel %vm9165, %v9825, 0.0
      %v10344 = vadd.f32 %v10342, %v10343
      %v10345 = vsel %vm9165, %v9826, 0.0
      %v10346 = vadd.f32 %v10344, %v10345
      %v10347 = vsel %vm9165, %v9827, 0.0
      %v10348 = vadd.f32 %v10346, %v10347
      %v10349 = vsel %vm9165, %v9828, 0.0
      %v10350 = vadd.f32 %v10348, %v10349
      %v10351 = vsel %vm9165, %v9829, 0.0
      %v10352 = vadd.f32 %v10350, %v10351
      %v10353 = vsel %vm9165, %v9830, 0.0
      %v10354 = vadd.f32 %v10352, %v10353
      %v10355 = vsel %vm9165, %v9831, 0.0
      %v10356 = vadd.f32 %v10354, %v10355
      %v10357 = vsel %vm9165, %v9832, 0.0
      %v10358 = vadd.f32 %v10356, %v10357
      %v10359 = vsel %vm9165, %v9833, 0.0
      %v10360 = vadd.f32 %v10358, %v10359
      %v10361 = vsel %vm9165, %v9834, 0.0
      %v10362 = vadd.f32 %v10360, %v10361
      %v10363 = vsel %vm9165, %v9835, 0.0
      %v10364 = vadd.f32 %v10362, %v10363
      %v10365 = vsel %vm9165, %v9836, 0.0
      %v10366 = vadd.f32 %v10364, %v10365
      %v10367 = vsel %vm9165, %v9837, 0.0
      %v10368 = vadd.f32 %v10366, %v10367
      %v10369 = vsel %vm9165, %v9838, 0.0
      %v10370 = vadd.f32 %v10368, %v10369
      %v10371 = vsel %vm9165, %v9839, 0.0
      %v10372 = vadd.f32 %v10370, %v10371
      %v10373 = vsel %vm9165, %v9840, 0.0
      %v10374 = vadd.f32 %v10372, %v10373
      %v10375 = vsel %vm9165, %v9841, 0.0
      %v10376 = vadd.f32 %v10374, %v10375
      %v10377 = vsel %vm9165, %v9842, 0.0
      %v10378 = vadd.f32 %v10376, %v10377
      %v10379 = vsel %vm9165, %v9843, 0.0
      %v10380 = vadd.f32 %v10378, %v10379
      %v10381 = vsel %vm9165, %v9844, 0.0
      %v10382 = vadd.f32 %v10380, %v10381
      %v10383 = vsel %vm9165, %v9845, 0.0
      %v10384 = vadd.f32 %v10382, %v10383
      %v10385 = vsel %vm9165, %v9846, 0.0
      %v10386 = vadd.f32 %v10384, %v10385
      %v10387 = vsel %vm9165, %v9847, 0.0
      %v10388 = vadd.f32 %v10386, %v10387
      %v10389 = vrot.slane %v10388, 4
      %v10390 = vadd.f32 %v10388, %v10389
      %v10391 = vrot.slane %v10390, 2
      %v10392 = vadd.f32 %v10390, %v10391
      %v10393 = vrot.slane %v10392, 1
      %v10394 = vadd.f32 %v10392, %v10393
      %v10395 = vsel %vm9165, %v9848, 0.0
      %v10396 = vsel %vm9165, %v9849, 0.0
      %v10397 = vadd.f32 %v10395, %v10396
      %v10398 = vsel %vm9165, %v9850, 0.0
      %v10399 = vadd.f32 %v10397, %v10398
      %v10400 = vsel %vm9165, %v9851, 0.0
      %v10401 = vadd.f32 %v10399, %v10400
      %v10402 = vsel %vm9165, %v9852, 0.0
      %v10403 = vadd.f32 %v10401, %v10402
      %v10404 = vsel %vm9165, %v9853, 0.0
      %v10405 = vadd.f32 %v10403, %v10404
      %v10406 = vsel %vm9165, %v9854, 0.0
      %v10407 = vadd.f32 %v10405, %v10406
      %v10408 = vsel %vm9165, %v9855, 0.0
      %v10409 = vadd.f32 %v10407, %v10408
      %v10410 = vsel %vm9165, %v9856, 0.0
      %v10411 = vadd.f32 %v10409, %v10410
      %v10412 = vsel %vm9165, %v9857, 0.0
      %v10413 = vadd.f32 %v10411, %v10412
      %v10414 = vsel %vm9165, %v9858, 0.0
      %v10415 = vadd.f32 %v10413, %v10414
      %v10416 = vsel %vm9165, %v9859, 0.0
      %v10417 = vadd.f32 %v10415, %v10416
      %v10418 = vsel %vm9165, %v9860, 0.0
      %v10419 = vadd.f32 %v10417, %v10418
      %v10420 = vsel %vm9165, %v9861, 0.0
      %v10421 = vadd.f32 %v10419, %v10420
      %v10422 = vsel %vm9165, %v9862, 0.0
      %v10423 = vadd.f32 %v10421, %v10422
      %v10424 = vsel %vm9165, %v9863, 0.0
      %v10425 = vadd.f32 %v10423, %v10424
      %v10426 = vsel %vm9165, %v9864, 0.0
      %v10427 = vadd.f32 %v10425, %v10426
      %v10428 = vsel %vm9165, %v9865, 0.0
      %v10429 = vadd.f32 %v10427, %v10428
      %v10430 = vsel %vm9165, %v9866, 0.0
      %v10431 = vadd.f32 %v10429, %v10430
      %v10432 = vsel %vm9165, %v9867, 0.0
      %v10433 = vadd.f32 %v10431, %v10432
      %v10434 = vsel %vm9165, %v9868, 0.0
      %v10435 = vadd.f32 %v10433, %v10434
      %v10436 = vsel %vm9165, %v9869, 0.0
      %v10437 = vadd.f32 %v10435, %v10436
      %v10438 = vsel %vm9165, %v9870, 0.0
      %v10439 = vadd.f32 %v10437, %v10438
      %v10440 = vsel %vm9165, %v9871, 0.0
      %v10441 = vadd.f32 %v10439, %v10440
      %v10442 = vsel %vm9165, %v9872, 0.0
      %v10443 = vadd.f32 %v10441, %v10442
      %v10444 = vsel %vm9165, %v9873, 0.0
      %v10445 = vadd.f32 %v10443, %v10444
      %v10446 = vsel %vm9165, %v9874, 0.0
      %v10447 = vadd.f32 %v10445, %v10446
      %v10448 = vsel %vm9165, %v9875, 0.0
      %v10449 = vadd.f32 %v10447, %v10448
      %v10450 = vrot.slane %v10449, 4
      %v10451 = vadd.f32 %v10449, %v10450
      %v10452 = vrot.slane %v10451, 2
      %v10453 = vadd.f32 %v10451, %v10452
      %v10454 = vrot.slane %v10453, 1
      %v10455 = vadd.f32 %v10453, %v10454
      %v10456 = vsel %vm9165, %v9876, 0.0
      %v10457 = vsel %vm9165, %v9877, 0.0
      %v10458 = vadd.f32 %v10456, %v10457
      %v10459 = vsel %vm9165, %v9878, 0.0
      %v10460 = vadd.f32 %v10458, %v10459
      %v10461 = vsel %vm9165, %v9879, 0.0
      %v10462 = vadd.f32 %v10460, %v10461
      %v10463 = vsel %vm9165, %v9880, 0.0
      %v10464 = vadd.f32 %v10462, %v10463
      %v10465 = vsel %vm9165, %v9881, 0.0
      %v10466 = vadd.f32 %v10464, %v10465
      %v10467 = vsel %vm9165, %v9882, 0.0
      %v10468 = vadd.f32 %v10466, %v10467
      %v10469 = vsel %vm9165, %v9883, 0.0
      %v10470 = vadd.f32 %v10468, %v10469
      %v10471 = vsel %vm9165, %v9884, 0.0
      %v10472 = vadd.f32 %v10470, %v10471
      %v10473 = vsel %vm9165, %v9885, 0.0
      %v10474 = vadd.f32 %v10472, %v10473
      %v10475 = vsel %vm9165, %v9886, 0.0
      %v10476 = vadd.f32 %v10474, %v10475
      %v10477 = vsel %vm9165, %v9887, 0.0
      %v10478 = vadd.f32 %v10476, %v10477
      %v10479 = vsel %vm9165, %v9888, 0.0
      %v10480 = vadd.f32 %v10478, %v10479
      %v10481 = vsel %vm9165, %v9889, 0.0
      %v10482 = vadd.f32 %v10480, %v10481
      %v10483 = vsel %vm9165, %v9890, 0.0
      %v10484 = vadd.f32 %v10482, %v10483
      %v10485 = vsel %vm9165, %v9891, 0.0
      %v10486 = vadd.f32 %v10484, %v10485
      %v10487 = vsel %vm9165, %v9892, 0.0
      %v10488 = vadd.f32 %v10486, %v10487
      %v10489 = vsel %vm9165, %v9893, 0.0
      %v10490 = vadd.f32 %v10488, %v10489
      %v10491 = vsel %vm9165, %v9894, 0.0
      %v10492 = vadd.f32 %v10490, %v10491
      %v10493 = vsel %vm9165, %v9895, 0.0
      %v10494 = vadd.f32 %v10492, %v10493
      %v10495 = vsel %vm9165, %v9896, 0.0
      %v10496 = vadd.f32 %v10494, %v10495
      %v10497 = vsel %vm9165, %v9897, 0.0
      %v10498 = vadd.f32 %v10496, %v10497
      %v10499 = vsel %vm9165, %v9898, 0.0
      %v10500 = vadd.f32 %v10498, %v10499
      %v10501 = vsel %vm9165, %v9899, 0.0
      %v10502 = vadd.f32 %v10500, %v10501
      %v10503 = vsel %vm9165, %v9900, 0.0
      %v10504 = vadd.f32 %v10502, %v10503
      %v10505 = vsel %vm9165, %v9901, 0.0
      %v10506 = vadd.f32 %v10504, %v10505
      %v10507 = vsel %vm9165, %v9902, 0.0
      %v10508 = vadd.f32 %v10506, %v10507
      %v10509 = vsel %vm9165, %v9903, 0.0
      %v10510 = vadd.f32 %v10508, %v10509
      %v10511 = vrot.slane %v10510, 4
      %v10512 = vadd.f32 %v10510, %v10511
      %v10513 = vrot.slane %v10512, 2
      %v10514 = vadd.f32 %v10512, %v10513
      %v10515 = vrot.slane %v10514, 1
      %v10516 = vadd.f32 %v10514, %v10515
      %v10517 = vsel %vm9165, %v9904, 0.0
      %v10518 = vsel %vm9165, %v9905, 0.0
      %v10519 = vadd.f32 %v10517, %v10518
      %v10520 = vsel %vm9165, %v9906, 0.0
      %v10521 = vadd.f32 %v10519, %v10520
      %v10522 = vsel %vm9165, %v9907, 0.0
      %v10523 = vadd.f32 %v10521, %v10522
      %v10524 = vsel %vm9165, %v9908, 0.0
      %v10525 = vadd.f32 %v10523, %v10524
      %v10526 = vsel %vm9165, %v9909, 0.0
      %v10527 = vadd.f32 %v10525, %v10526
      %v10528 = vsel %vm9165, %v9910, 0.0
      %v10529 = vadd.f32 %v10527, %v10528
      %v10530 = vsel %vm9165, %v9911, 0.0
      %v10531 = vadd.f32 %v10529, %v10530
      %v10532 = vsel %vm9165, %v9912, 0.0
      %v10533 = vadd.f32 %v10531, %v10532
      %v10534 = vsel %vm9165, %v9913, 0.0
      %v10535 = vadd.f32 %v10533, %v10534
      %v10536 = vsel %vm9165, %v9914, 0.0
      %v10537 = vadd.f32 %v10535, %v10536
      %v10538 = vsel %vm9165, %v9915, 0.0
      %v10539 = vadd.f32 %v10537, %v10538
      %v10540 = vsel %vm9165, %v9916, 0.0
      %v10541 = vadd.f32 %v10539, %v10540
      %v10542 = vsel %vm9165, %v9917, 0.0
      %v10543 = vadd.f32 %v10541, %v10542
      %v10544 = vsel %vm9165, %v9918, 0.0
      %v10545 = vadd.f32 %v10543, %v10544
      %v10546 = vsel %vm9165, %v9919, 0.0
      %v10547 = vadd.f32 %v10545, %v10546
      %v10548 = vsel %vm9165, %v9920, 0.0
      %v10549 = vadd.f32 %v10547, %v10548
      %v10550 = vsel %vm9165, %v9921, 0.0
      %v10551 = vadd.f32 %v10549, %v10550
      %v10552 = vsel %vm9165, %v9922, 0.0
      %v10553 = vadd.f32 %v10551, %v10552
      %v10554 = vsel %vm9165, %v9923, 0.0
      %v10555 = vadd.f32 %v10553, %v10554
      %v10556 = vsel %vm9165, %v9924, 0.0
      %v10557 = vadd.f32 %v10555, %v10556
      %v10558 = vsel %vm9165, %v9925, 0.0
      %v10559 = vadd.f32 %v10557, %v10558
      %v10560 = vsel %vm9165, %v9926, 0.0
      %v10561 = vadd.f32 %v10559, %v10560
      %v10562 = vsel %vm9165, %v9927, 0.0
      %v10563 = vadd.f32 %v10561, %v10562
      %v10564 = vsel %vm9165, %v9928, 0.0
      %v10565 = vadd.f32 %v10563, %v10564
      %v10566 = vsel %vm9165, %v9929, 0.0
      %v10567 = vadd.f32 %v10565, %v10566
      %v10568 = vsel %vm9165, %v9930, 0.0
      %v10569 = vadd.f32 %v10567, %v10568
      %v10570 = vsel %vm9165, %v9931, 0.0
      %v10571 = vadd.f32 %v10569, %v10570
      %v10572 = vrot.slane %v10571, 4
      %v10573 = vadd.f32 %v10571, %v10572
      %v10574 = vrot.slane %v10573, 2
      %v10575 = vadd.f32 %v10573, %v10574
      %v10576 = vrot.slane %v10575, 1
      %v10577 = vadd.f32 %v10575, %v10576
      %v10578 = vsel %vm9165, %v9932, 0.0
      %v10579 = vsel %vm9165, %v9933, 0.0
      %v10580 = vadd.f32 %v10578, %v10579
      %v10581 = vsel %vm9165, %v9934, 0.0
      %v10582 = vadd.f32 %v10580, %v10581
      %v10583 = vsel %vm9165, %v9935, 0.0
      %v10584 = vadd.f32 %v10582, %v10583
      %v10585 = vsel %vm9165, %v9936, 0.0
      %v10586 = vadd.f32 %v10584, %v10585
      %v10587 = vsel %vm9165, %v9937, 0.0
      %v10588 = vadd.f32 %v10586, %v10587
      %v10589 = vsel %vm9165, %v9938, 0.0
      %v10590 = vadd.f32 %v10588, %v10589
      %v10591 = vsel %vm9165, %v9939, 0.0
      %v10592 = vadd.f32 %v10590, %v10591
      %v10593 = vsel %vm9165, %v9940, 0.0
      %v10594 = vadd.f32 %v10592, %v10593
      %v10595 = vsel %vm9165, %v9941, 0.0
      %v10596 = vadd.f32 %v10594, %v10595
      %v10597 = vsel %vm9165, %v9942, 0.0
      %v10598 = vadd.f32 %v10596, %v10597
      %v10599 = vsel %vm9165, %v9943, 0.0
      %v10600 = vadd.f32 %v10598, %v10599
      %v10601 = vsel %vm9165, %v9944, 0.0
      %v10602 = vadd.f32 %v10600, %v10601
      %v10603 = vsel %vm9165, %v9945, 0.0
      %v10604 = vadd.f32 %v10602, %v10603
      %v10605 = vsel %vm9165, %v9946, 0.0
      %v10606 = vadd.f32 %v10604, %v10605
      %v10607 = vsel %vm9165, %v9947, 0.0
      %v10608 = vadd.f32 %v10606, %v10607
      %v10609 = vsel %vm9165, %v9948, 0.0
      %v10610 = vadd.f32 %v10608, %v10609
      %v10611 = vsel %vm9165, %v9949, 0.0
      %v10612 = vadd.f32 %v10610, %v10611
      %v10613 = vsel %vm9165, %v9950, 0.0
      %v10614 = vadd.f32 %v10612, %v10613
      %v10615 = vsel %vm9165, %v9951, 0.0
      %v10616 = vadd.f32 %v10614, %v10615
      %v10617 = vsel %vm9165, %v9952, 0.0
      %v10618 = vadd.f32 %v10616, %v10617
      %v10619 = vsel %vm9165, %v9953, 0.0
      %v10620 = vadd.f32 %v10618, %v10619
      %v10621 = vsel %vm9165, %v9954, 0.0
      %v10622 = vadd.f32 %v10620, %v10621
      %v10623 = vsel %vm9165, %v9955, 0.0
      %v10624 = vadd.f32 %v10622, %v10623
      %v10625 = vsel %vm9165, %v9956, 0.0
      %v10626 = vadd.f32 %v10624, %v10625
      %v10627 = vsel %vm9165, %v9957, 0.0
      %v10628 = vadd.f32 %v10626, %v10627
      %v10629 = vsel %vm9165, %v9958, 0.0
      %v10630 = vadd.f32 %v10628, %v10629
      %v10631 = vsel %vm9165, %v9959, 0.0
      %v10632 = vadd.f32 %v10630, %v10631
      %v10633 = vrot.slane %v10632, 4
      %v10634 = vadd.f32 %v10632, %v10633
      %v10635 = vrot.slane %v10634, 2
      %v10636 = vadd.f32 %v10634, %v10635
      %v10637 = vrot.slane %v10636, 1
      %v10638 = vadd.f32 %v10636, %v10637
      %v10639 = vsel %vm9165, %v9960, 0.0
      %v10640 = vsel %vm9165, %v9961, 0.0
      %v10641 = vadd.f32 %v10639, %v10640
      %v10642 = vsel %vm9165, %v9962, 0.0
      %v10643 = vadd.f32 %v10641, %v10642
      %v10644 = vsel %vm9165, %v9963, 0.0
      %v10645 = vadd.f32 %v10643, %v10644
      %v10646 = vsel %vm9165, %v9964, 0.0
      %v10647 = vadd.f32 %v10645, %v10646
      %v10648 = vsel %vm9165, %v9965, 0.0
      %v10649 = vadd.f32 %v10647, %v10648
      %v10650 = vsel %vm9165, %v9966, 0.0
      %v10651 = vadd.f32 %v10649, %v10650
      %v10652 = vsel %vm9165, %v9967, 0.0
      %v10653 = vadd.f32 %v10651, %v10652
      %v10654 = vsel %vm9165, %v9968, 0.0
      %v10655 = vadd.f32 %v10653, %v10654
      %v10656 = vsel %vm9165, %v9969, 0.0
      %v10657 = vadd.f32 %v10655, %v10656
      %v10658 = vsel %vm9165, %v9970, 0.0
      %v10659 = vadd.f32 %v10657, %v10658
      %v10660 = vsel %vm9165, %v9971, 0.0
      %v10661 = vadd.f32 %v10659, %v10660
      %v10662 = vsel %vm9165, %v9972, 0.0
      %v10663 = vadd.f32 %v10661, %v10662
      %v10664 = vsel %vm9165, %v9973, 0.0
      %v10665 = vadd.f32 %v10663, %v10664
      %v10666 = vsel %vm9165, %v9974, 0.0
      %v10667 = vadd.f32 %v10665, %v10666
      %v10668 = vsel %vm9165, %v9975, 0.0
      %v10669 = vadd.f32 %v10667, %v10668
      %v10670 = vsel %vm9165, %v9976, 0.0
      %v10671 = vadd.f32 %v10669, %v10670
      %v10672 = vsel %vm9165, %v9977, 0.0
      %v10673 = vadd.f32 %v10671, %v10672
      %v10674 = vsel %vm9165, %v9978, 0.0
      %v10675 = vadd.f32 %v10673, %v10674
      %v10676 = vsel %vm9165, %v9979, 0.0
      %v10677 = vadd.f32 %v10675, %v10676
      %v10678 = vsel %vm9165, %v9980, 0.0
      %v10679 = vadd.f32 %v10677, %v10678
      %v10680 = vsel %vm9165, %v9981, 0.0
      %v10681 = vadd.f32 %v10679, %v10680
      %v10682 = vsel %vm9165, %v9982, 0.0
      %v10683 = vadd.f32 %v10681, %v10682
      %v10684 = vsel %vm9165, %v9983, 0.0
      %v10685 = vadd.f32 %v10683, %v10684
      %v10686 = vsel %vm9165, %v9984, 0.0
      %v10687 = vadd.f32 %v10685, %v10686
      %v10688 = vsel %vm9165, %v9985, 0.0
      %v10689 = vadd.f32 %v10687, %v10688
      %v10690 = vsel %vm9165, %v9986, 0.0
      %v10691 = vadd.f32 %v10689, %v10690
      %v10692 = vsel %vm9165, %v9987, 0.0
      %v10693 = vadd.f32 %v10691, %v10692
      %v10694 = vrot.slane %v10693, 4
      %v10695 = vadd.f32 %v10693, %v10694
      %v10696 = vrot.slane %v10695, 2
      %v10697 = vadd.f32 %v10695, %v10696
      %v10698 = vrot.slane %v10697, 1
      %v10699 = vadd.f32 %v10697, %v10698
      %v10700 = vsel %vm9165, %v9988, 0.0
      %v10701 = vsel %vm9165, %v9989, 0.0
      %v10702 = vadd.f32 %v10700, %v10701
      %v10703 = vsel %vm9165, %v9990, 0.0
      %v10704 = vadd.f32 %v10702, %v10703
      %v10705 = vsel %vm9165, %v9991, 0.0
      %v10706 = vadd.f32 %v10704, %v10705
      %v10707 = vsel %vm9165, %v9992, 0.0
      %v10708 = vadd.f32 %v10706, %v10707
      %v10709 = vsel %vm9165, %v9993, 0.0
      %v10710 = vadd.f32 %v10708, %v10709
      %v10711 = vsel %vm9165, %v9994, 0.0
      %v10712 = vadd.f32 %v10710, %v10711
      %v10713 = vsel %vm9165, %v9995, 0.0
      %v10714 = vadd.f32 %v10712, %v10713
      %v10715 = vsel %vm9165, %v9996, 0.0
      %v10716 = vadd.f32 %v10714, %v10715
      %v10717 = vsel %vm9165, %v9997, 0.0
      %v10718 = vadd.f32 %v10716, %v10717
      %v10719 = vsel %vm9165, %v9998, 0.0
      %v10720 = vadd.f32 %v10718, %v10719
      %v10721 = vsel %vm9165, %v9999, 0.0
      %v10722 = vadd.f32 %v10720, %v10721
      %v10723 = vsel %vm9165, %v10000, 0.0
      %v10724 = vadd.f32 %v10722, %v10723
      %v10725 = vsel %vm9165, %v10001, 0.0
      %v10726 = vadd.f32 %v10724, %v10725
      %v10727 = vsel %vm9165, %v10002, 0.0
      %v10728 = vadd.f32 %v10726, %v10727
      %v10729 = vsel %vm9165, %v10003, 0.0
      %v10730 = vadd.f32 %v10728, %v10729
      %v10731 = vsel %vm9165, %v10004, 0.0
      %v10732 = vadd.f32 %v10730, %v10731
      %v10733 = vsel %vm9165, %v10005, 0.0
      %v10734 = vadd.f32 %v10732, %v10733
      %v10735 = vsel %vm9165, %v10006, 0.0
      %v10736 = vadd.f32 %v10734, %v10735
      %v10737 = vsel %vm9165, %v10007, 0.0
      %v10738 = vadd.f32 %v10736, %v10737
      %v10739 = vsel %vm9165, %v10008, 0.0
      %v10740 = vadd.f32 %v10738, %v10739
      %v10741 = vsel %vm9165, %v10009, 0.0
      %v10742 = vadd.f32 %v10740, %v10741
      %v10743 = vsel %vm9165, %v10010, 0.0
      %v10744 = vadd.f32 %v10742, %v10743
      %v10745 = vsel %vm9165, %v10011, 0.0
      %v10746 = vadd.f32 %v10744, %v10745
      %v10747 = vsel %vm9165, %v10012, 0.0
      %v10748 = vadd.f32 %v10746, %v10747
      %v10749 = vsel %vm9165, %v10013, 0.0
      %v10750 = vadd.f32 %v10748, %v10749
      %v10751 = vsel %vm9165, %v10014, 0.0
      %v10752 = vadd.f32 %v10750, %v10751
      %v10753 = vsel %vm9165, %v10015, 0.0
      %v10754 = vadd.f32 %v10752, %v10753
      %v10755 = vrot.slane %v10754, 4
      %v10756 = vadd.f32 %v10754, %v10755
      %v10757 = vrot.slane %v10756, 2
      %v10758 = vadd.f32 %v10756, %v10757
      %v10759 = vrot.slane %v10758, 1
      %v10760 = vadd.f32 %v10758, %v10759
      %v10761 = vsel %vm9165, %v10016, 0.0
      %v10762 = vsel %vm9165, %v10017, 0.0
      %v10763 = vadd.f32 %v10761, %v10762
      %v10764 = vsel %vm9165, %v10018, 0.0
      %v10765 = vadd.f32 %v10763, %v10764
      %v10766 = vsel %vm9165, %v10019, 0.0
      %v10767 = vadd.f32 %v10765, %v10766
      %v10768 = vsel %vm9165, %v10020, 0.0
      %v10769 = vadd.f32 %v10767, %v10768
      %v10770 = vsel %vm9165, %v10021, 0.0
      %v10771 = vadd.f32 %v10769, %v10770
      %v10772 = vsel %vm9165, %v10022, 0.0
      %v10773 = vadd.f32 %v10771, %v10772
      %v10774 = vsel %vm9165, %v10023, 0.0
      %v10775 = vadd.f32 %v10773, %v10774
      %v10776 = vsel %vm9165, %v10024, 0.0
      %v10777 = vadd.f32 %v10775, %v10776
      %v10778 = vsel %vm9165, %v10025, 0.0
      %v10779 = vadd.f32 %v10777, %v10778
      %v10780 = vsel %vm9165, %v10026, 0.0
      %v10781 = vadd.f32 %v10779, %v10780
      %v10782 = vsel %vm9165, %v10027, 0.0
      %v10783 = vadd.f32 %v10781, %v10782
      %v10784 = vsel %vm9165, %v10028, 0.0
      %v10785 = vadd.f32 %v10783, %v10784
      %v10786 = vsel %vm9165, %v10029, 0.0
      %v10787 = vadd.f32 %v10785, %v10786
      %v10788 = vsel %vm9165, %v10030, 0.0
      %v10789 = vadd.f32 %v10787, %v10788
      %v10790 = vsel %vm9165, %v10031, 0.0
      %v10791 = vadd.f32 %v10789, %v10790
      %v10792 = vsel %vm9165, %v10032, 0.0
      %v10793 = vadd.f32 %v10791, %v10792
      %v10794 = vsel %vm9165, %v10033, 0.0
      %v10795 = vadd.f32 %v10793, %v10794
      %v10796 = vsel %vm9165, %v10034, 0.0
      %v10797 = vadd.f32 %v10795, %v10796
      %v10798 = vsel %vm9165, %v10035, 0.0
      %v10799 = vadd.f32 %v10797, %v10798
      %v10800 = vsel %vm9165, %v10036, 0.0
      %v10801 = vadd.f32 %v10799, %v10800
      %v10802 = vsel %vm9165, %v10037, 0.0
      %v10803 = vadd.f32 %v10801, %v10802
      %v10804 = vsel %vm9165, %v10038, 0.0
      %v10805 = vadd.f32 %v10803, %v10804
      %v10806 = vsel %vm9165, %v10039, 0.0
      %v10807 = vadd.f32 %v10805, %v10806
      %v10808 = vsel %vm9165, %v10040, 0.0
      %v10809 = vadd.f32 %v10807, %v10808
      %v10810 = vsel %vm9165, %v10041, 0.0
      %v10811 = vadd.f32 %v10809, %v10810
      %v10812 = vsel %vm9165, %v10042, 0.0
      %v10813 = vadd.f32 %v10811, %v10812
      %v10814 = vsel %vm9165, %v10043, 0.0
      %v10815 = vadd.f32 %v10813, %v10814
      %v10816 = vrot.slane %v10815, 4
      %v10817 = vadd.f32 %v10815, %v10816
      %v10818 = vrot.slane %v10817, 2
      %v10819 = vadd.f32 %v10817, %v10818
      %v10820 = vrot.slane %v10819, 1
      %v10821 = vadd.f32 %v10819, %v10820
      %v10822 = vsel %vm9165, %v10044, 0.0
      %v10823 = vsel %vm9165, %v10045, 0.0
      %v10824 = vadd.f32 %v10822, %v10823
      %v10825 = vsel %vm9165, %v10046, 0.0
      %v10826 = vadd.f32 %v10824, %v10825
      %v10827 = vsel %vm9165, %v10047, 0.0
      %v10828 = vadd.f32 %v10826, %v10827
      %v10829 = vsel %vm9165, %v10048, 0.0
      %v10830 = vadd.f32 %v10828, %v10829
      %v10831 = vsel %vm9165, %v10049, 0.0
      %v10832 = vadd.f32 %v10830, %v10831
      %v10833 = vsel %vm9165, %v10050, 0.0
      %v10834 = vadd.f32 %v10832, %v10833
      %v10835 = vsel %vm9165, %v10051, 0.0
      %v10836 = vadd.f32 %v10834, %v10835
      %v10837 = vsel %vm9165, %v10052, 0.0
      %v10838 = vadd.f32 %v10836, %v10837
      %v10839 = vsel %vm9165, %v10053, 0.0
      %v10840 = vadd.f32 %v10838, %v10839
      %v10841 = vsel %vm9165, %v10054, 0.0
      %v10842 = vadd.f32 %v10840, %v10841
      %v10843 = vsel %vm9165, %v10055, 0.0
      %v10844 = vadd.f32 %v10842, %v10843
      %v10845 = vsel %vm9165, %v10056, 0.0
      %v10846 = vadd.f32 %v10844, %v10845
      %v10847 = vsel %vm9165, %v10057, 0.0
      %v10848 = vadd.f32 %v10846, %v10847
      %v10849 = vsel %vm9165, %v10058, 0.0
      %v10850 = vadd.f32 %v10848, %v10849
      %v10851 = vsel %vm9165, %v10059, 0.0
      %v10852 = vadd.f32 %v10850, %v10851
      %v10853 = vsel %vm9165, %v10060, 0.0
      %v10854 = vadd.f32 %v10852, %v10853
      %v10855 = vsel %vm9165, %v10061, 0.0
      %v10856 = vadd.f32 %v10854, %v10855
      %v10857 = vsel %vm9165, %v10062, 0.0
      %v10858 = vadd.f32 %v10856, %v10857
      %v10859 = vsel %vm9165, %v10063, 0.0
      %v10860 = vadd.f32 %v10858, %v10859
      %v10861 = vsel %vm9165, %v10064, 0.0
      %v10862 = vadd.f32 %v10860, %v10861
      %v10863 = vsel %vm9165, %v10065, 0.0
      %v10864 = vadd.f32 %v10862, %v10863
      %v10865 = vsel %vm9165, %v10066, 0.0
      %v10866 = vadd.f32 %v10864, %v10865
      %v10867 = vsel %vm9165, %v10067, 0.0
      %v10868 = vadd.f32 %v10866, %v10867
      %v10869 = vsel %vm9165, %v10068, 0.0
      %v10870 = vadd.f32 %v10868, %v10869
      %v10871 = vsel %vm9165, %v10069, 0.0
      %v10872 = vadd.f32 %v10870, %v10871
      %v10873 = vsel %vm9165, %v10070, 0.0
      %v10874 = vadd.f32 %v10872, %v10873
      %v10875 = vsel %vm9165, %v10071, 0.0
      %v10876 = vadd.f32 %v10874, %v10875
      %v10877 = vrot.slane %v10876, 4
      %v10878 = vadd.f32 %v10876, %v10877
      %v10879 = vrot.slane %v10878, 2
      %v10880 = vadd.f32 %v10878, %v10879
      %v10881 = vrot.slane %v10880, 1
      %v10882 = vadd.f32 %v10880, %v10881
      %v10883 = vsel %vm9165, %v10072, 0.0
      %v10884 = vsel %vm9165, %v10073, 0.0
      %v10885 = vadd.f32 %v10883, %v10884
      %v10886 = vsel %vm9165, %v10074, 0.0
      %v10887 = vadd.f32 %v10885, %v10886
      %v10888 = vsel %vm9165, %v10075, 0.0
      %v10889 = vadd.f32 %v10887, %v10888
      %v10890 = vsel %vm9165, %v10076, 0.0
      %v10891 = vadd.f32 %v10889, %v10890
      %v10892 = vsel %vm9165, %v10077, 0.0
      %v10893 = vadd.f32 %v10891, %v10892
      %v10894 = vsel %vm9165, %v10078, 0.0
      %v10895 = vadd.f32 %v10893, %v10894
      %v10896 = vsel %vm9165, %v10079, 0.0
      %v10897 = vadd.f32 %v10895, %v10896
      %v10898 = vsel %vm9165, %v10080, 0.0
      %v10899 = vadd.f32 %v10897, %v10898
      %v10900 = vsel %vm9165, %v10081, 0.0
      %v10901 = vadd.f32 %v10899, %v10900
      %v10902 = vsel %vm9165, %v10082, 0.0
      %v10903 = vadd.f32 %v10901, %v10902
      %v10904 = vsel %vm9165, %v10083, 0.0
      %v10905 = vadd.f32 %v10903, %v10904
      %v10906 = vsel %vm9165, %v10084, 0.0
      %v10907 = vadd.f32 %v10905, %v10906
      %v10908 = vsel %vm9165, %v10085, 0.0
      %v10909 = vadd.f32 %v10907, %v10908
      %v10910 = vsel %vm9165, %v10086, 0.0
      %v10911 = vadd.f32 %v10909, %v10910
      %v10912 = vsel %vm9165, %v10087, 0.0
      %v10913 = vadd.f32 %v10911, %v10912
      %v10914 = vsel %vm9165, %v10088, 0.0
      %v10915 = vadd.f32 %v10913, %v10914
      %v10916 = vsel %vm9165, %v10089, 0.0
      %v10917 = vadd.f32 %v10915, %v10916
      %v10918 = vsel %vm9165, %v10090, 0.0
      %v10919 = vadd.f32 %v10917, %v10918
      %v10920 = vsel %vm9165, %v10091, 0.0
      %v10921 = vadd.f32 %v10919, %v10920
      %v10922 = vsel %vm9165, %v10092, 0.0
      %v10923 = vadd.f32 %v10921, %v10922
      %v10924 = vsel %vm9165, %v10093, 0.0
      %v10925 = vadd.f32 %v10923, %v10924
      %v10926 = vsel %vm9165, %v10094, 0.0
      %v10927 = vadd.f32 %v10925, %v10926
      %v10928 = vsel %vm9165, %v10095, 0.0
      %v10929 = vadd.f32 %v10927, %v10928
      %v10930 = vsel %vm9165, %v10096, 0.0
      %v10931 = vadd.f32 %v10929, %v10930
      %v10932 = vsel %vm9165, %v10097, 0.0
      %v10933 = vadd.f32 %v10931, %v10932
      %v10934 = vsel %vm9165, %v10098, 0.0
      %v10935 = vadd.f32 %v10933, %v10934
      %v10936 = vsel %vm9165, %v10099, 0.0
      %v10937 = vadd.f32 %v10935, %v10936
      %v10938 = vrot.slane %v10937, 4
      %v10939 = vadd.f32 %v10937, %v10938
      %v10940 = vrot.slane %v10939, 2
      %v10941 = vadd.f32 %v10939, %v10940
      %v10942 = vrot.slane %v10941, 1
      %v10943 = vadd.f32 %v10941, %v10942
      %v10944 = vsel %vm9165, %v10100, 0.0
      %v10945 = vsel %vm9165, %v10101, 0.0
      %v10946 = vadd.f32 %v10944, %v10945
      %v10947 = vsel %vm9165, %v10102, 0.0
      %v10948 = vadd.f32 %v10946, %v10947
      %v10949 = vsel %vm9165, %v10103, 0.0
      %v10950 = vadd.f32 %v10948, %v10949
      %v10951 = vsel %vm9165, %v10104, 0.0
      %v10952 = vadd.f32 %v10950, %v10951
      %v10953 = vsel %vm9165, %v10105, 0.0
      %v10954 = vadd.f32 %v10952, %v10953
      %v10955 = vsel %vm9165, %v10106, 0.0
      %v10956 = vadd.f32 %v10954, %v10955
      %v10957 = vsel %vm9165, %v10107, 0.0
      %v10958 = vadd.f32 %v10956, %v10957
      %v10959 = vsel %vm9165, %v10108, 0.0
      %v10960 = vadd.f32 %v10958, %v10959
      %v10961 = vsel %vm9165, %v10109, 0.0
      %v10962 = vadd.f32 %v10960, %v10961
      %v10963 = vsel %vm9165, %v10110, 0.0
      %v10964 = vadd.f32 %v10962, %v10963
      %v10965 = vsel %vm9165, %v10111, 0.0
      %v10966 = vadd.f32 %v10964, %v10965
      %v10967 = vsel %vm9165, %v10112, 0.0
      %v10968 = vadd.f32 %v10966, %v10967
      %v10969 = vsel %vm9165, %v10113, 0.0
      %v10970 = vadd.f32 %v10968, %v10969
      %v10971 = vsel %vm9165, %v10114, 0.0
      %v10972 = vadd.f32 %v10970, %v10971
      %v10973 = vsel %vm9165, %v10115, 0.0
      %v10974 = vadd.f32 %v10972, %v10973
      %v10975 = vsel %vm9165, %v10116, 0.0
      %v10976 = vadd.f32 %v10974, %v10975
      %v10977 = vsel %vm9165, %v10117, 0.0
      %v10978 = vadd.f32 %v10976, %v10977
      %v10979 = vsel %vm9165, %v10118, 0.0
      %v10980 = vadd.f32 %v10978, %v10979
      %v10981 = vsel %vm9165, %v10119, 0.0
      %v10982 = vadd.f32 %v10980, %v10981
      %v10983 = vsel %vm9165, %v10120, 0.0
      %v10984 = vadd.f32 %v10982, %v10983
      %v10985 = vsel %vm9165, %v10121, 0.0
      %v10986 = vadd.f32 %v10984, %v10985
      %v10987 = vsel %vm9165, %v10122, 0.0
      %v10988 = vadd.f32 %v10986, %v10987
      %v10989 = vsel %vm9165, %v10123, 0.0
      %v10990 = vadd.f32 %v10988, %v10989
      %v10991 = vsel %vm9165, %v10124, 0.0
      %v10992 = vadd.f32 %v10990, %v10991
      %v10993 = vsel %vm9165, %v10125, 0.0
      %v10994 = vadd.f32 %v10992, %v10993
      %v10995 = vsel %vm9165, %v10126, 0.0
      %v10996 = vadd.f32 %v10994, %v10995
      %v10997 = vsel %vm9165, %v10127, 0.0
      %v10998 = vadd.f32 %v10996, %v10997
      %v10999 = vrot.slane %v10998, 4
      %v11000 = vadd.f32 %v10998, %v10999
      %v11001 = vrot.slane %v11000, 2
      %v11002 = vadd.f32 %v11000, %v11001
      %v11003 = vrot.slane %v11002, 1
      %v11004 = vadd.f32 %v11002, %v11003
      %v11005 = vsel %vm9165, %v10128, 0.0
      %v11006 = vsel %vm9165, %v10129, 0.0
      %v11007 = vadd.f32 %v11005, %v11006
      %v11008 = vsel %vm9165, %v10130, 0.0
      %v11009 = vadd.f32 %v11007, %v11008
      %v11010 = vsel %vm9165, %v10131, 0.0
      %v11011 = vadd.f32 %v11009, %v11010
      %v11012 = vsel %vm9165, %v10132, 0.0
      %v11013 = vadd.f32 %v11011, %v11012
      %v11014 = vsel %vm9165, %v10133, 0.0
      %v11015 = vadd.f32 %v11013, %v11014
      %v11016 = vsel %vm9165, %v10134, 0.0
      %v11017 = vadd.f32 %v11015, %v11016
      %v11018 = vsel %vm9165, %v10135, 0.0
      %v11019 = vadd.f32 %v11017, %v11018
      %v11020 = vsel %vm9165, %v10136, 0.0
      %v11021 = vadd.f32 %v11019, %v11020
      %v11022 = vsel %vm9165, %v10137, 0.0
      %v11023 = vadd.f32 %v11021, %v11022
      %v11024 = vsel %vm9165, %v10138, 0.0
      %v11025 = vadd.f32 %v11023, %v11024
      %v11026 = vsel %vm9165, %v10139, 0.0
      %v11027 = vadd.f32 %v11025, %v11026
      %v11028 = vsel %vm9165, %v10140, 0.0
      %v11029 = vadd.f32 %v11027, %v11028
      %v11030 = vsel %vm9165, %v10141, 0.0
      %v11031 = vadd.f32 %v11029, %v11030
      %v11032 = vsel %vm9165, %v10142, 0.0
      %v11033 = vadd.f32 %v11031, %v11032
      %v11034 = vsel %vm9165, %v10143, 0.0
      %v11035 = vadd.f32 %v11033, %v11034
      %v11036 = vsel %vm9165, %v10144, 0.0
      %v11037 = vadd.f32 %v11035, %v11036
      %v11038 = vsel %vm9165, %v10145, 0.0
      %v11039 = vadd.f32 %v11037, %v11038
      %v11040 = vsel %vm9165, %v10146, 0.0
      %v11041 = vadd.f32 %v11039, %v11040
      %v11042 = vsel %vm9165, %v10147, 0.0
      %v11043 = vadd.f32 %v11041, %v11042
      %v11044 = vsel %vm9165, %v10148, 0.0
      %v11045 = vadd.f32 %v11043, %v11044
      %v11046 = vsel %vm9165, %v10149, 0.0
      %v11047 = vadd.f32 %v11045, %v11046
      %v11048 = vsel %vm9165, %v10150, 0.0
      %v11049 = vadd.f32 %v11047, %v11048
      %v11050 = vsel %vm9165, %v10151, 0.0
      %v11051 = vadd.f32 %v11049, %v11050
      %v11052 = vsel %vm9165, %v10152, 0.0
      %v11053 = vadd.f32 %v11051, %v11052
      %v11054 = vsel %vm9165, %v10153, 0.0
      %v11055 = vadd.f32 %v11053, %v11054
      %v11056 = vsel %vm9165, %v10154, 0.0
      %v11057 = vadd.f32 %v11055, %v11056
      %v11058 = vsel %vm9165, %v10155, 0.0
      %v11059 = vadd.f32 %v11057, %v11058
      %v11060 = vrot.slane %v11059, 4
      %v11061 = vadd.f32 %v11059, %v11060
      %v11062 = vrot.slane %v11061, 2
      %v11063 = vadd.f32 %v11061, %v11062
      %v11064 = vrot.slane %v11063, 1
      %v11065 = vadd.f32 %v11063, %v11064
      %v11066 = vsel %vm9165, %v10156, 0.0
      %v11067 = vsel %vm9165, %v10157, 0.0
      %v11068 = vadd.f32 %v11066, %v11067
      %v11069 = vsel %vm9165, %v10158, 0.0
      %v11070 = vadd.f32 %v11068, %v11069
      %v11071 = vsel %vm9165, %v10159, 0.0
      %v11072 = vadd.f32 %v11070, %v11071
      %v11073 = vsel %vm9165, %v10160, 0.0
      %v11074 = vadd.f32 %v11072, %v11073
      %v11075 = vsel %vm9165, %v10161, 0.0
      %v11076 = vadd.f32 %v11074, %v11075
      %v11077 = vsel %vm9165, %v10162, 0.0
      %v11078 = vadd.f32 %v11076, %v11077
      %v11079 = vsel %vm9165, %v10163, 0.0
      %v11080 = vadd.f32 %v11078, %v11079
      %v11081 = vsel %vm9165, %v10164, 0.0
      %v11082 = vadd.f32 %v11080, %v11081
      %v11083 = vsel %vm9165, %v10165, 0.0
      %v11084 = vadd.f32 %v11082, %v11083
      %v11085 = vsel %vm9165, %v10166, 0.0
      %v11086 = vadd.f32 %v11084, %v11085
      %v11087 = vsel %vm9165, %v10167, 0.0
      %v11088 = vadd.f32 %v11086, %v11087
      %v11089 = vsel %vm9165, %v10168, 0.0
      %v11090 = vadd.f32 %v11088, %v11089
      %v11091 = vsel %vm9165, %v10169, 0.0
      %v11092 = vadd.f32 %v11090, %v11091
      %v11093 = vsel %vm9165, %v10170, 0.0
      %v11094 = vadd.f32 %v11092, %v11093
      %v11095 = vsel %vm9165, %v10171, 0.0
      %v11096 = vadd.f32 %v11094, %v11095
      %v11097 = vsel %vm9165, %v10172, 0.0
      %v11098 = vadd.f32 %v11096, %v11097
      %v11099 = vsel %vm9165, %v10173, 0.0
      %v11100 = vadd.f32 %v11098, %v11099
      %v11101 = vsel %vm9165, %v10174, 0.0
      %v11102 = vadd.f32 %v11100, %v11101
      %v11103 = vsel %vm9165, %v10175, 0.0
      %v11104 = vadd.f32 %v11102, %v11103
      %v11105 = vsel %vm9165, %v10176, 0.0
      %v11106 = vadd.f32 %v11104, %v11105
      %v11107 = vsel %vm9165, %v10177, 0.0
      %v11108 = vadd.f32 %v11106, %v11107
      %v11109 = vsel %vm9165, %v10178, 0.0
      %v11110 = vadd.f32 %v11108, %v11109
      %v11111 = vsel %vm9165, %v10179, 0.0
      %v11112 = vadd.f32 %v11110, %v11111
      %v11113 = vsel %vm9165, %v10180, 0.0
      %v11114 = vadd.f32 %v11112, %v11113
      %v11115 = vsel %vm9165, %v10181, 0.0
      %v11116 = vadd.f32 %v11114, %v11115
      %v11117 = vsel %vm9165, %v10182, 0.0
      %v11118 = vadd.f32 %v11116, %v11117
      %v11119 = vsel %vm9165, %v10183, 0.0
      %v11120 = vadd.f32 %v11118, %v11119
      %v11121 = vrot.slane %v11120, 4
      %v11122 = vadd.f32 %v11120, %v11121
      %v11123 = vrot.slane %v11122, 2
      %v11124 = vadd.f32 %v11122, %v11123
      %v11125 = vrot.slane %v11124, 1
      %v11126 = vadd.f32 %v11124, %v11125
      %v11127 = vsel %vm9165, %v10184, 0.0
      %v11128 = vsel %vm9165, %v10185, 0.0
      %v11129 = vadd.f32 %v11127, %v11128
      %v11130 = vsel %vm9165, %v10186, 0.0
      %v11131 = vadd.f32 %v11129, %v11130
      %v11132 = vsel %vm9165, %v10187, 0.0
      %v11133 = vadd.f32 %v11131, %v11132
      %v11134 = vsel %vm9165, %v10188, 0.0
      %v11135 = vadd.f32 %v11133, %v11134
      %v11136 = vsel %vm9165, %v10189, 0.0
      %v11137 = vadd.f32 %v11135, %v11136
      %v11138 = vsel %vm9165, %v10190, 0.0
      %v11139 = vadd.f32 %v11137, %v11138
      %v11140 = vsel %vm9165, %v10191, 0.0
      %v11141 = vadd.f32 %v11139, %v11140
      %v11142 = vsel %vm9165, %v10192, 0.0
      %v11143 = vadd.f32 %v11141, %v11142
      %v11144 = vsel %vm9165, %v10193, 0.0
      %v11145 = vadd.f32 %v11143, %v11144
      %v11146 = vsel %vm9165, %v10194, 0.0
      %v11147 = vadd.f32 %v11145, %v11146
      %v11148 = vsel %vm9165, %v10195, 0.0
      %v11149 = vadd.f32 %v11147, %v11148
      %v11150 = vsel %vm9165, %v10196, 0.0
      %v11151 = vadd.f32 %v11149, %v11150
      %v11152 = vsel %vm9165, %v10197, 0.0
      %v11153 = vadd.f32 %v11151, %v11152
      %v11154 = vsel %vm9165, %v10198, 0.0
      %v11155 = vadd.f32 %v11153, %v11154
      %v11156 = vsel %vm9165, %v10199, 0.0
      %v11157 = vadd.f32 %v11155, %v11156
      %v11158 = vsel %vm9165, %v10200, 0.0
      %v11159 = vadd.f32 %v11157, %v11158
      %v11160 = vsel %vm9165, %v10201, 0.0
      %v11161 = vadd.f32 %v11159, %v11160
      %v11162 = vsel %vm9165, %v10202, 0.0
      %v11163 = vadd.f32 %v11161, %v11162
      %v11164 = vsel %vm9165, %v10203, 0.0
      %v11165 = vadd.f32 %v11163, %v11164
      %v11166 = vsel %vm9165, %v10204, 0.0
      %v11167 = vadd.f32 %v11165, %v11166
      %v11168 = vsel %vm9165, %v10205, 0.0
      %v11169 = vadd.f32 %v11167, %v11168
      %v11170 = vsel %vm9165, %v10206, 0.0
      %v11171 = vadd.f32 %v11169, %v11170
      %v11172 = vsel %vm9165, %v10207, 0.0
      %v11173 = vadd.f32 %v11171, %v11172
      %v11174 = vsel %vm9165, %v10208, 0.0
      %v11175 = vadd.f32 %v11173, %v11174
      %v11176 = vsel %vm9165, %v10209, 0.0
      %v11177 = vadd.f32 %v11175, %v11176
      %v11178 = vsel %vm9165, %v10210, 0.0
      %v11179 = vadd.f32 %v11177, %v11178
      %v11180 = vsel %vm9165, %v10211, 0.0
      %v11181 = vadd.f32 %v11179, %v11180
      %v11182 = vrot.slane %v11181, 4
      %v11183 = vadd.f32 %v11181, %v11182
      %v11184 = vrot.slane %v11183, 2
      %v11185 = vadd.f32 %v11183, %v11184
      %v11186 = vrot.slane %v11185, 1
      %v11187 = vadd.f32 %v11185, %v11186
      %vm11204 = vcmask 1041409
      %v11205 = vsel %vm11204, %v10333, %v10272
      %vm11206 = vcmask 1042434
      %v11207 = vsel %vm11206, %v10394, %v11205
      %vm11208 = vcmask 1043459
      %v11209 = vsel %vm11208, %v10455, %v11207
      %vm11210 = vcmask 1044484
      %v11211 = vsel %vm11210, %v10516, %v11209
      %vm11212 = vcmask 1045509
      %v11213 = vsel %vm11212, %v10577, %v11211
      %vm11214 = vcmask 1046534
      %v11215 = vsel %vm11214, %v10638, %v11213
      %vm11216 = vcmask 1047559
      %v11217 = vsel %vm11216, %v10699, %v11215
      %v11218 = vsel %vm11204, %v10821, %v10760
      %v11219 = vsel %vm11206, %v10882, %v11218
      %v11220 = vsel %vm11208, %v10943, %v11219
      %v11221 = vsel %vm11210, %v11004, %v11220
      %v11222 = vsel %vm11212, %v11065, %v11221
      %v11223 = vsel %vm11214, %v11126, %v11222
      %v11224 = vsel %vm11216, %v11187, %v11223
      %v11227 = vsel %vm9165, %v11217, 0.0
      %11228 = vadd.xlane.f32.xlu0 %v11227
      %v11229 = vpop.xlane.xlu0 %11228
      %v11230 = vsel %vm9165, %v11224, 0.0
      %11231 = vadd.xlane.f32.xlu0 %v11230
      %v11232 = vpop.xlane.xlu0 %11231
      %v11233 = vld [vmem:[%s7] sm:$0xff]
      %v11234 = vld [vmem:[%s7 + $0x8] sm:$0xff]
      %v11235 = vadd.f32 %v11229, %v11233
      %v11236 = vadd.f32 %v11232, %v11234
      %vm11237 = vcmask 7168
      %11238 = vst.msk [vmem:[%s325] sm:$0xff] %vm11237, %v11235
      %11239 = vst.msk [vmem:[%s325 + $0x8] sm:$0xff] %vm11237, %v11236
      %p11240 = scmp.lt.s32.totalorder %s19, 1
      %s11241 = scalar_select %p11240, %s19, 1
      %s11242 = smul.addr %s11241, 2
      %s11243 = smul.addr %s11242, 8
      %s11244 = scalar_lea.vmem %s8, %s11243
      // Predicated region
      $region53: #{merged_model_forward.1} parent=51 // pred_check
        %p11245 = pneg %p215
      $region54: #{merged_model_forward.1} parent=51 // pred_check_branch
        %11247 = sbr.rel (%p11245) target = $region56
      $region55: #{merged_model_forward.1} parent=51 // pred_region
        _
      $region56: #{merged_model_forward.1} parent=51 // pred_fallthru
        _
    $region52: #{merged_model_forward.1} parent=5 // pred_fallthru
      _
    %p11248 = scmp.le.s32.totalorder 2, %s14
    // Predicated region
    $region57: #{merged_model_forward.1} parent=5 // pred_check
      %p11249 = pneg %p11248
    $region58: #{merged_model_forward.1} parent=5 // pred_check_branch
      %11251 = sbr.rel (%p11249) target = $region60
    $region59: #{merged_model_forward.1} parent=5 // pred_region
      %s11252 = ssub.s32 %s14, 2
      // Predicated region
      $region61: #{merged_model_forward.1} parent=59 // pred_check
        %p11253 = pneg %p221
      $region62: #{merged_model_forward.1} parent=59 // pred_check_branch
        %11255 = sbr.rel (%p11253) target = $region64
      $region63: #{merged_model_forward.1} parent=59 // pred_region
        %p11256 = scmp.lt.s32.totalorder %s20, 1
        %s11257 = scalar_select %p11256, %s20, 1
        %s11258 = smul.addr %s11257, 2
        %s11259 = smul.addr %s11258, 8
        %s11260 = scalar_lea.vmem %s8, %s11259
      $region64: #{merged_model_forward.1} parent=59 // pred_fallthru
        _
    $region60: #{merged_model_forward.1} parent=5 // pred_fallthru
      _
  $region6: #{merged_model_forward.1} parent=0 // loop_footer
    %s18 = sadd.s32 1, %s14
  $region7: #{merged_model_forward.1} parent=0 // loop_footer_branch
    %13 = sbr.rel target = $region3
  $region8: #{merged_model_forward.1} parent=0 // loop_exit
    _

</llo_original>
